<compile_context>
chip_gen: v7x
topology: tpu7x:2x2x1
jax: 0.10.0
libtpu: 0.0.40
codegen_flags: <defaults>
</compile_context>

<pallas_src>
import functools
import math

import numpy as np
import jax
import jax.numpy as jnp
from jax.experimental import pallas as pl
from jax.experimental.pallas import tpu as pltpu

GROUPS = 32          # norm='group' -> nn.GroupNorm(32, C) everywhere
GN_EPS = 1e-5
LRELU_SLOPE = 0.2
BATCH_SIZE = 2       # the reference hard-codes batch_size = 2 inside its reshapes

_PARALLEL = pltpu.CompilerParams(dimension_semantics=("parallel",))


# ----------------------------------------------------------------------------
# GroupNorm one-hot constants (built once at parameter-prep time)
# ----------------------------------------------------------------------------
@functools.lru_cache(maxsize=None)
def _gn_onehots_np(C):
    gs = C // GROUPS
    M = (np.arange(C)[:, None] // gs == np.arange(GROUPS)[None, :]).astype(np.float32)
    return M, np.ascontiguousarray(M.T)


def _gn_onehots(C):
    M, MT = _gn_onehots_np(C)
    return jnp.asarray(M), jnp.asarray(MT)            # (C, G), (G, C)


def _const_spec(arr):
    """BlockSpec for a grid-invariant (whole-array) input."""
    return pl.BlockSpec(arr.shape, lambda b, _n=arr.ndim: (0,) * _n)


# ----------------------------------------------------------------------------
# In-kernel building blocks
# ----------------------------------------------------------------------------
def _gn_lrelu(h, gamma, beta, M, MT, n_rows):
    """Per-sample GroupNorm + LeakyReLU of h: (R, C) f32 — one-pass stats.

    sum / sum-of-squares are stacked into a (2, C) operand so the group
    reduce and the group->channel broadcast are ONE small MXU matmul each.
    """
    C = gamma.shape[-1]
    cnt = float(n_rows * (C // GROUPS))
    s1 = jnp.sum(h, axis=0, keepdims=True)                                  # (1, C)
    s2 = jnp.sum(h * h, axis=0, keepdims=True)                              # (1, C)
    g = jnp.dot(jnp.concatenate([s1, s2], axis=0), M,
                preferred_element_type=jnp.float32) / cnt                   # (2, G)
    mean_g = g[0:1]
    var_g = jnp.maximum(g[1:2] - mean_g * mean_g, 0.0)
    inv_g = jax.lax.rsqrt(var_g + GN_EPS)
    back = jnp.dot(jnp.concatenate([mean_g, inv_g], axis=0), MT,
                   preferred_element_type=jnp.float32)                      # (2, C)
    scale = back[1:2] * gamma
    shift = beta - back[0:1] * scale
    hn = h * scale + shift
    return jnp.where(hn >= 0.0, hn, LRELU_SLOPE * hn)


def _conv_gn_lrelu(rows_bf16, w, bias, gamma, beta, M, MT, n_rows):
    """1x1 conv (single bf16 MXU matmul, f32 accum) + GroupNorm + LeakyReLU."""
    h = jnp.dot(rows_bf16, w, preferred_element_type=jnp.float32) + bias
    return _gn_lrelu(h, gamma, beta, M, MT, n_rows)


def _max_over_k(h, K, N):
    """h: (K*N, C) with rows ordered [neighbor j, point n] -> max over neighbors."""
    m = h[0:N, :]
    for j in range(1, K):
        m = jnp.maximum(m, h[j * N:(j + 1) * N, :])
    return m                                                                # (N, C)


# ----------------------------------------------------------------------------
# Pallas kernels
# ----------------------------------------------------------------------------
def _make_edge2_kernel(K, N):
    """Fused GraphConv(layer=2): conv1+GN+LReLU -> conv2+GN+LReLU -> max over k.

    One grid step = one batch element; the whole (K, N) neighborhood is a
    single (K*N, Cin) bf16 slab, so each conv is one MXU matmul.  Output is
    written channel-last (N, C)."""
    KN = K * N

    def kernel(feat_ref, w1_ref, w2_ref, c_ref, M_ref, MT_ref, out_ref):
        M, MT, c = M_ref[...], MT_ref[...], c_ref[...]          # c: (6, C)
        rows = feat_ref[0]                                      # (K*N, Cin) bf16
        h = _conv_gn_lrelu(rows, w1_ref[...], c[0:1], c[1:2], c[2:3], M, MT, KN)
        h = _conv_gn_lrelu(h.astype(jnp.bfloat16), w2_ref[...],
                           c[3:4], c[4:5], c[5:6], M, MT, KN)
        out_ref[0] = _max_over_k(h, K, N)                       # (N, C)

    return kernel


def _make_edge3_fused_kernel(K, N):
    """edge3 + edge3_2 (two two-layer GraphConvs on different kNN graphs) and
    conv3 (1x1 Conv1d + GN + LReLU) in one pallas_call.  conv3's channel
    concat is replaced by a split matmul (cwa/cwb) -> no lane concat."""
    KN = K * N

    def kernel(fa_ref, fb_ref, aw1, aw2, bw1, bw2, cwa, cwb,
               c_ref, M_ref, MT_ref, out_ref):
        M, MT, c = M_ref[...], MT_ref[...], c_ref[...]          # c: (15, C)

        def edge(feat_ref, w1, w2, o):
            rows = feat_ref[0]                                  # (K*N, Cin) bf16
            h = _conv_gn_lrelu(rows, w1[...], c[o:o + 1], c[o + 1:o + 2],
                               c[o + 2:o + 3], M, MT, KN)
            h = _conv_gn_lrelu(h.astype(jnp.bfloat16), w2[...], c[o + 3:o + 4],
                               c[o + 4:o + 5], c[o + 5:o + 6], M, MT, KN)
            return _max_over_k(h, K, N)                         # (N, C)

        ma = edge(fa_ref, aw1, aw2, 0)                          # edge3   (dilated kNN)
        mb = edge(fb_ref, bw1, bw2, 6)                          # edge3_2 (plain kNN)
        h3 = (jnp.dot(ma.astype(jnp.bfloat16), cwa[...],
                      preferred_element_type=jnp.float32)
              + jnp.dot(mb.astype(jnp.bfloat16), cwb[...],
                        preferred_element_type=jnp.float32) + c[12:13])
        out_ref[0] = _gn_lrelu(h3, c[13:14], c[14:15], M, MT, N)

    return kernel


def _make_edge4_head_kernel(K, N):
    """edge4 (GraphConv layer=1) fused with the MLP head: conv1+GN+LReLU ->
    max over k -> em; global max-pool -> linear1 + GN(32,256) + LReLU ->
    (dropout = identity) -> linear2 -> logits."""
    KN = K * N

    def kernel(feat_ref, ew, ce_ref, M64, MT64, hw1, ch_ref, M256, MT256,
               hw2, hb2, em_ref, logit_ref):
        ce, ch = ce_ref[...], ch_ref[...]                       # (3, C), (3, 256)
        rows = feat_ref[0]                                      # (K*N, Cin) bf16
        h = _conv_gn_lrelu(rows, ew[...], ce[0:1], ce[1:2], ce[2:3],
                           M64[...], MT64[...], KN)             # (K*N, C)
        # N=6 slices cross the 8-sublane boundary; tiny, accepted.
        em_ref[0] = _max_over_k(h, K, N)                        # (N, C)
        # global max over points == max over all K*N rows (aligned reduce).
        xmax = jnp.max(h, axis=0, keepdims=True)                # (1, C)
        hh = jnp.dot(xmax.astype(jnp.bfloat16), hw1[...],
                     preferred_element_type=jnp.float32) + ch[0:1]
        hh = _gn_lrelu(hh, ch[1:2], ch[2:3], M256[...], MT256[...], 1)
        # TODO(synk): nn.Dropout(p=0.5) treated as identity (eval mode).
        logit_ref[0] = jnp.dot(hh.astype(jnp.bfloat16), hw2[...],
                               preferred_element_type=jnp.float32) + hb2[...]

    return kernel


# ----------------------------------------------------------------------------
# pallas_call wrappers
# ----------------------------------------------------------------------------
def graphconv2_block(x_cl, pos_cl, p, k, idx):
    """GraphConv(layer=2).  x_cl: (B, N, C) -> (B, N, Cout)."""
    B, N, _ = x_cl.shape
    feat = get_graph_feature_cl(x_cl, pos_cl, idx)              # (B, k*N, Cin) bf16
    Cin = feat.shape[-1]
    Cout = p["w2"].shape[1]
    args = (feat, p["w1"], p["w2"], p["c"], p["M"], p["MT"])
    in_specs = ([pl.BlockSpec((1, k * N, Cin), lambda b: (b, 0, 0))]
                + [_const_spec(a) for a in args[1:]])
    return pl.pallas_call(
        _make_edge2_kernel(k, N),
        grid=(B,),
        in_specs=in_specs,
        out_specs=pl.BlockSpec((1, N, Cout), lambda b: (b, 0, 0)),
        out_shape=jax.ShapeDtypeStruct((B, N, Cout), jnp.float32),
        compiler_params=_PARALLEL,
    )(*args)


def edge3_block(x_cl, pos_cl, p, k, idx_a, idx_b):
    """edge3 + edge3_2 + conv3 fused.  -> (B, N, Cout)."""
    B, N, _ = x_cl.shape
    fa = get_graph_feature_cl(x_cl, pos_cl, idx_a)              # dilated kNN branch
    fb = get_graph_feature_cl(x_cl, pos_cl, idx_b)              # plain   kNN branch
    Cin = fa.shape[-1]
    Cout = p["cwa"].shape[1]
    args = (fa, fb, p["aw1"], p["aw2"], p["bw1"], p["bw2"],
            p["cwa"], p["cwb"], p["c"], p["M"], p["MT"])
    feat_spec = pl.BlockSpec((1, k * N, Cin), lambda b: (b, 0, 0))
    in_specs = [feat_spec, feat_spec] + [_const_spec(a) for a in args[2:]]
    return pl.pallas_call(
        _make_edge3_fused_kernel(k, N),
        grid=(B,),
        in_specs=in_specs,
        out_specs=pl.BlockSpec((1, N, Cout), lambda b: (b, 0, 0)),
        out_shape=jax.ShapeDtypeStruct((B, N, Cout), jnp.float32),
        compiler_params=_PARALLEL,
    )(*args)


def edge4_head_block(x_cl, pos_cl, p, k, idx):
    """edge4 (layer=1 GraphConv) + global max-pool + MLP head.
    Returns (logits (B, 2), em_cl (B, N, Cout))."""
    B, N, _ = x_cl.shape
    feat = get_graph_feature_cl(x_cl, pos_cl, idx)
    Cin = feat.shape[-1]
    Cout = p["ew"].shape[1]
    Ncls = p["hw2"].shape[1]
    args = (feat, p["ew"], p["ce"], p["M64"], p["MT64"],
            p["hw1"], p["ch"], p["M256"], p["MT256"], p["hw2"], p["hb2"])
    in_specs = ([pl.BlockSpec((1, k * N, Cin), lambda b: (b, 0, 0))]
                + [_const_spec(a) for a in args[1:]])
    em, logits = pl.pallas_call(
        _make_edge4_head_kernel(k, N),
        grid=(B,),
        in_specs=in_specs,
        out_specs=(pl.BlockSpec((1, N, Cout), lambda b: (b, 0, 0)),
                   pl.BlockSpec((1, 1, Ncls), lambda b: (b, 0, 0))),
        out_shape=(jax.ShapeDtypeStruct((B, N, Cout), jnp.float32),
                   jax.ShapeDtypeStruct((B, 1, Ncls), jnp.float32)),
        compiler_params=_PARALLEL,
    )(*args)
    return logits.reshape(B, Ncls), em


# ----------------------------------------------------------------------------
# Plain-JAX glue: kNN, graph-feature construction, FPS, reference reshuffles
# ----------------------------------------------------------------------------
def knn_idx_cl(pos_cl, k):
    """pos_cl: (B, N, 3) -> (B, N, k) indices of the k nearest points (incl. self)."""
    sq = jnp.sum(pos_cl * pos_cl, axis=-1)
    d2 = sq[:, :, None] + sq[:, None, :] - 2.0 * jnp.einsum("bic,bjc->bij",
                                                            pos_cl, pos_cl)
    _, idx = jax.lax.top_k(-d2, k)                              # ascending distance
    return idx


def get_graph_feature_cl(x_cl, pos_cl, idx):
    """Graph feature in kernel layout: (B, k*N, 2C+3+1) bf16, rows ordered
    [neighbor j, point n].  Faithful to the reference, including the old
    nn.PairwiseDistance behavior (norm over the coord dim, eps added to the
    diff) and the raw contiguous view of feature_add back to (B, N, k, 1)."""
    B, N, C = x_cl.shape
    k = idx.shape[-1]
    idx_t = jnp.transpose(idx, (0, 2, 1))                       # (B, k, N)
    bidx = jnp.arange(B)[:, None, None]
    feat = x_cl[bidx, idx_t]                                    # (B, k, N, C)
    feat_pos = pos_cl[bidx, idx_t]                              # (B, k, N, 3)
    x_c = jnp.broadcast_to(x_cl[:, None, :, :], (B, k, N, C))
    pos_c = jnp.broadcast_to(pos_cl[:, None, :, :], (B, k, N, 3))
    fa_raw = jnp.sqrt(jnp.sum((pos_c - feat_pos + 1e-6) ** 2, axis=-1))     # (B, k, N)
    fa = jnp.transpose(fa_raw.reshape(B, N, k), (0, 2, 1))[..., None]       # (B, k, N, 1)
    gf = jnp.concatenate([feat - x_c, feat_pos - pos_c, fa, x_c], axis=-1)
    return gf.reshape(B, k * N, 2 * C + 4).astype(jnp.bfloat16)


def scramble_cl(t_cl):
    """(B, N, C) channel-last -> (N*B, C), replicating the reference's
    `.permute(2,1,0).contiguous().view(N*B, -1)` applied to the (B, C, N) tensor."""
    B, N, C = t_cl.shape
    return jnp.transpose(t_cl, (1, 2, 0)).reshape(N * B, C)


def unscramble_cl(rows, B):
    """(B*m, C) -> (B, m, C), the channel-last counterpart of the reference's
    `.view(-1, C, batch_size).permute(2,1,0)`."""
    M_, C = rows.shape
    m = M_ // B
    return jnp.transpose(rows.reshape(m, C, B), (2, 0, 1))


def _fps_segment(pts, m):
    """Deterministic farthest point sampling of m points, starting at row 0.
    TODO(synk): torch_geometric.nn.fps uses a random start point; fixed to 0 here."""
    d0 = jnp.sum((pts - pts[0]) ** 2, axis=-1)
    sel0 = jnp.zeros((m,), jnp.int32)

    def body(i, carry):
        sel, dists = carry
        nxt = jnp.argmax(dists).astype(jnp.int32)
        sel = sel.at[i].set(nxt)
        d = jnp.sum((pts - pts[nxt]) ** 2, axis=-1)
        return sel, jnp.minimum(dists, d)

    sel, _ = jax.lax.fori_loop(1, m, body, (sel0, d0))
    return sel


def _fps_batched(rows, n_per_batch, ratio):
    """vmapped per-batch FPS over contiguous row segments (matches the
    reference's batch vector arange(B).repeat_interleave(N))."""
    B = rows.shape[0] // n_per_batch
    m = int(math.ceil(ratio * n_per_batch))
    segs = rows.reshape(B, n_per_batch, rows.shape[-1])
    sel = jax.vmap(lambda s: _fps_segment(s, m))(segs)          # (B, m)
    sel = sel + (jnp.arange(B, dtype=jnp.int32)[:, None] * n_per_batch)
    return sel.reshape(-1), m


# ----------------------------------------------------------------------------
# Discriminator forward
# ----------------------------------------------------------------------------
def discriminator_forward(x, pp, *, k):
    B, _, N = x.shape
    assert B == BATCH_SIZE, "the reference hard-codes batch_size = 2 in its reshapes"
    pos_cl = jnp.transpose(x[:, :3], (0, 2, 1))                 # (B, N, 3)
    x_cl = jnp.transpose(x, (0, 2, 1))                          # (B, N, C)

    # edge1: dilation_rate == 1 -> dilated kNN (rate=2, 'order')
    idx1 = knn_idx_cl(pos_cl, 2 * k)[:, :, ::2]
    x1 = graphconv2_block(x_cl, pos_cl, pp["edge1"], k, idx1)   # (B, N, 64)

    # ---- FPS downsample 1 (ratio 0.375), replicating the reference reshuffles ----
    pos_rows, x1_rows = scramble_cl(pos_cl), scramble_cl(x1)
    sel, n2 = _fps_batched(pos_rows, N, 0.375)
    pos2 = unscramble_cl(pos_rows[sel], B)                      # (B, n2, 3)
    x2in = unscramble_cl(x1_rows[sel], B)                       # (B, n2, 64)
    idx2 = knn_idx_cl(pos2, 2 * k)[:, :, ::2]
    x2 = graphconv2_block(x2in, pos2, pp["edge2"], k, idx2)     # (B, n2, 64)

    # ---- FPS downsample 2 (ratio 1/3) ----
    pos2_rows, x2_rows = scramble_cl(pos2), scramble_cl(x2)
    sel, n3 = _fps_batched(pos2_rows, n2, 1.0 / 3.0)
    pos3 = unscramble_cl(pos2_rows[sel], B)
    x3in = unscramble_cl(x2_rows[sel], B)
    # edge3 (dilated kNN, rate 2) and edge3_2 (plain kNN) share one cdist+top_k
    idx2k = knn_idx_cl(pos3, 2 * k)
    x3 = edge3_block(x3in, pos3, pp["e3"], k,
                     idx_a=idx2k[:, :, ::2], idx_b=idx2k[:, :, :k])   # (B, n3, 64)

    # ---- FPS downsample 3 (ratio 1/3) ----
    pos3_rows, x3_rows = scramble_cl(pos3), scramble_cl(x3)
    sel, _n4 = _fps_batched(pos3_rows, n3, 1.0 / 3.0)
    pos4 = unscramble_cl(pos3_rows[sel], B)
    x4in = unscramble_cl(x3_rows[sel], B)
    idx4 = knn_idx_cl(pos4, k)                                   # plain kNN (rate 1)
    logits, em_cl = edge4_head_block(x4in, pos4, pp["e4h"], k, idx4)
    em = jnp.transpose(em_cl, (0, 2, 1))                         # (B, 64, n4) as in torch
    return logits, em


# ----------------------------------------------------------------------------
# Parameters: raw (torch-layout-equivalent) init + one-time prep (bf16 weights,
# packed GroupNorm/bias constants, one-hot masks)
# ----------------------------------------------------------------------------
def _init_lin(key, cin, cout):
    k1, k2 = jax.random.split(key)
    w = jax.random.normal(k1, (cin, cout), jnp.float32) * (1.0 / math.sqrt(cin))
    b = jax.random.normal(k2, (1, cout), jnp.float32) * 0.01
    return w, b


def _init_gn(key, c):
    k1, k2 = jax.random.split(key)
    g = 1.0 + 0.1 * jax.random.normal(k1, (1, c), jnp.float32)
    be = 0.1 * jax.random.normal(k2, (1, c), jnp.float32)
    return g, be


def init_params(key, n_cls, out_dims):
    d0, d1, d2, d3 = out_dims
    keys = jax.random.split(key, 8)

    def two_layer(kk, cin, cmid, cout):
        k1, k2, k3, k4 = jax.random.split(kk, 4)
        w1, b1 = _init_lin(k1, cin, cmid)
        g1, be1 = _init_gn(k2, cmid)
        w2, b2 = _init_lin(k3, cmid, cout)
        g2, be2 = _init_gn(k4, cout)
        return dict(w1=w1, b1=b1, g1=g1, be1=be1, w2=w2, b2=b2, g2=g2, be2=be2)

    def one_layer(kk, cin, cout):
        k1, k2 = jax.random.split(kk, 2)
        w1, b1 = _init_lin(k1, cin, cout)
        g1, be1 = _init_gn(k2, cout)
        return dict(w1=w1, b1=b1, g1=g1, be1=be1)

    P = {
        "edge1": two_layer(keys[0], (n_cls + 3) * 2 + 4, d0, d0),
        "edge2": two_layer(keys[1], d0 * 2 + 4, d1, d1),
        "edge3": two_layer(keys[2], d1 * 2 + 4, d2, d2),
        "edge3_2": two_layer(keys[3], d1 * 2 + 4, d2, d2),
        "conv3": one_layer(keys[4], d2 * 2, d2),
        "edge4": one_layer(keys[5], d2 * 2 + 4, d3),
    }
    k1, k2, k3 = jax.random.split(keys[6], 3)
    w1, b1 = _init_lin(k1, d3, 256)
    g, be = _init_gn(k2, 256)
    w2, b2 = _init_lin(k3, 256, 2)
    P["head"] = dict(w1=w1, b1=b1, g=g, be=be, w2=w2, b2=b2)
    return P


def prepare_params(raw):
    """One-time prep: bf16 weights, packed (bias|gamma|beta) constant slabs,
    GroupNorm one-hot masks.  Done outside the per-forward trace."""
    def bf(w):
        return w.astype(jnp.bfloat16)

    def two_layer(p):
        C = p["w2"].shape[1]
        M, MT = _gn_onehots(C)
        c = jnp.concatenate([p["b1"], p["g1"], p["be1"],
                             p["b2"], p["g2"], p["be2"]], axis=0)       # (6, C)
        return dict(w1=bf(p["w1"]), w2=bf(p["w2"]), c=c, M=M, MT=MT)

    e3a, e3b, c3 = raw["edge3"], raw["edge3_2"], raw["conv3"]
    C3 = c3["w1"].shape[1]
    M3, MT3 = _gn_onehots(C3)
    e3 = dict(
        aw1=bf(e3a["w1"]), aw2=bf(e3a["w2"]),
        bw1=bf(e3b["w1"]), bw2=bf(e3b["w2"]),
        cwa=bf(c3["w1"][:C3]), cwb=bf(c3["w1"][C3:]),
        c=jnp.concatenate([e3a["b1"], e3a["g1"], e3a["be1"],
                           e3a["b2"], e3a["g2"], e3a["be2"],
                           e3b["b1"], e3b["g1"], e3b["be1"],
                           e3b["b2"], e3b["g2"], e3b["be2"],
                           c3["b1"], c3["g1"], c3["be1"]], axis=0),     # (15, C)
        M=M3, MT=MT3)

    e4, hd = raw["edge4"], raw["head"]
    C4 = e4["w1"].shape[1]
    Ch = hd["w1"].shape[1]
    M4, MT4 = _gn_onehots(C4)
    Mh, MTh = _gn_onehots(Ch)
    e4h = dict(
        ew=bf(e4["w1"]),
        ce=jnp.concatenate([e4["b1"], e4["g1"], e4["be1"]], axis=0),    # (3, C4)
        M64=M4, MT64=MT4,
        hw1=bf(hd["w1"]),
        ch=jnp.concatenate([hd["b1"], hd["g"], hd["be"]], axis=0),      # (3, 256)
        M256=Mh, MT256=MTh,
        hw2=bf(hd["w2"]), hb2=hd["b2"])

    return dict(edge1=two_layer(raw["edge1"]),
                edge2=two_layer(raw["edge2"]),
                e3=e3, e4h=e4h)


# ----------------------------------------------------------------------------
if __name__ == "__main__":
    B, n_cls, N, K = 2, 5, 128, 4            # x channels = n_cls + 3 = 8
    out_dims = (64, 64, 64, 64)              # multiples of 32 for GroupNorm(32, C)

    x = jax.random.normal(jax.random.PRNGKey(0), (B, n_cls + 3, N), jnp.float32)
    raw_params = init_params(jax.random.PRNGKey(1), n_cls, out_dims)
    pp = prepare_params(raw_params)

    fwd = jax.jit(functools.partial(discriminator_forward, k=K))
    logits, em = fwd(x, pp)
    jax.block_until_ready((logits, em))

    # expected point counts: 128 -> 48 -> 16 -> 6
    assert logits.shape == (B, 2), logits.shape
    assert em.shape == (B, out_dims[3], 6), em.shape
    assert bool(jnp.all(jnp.isfinite(logits))) and bool(jnp.all(jnp.isfinite(em)))
    print("KERNEL_OK")
</pallas_src>

<mosaic_0001>
module attributes {stable_mosaic.version = 11 : i64} {
  func.func @kernel(%arg0: i32, %arg1: memref<1x512x20xbf16, #tpu.memory_space<vmem>>, %arg2: memref<20x64xbf16, #tpu.memory_space<vmem>>, %arg3: memref<64x64xbf16, #tpu.memory_space<vmem>>, %arg4: memref<6x64xf32, #tpu.memory_space<vmem>>, %arg5: memref<64x32xf32, #tpu.memory_space<vmem>>, %arg6: memref<32x64xf32, #tpu.memory_space<vmem>>, %arg7: memref<1x128x64xf32, #tpu.memory_space<vmem>>) attributes {dimension_semantics = [#tpu.dimension_semantics<parallel>], iteration_bounds = array<i64: 2>, scalar_prefetch = 0 : i64, scratch_operands = 0 : i64, tpu.core_type = #tpu.core_type<tc>, window_params = [{transform_indices = @transform_0, window_bounds = array<i64: 1, 512, 20>}, {pipeline_mode = #tpu.pipeline_mode<synchronous>, transform_indices = @transform_1, window_bounds = array<i64: 20, 64>}, {pipeline_mode = #tpu.pipeline_mode<synchronous>, transform_indices = @transform_2, window_bounds = array<i64: 64, 64>}, {pipeline_mode = #tpu.pipeline_mode<synchronous>, transform_indices = @transform_3, window_bounds = array<i64: 6, 64>}, {pipeline_mode = #tpu.pipeline_mode<synchronous>, transform_indices = @transform_4, window_bounds = array<i64: 64, 32>}, {pipeline_mode = #tpu.pipeline_mode<synchronous>, transform_indices = @transform_5, window_bounds = array<i64: 32, 64>}, {transform_indices = @transform_6, window_bounds = array<i64: 1, 128, 64>}]} {
    %c0 = arith.constant 0 : index
    %c0_0 = arith.constant 0 : index
    %0 = vector.load %arg5[%c0, %c0_0] : memref<64x32xf32, #tpu.memory_space<vmem>>, vector<64x32xf32>
    %c0_1 = arith.constant 0 : index
    %c0_2 = arith.constant 0 : index
    %1 = vector.load %arg6[%c0_1, %c0_2] : memref<32x64xf32, #tpu.memory_space<vmem>>, vector<32x64xf32>
    %c0_3 = arith.constant 0 : index
    %c0_4 = arith.constant 0 : index
    %2 = vector.load %arg4[%c0_3, %c0_4] : memref<6x64xf32, #tpu.memory_space<vmem>>, vector<6x64xf32>
    %c0_5 = arith.constant 0 : index
    %c0_6 = arith.constant 0 : index
    %c0_7 = arith.constant 0 : index
    %3 = vector.load %arg1[%c0_5, %c0_6, %c0_7] : memref<1x512x20xbf16, #tpu.memory_space<vmem>>, vector<1x512x20xbf16>
    %4 = vector.shape_cast %3 : vector<1x512x20xbf16> to vector<512x20xbf16>
    %c0_8 = arith.constant 0 : index
    %c0_9 = arith.constant 0 : index
    %5 = vector.load %arg2[%c0_8, %c0_9] : memref<20x64xbf16, #tpu.memory_space<vmem>>, vector<20x64xbf16>
    %6 = vector.extract_strided_slice %2 {offsets = [0, 0], sizes = [1, 64], strides = [1, 1]} : vector<6x64xf32> to vector<1x64xf32>
    %7 = vector.extract_strided_slice %2 {offsets = [1, 0], sizes = [1, 64], strides = [1, 1]} : vector<6x64xf32> to vector<1x64xf32>
    %8 = vector.extract_strided_slice %2 {offsets = [2, 0], sizes = [1, 64], strides = [1, 1]} : vector<6x64xf32> to vector<1x64xf32>
    %cst = arith.constant dense<0.000000e+00> : vector<512x64xf32>
    %9 = tpu.matmul %4, %5, %cst {dimension_numbers = #tpu.dot_dimension_numbers<[1], [0], [0], [1], [0, 0, 1, 1], [], []>} : vector<512x20xbf16>, vector<20x64xbf16>, vector<512x64xf32> -> vector<512x64xf32>
    %10 = vector.broadcast %6 : vector<1x64xf32> to vector<512x64xf32>
    %11 = arith.addf %9, %10 : vector<512x64xf32>
    %cst_10 = arith.constant dense<0.000000e+00> : vector<64xf32>
    %12 = vector.multi_reduction <add>, %11, %cst_10 [0] : vector<512x64xf32> to vector<64xf32>
    %13 = vector.shape_cast %12 : vector<64xf32> to vector<1x64xf32>
    %14 = arith.mulf %11, %11 : vector<512x64xf32>
    %cst_11 = arith.constant dense<0.000000e+00> : vector<64xf32>
    %15 = vector.multi_reduction <add>, %14, %cst_11 [0] : vector<512x64xf32> to vector<64xf32>
    %16 = vector.shape_cast %15 : vector<64xf32> to vector<1x64xf32>
    %17 = tpu.concatenate %13, %16 in 0 : vector<1x64xf32>, vector<1x64xf32> -> vector<2x64xf32>
    %cst_12 = arith.constant dense<0.000000e+00> : vector<2x32xf32>
    %18 = tpu.matmul %17, %0, %cst_12 {dimension_numbers = #tpu.dot_dimension_numbers<[1], [0], [0], [1], [0, 0, 1, 1], [], []>} : vector<2x64xf32>, vector<64x32xf32>, vector<2x32xf32> -> vector<2x32xf32>
    %cst_13 = arith.constant 1.024000e+03 : f32
    %19 = vector.broadcast %cst_13 : f32 to vector<2x32xf32>
    %20 = arith.divf %18, %19 : vector<2x32xf32>
    %21 = vector.extract_strided_slice %20 {offsets = [0, 0], sizes = [1, 32], strides = [1, 1]} : vector<2x32xf32> to vector<1x32xf32>
    %22 = vector.extract_strided_slice %20 {offsets = [1, 0], sizes = [1, 32], strides = [1, 1]} : vector<2x32xf32> to vector<1x32xf32>
    %23 = arith.mulf %21, %21 : vector<1x32xf32>
    %24 = arith.subf %22, %23 : vector<1x32xf32>
    %cst_14 = arith.constant 0.000000e+00 : f32
    %25 = vector.broadcast %cst_14 : f32 to vector<1x32xf32>
    %26 = arith.maximumf %24, %25 : vector<1x32xf32>
    %cst_15 = arith.constant 9.99999974E-6 : f32
    %27 = vector.broadcast %cst_15 : f32 to vector<1x32xf32>
    %28 = arith.addf %26, %27 : vector<1x32xf32>
    %29 = math.rsqrt %28 : vector<1x32xf32>
    %30 = tpu.concatenate %21, %29 in 0 : vector<1x32xf32>, vector<1x32xf32> -> vector<2x32xf32>
    %cst_16 = arith.constant dense<0.000000e+00> : vector<2x64xf32>
    %31 = tpu.matmul %30, %1, %cst_16 {dimension_numbers = #tpu.dot_dimension_numbers<[1], [0], [0], [1], [0, 0, 1, 1], [], []>} : vector<2x32xf32>, vector<32x64xf32>, vector<2x64xf32> -> vector<2x64xf32>
    %32 = vector.extract_strided_slice %31 {offsets = [1, 0], sizes = [1, 64], strides = [1, 1]} : vector<2x64xf32> to vector<1x64xf32>
    %33 = arith.mulf %32, %7 : vector<1x64xf32>
    %34 = vector.extract_strided_slice %31 {offsets = [0, 0], sizes = [1, 64], strides = [1, 1]} : vector<2x64xf32> to vector<1x64xf32>
    %35 = arith.mulf %34, %33 : vector<1x64xf32>
    %36 = arith.subf %8, %35 : vector<1x64xf32>
    %37 = vector.broadcast %33 : vector<1x64xf32> to vector<512x64xf32>
    %38 = arith.mulf %11, %37 : vector<512x64xf32>
    %39 = vector.broadcast %36 : vector<1x64xf32> to vector<512x64xf32>
    %40 = arith.addf %38, %39 : vector<512x64xf32>
    %cst_17 = arith.constant 0.000000e+00 : f32
    %41 = vector.broadcast %cst_17 : f32 to vector<512x64xf32>
    %42 = arith.cmpf oge, %40, %41 : vector<512x64xf32>
    %cst_18 = arith.constant 2.000000e-01 : f32
    %43 = vector.broadcast %cst_18 : f32 to vector<512x64xf32>
    %44 = arith.mulf %43, %40 : vector<512x64xf32>
    %45 = arith.select %42, %40, %44 : vector<512x64xi1>, vector<512x64xf32>
    %46 = arith.truncf %45 : vector<512x64xf32> to vector<512x64xbf16>
    %c0_19 = arith.constant 0 : index
    %c0_20 = arith.constant 0 : index
    %47 = vector.load %arg3[%c0_19, %c0_20] : memref<64x64xbf16, #tpu.memory_space<vmem>>, vector<64x64xbf16>
    %48 = vector.extract_strided_slice %2 {offsets = [3, 0], sizes = [1, 64], strides = [1, 1]} : vector<6x64xf32> to vector<1x64xf32>
    %49 = vector.extract_strided_slice %2 {offsets = [4, 0], sizes = [1, 64], strides = [1, 1]} : vector<6x64xf32> to vector<1x64xf32>
    %50 = vector.extract_strided_slice %2 {offsets = [5, 0], sizes = [1, 64], strides = [1, 1]} : vector<6x64xf32> to vector<1x64xf32>
    %cst_21 = arith.constant dense<0.000000e+00> : vector<512x64xf32>
    %51 = tpu.matmul %46, %47, %cst_21 {dimension_numbers = #tpu.dot_dimension_numbers<[1], [0], [0], [1], [0, 0, 1, 1], [], []>} : vector<512x64xbf16>, vector<64x64xbf16>, vector<512x64xf32> -> vector<512x64xf32>
    %52 = vector.broadcast %48 : vector<1x64xf32> to vector<512x64xf32>
    %53 = arith.addf %51, %52 : vector<512x64xf32>
    %cst_22 = arith.constant dense<0.000000e+00> : vector<64xf32>
    %54 = vector.multi_reduction <add>, %53, %cst_22 [0] : vector<512x64xf32> to vector<64xf32>
    %55 = vector.shape_cast %54 : vector<64xf32> to vector<1x64xf32>
    %56 = arith.mulf %53, %53 : vector<512x64xf32>
    %cst_23 = arith.constant dense<0.000000e+00> : vector<64xf32>
    %57 = vector.multi_reduction <add>, %56, %cst_23 [0] : vector<512x64xf32> to vector<64xf32>
    %58 = vector.shape_cast %57 : vector<64xf32> to vector<1x64xf32>
    %59 = tpu.concatenate %55, %58 in 0 : vector<1x64xf32>, vector<1x64xf32> -> vector<2x64xf32>
    %cst_24 = arith.constant dense<0.000000e+00> : vector<2x32xf32>
    %60 = tpu.matmul %59, %0, %cst_24 {dimension_numbers = #tpu.dot_dimension_numbers<[1], [0], [0], [1], [0, 0, 1, 1], [], []>} : vector<2x64xf32>, vector<64x32xf32>, vector<2x32xf32> -> vector<2x32xf32>
    %cst_25 = arith.constant 1.024000e+03 : f32
    %61 = vector.broadcast %cst_25 : f32 to vector<2x32xf32>
    %62 = arith.divf %60, %61 : vector<2x32xf32>
    %63 = vector.extract_strided_slice %62 {offsets = [0, 0], sizes = [1, 32], strides = [1, 1]} : vector<2x32xf32> to vector<1x32xf32>
    %64 = vector.extract_strided_slice %62 {offsets = [1, 0], sizes = [1, 32], strides = [1, 1]} : vector<2x32xf32> to vector<1x32xf32>
    %65 = arith.mulf %63, %63 : vector<1x32xf32>
    %66 = arith.subf %64, %65 : vector<1x32xf32>
    %cst_26 = arith.constant 0.000000e+00 : f32
    %67 = vector.broadcast %cst_26 : f32 to vector<1x32xf32>
    %68 = arith.maximumf %66, %67 : vector<1x32xf32>
    %cst_27 = arith.constant 9.99999974E-6 : f32
    %69 = vector.broadcast %cst_27 : f32 to vector<1x32xf32>
    %70 = arith.addf %68, %69 : vector<1x32xf32>
    %71 = math.rsqrt %70 : vector<1x32xf32>
    %72 = tpu.concatenate %63, %71 in 0 : vector<1x32xf32>, vector<1x32xf32> -> vector<2x32xf32>
    %cst_28 = arith.constant dense<0.000000e+00> : vector<2x64xf32>
    %73 = tpu.matmul %72, %1, %cst_28 {dimension_numbers = #tpu.dot_dimension_numbers<[1], [0], [0], [1], [0, 0, 1, 1], [], []>} : vector<2x32xf32>, vector<32x64xf32>, vector<2x64xf32> -> vector<2x64xf32>
    %74 = vector.extract_strided_slice %73 {offsets = [1, 0], sizes = [1, 64], strides = [1, 1]} : vector<2x64xf32> to vector<1x64xf32>
    %75 = arith.mulf %74, %49 : vector<1x64xf32>
    %76 = vector.extract_strided_slice %73 {offsets = [0, 0], sizes = [1, 64], strides = [1, 1]} : vector<2x64xf32> to vector<1x64xf32>
    %77 = arith.mulf %76, %75 : vector<1x64xf32>
    %78 = arith.subf %50, %77 : vector<1x64xf32>
    %79 = vector.broadcast %75 : vector<1x64xf32> to vector<512x64xf32>
    %80 = arith.mulf %53, %79 : vector<512x64xf32>
    %81 = vector.broadcast %78 : vector<1x64xf32> to vector<512x64xf32>
    %82 = arith.addf %80, %81 : vector<512x64xf32>
    %cst_29 = arith.constant 0.000000e+00 : f32
    %83 = vector.broadcast %cst_29 : f32 to vector<512x64xf32>
    %84 = arith.cmpf oge, %82, %83 : vector<512x64xf32>
    %cst_30 = arith.constant 2.000000e-01 : f32
    %85 = vector.broadcast %cst_30 : f32 to vector<512x64xf32>
    %86 = arith.mulf %85, %82 : vector<512x64xf32>
    %87 = arith.select %84, %82, %86 : vector<512x64xi1>, vector<512x64xf32>
    %88 = vector.extract_strided_slice %87 {offsets = [0, 0], sizes = [128, 64], strides = [1, 1]} : vector<512x64xf32> to vector<128x64xf32>
    %89 = vector.extract_strided_slice %87 {offsets = [128, 0], sizes = [128, 64], strides = [1, 1]} : vector<512x64xf32> to vector<128x64xf32>
    %90 = arith.maximumf %88, %89 : vector<128x64xf32>
    %91 = vector.extract_strided_slice %87 {offsets = [256, 0], sizes = [128, 64], strides = [1, 1]} : vector<512x64xf32> to vector<128x64xf32>
    %92 = arith.maximumf %90, %91 : vector<128x64xf32>
    %93 = vector.extract_strided_slice %87 {offsets = [384, 0], sizes = [128, 64], strides = [1, 1]} : vector<512x64xf32> to vector<128x64xf32>
    %94 = arith.maximumf %92, %93 : vector<128x64xf32>
    %c0_31 = arith.constant 0 : index
    %c0_32 = arith.constant 0 : index
    %c0_33 = arith.constant 0 : index
    %95 = vector.load %arg7[%c0_31, %c0_32, %c0_33] : memref<1x128x64xf32, #tpu.memory_space<vmem>>, vector<1x128x64xf32>
    %96 = vector.shape_cast %95 : vector<1x128x64xf32> to vector<128x64xf32>
    %97 = vector.shape_cast %94 : vector<128x64xf32> to vector<1x128x64xf32>
    tpu.vector_store %arg7[%c0_31, %c0_32, %c0_33], %97 {strides = array<i32>} : memref<1x128x64xf32, #tpu.memory_space<vmem>>, vector<1x128x64xf32>,
    return
  }
  func.func @transform_0(%arg0: i32) -> (i32, i32, i32) {
    %c0_i32 = arith.constant 0 : i32
    %c0_i32_0 = arith.constant 0 : i32
    %c0_i32_1 = arith.constant 0 : i32
    return %arg0, %c0_i32, %c0_i32_0 : i32, i32, i32
  }
  func.func @transform_1(%arg0: i32) -> (i32, i32) {
    %c0_i32 = arith.constant 0 : i32
    %c0_i32_0 = arith.constant 0 : i32
    %c0_i32_1 = arith.constant 0 : i32
    return %c0_i32, %c0_i32_0 : i32, i32
  }
  func.func @transform_2(%arg0: i32) -> (i32, i32) {
    %c0_i32 = arith.constant 0 : i32
    %c0_i32_0 = arith.constant 0 : i32
    %c0_i32_1 = arith.constant 0 : i32
    return %c0_i32, %c0_i32_0 : i32, i32
  }
  func.func @transform_3(%arg0: i32) -> (i32, i32) {
    %c0_i32 = arith.constant 0 : i32
    %c0_i32_0 = arith.constant 0 : i32
    %c0_i32_1 = arith.constant 0 : i32
    return %c0_i32, %c0_i32_0 : i32, i32
  }
  func.func @transform_4(%arg0: i32) -> (i32, i32) {
    %c0_i32 = arith.constant 0 : i32
    %c0_i32_0 = arith.constant 0 : i32
    %c0_i32_1 = arith.constant 0 : i32
    return %c0_i32, %c0_i32_0 : i32, i32
  }
  func.func @transform_5(%arg0: i32) -> (i32, i32) {
    %c0_i32 = arith.constant 0 : i32
    %c0_i32_0 = arith.constant 0 : i32
    %c0_i32_1 = arith.constant 0 : i32
    return %c0_i32, %c0_i32_0 : i32, i32
  }
  func.func @transform_6(%arg0: i32) -> (i32, i32, i32) {
    %c0_i32 = arith.constant 0 : i32
    %c0_i32_0 = arith.constant 0 : i32
    %c0_i32_1 = arith.constant 0 : i32
    return %arg0, %c0_i32, %c0_i32_0 : i32, i32, i32
  }
}

module attributes {stable_mosaic.version = 11 : i64} {
  func.func @kernel(%arg0: i32, %arg1: memref<1x192x132xbf16, #tpu.memory_space<vmem>>, %arg2: memref<132x64xbf16, #tpu.memory_space<vmem>>, %arg3: memref<64x64xbf16, #tpu.memory_space<vmem>>, %arg4: memref<6x64xf32, #tpu.memory_space<vmem>>, %arg5: memref<64x32xf32, #tpu.memory_space<vmem>>, %arg6: memref<32x64xf32, #tpu.memory_space<vmem>>, %arg7: memref<1x48x64xf32, #tpu.memory_space<vmem>>) attributes {dimension_semantics = [#tpu.dimension_semantics<parallel>], iteration_bounds = array<i64: 2>, scalar_prefetch = 0 : i64, scratch_operands = 0 : i64, tpu.core_type = #tpu.core_type<tc>, window_params = [{transform_indices = @transform_0, window_bounds = array<i64: 1, 192, 132>}, {pipeline_mode = #tpu.pipeline_mode<synchronous>, transform_indices = @transform_1, window_bounds = array<i64: 132, 64>}, {pipeline_mode = #tpu.pipeline_mode<synchronous>, transform_indices = @transform_2, window_bounds = array<i64: 64, 64>}, {pipeline_mode = #tpu.pipeline_mode<synchronous>, transform_indices = @transform_3, window_bounds = array<i64: 6, 64>}, {pipeline_mode = #tpu.pipeline_mode<synchronous>, transform_indices = @transform_4, window_bounds = array<i64: 64, 32>}, {pipeline_mode = #tpu.pipeline_mode<synchronous>, transform_indices = @transform_5, window_bounds = array<i64: 32, 64>}, {transform_indices = @transform_6, window_bounds = array<i64: 1, 48, 64>}]} {
    %c0 = arith.constant 0 : index
    %c0_0 = arith.constant 0 : index
    %0 = vector.load %arg5[%c0, %c0_0] : memref<64x32xf32, #tpu.memory_space<vmem>>, vector<64x32xf32>
    %c0_1 = arith.constant 0 : index
    %c0_2 = arith.constant 0 : index
    %1 = vector.load %arg6[%c0_1, %c0_2] : memref<32x64xf32, #tpu.memory_space<vmem>>, vector<32x64xf32>
    %c0_3 = arith.constant 0 : index
    %c0_4 = arith.constant 0 : index
    %2 = vector.load %arg4[%c0_3, %c0_4] : memref<6x64xf32, #tpu.memory_space<vmem>>, vector<6x64xf32>
    %c0_5 = arith.constant 0 : index
    %c0_6 = arith.constant 0 : index
    %c0_7 = arith.constant 0 : index
    %3 = vector.load %arg1[%c0_5, %c0_6, %c0_7] : memref<1x192x132xbf16, #tpu.memory_space<vmem>>, vector<1x192x132xbf16>
    %4 = vector.shape_cast %3 : vector<1x192x132xbf16> to vector<192x132xbf16>
    %c0_8 = arith.constant 0 : index
    %c0_9 = arith.constant 0 : index
    %5 = vector.load %arg2[%c0_8, %c0_9] : memref<132x64xbf16, #tpu.memory_space<vmem>>, vector<132x64xbf16>
    %6 = vector.extract_strided_slice %2 {offsets = [0, 0], sizes = [1, 64], strides = [1, 1]} : vector<6x64xf32> to vector<1x64xf32>
    %7 = vector.extract_strided_slice %2 {offsets = [1, 0], sizes = [1, 64], strides = [1, 1]} : vector<6x64xf32> to vector<1x64xf32>
    %8 = vector.extract_strided_slice %2 {offsets = [2, 0], sizes = [1, 64], strides = [1, 1]} : vector<6x64xf32> to vector<1x64xf32>
    %cst = arith.constant dense<0.000000e+00> : vector<192x64xf32>
    %9 = tpu.matmul %4, %5, %cst {dimension_numbers = #tpu.dot_dimension_numbers<[1], [0], [0], [1], [0, 0, 1, 1], [], []>} : vector<192x132xbf16>, vector<132x64xbf16>, vector<192x64xf32> -> vector<192x64xf32>
    %10 = vector.broadcast %6 : vector<1x64xf32> to vector<192x64xf32>
    %11 = arith.addf %9, %10 : vector<192x64xf32>
    %cst_10 = arith.constant dense<0.000000e+00> : vector<64xf32>
    %12 = vector.multi_reduction <add>, %11, %cst_10 [0] : vector<192x64xf32> to vector<64xf32>
    %13 = vector.shape_cast %12 : vector<64xf32> to vector<1x64xf32>
    %14 = arith.mulf %11, %11 : vector<192x64xf32>
    %cst_11 = arith.constant dense<0.000000e+00> : vector<64xf32>
    %15 = vector.multi_reduction <add>, %14, %cst_11 [0] : vector<192x64xf32> to vector<64xf32>
    %16 = vector.shape_cast %15 : vector<64xf32> to vector<1x64xf32>
    %17 = tpu.concatenate %13, %16 in 0 : vector<1x64xf32>, vector<1x64xf32> -> vector<2x64xf32>
    %cst_12 = arith.constant dense<0.000000e+00> : vector<2x32xf32>
    %18 = tpu.matmul %17, %0, %cst_12 {dimension_numbers = #tpu.dot_dimension_numbers<[1], [0], [0], [1], [0, 0, 1, 1], [], []>} : vector<2x64xf32>, vector<64x32xf32>, vector<2x32xf32> -> vector<2x32xf32>
    %cst_13 = arith.constant 3.840000e+02 : f32
    %19 = vector.broadcast %cst_13 : f32 to vector<2x32xf32>
    %20 = arith.divf %18, %19 : vector<2x32xf32>
    %21 = vector.extract_strided_slice %20 {offsets = [0, 0], sizes = [1, 32], strides = [1, 1]} : vector<2x32xf32> to vector<1x32xf32>
    %22 = vector.extract_strided_slice %20 {offsets = [1, 0], sizes = [1, 32], strides = [1, 1]} : vector<2x32xf32> to vector<1x32xf32>
    %23 = arith.mulf %21, %21 : vector<1x32xf32>
    %24 = arith.subf %22, %23 : vector<1x32xf32>
    %cst_14 = arith.constant 0.000000e+00 : f32
    %25 = vector.broadcast %cst_14 : f32 to vector<1x32xf32>
    %26 = arith.maximumf %24, %25 : vector<1x32xf32>
    %cst_15 = arith.constant 9.99999974E-6 : f32
    %27 = vector.broadcast %cst_15 : f32 to vector<1x32xf32>
    %28 = arith.addf %26, %27 : vector<1x32xf32>
    %29 = math.rsqrt %28 : vector<1x32xf32>
    %30 = tpu.concatenate %21, %29 in 0 : vector<1x32xf32>, vector<1x32xf32> -> vector<2x32xf32>
    %cst_16 = arith.constant dense<0.000000e+00> : vector<2x64xf32>
    %31 = tpu.matmul %30, %1, %cst_16 {dimension_numbers = #tpu.dot_dimension_numbers<[1], [0], [0], [1], [0, 0, 1, 1], [], []>} : vector<2x32xf32>, vector<32x64xf32>, vector<2x64xf32> -> vector<2x64xf32>
    %32 = vector.extract_strided_slice %31 {offsets = [1, 0], sizes = [1, 64], strides = [1, 1]} : vector<2x64xf32> to vector<1x64xf32>
    %33 = arith.mulf %32, %7 : vector<1x64xf32>
    %34 = vector.extract_strided_slice %31 {offsets = [0, 0], sizes = [1, 64], strides = [1, 1]} : vector<2x64xf32> to vector<1x64xf32>
    %35 = arith.mulf %34, %33 : vector<1x64xf32>
    %36 = arith.subf %8, %35 : vector<1x64xf32>
    %37 = vector.broadcast %33 : vector<1x64xf32> to vector<192x64xf32>
    %38 = arith.mulf %11, %37 : vector<192x64xf32>
    %39 = vector.broadcast %36 : vector<1x64xf32> to vector<192x64xf32>
    %40 = arith.addf %38, %39 : vector<192x64xf32>
    %cst_17 = arith.constant 0.000000e+00 : f32
    %41 = vector.broadcast %cst_17 : f32 to vector<192x64xf32>
    %42 = arith.cmpf oge, %40, %41 : vector<192x64xf32>
    %cst_18 = arith.constant 2.000000e-01 : f32
    %43 = vector.broadcast %cst_18 : f32 to vector<192x64xf32>
    %44 = arith.mulf %43, %40 : vector<192x64xf32>
    %45 = arith.select %42, %40, %44 : vector<192x64xi1>, vector<192x64xf32>
    %46 = arith.truncf %45 : vector<192x64xf32> to vector<192x64xbf16>
    %c0_19 = arith.constant 0 : index
    %c0_20 = arith.constant 0 : index
    %47 = vector.load %arg3[%c0_19, %c0_20] : memref<64x64xbf16, #tpu.memory_space<vmem>>, vector<64x64xbf16>
    %48 = vector.extract_strided_slice %2 {offsets = [3, 0], sizes = [1, 64], strides = [1, 1]} : vector<6x64xf32> to vector<1x64xf32>
    %49 = vector.extract_strided_slice %2 {offsets = [4, 0], sizes = [1, 64], strides = [1, 1]} : vector<6x64xf32> to vector<1x64xf32>
    %50 = vector.extract_strided_slice %2 {offsets = [5, 0], sizes = [1, 64], strides = [1, 1]} : vector<6x64xf32> to vector<1x64xf32>
    %cst_21 = arith.constant dense<0.000000e+00> : vector<192x64xf32>
    %51 = tpu.matmul %46, %47, %cst_21 {dimension_numbers = #tpu.dot_dimension_numbers<[1], [0], [0], [1], [0, 0, 1, 1], [], []>} : vector<192x64xbf16>, vector<64x64xbf16>, vector<192x64xf32> -> vector<192x64xf32>
    %52 = vector.broadcast %48 : vector<1x64xf32> to vector<192x64xf32>
    %53 = arith.addf %51, %52 : vector<192x64xf32>
    %cst_22 = arith.constant dense<0.000000e+00> : vector<64xf32>
    %54 = vector.multi_reduction <add>, %53, %cst_22 [0] : vector<192x64xf32> to vector<64xf32>
    %55 = vector.shape_cast %54 : vector<64xf32> to vector<1x64xf32>
    %56 = arith.mulf %53, %53 : vector<192x64xf32>
    %cst_23 = arith.constant dense<0.000000e+00> : vector<64xf32>
    %57 = vector.multi_reduction <add>, %56, %cst_23 [0] : vector<192x64xf32> to vector<64xf32>
    %58 = vector.shape_cast %57 : vector<64xf32> to vector<1x64xf32>
    %59 = tpu.concatenate %55, %58 in 0 : vector<1x64xf32>, vector<1x64xf32> -> vector<2x64xf32>
    %cst_24 = arith.constant dense<0.000000e+00> : vector<2x32xf32>
    %60 = tpu.matmul %59, %0, %cst_24 {dimension_numbers = #tpu.dot_dimension_numbers<[1], [0], [0], [1], [0, 0, 1, 1], [], []>} : vector<2x64xf32>, vector<64x32xf32>, vector<2x32xf32> -> vector<2x32xf32>
    %cst_25 = arith.constant 3.840000e+02 : f32
    %61 = vector.broadcast %cst_25 : f32 to vector<2x32xf32>
    %62 = arith.divf %60, %61 : vector<2x32xf32>
    %63 = vector.extract_strided_slice %62 {offsets = [0, 0], sizes = [1, 32], strides = [1, 1]} : vector<2x32xf32> to vector<1x32xf32>
    %64 = vector.extract_strided_slice %62 {offsets = [1, 0], sizes = [1, 32], strides = [1, 1]} : vector<2x32xf32> to vector<1x32xf32>
    %65 = arith.mulf %63, %63 : vector<1x32xf32>
    %66 = arith.subf %64, %65 : vector<1x32xf32>
    %cst_26 = arith.constant 0.000000e+00 : f32
    %67 = vector.broadcast %cst_26 : f32 to vector<1x32xf32>
    %68 = arith.maximumf %66, %67 : vector<1x32xf32>
    %cst_27 = arith.constant 9.99999974E-6 : f32
    %69 = vector.broadcast %cst_27 : f32 to vector<1x32xf32>
    %70 = arith.addf %68, %69 : vector<1x32xf32>
    %71 = math.rsqrt %70 : vector<1x32xf32>
    %72 = tpu.concatenate %63, %71 in 0 : vector<1x32xf32>, vector<1x32xf32> -> vector<2x32xf32>
    %cst_28 = arith.constant dense<0.000000e+00> : vector<2x64xf32>
    %73 = tpu.matmul %72, %1, %cst_28 {dimension_numbers = #tpu.dot_dimension_numbers<[1], [0], [0], [1], [0, 0, 1, 1], [], []>} : vector<2x32xf32>, vector<32x64xf32>, vector<2x64xf32> -> vector<2x64xf32>
    %74 = vector.extract_strided_slice %73 {offsets = [1, 0], sizes = [1, 64], strides = [1, 1]} : vector<2x64xf32> to vector<1x64xf32>
    %75 = arith.mulf %74, %49 : vector<1x64xf32>
    %76 = vector.extract_strided_slice %73 {offsets = [0, 0], sizes = [1, 64], strides = [1, 1]} : vector<2x64xf32> to vector<1x64xf32>
    %77 = arith.mulf %76, %75 : vector<1x64xf32>
    %78 = arith.subf %50, %77 : vector<1x64xf32>
    %79 = vector.broadcast %75 : vector<1x64xf32> to vector<192x64xf32>
    %80 = arith.mulf %53, %79 : vector<192x64xf32>
    %81 = vector.broadcast %78 : vector<1x64xf32> to vector<192x64xf32>
    %82 = arith.addf %80, %81 : vector<192x64xf32>
    %cst_29 = arith.constant 0.000000e+00 : f32
    %83 = vector.broadcast %cst_29 : f32 to vector<192x64xf32>
    %84 = arith.cmpf oge, %82, %83 : vector<192x64xf32>
    %cst_30 = arith.constant 2.000000e-01 : f32
    %85 = vector.broadcast %cst_30 : f32 to vector<192x64xf32>
    %86 = arith.mulf %85, %82 : vector<192x64xf32>
    %87 = arith.select %84, %82, %86 : vector<192x64xi1>, vector<192x64xf32>
    %88 = vector.extract_strided_slice %87 {offsets = [0, 0], sizes = [48, 64], strides = [1, 1]} : vector<192x64xf32> to vector<48x64xf32>
    %89 = vector.extract_strided_slice %87 {offsets = [48, 0], sizes = [48, 64], strides = [1, 1]} : vector<192x64xf32> to vector<48x64xf32>
    %90 = arith.maximumf %88, %89 : vector<48x64xf32>
    %91 = vector.extract_strided_slice %87 {offsets = [96, 0], sizes = [48, 64], strides = [1, 1]} : vector<192x64xf32> to vector<48x64xf32>
    %92 = arith.maximumf %90, %91 : vector<48x64xf32>
    %93 = vector.extract_strided_slice %87 {offsets = [144, 0], sizes = [48, 64], strides = [1, 1]} : vector<192x64xf32> to vector<48x64xf32>
    %94 = arith.maximumf %92, %93 : vector<48x64xf32>
    %c0_31 = arith.constant 0 : index
    %c0_32 = arith.constant 0 : index
    %c0_33 = arith.constant 0 : index
    %95 = vector.load %arg7[%c0_31, %c0_32, %c0_33] : memref<1x48x64xf32, #tpu.memory_space<vmem>>, vector<1x48x64xf32>
    %96 = vector.shape_cast %95 : vector<1x48x64xf32> to vector<48x64xf32>
    %97 = vector.shape_cast %94 : vector<48x64xf32> to vector<1x48x64xf32>
    tpu.vector_store %arg7[%c0_31, %c0_32, %c0_33], %97 {strides = array<i32>} : memref<1x48x64xf32, #tpu.memory_space<vmem>>, vector<1x48x64xf32>,
    return
  }
  func.func @transform_0(%arg0: i32) -> (i32, i32, i32) {
    %c0_i32 = arith.constant 0 : i32
    %c0_i32_0 = arith.constant 0 : i32
    %c0_i32_1 = arith.constant 0 : i32
    return %arg0, %c0_i32, %c0_i32_0 : i32, i32, i32
  }
  func.func @transform_1(%arg0: i32) -> (i32, i32) {
    %c0_i32 = arith.constant 0 : i32
    %c0_i32_0 = arith.constant 0 : i32
    %c0_i32_1 = arith.constant 0 : i32
    return %c0_i32, %c0_i32_0 : i32, i32
  }
  func.func @transform_2(%arg0: i32) -> (i32, i32) {
    %c0_i32 = arith.constant 0 : i32
    %c0_i32_0 = arith.constant 0 : i32
    %c0_i32_1 = arith.constant 0 : i32
    return %c0_i32, %c0_i32_0 : i32, i32
  }
  func.func @transform_3(%arg0: i32) -> (i32, i32) {
    %c0_i32 = arith.constant 0 : i32
    %c0_i32_0 = arith.constant 0 : i32
    %c0_i32_1 = arith.constant 0 : i32
    return %c0_i32, %c0_i32_0 : i32, i32
  }
  func.func @transform_4(%arg0: i32) -> (i32, i32) {
    %c0_i32 = arith.constant 0 : i32
    %c0_i32_0 = arith.constant 0 : i32
    %c0_i32_1 = arith.constant 0 : i32
    return %c0_i32, %c0_i32_0 : i32, i32
  }
  func.func @transform_5(%arg0: i32) -> (i32, i32) {
    %c0_i32 = arith.constant 0 : i32
    %c0_i32_0 = arith.constant 0 : i32
    %c0_i32_1 = arith.constant 0 : i32
    return %c0_i32, %c0_i32_0 : i32, i32
  }
  func.func @transform_6(%arg0: i32) -> (i32, i32, i32) {
    %c0_i32 = arith.constant 0 : i32
    %c0_i32_0 = arith.constant 0 : i32
    %c0_i32_1 = arith.constant 0 : i32
    return %arg0, %c0_i32, %c0_i32_0 : i32, i32, i32
  }
}

module attributes {stable_mosaic.version = 11 : i64} {
  func.func @kernel(%arg0: i32, %arg1: memref<1x64x132xbf16, #tpu.memory_space<vmem>>, %arg2: memref<1x64x132xbf16, #tpu.memory_space<vmem>>, %arg3: memref<132x64xbf16, #tpu.memory_space<vmem>>, %arg4: memref<64x64xbf16, #tpu.memory_space<vmem>>, %arg5: memref<132x64xbf16, #tpu.memory_space<vmem>>, %arg6: memref<64x64xbf16, #tpu.memory_space<vmem>>, %arg7: memref<64x64xbf16, #tpu.memory_space<vmem>>, %arg8: memref<64x64xbf16, #tpu.memory_space<vmem>>, %arg9: memref<15x64xf32, #tpu.memory_space<vmem>>, %arg10: memref<64x32xf32, #tpu.memory_space<vmem>>, %arg11: memref<32x64xf32, #tpu.memory_space<vmem>>, %arg12: memref<1x16x64xf32, #tpu.memory_space<vmem>>) attributes {dimension_semantics = [#tpu.dimension_semantics<parallel>], iteration_bounds = array<i64: 2>, scalar_prefetch = 0 : i64, scratch_operands = 0 : i64, tpu.core_type = #tpu.core_type<tc>, window_params = [{transform_indices = @transform_0, window_bounds = array<i64: 1, 64, 132>}, {transform_indices = @transform_1, window_bounds = array<i64: 1, 64, 132>}, {pipeline_mode = #tpu.pipeline_mode<synchronous>, transform_indices = @transform_2, window_bounds = array<i64: 132, 64>}, {pipeline_mode = #tpu.pipeline_mode<synchronous>, transform_indices = @transform_3, window_bounds = array<i64: 64, 64>}, {pipeline_mode = #tpu.pipeline_mode<synchronous>, transform_indices = @transform_4, window_bounds = array<i64: 132, 64>}, {pipeline_mode = #tpu.pipeline_mode<synchronous>, transform_indices = @transform_5, window_bounds = array<i64: 64, 64>}, {pipeline_mode = #tpu.pipeline_mode<synchronous>, transform_indices = @transform_6, window_bounds = array<i64: 64, 64>}, {pipeline_mode = #tpu.pipeline_mode<synchronous>, transform_indices = @transform_7, window_bounds = array<i64: 64, 64>}, {pipeline_mode = #tpu.pipeline_mode<synchronous>, transform_indices = @transform_8, window_bounds = array<i64: 15, 64>}, {pipeline_mode = #tpu.pipeline_mode<synchronous>, transform_indices = @transform_9, window_bounds = array<i64: 64, 32>}, {pipeline_mode = #tpu.pipeline_mode<synchronous>, transform_indices = @transform_10, window_bounds = array<i64: 32, 64>}, {transform_indices = @transform_11, window_bounds = array<i64: 1, 16, 64>}]} {
    %c0 = arith.constant 0 : index
    %c0_0 = arith.constant 0 : index
    %0 = vector.load %arg10[%c0, %c0_0] : memref<64x32xf32, #tpu.memory_space<vmem>>, vector<64x32xf32>
    %c0_1 = arith.constant 0 : index
    %c0_2 = arith.constant 0 : index
    %1 = vector.load %arg11[%c0_1, %c0_2] : memref<32x64xf32, #tpu.memory_space<vmem>>, vector<32x64xf32>
    %c0_3 = arith.constant 0 : index
    %c0_4 = arith.constant 0 : index
    %2 = vector.load %arg9[%c0_3, %c0_4] : memref<15x64xf32, #tpu.memory_space<vmem>>, vector<15x64xf32>
    %c0_5 = arith.constant 0 : index
    %c0_6 = arith.constant 0 : index
    %c0_7 = arith.constant 0 : index
    %3 = vector.load %arg1[%c0_5, %c0_6, %c0_7] : memref<1x64x132xbf16, #tpu.memory_space<vmem>>, vector<1x64x132xbf16>
    %4 = vector.shape_cast %3 : vector<1x64x132xbf16> to vector<64x132xbf16>
    %c0_8 = arith.constant 0 : index
    %c0_9 = arith.constant 0 : index
    %5 = vector.load %arg3[%c0_8, %c0_9] : memref<132x64xbf16, #tpu.memory_space<vmem>>, vector<132x64xbf16>
    %6 = vector.extract_strided_slice %2 {offsets = [0, 0], sizes = [1, 64], strides = [1, 1]} : vector<15x64xf32> to vector<1x64xf32>
    %7 = vector.extract_strided_slice %2 {offsets = [1, 0], sizes = [1, 64], strides = [1, 1]} : vector<15x64xf32> to vector<1x64xf32>
    %8 = vector.extract_strided_slice %2 {offsets = [2, 0], sizes = [1, 64], strides = [1, 1]} : vector<15x64xf32> to vector<1x64xf32>
    %cst = arith.constant dense<0.000000e+00> : vector<64x64xf32>
    %9 = tpu.matmul %4, %5, %cst {dimension_numbers = #tpu.dot_dimension_numbers<[1], [0], [0], [1], [0, 0, 1, 1], [], []>} : vector<64x132xbf16>, vector<132x64xbf16>, vector<64x64xf32> -> vector<64x64xf32>
    %10 = vector.broadcast %6 : vector<1x64xf32> to vector<64x64xf32>
    %11 = arith.addf %9, %10 : vector<64x64xf32>
    %cst_10 = arith.constant dense<0.000000e+00> : vector<64xf32>
    %12 = vector.multi_reduction <add>, %11, %cst_10 [0] : vector<64x64xf32> to vector<64xf32>
    %13 = vector.shape_cast %12 : vector<64xf32> to vector<1x64xf32>
    %14 = arith.mulf %11, %11 : vector<64x64xf32>
    %cst_11 = arith.constant dense<0.000000e+00> : vector<64xf32>
    %15 = vector.multi_reduction <add>, %14, %cst_11 [0] : vector<64x64xf32> to vector<64xf32>
    %16 = vector.shape_cast %15 : vector<64xf32> to vector<1x64xf32>
    %17 = tpu.concatenate %13, %16 in 0 : vector<1x64xf32>, vector<1x64xf32> -> vector<2x64xf32>
    %cst_12 = arith.constant dense<0.000000e+00> : vector<2x32xf32>
    %18 = tpu.matmul %17, %0, %cst_12 {dimension_numbers = #tpu.dot_dimension_numbers<[1], [0], [0], [1], [0, 0, 1, 1], [], []>} : vector<2x64xf32>, vector<64x32xf32>, vector<2x32xf32> -> vector<2x32xf32>
    %cst_13 = arith.constant 1.280000e+02 : f32
    %19 = vector.broadcast %cst_13 : f32 to vector<2x32xf32>
    %20 = arith.divf %18, %19 : vector<2x32xf32>
    %21 = vector.extract_strided_slice %20 {offsets = [0, 0], sizes = [1, 32], strides = [1, 1]} : vector<2x32xf32> to vector<1x32xf32>
    %22 = vector.extract_strided_slice %20 {offsets = [1, 0], sizes = [1, 32], strides = [1, 1]} : vector<2x32xf32> to vector<1x32xf32>
    %23 = arith.mulf %21, %21 : vector<1x32xf32>
    %24 = arith.subf %22, %23 : vector<1x32xf32>
    %cst_14 = arith.constant 0.000000e+00 : f32
    %25 = vector.broadcast %cst_14 : f32 to vector<1x32xf32>
    %26 = arith.maximumf %24, %25 : vector<1x32xf32>
    %cst_15 = arith.constant 9.99999974E-6 : f32
    %27 = vector.broadcast %cst_15 : f32 to vector<1x32xf32>
    %28 = arith.addf %26, %27 : vector<1x32xf32>
    %29 = math.rsqrt %28 : vector<1x32xf32>
    %30 = tpu.concatenate %21, %29 in 0 : vector<1x32xf32>, vector<1x32xf32> -> vector<2x32xf32>
    %cst_16 = arith.constant dense<0.000000e+00> : vector<2x64xf32>
    %31 = tpu.matmul %30, %1, %cst_16 {dimension_numbers = #tpu.dot_dimension_numbers<[1], [0], [0], [1], [0, 0, 1, 1], [], []>} : vector<2x32xf32>, vector<32x64xf32>, vector<2x64xf32> -> vector<2x64xf32>
    %32 = vector.extract_strided_slice %31 {offsets = [1, 0], sizes = [1, 64], strides = [1, 1]} : vector<2x64xf32> to vector<1x64xf32>
    %33 = arith.mulf %32, %7 : vector<1x64xf32>
    %34 = vector.extract_strided_slice %31 {offsets = [0, 0], sizes = [1, 64], strides = [1, 1]} : vector<2x64xf32> to vector<1x64xf32>
    %35 = arith.mulf %34, %33 : vector<1x64xf32>
    %36 = arith.subf %8, %35 : vector<1x64xf32>
    %37 = vector.broadcast %33 : vector<1x64xf32> to vector<64x64xf32>
    %38 = arith.mulf %11, %37 : vector<64x64xf32>
    %39 = vector.broadcast %36 : vector<1x64xf32> to vector<64x64xf32>
    %40 = arith.addf %38, %39 : vector<64x64xf32>
    %cst_17 = arith.constant 0.000000e+00 : f32
    %41 = vector.broadcast %cst_17 : f32 to vector<64x64xf32>
    %42 = arith.cmpf oge, %40, %41 : vector<64x64xf32>
    %cst_18 = arith.constant 2.000000e-01 : f32
    %43 = vector.broadcast %cst_18 : f32 to vector<64x64xf32>
    %44 = arith.mulf %43, %40 : vector<64x64xf32>
    %45 = arith.select %42, %40, %44 : vector<64x64xi1>, vector<64x64xf32>
    %46 = arith.truncf %45 : vector<64x64xf32> to vector<64x64xbf16>
    %c0_19 = arith.constant 0 : index
    %c0_20 = arith.constant 0 : index
    %47 = vector.load %arg4[%c0_19, %c0_20] : memref<64x64xbf16, #tpu.memory_space<vmem>>, vector<64x64xbf16>
    %48 = vector.extract_strided_slice %2 {offsets = [3, 0], sizes = [1, 64], strides = [1, 1]} : vector<15x64xf32> to vector<1x64xf32>
    %49 = vector.extract_strided_slice %2 {offsets = [4, 0], sizes = [1, 64], strides = [1, 1]} : vector<15x64xf32> to vector<1x64xf32>
    %50 = vector.extract_strided_slice %2 {offsets = [5, 0], sizes = [1, 64], strides = [1, 1]} : vector<15x64xf32> to vector<1x64xf32>
    %cst_21 = arith.constant dense<0.000000e+00> : vector<64x64xf32>
    %51 = tpu.matmul %46, %47, %cst_21 {dimension_numbers = #tpu.dot_dimension_numbers<[1], [0], [0], [1], [0, 0, 1, 1], [], []>} : vector<64x64xbf16>, vector<64x64xbf16>, vector<64x64xf32> -> vector<64x64xf32>
    %52 = vector.broadcast %48 : vector<1x64xf32> to vector<64x64xf32>
    %53 = arith.addf %51, %52 : vector<64x64xf32>
    %cst_22 = arith.constant dense<0.000000e+00> : vector<64xf32>
    %54 = vector.multi_reduction <add>, %53, %cst_22 [0] : vector<64x64xf32> to vector<64xf32>
    %55 = vector.shape_cast %54 : vector<64xf32> to vector<1x64xf32>
    %56 = arith.mulf %53, %53 : vector<64x64xf32>
    %cst_23 = arith.constant dense<0.000000e+00> : vector<64xf32>
    %57 = vector.multi_reduction <add>, %56, %cst_23 [0] : vector<64x64xf32> to vector<64xf32>
    %58 = vector.shape_cast %57 : vector<64xf32> to vector<1x64xf32>
    %59 = tpu.concatenate %55, %58 in 0 : vector<1x64xf32>, vector<1x64xf32> -> vector<2x64xf32>
    %cst_24 = arith.constant dense<0.000000e+00> : vector<2x32xf32>
    %60 = tpu.matmul %59, %0, %cst_24 {dimension_numbers = #tpu.dot_dimension_numbers<[1], [0], [0], [1], [0, 0, 1, 1], [], []>} : vector<2x64xf32>, vector<64x32xf32>, vector<2x32xf32> -> vector<2x32xf32>
    %cst_25 = arith.constant 1.280000e+02 : f32
    %61 = vector.broadcast %cst_25 : f32 to vector<2x32xf32>
    %62 = arith.divf %60, %61 : vector<2x32xf32>
    %63 = vector.extract_strided_slice %62 {offsets = [0, 0], sizes = [1, 32], strides = [1, 1]} : vector<2x32xf32> to vector<1x32xf32>
    %64 = vector.extract_strided_slice %62 {offsets = [1, 0], sizes = [1, 32], strides = [1, 1]} : vector<2x32xf32> to vector<1x32xf32>
    %65 = arith.mulf %63, %63 : vector<1x32xf32>
    %66 = arith.subf %64, %65 : vector<1x32xf32>
    %cst_26 = arith.constant 0.000000e+00 : f32
    %67 = vector.broadcast %cst_26 : f32 to vector<1x32xf32>
    %68 = arith.maximumf %66, %67 : vector<1x32xf32>
    %cst_27 = arith.constant 9.99999974E-6 : f32
    %69 = vector.broadcast %cst_27 : f32 to vector<1x32xf32>
    %70 = arith.addf %68, %69 : vector<1x32xf32>
    %71 = math.rsqrt %70 : vector<1x32xf32>
    %72 = tpu.concatenate %63, %71 in 0 : vector<1x32xf32>, vector<1x32xf32> -> vector<2x32xf32>
    %cst_28 = arith.constant dense<0.000000e+00> : vector<2x64xf32>
    %73 = tpu.matmul %72, %1, %cst_28 {dimension_numbers = #tpu.dot_dimension_numbers<[1], [0], [0], [1], [0, 0, 1, 1], [], []>} : vector<2x32xf32>, vector<32x64xf32>, vector<2x64xf32> -> vector<2x64xf32>
    %74 = vector.extract_strided_slice %73 {offsets = [1, 0], sizes = [1, 64], strides = [1, 1]} : vector<2x64xf32> to vector<1x64xf32>
    %75 = arith.mulf %74, %49 : vector<1x64xf32>
    %76 = vector.extract_strided_slice %73 {offsets = [0, 0], sizes = [1, 64], strides = [1, 1]} : vector<2x64xf32> to vector<1x64xf32>
    %77 = arith.mulf %76, %75 : vector<1x64xf32>
    %78 = arith.subf %50, %77 : vector<1x64xf32>
    %79 = vector.broadcast %75 : vector<1x64xf32> to vector<64x64xf32>
    %80 = arith.mulf %53, %79 : vector<64x64xf32>
    %81 = vector.broadcast %78 : vector<1x64xf32> to vector<64x64xf32>
    %82 = arith.addf %80, %81 : vector<64x64xf32>
    %cst_29 = arith.constant 0.000000e+00 : f32
    %83 = vector.broadcast %cst_29 : f32 to vector<64x64xf32>
    %84 = arith.cmpf oge, %82, %83 : vector<64x64xf32>
    %cst_30 = arith.constant 2.000000e-01 : f32
    %85 = vector.broadcast %cst_30 : f32 to vector<64x64xf32>
    %86 = arith.mulf %85, %82 : vector<64x64xf32>
    %87 = arith.select %84, %82, %86 : vector<64x64xi1>, vector<64x64xf32>
    %88 = vector.extract_strided_slice %87 {offsets = [0, 0], sizes = [16, 64], strides = [1, 1]} : vector<64x64xf32> to vector<16x64xf32>
    %89 = vector.extract_strided_slice %87 {offsets = [16, 0], sizes = [16, 64], strides = [1, 1]} : vector<64x64xf32> to vector<16x64xf32>
    %90 = arith.maximumf %88, %89 : vector<16x64xf32>
    %91 = vector.extract_strided_slice %87 {offsets = [32, 0], sizes = [16, 64], strides = [1, 1]} : vector<64x64xf32> to vector<16x64xf32>
    %92 = arith.maximumf %90, %91 : vector<16x64xf32>
    %93 = vector.extract_strided_slice %87 {offsets = [48, 0], sizes = [16, 64], strides = [1, 1]} : vector<64x64xf32> to vector<16x64xf32>
    %94 = arith.maximumf %92, %93 : vector<16x64xf32>
    %c0_31 = arith.constant 0 : index
    %c0_32 = arith.constant 0 : index
    %c0_33 = arith.constant 0 : index
    %95 = vector.load %arg2[%c0_31, %c0_32, %c0_33] : memref<1x64x132xbf16, #tpu.memory_space<vmem>>, vector<1x64x132xbf16>
    %96 = vector.shape_cast %95 : vector<1x64x132xbf16> to vector<64x132xbf16>
    %c0_34 = arith.constant 0 : index
    %c0_35 = arith.constant 0 : index
    %97 = vector.load %arg5[%c0_34, %c0_35] : memref<132x64xbf16, #tpu.memory_space<vmem>>, vector<132x64xbf16>
    %98 = vector.extract_strided_slice %2 {offsets = [6, 0], sizes = [1, 64], strides = [1, 1]} : vector<15x64xf32> to vector<1x64xf32>
    %99 = vector.extract_strided_slice %2 {offsets = [7, 0], sizes = [1, 64], strides = [1, 1]} : vector<15x64xf32> to vector<1x64xf32>
    %100 = vector.extract_strided_slice %2 {offsets = [8, 0], sizes = [1, 64], strides = [1, 1]} : vector<15x64xf32> to vector<1x64xf32>
    %cst_36 = arith.constant dense<0.000000e+00> : vector<64x64xf32>
    %101 = tpu.matmul %96, %97, %cst_36 {dimension_numbers = #tpu.dot_dimension_numbers<[1], [0], [0], [1], [0, 0, 1, 1], [], []>} : vector<64x132xbf16>, vector<132x64xbf16>, vector<64x64xf32> -> vector<64x64xf32>
    %102 = vector.broadcast %98 : vector<1x64xf32> to vector<64x64xf32>
    %103 = arith.addf %101, %102 : vector<64x64xf32>
    %cst_37 = arith.constant dense<0.000000e+00> : vector<64xf32>
    %104 = vector.multi_reduction <add>, %103, %cst_37 [0] : vector<64x64xf32> to vector<64xf32>
    %105 = vector.shape_cast %104 : vector<64xf32> to vector<1x64xf32>
    %106 = arith.mulf %103, %103 : vector<64x64xf32>
    %cst_38 = arith.constant dense<0.000000e+00> : vector<64xf32>
    %107 = vector.multi_reduction <add>, %106, %cst_38 [0] : vector<64x64xf32> to vector<64xf32>
    %108 = vector.shape_cast %107 : vector<64xf32> to vector<1x64xf32>
    %109 = tpu.concatenate %105, %108 in 0 : vector<1x64xf32>, vector<1x64xf32> -> vector<2x64xf32>
    %cst_39 = arith.constant dense<0.000000e+00> : vector<2x32xf32>
    %110 = tpu.matmul %109, %0, %cst_39 {dimension_numbers = #tpu.dot_dimension_numbers<[1], [0], [0], [1], [0, 0, 1, 1], [], []>} : vector<2x64xf32>, vector<64x32xf32>, vector<2x32xf32> -> vector<2x32xf32>
    %cst_40 = arith.constant 1.280000e+02 : f32
    %111 = vector.broadcast %cst_40 : f32 to vector<2x32xf32>
    %112 = arith.divf %110, %111 : vector<2x32xf32>
    %113 = vector.extract_strided_slice %112 {offsets = [0, 0], sizes = [1, 32], strides = [1, 1]} : vector<2x32xf32> to vector<1x32xf32>
    %114 = vector.extract_strided_slice %112 {offsets = [1, 0], sizes = [1, 32], strides = [1, 1]} : vector<2x32xf32> to vector<1x32xf32>
    %115 = arith.mulf %113, %113 : vector<1x32xf32>
    %116 = arith.subf %114, %115 : vector<1x32xf32>
    %cst_41 = arith.constant 0.000000e+00 : f32
    %117 = vector.broadcast %cst_41 : f32 to vector<1x32xf32>
    %118 = arith.maximumf %116, %117 : vector<1x32xf32>
    %cst_42 = arith.constant 9.99999974E-6 : f32
    %119 = vector.broadcast %cst_42 : f32 to vector<1x32xf32>
    %120 = arith.addf %118, %119 : vector<1x32xf32>
    %121 = math.rsqrt %120 : vector<1x32xf32>
    %122 = tpu.concatenate %113, %121 in 0 : vector<1x32xf32>, vector<1x32xf32> -> vector<2x32xf32>
    %cst_43 = arith.constant dense<0.000000e+00> : vector<2x64xf32>
    %123 = tpu.matmul %122, %1, %cst_43 {dimension_numbers = #tpu.dot_dimension_numbers<[1], [0], [0], [1], [0, 0, 1, 1], [], []>} : vector<2x32xf32>, vector<32x64xf32>, vector<2x64xf32> -> vector<2x64xf32>
    %124 = vector.extract_strided_slice %123 {offsets = [1, 0], sizes = [1, 64], strides = [1, 1]} : vector<2x64xf32> to vector<1x64xf32>
    %125 = arith.mulf %124, %99 : vector<1x64xf32>
    %126 = vector.extract_strided_slice %123 {offsets = [0, 0], sizes = [1, 64], strides = [1, 1]} : vector<2x64xf32> to vector<1x64xf32>
    %127 = arith.mulf %126, %125 : vector<1x64xf32>
    %128 = arith.subf %100, %127 : vector<1x64xf32>
    %129 = vector.broadcast %125 : vector<1x64xf32> to vector<64x64xf32>
    %130 = arith.mulf %103, %129 : vector<64x64xf32>
    %131 = vector.broadcast %128 : vector<1x64xf32> to vector<64x64xf32>
    %132 = arith.addf %130, %131 : vector<64x64xf32>
    %cst_44 = arith.constant 0.000000e+00 : f32
    %133 = vector.broadcast %cst_44 : f32 to vector<64x64xf32>
    %134 = arith.cmpf oge, %132, %133 : vector<64x64xf32>
    %cst_45 = arith.constant 2.000000e-01 : f32
    %135 = vector.broadcast %cst_45 : f32 to vector<64x64xf32>
    %136 = arith.mulf %135, %132 : vector<64x64xf32>
    %137 = arith.select %134, %132, %136 : vector<64x64xi1>, vector<64x64xf32>
    %138 = arith.truncf %137 : vector<64x64xf32> to vector<64x64xbf16>
    %c0_46 = arith.constant 0 : index
    %c0_47 = arith.constant 0 : index
    %139 = vector.load %arg6[%c0_46, %c0_47] : memref<64x64xbf16, #tpu.memory_space<vmem>>, vector<64x64xbf16>
    %140 = vector.extract_strided_slice %2 {offsets = [9, 0], sizes = [1, 64], strides = [1, 1]} : vector<15x64xf32> to vector<1x64xf32>
    %141 = vector.extract_strided_slice %2 {offsets = [10, 0], sizes = [1, 64], strides = [1, 1]} : vector<15x64xf32> to vector<1x64xf32>
    %142 = vector.extract_strided_slice %2 {offsets = [11, 0], sizes = [1, 64], strides = [1, 1]} : vector<15x64xf32> to vector<1x64xf32>
    %cst_48 = arith.constant dense<0.000000e+00> : vector<64x64xf32>
    %143 = tpu.matmul %138, %139, %cst_48 {dimension_numbers = #tpu.dot_dimension_numbers<[1], [0], [0], [1], [0, 0, 1, 1], [], []>} : vector<64x64xbf16>, vector<64x64xbf16>, vector<64x64xf32> -> vector<64x64xf32>
    %144 = vector.broadcast %140 : vector<1x64xf32> to vector<64x64xf32>
    %145 = arith.addf %143, %144 : vector<64x64xf32>
    %cst_49 = arith.constant dense<0.000000e+00> : vector<64xf32>
    %146 = vector.multi_reduction <add>, %145, %cst_49 [0] : vector<64x64xf32> to vector<64xf32>
    %147 = vector.shape_cast %146 : vector<64xf32> to vector<1x64xf32>
    %148 = arith.mulf %145, %145 : vector<64x64xf32>
    %cst_50 = arith.constant dense<0.000000e+00> : vector<64xf32>
    %149 = vector.multi_reduction <add>, %148, %cst_50 [0] : vector<64x64xf32> to vector<64xf32>
    %150 = vector.shape_cast %149 : vector<64xf32> to vector<1x64xf32>
    %151 = tpu.concatenate %147, %150 in 0 : vector<1x64xf32>, vector<1x64xf32> -> vector<2x64xf32>
    %cst_51 = arith.constant dense<0.000000e+00> : vector<2x32xf32>
    %152 = tpu.matmul %151, %0, %cst_51 {dimension_numbers = #tpu.dot_dimension_numbers<[1], [0], [0], [1], [0, 0, 1, 1], [], []>} : vector<2x64xf32>, vector<64x32xf32>, vector<2x32xf32> -> vector<2x32xf32>
    %cst_52 = arith.constant 1.280000e+02 : f32
    %153 = vector.broadcast %cst_52 : f32 to vector<2x32xf32>
    %154 = arith.divf %152, %153 : vector<2x32xf32>
    %155 = vector.extract_strided_slice %154 {offsets = [0, 0], sizes = [1, 32], strides = [1, 1]} : vector<2x32xf32> to vector<1x32xf32>
    %156 = vector.extract_strided_slice %154 {offsets = [1, 0], sizes = [1, 32], strides = [1, 1]} : vector<2x32xf32> to vector<1x32xf32>
    %157 = arith.mulf %155, %155 : vector<1x32xf32>
    %158 = arith.subf %156, %157 : vector<1x32xf32>
    %cst_53 = arith.constant 0.000000e+00 : f32
    %159 = vector.broadcast %cst_53 : f32 to vector<1x32xf32>
    %160 = arith.maximumf %158, %159 : vector<1x32xf32>
    %cst_54 = arith.constant 9.99999974E-6 : f32
    %161 = vector.broadcast %cst_54 : f32 to vector<1x32xf32>
    %162 = arith.addf %160, %161 : vector<1x32xf32>
    %163 = math.rsqrt %162 : vector<1x32xf32>
    %164 = tpu.concatenate %155, %163 in 0 : vector<1x32xf32>, vector<1x32xf32> -> vector<2x32xf32>
    %cst_55 = arith.constant dense<0.000000e+00> : vector<2x64xf32>
    %165 = tpu.matmul %164, %1, %cst_55 {dimension_numbers = #tpu.dot_dimension_numbers<[1], [0], [0], [1], [0, 0, 1, 1], [], []>} : vector<2x32xf32>, vector<32x64xf32>, vector<2x64xf32> -> vector<2x64xf32>
    %166 = vector.extract_strided_slice %165 {offsets = [1, 0], sizes = [1, 64], strides = [1, 1]} : vector<2x64xf32> to vector<1x64xf32>
    %167 = arith.mulf %166, %141 : vector<1x64xf32>
    %168 = vector.extract_strided_slice %165 {offsets = [0, 0], sizes = [1, 64], strides = [1, 1]} : vector<2x64xf32> to vector<1x64xf32>
    %169 = arith.mulf %168, %167 : vector<1x64xf32>
    %170 = arith.subf %142, %169 : vector<1x64xf32>
    %171 = vector.broadcast %167 : vector<1x64xf32> to vector<64x64xf32>
    %172 = arith.mulf %145, %171 : vector<64x64xf32>
    %173 = vector.broadcast %170 : vector<1x64xf32> to vector<64x64xf32>
    %174 = arith.addf %172, %173 : vector<64x64xf32>
    %cst_56 = arith.constant 0.000000e+00 : f32
    %175 = vector.broadcast %cst_56 : f32 to vector<64x64xf32>
    %176 = arith.cmpf oge, %174, %175 : vector<64x64xf32>
    %cst_57 = arith.constant 2.000000e-01 : f32
    %177 = vector.broadcast %cst_57 : f32 to vector<64x64xf32>
    %178 = arith.mulf %177, %174 : vector<64x64xf32>
    %179 = arith.select %176, %174, %178 : vector<64x64xi1>, vector<64x64xf32>
    %180 = vector.extract_strided_slice %179 {offsets = [0, 0], sizes = [16, 64], strides = [1, 1]} : vector<64x64xf32> to vector<16x64xf32>
    %181 = vector.extract_strided_slice %179 {offsets = [16, 0], sizes = [16, 64], strides = [1, 1]} : vector<64x64xf32> to vector<16x64xf32>
    %182 = arith.maximumf %180, %181 : vector<16x64xf32>
    %183 = vector.extract_strided_slice %179 {offsets = [32, 0], sizes = [16, 64], strides = [1, 1]} : vector<64x64xf32> to vector<16x64xf32>
    %184 = arith.maximumf %182, %183 : vector<16x64xf32>
    %185 = vector.extract_strided_slice %179 {offsets = [48, 0], sizes = [16, 64], strides = [1, 1]} : vector<64x64xf32> to vector<16x64xf32>
    %186 = arith.maximumf %184, %185 : vector<16x64xf32>
    %187 = arith.truncf %94 : vector<16x64xf32> to vector<16x64xbf16>
    %c0_58 = arith.constant 0 : index
    %c0_59 = arith.constant 0 : index
    %188 = vector.load %arg7[%c0_58, %c0_59] : memref<64x64xbf16, #tpu.memory_space<vmem>>, vector<64x64xbf16>
    %cst_60 = arith.constant dense<0.000000e+00> : vector<16x64xf32>
    %189 = tpu.matmul %187, %188, %cst_60 {dimension_numbers = #tpu.dot_dimension_numbers<[1], [0], [0], [1], [0, 0, 1, 1], [], []>} : vector<16x64xbf16>, vector<64x64xbf16>, vector<16x64xf32> -> vector<16x64xf32>
    %190 = arith.truncf %186 : vector<16x64xf32> to vector<16x64xbf16>
    %c0_61 = arith.constant 0 : index
    %c0_62 = arith.constant 0 : index
    %191 = vector.load %arg8[%c0_61, %c0_62] : memref<64x64xbf16, #tpu.memory_space<vmem>>, vector<64x64xbf16>
    %cst_63 = arith.constant dense<0.000000e+00> : vector<16x64xf32>
    %192 = tpu.matmul %190, %191, %cst_63 {dimension_numbers = #tpu.dot_dimension_numbers<[1], [0], [0], [1], [0, 0, 1, 1], [], []>} : vector<16x64xbf16>, vector<64x64xbf16>, vector<16x64xf32> -> vector<16x64xf32>
    %193 = arith.addf %189, %192 : vector<16x64xf32>
    %194 = vector.extract_strided_slice %2 {offsets = [12, 0], sizes = [1, 64], strides = [1, 1]} : vector<15x64xf32> to vector<1x64xf32>
    %195 = vector.broadcast %194 : vector<1x64xf32> to vector<16x64xf32>
    %196 = arith.addf %193, %195 : vector<16x64xf32>
    %197 = vector.extract_strided_slice %2 {offsets = [13, 0], sizes = [1, 64], strides = [1, 1]} : vector<15x64xf32> to vector<1x64xf32>
    %198 = vector.extract_strided_slice %2 {offsets = [14, 0], sizes = [1, 64], strides = [1, 1]} : vector<15x64xf32> to vector<1x64xf32>
    %cst_64 = arith.constant dense<0.000000e+00> : vector<64xf32>
    %199 = vector.multi_reduction <add>, %196, %cst_64 [0] : vector<16x64xf32> to vector<64xf32>
    %200 = vector.shape_cast %199 : vector<64xf32> to vector<1x64xf32>
    %201 = arith.mulf %196, %196 : vector<16x64xf32>
    %cst_65 = arith.constant dense<0.000000e+00> : vector<64xf32>
    %202 = vector.multi_reduction <add>, %201, %cst_65 [0] : vector<16x64xf32> to vector<64xf32>
    %203 = vector.shape_cast %202 : vector<64xf32> to vector<1x64xf32>
    %204 = tpu.concatenate %200, %203 in 0 : vector<1x64xf32>, vector<1x64xf32> -> vector<2x64xf32>
    %cst_66 = arith.constant dense<0.000000e+00> : vector<2x32xf32>
    %205 = tpu.matmul %204, %0, %cst_66 {dimension_numbers = #tpu.dot_dimension_numbers<[1], [0], [0], [1], [0, 0, 1, 1], [], []>} : vector<2x64xf32>, vector<64x32xf32>, vector<2x32xf32> -> vector<2x32xf32>
    %cst_67 = arith.constant 3.200000e+01 : f32
    %206 = vector.broadcast %cst_67 : f32 to vector<2x32xf32>
    %207 = arith.divf %205, %206 : vector<2x32xf32>
    %208 = vector.extract_strided_slice %207 {offsets = [0, 0], sizes = [1, 32], strides = [1, 1]} : vector<2x32xf32> to vector<1x32xf32>
    %209 = vector.extract_strided_slice %207 {offsets = [1, 0], sizes = [1, 32], strides = [1, 1]} : vector<2x32xf32> to vector<1x32xf32>
    %210 = arith.mulf %208, %208 : vector<1x32xf32>
    %211 = arith.subf %209, %210 : vector<1x32xf32>
    %cst_68 = arith.constant 0.000000e+00 : f32
    %212 = vector.broadcast %cst_68 : f32 to vector<1x32xf32>
    %213 = arith.maximumf %211, %212 : vector<1x32xf32>
    %cst_69 = arith.constant 9.99999974E-6 : f32
    %214 = vector.broadcast %cst_69 : f32 to vector<1x32xf32>
    %215 = arith.addf %213, %214 : vector<1x32xf32>
    %216 = math.rsqrt %215 : vector<1x32xf32>
    %217 = tpu.concatenate %208, %216 in 0 : vector<1x32xf32>, vector<1x32xf32> -> vector<2x32xf32>
    %cst_70 = arith.constant dense<0.000000e+00> : vector<2x64xf32>
    %218 = tpu.matmul %217, %1, %cst_70 {dimension_numbers = #tpu.dot_dimension_numbers<[1], [0], [0], [1], [0, 0, 1, 1], [], []>} : vector<2x32xf32>, vector<32x64xf32>, vector<2x64xf32> -> vector<2x64xf32>
    %219 = vector.extract_strided_slice %218 {offsets = [1, 0], sizes = [1, 64], strides = [1, 1]} : vector<2x64xf32> to vector<1x64xf32>
    %220 = arith.mulf %219, %197 : vector<1x64xf32>
    %221 = vector.extract_strided_slice %218 {offsets = [0, 0], sizes = [1, 64], strides = [1, 1]} : vector<2x64xf32> to vector<1x64xf32>
    %222 = arith.mulf %221, %220 : vector<1x64xf32>
    %223 = arith.subf %198, %222 : vector<1x64xf32>
    %224 = vector.broadcast %220 : vector<1x64xf32> to vector<16x64xf32>
    %225 = arith.mulf %196, %224 : vector<16x64xf32>
    %226 = vector.broadcast %223 : vector<1x64xf32> to vector<16x64xf32>
    %227 = arith.addf %225, %226 : vector<16x64xf32>
    %cst_71 = arith.constant 0.000000e+00 : f32
    %228 = vector.broadcast %cst_71 : f32 to vector<16x64xf32>
    %229 = arith.cmpf oge, %227, %228 : vector<16x64xf32>
    %cst_72 = arith.constant 2.000000e-01 : f32
    %230 = vector.broadcast %cst_72 : f32 to vector<16x64xf32>
    %231 = arith.mulf %230, %227 : vector<16x64xf32>
    %232 = arith.select %229, %227, %231 : vector<16x64xi1>, vector<16x64xf32>
    %c0_73 = arith.constant 0 : index
    %c0_74 = arith.constant 0 : index
    %c0_75 = arith.constant 0 : index
    %233 = vector.load %arg12[%c0_73, %c0_74, %c0_75] : memref<1x16x64xf32, #tpu.memory_space<vmem>>, vector<1x16x64xf32>
    %234 = vector.shape_cast %233 : vector<1x16x64xf32> to vector<16x64xf32>
    %235 = vector.shape_cast %232 : vector<16x64xf32> to vector<1x16x64xf32>
    tpu.vector_store %arg12[%c0_73, %c0_74, %c0_75], %235 {strides = array<i32>} : memref<1x16x64xf32, #tpu.memory_space<vmem>>, vector<1x16x64xf32>,
    return
  }
  func.func @transform_0(%arg0: i32) -> (i32, i32, i32) {
    %c0_i32 = arith.constant 0 : i32
    %c0_i32_0 = arith.constant 0 : i32
    %c0_i32_1 = arith.constant 0 : i32
    return %arg0, %c0_i32, %c0_i32_0 : i32, i32, i32
  }
  func.func @transform_1(%arg0: i32) -> (i32, i32, i32) {
    %c0_i32 = arith.constant 0 : i32
    %c0_i32_0 = arith.constant 0 : i32
    %c0_i32_1 = arith.constant 0 : i32
    return %arg0, %c0_i32, %c0_i32_0 : i32, i32, i32
  }
  func.func @transform_2(%arg0: i32) -> (i32, i32) {
    %c0_i32 = arith.constant 0 : i32
    %c0_i32_0 = arith.constant 0 : i32
    %c0_i32_1 = arith.constant 0 : i32
    return %c0_i32, %c0_i32_0 : i32, i32
  }
  func.func @transform_3(%arg0: i32) -> (i32, i32) {
    %c0_i32 = arith.constant 0 : i32
    %c0_i32_0 = arith.constant 0 : i32
    %c0_i32_1 = arith.constant 0 : i32
    return %c0_i32, %c0_i32_0 : i32, i32
  }
  func.func @transform_4(%arg0: i32) -> (i32, i32) {
    %c0_i32 = arith.constant 0 : i32
    %c0_i32_0 = arith.constant 0 : i32
    %c0_i32_1 = arith.constant 0 : i32
    return %c0_i32, %c0_i32_0 : i32, i32
  }
  func.func @transform_5(%arg0: i32) -> (i32, i32) {
    %c0_i32 = arith.constant 0 : i32
    %c0_i32_0 = arith.constant 0 : i32
    %c0_i32_1 = arith.constant 0 : i32
    return %c0_i32, %c0_i32_0 : i32, i32
  }
  func.func @transform_6(%arg0: i32) -> (i32, i32) {
    %c0_i32 = arith.constant 0 : i32
    %c0_i32_0 = arith.constant 0 : i32
    %c0_i32_1 = arith.constant 0 : i32
    return %c0_i32, %c0_i32_0 : i32, i32
  }
  func.func @transform_7(%arg0: i32) -> (i32, i32) {
    %c0_i32 = arith.constant 0 : i32
    %c0_i32_0 = arith.constant 0 : i32
    %c0_i32_1 = arith.constant 0 : i32
    return %c0_i32, %c0_i32_0 : i32, i32
  }
  func.func @transform_8(%arg0: i32) -> (i32, i32) {
    %c0_i32 = arith.constant 0 : i32
    %c0_i32_0 = arith.constant 0 : i32
    %c0_i32_1 = arith.constant 0 : i32
    return %c0_i32, %c0_i32_0 : i32, i32
  }
  func.func @transform_9(%arg0: i32) -> (i32, i32) {
    %c0_i32 = arith.constant 0 : i32
    %c0_i32_0 = arith.constant 0 : i32
    %c0_i32_1 = arith.constant 0 : i32
    return %c0_i32, %c0_i32_0 : i32, i32
  }
  func.func @transform_10(%arg0: i32) -> (i32, i32) {
    %c0_i32 = arith.constant 0 : i32
    %c0_i32_0 = arith.constant 0 : i32
    %c0_i32_1 = arith.constant 0 : i32
    return %c0_i32, %c0_i32_0 : i32, i32
  }
  func.func @transform_11(%arg0: i32) -> (i32, i32, i32) {
    %c0_i32 = arith.constant 0 : i32
    %c0_i32_0 = arith.constant 0 : i32
    %c0_i32_1 = arith.constant 0 : i32
    return %arg0, %c0_i32, %c0_i32_0 : i32, i32, i32
  }
}

module attributes {stable_mosaic.version = 11 : i64} {
  func.func @kernel(%arg0: i32, %arg1: memref<1x24x132xbf16, #tpu.memory_space<vmem>>, %arg2: memref<132x64xbf16, #tpu.memory_space<vmem>>, %arg3: memref<3x64xf32, #tpu.memory_space<vmem>>, %arg4: memref<64x32xf32, #tpu.memory_space<vmem>>, %arg5: memref<32x64xf32, #tpu.memory_space<vmem>>, %arg6: memref<64x256xbf16, #tpu.memory_space<vmem>>, %arg7: memref<3x256xf32, #tpu.memory_space<vmem>>, %arg8: memref<256x32xf32, #tpu.memory_space<vmem>>, %arg9: memref<32x256xf32, #tpu.memory_space<vmem>>, %arg10: memref<256x2xbf16, #tpu.memory_space<vmem>>, %arg11: memref<1x2xf32, #tpu.memory_space<vmem>>, %arg12: memref<1x6x64xf32, #tpu.memory_space<vmem>>, %arg13: memref<1x1x2xf32, #tpu.memory_space<vmem>>) attributes {dimension_semantics = [#tpu.dimension_semantics<parallel>], iteration_bounds = array<i64: 2>, scalar_prefetch = 0 : i64, scratch_operands = 0 : i64, tpu.core_type = #tpu.core_type<tc>, window_params = [{transform_indices = @transform_0, window_bounds = array<i64: 1, 24, 132>}, {pipeline_mode = #tpu.pipeline_mode<synchronous>, transform_indices = @transform_1, window_bounds = array<i64: 132, 64>}, {pipeline_mode = #tpu.pipeline_mode<synchronous>, transform_indices = @transform_2, window_bounds = array<i64: 3, 64>}, {pipeline_mode = #tpu.pipeline_mode<synchronous>, transform_indices = @transform_3, window_bounds = array<i64: 64, 32>}, {pipeline_mode = #tpu.pipeline_mode<synchronous>, transform_indices = @transform_4, window_bounds = array<i64: 32, 64>}, {pipeline_mode = #tpu.pipeline_mode<synchronous>, transform_indices = @transform_5, window_bounds = array<i64: 64, 256>}, {pipeline_mode = #tpu.pipeline_mode<synchronous>, transform_indices = @transform_6, window_bounds = array<i64: 3, 256>}, {pipeline_mode = #tpu.pipeline_mode<synchronous>, transform_indices = @transform_7, window_bounds = array<i64: 256, 32>}, {pipeline_mode = #tpu.pipeline_mode<synchronous>, transform_indices = @transform_8, window_bounds = array<i64: 32, 256>}, {pipeline_mode = #tpu.pipeline_mode<synchronous>, transform_indices = @transform_9, window_bounds = array<i64: 256, 2>}, {pipeline_mode = #tpu.pipeline_mode<synchronous>, transform_indices = @transform_10, window_bounds = array<i64: 1, 2>}, {transform_indices = @transform_11, window_bounds = array<i64: 1, 6, 64>}, {transform_indices = @transform_12, window_bounds = array<i64: 1, 1, 2>}]} {
    %c0 = arith.constant 0 : index
    %c0_0 = arith.constant 0 : index
    %0 = vector.load %arg3[%c0, %c0_0] : memref<3x64xf32, #tpu.memory_space<vmem>>, vector<3x64xf32>
    %c0_1 = arith.constant 0 : index
    %c0_2 = arith.constant 0 : index
    %1 = vector.load %arg7[%c0_1, %c0_2] : memref<3x256xf32, #tpu.memory_space<vmem>>, vector<3x256xf32>
    %c0_3 = arith.constant 0 : index
    %c0_4 = arith.constant 0 : index
    %c0_5 = arith.constant 0 : index
    %2 = vector.load %arg1[%c0_3, %c0_4, %c0_5] : memref<1x24x132xbf16, #tpu.memory_space<vmem>>, vector<1x24x132xbf16>
    %3 = vector.shape_cast %2 : vector<1x24x132xbf16> to vector<24x132xbf16>
    %c0_6 = arith.constant 0 : index
    %c0_7 = arith.constant 0 : index
    %4 = vector.load %arg2[%c0_6, %c0_7] : memref<132x64xbf16, #tpu.memory_space<vmem>>, vector<132x64xbf16>
    %5 = vector.extract_strided_slice %0 {offsets = [0, 0], sizes = [1, 64], strides = [1, 1]} : vector<3x64xf32> to vector<1x64xf32>
    %6 = vector.extract_strided_slice %0 {offsets = [1, 0], sizes = [1, 64], strides = [1, 1]} : vector<3x64xf32> to vector<1x64xf32>
    %7 = vector.extract_strided_slice %0 {offsets = [2, 0], sizes = [1, 64], strides = [1, 1]} : vector<3x64xf32> to vector<1x64xf32>
    %c0_8 = arith.constant 0 : index
    %c0_9 = arith.constant 0 : index
    %8 = vector.load %arg4[%c0_8, %c0_9] : memref<64x32xf32, #tpu.memory_space<vmem>>, vector<64x32xf32>
    %c0_10 = arith.constant 0 : index
    %c0_11 = arith.constant 0 : index
    %9 = vector.load %arg5[%c0_10, %c0_11] : memref<32x64xf32, #tpu.memory_space<vmem>>, vector<32x64xf32>
    %cst = arith.constant dense<0.000000e+00> : vector<24x64xf32>
    %10 = tpu.matmul %3, %4, %cst {dimension_numbers = #tpu.dot_dimension_numbers<[1], [0], [0], [1], [0, 0, 1, 1], [], []>} : vector<24x132xbf16>, vector<132x64xbf16>, vector<24x64xf32> -> vector<24x64xf32>
    %11 = vector.broadcast %5 : vector<1x64xf32> to vector<24x64xf32>
    %12 = arith.addf %10, %11 : vector<24x64xf32>
    %cst_12 = arith.constant dense<0.000000e+00> : vector<64xf32>
    %13 = vector.multi_reduction <add>, %12, %cst_12 [0] : vector<24x64xf32> to vector<64xf32>
    %14 = vector.shape_cast %13 : vector<64xf32> to vector<1x64xf32>
    %15 = arith.mulf %12, %12 : vector<24x64xf32>
    %cst_13 = arith.constant dense<0.000000e+00> : vector<64xf32>
    %16 = vector.multi_reduction <add>, %15, %cst_13 [0] : vector<24x64xf32> to vector<64xf32>
    %17 = vector.shape_cast %16 : vector<64xf32> to vector<1x64xf32>
    %18 = tpu.concatenate %14, %17 in 0 : vector<1x64xf32>, vector<1x64xf32> -> vector<2x64xf32>
    %cst_14 = arith.constant dense<0.000000e+00> : vector<2x32xf32>
    %19 = tpu.matmul %18, %8, %cst_14 {dimension_numbers = #tpu.dot_dimension_numbers<[1], [0], [0], [1], [0, 0, 1, 1], [], []>} : vector<2x64xf32>, vector<64x32xf32>, vector<2x32xf32> -> vector<2x32xf32>
    %cst_15 = arith.constant 4.800000e+01 : f32
    %20 = vector.broadcast %cst_15 : f32 to vector<2x32xf32>
    %21 = arith.divf %19, %20 : vector<2x32xf32>
    %22 = vector.extract_strided_slice %21 {offsets = [0, 0], sizes = [1, 32], strides = [1, 1]} : vector<2x32xf32> to vector<1x32xf32>
    %23 = vector.extract_strided_slice %21 {offsets = [1, 0], sizes = [1, 32], strides = [1, 1]} : vector<2x32xf32> to vector<1x32xf32>
    %24 = arith.mulf %22, %22 : vector<1x32xf32>
    %25 = arith.subf %23, %24 : vector<1x32xf32>
    %cst_16 = arith.constant 0.000000e+00 : f32
    %26 = vector.broadcast %cst_16 : f32 to vector<1x32xf32>
    %27 = arith.maximumf %25, %26 : vector<1x32xf32>
    %cst_17 = arith.constant 9.99999974E-6 : f32
    %28 = vector.broadcast %cst_17 : f32 to vector<1x32xf32>
    %29 = arith.addf %27, %28 : vector<1x32xf32>
    %30 = math.rsqrt %29 : vector<1x32xf32>
    %31 = tpu.concatenate %22, %30 in 0 : vector<1x32xf32>, vector<1x32xf32> -> vector<2x32xf32>
    %cst_18 = arith.constant dense<0.000000e+00> : vector<2x64xf32>
    %32 = tpu.matmul %31, %9, %cst_18 {dimension_numbers = #tpu.dot_dimension_numbers<[1], [0], [0], [1], [0, 0, 1, 1], [], []>} : vector<2x32xf32>, vector<32x64xf32>, vector<2x64xf32> -> vector<2x64xf32>
    %33 = vector.extract_strided_slice %32 {offsets = [1, 0], sizes = [1, 64], strides = [1, 1]} : vector<2x64xf32> to vector<1x64xf32>
    %34 = arith.mulf %33, %6 : vector<1x64xf32>
    %35 = vector.extract_strided_slice %32 {offsets = [0, 0], sizes = [1, 64], strides = [1, 1]} : vector<2x64xf32> to vector<1x64xf32>
    %36 = arith.mulf %35, %34 : vector<1x64xf32>
    %37 = arith.subf %7, %36 : vector<1x64xf32>
    %38 = vector.broadcast %34 : vector<1x64xf32> to vector<24x64xf32>
    %39 = arith.mulf %12, %38 : vector<24x64xf32>
    %40 = vector.broadcast %37 : vector<1x64xf32> to vector<24x64xf32>
    %41 = arith.addf %39, %40 : vector<24x64xf32>
    %cst_19 = arith.constant 0.000000e+00 : f32
    %42 = vector.broadcast %cst_19 : f32 to vector<24x64xf32>
    %43 = arith.cmpf oge, %41, %42 : vector<24x64xf32>
    %cst_20 = arith.constant 2.000000e-01 : f32
    %44 = vector.broadcast %cst_20 : f32 to vector<24x64xf32>
    %45 = arith.mulf %44, %41 : vector<24x64xf32>
    %46 = arith.select %43, %41, %45 : vector<24x64xi1>, vector<24x64xf32>
    %47 = vector.extract_strided_slice %46 {offsets = [0, 0], sizes = [6, 64], strides = [1, 1]} : vector<24x64xf32> to vector<6x64xf32>
    %48 = vector.extract_strided_slice %46 {offsets = [6, 0], sizes = [6, 64], strides = [1, 1]} : vector<24x64xf32> to vector<6x64xf32>
    %49 = arith.maximumf %47, %48 : vector<6x64xf32>
    %50 = vector.extract_strided_slice %46 {offsets = [12, 0], sizes = [6, 64], strides = [1, 1]} : vector<24x64xf32> to vector<6x64xf32>
    %51 = arith.maximumf %49, %50 : vector<6x64xf32>
    %52 = vector.extract_strided_slice %46 {offsets = [18, 0], sizes = [6, 64], strides = [1, 1]} : vector<24x64xf32> to vector<6x64xf32>
    %53 = arith.maximumf %51, %52 : vector<6x64xf32>
    %c0_21 = arith.constant 0 : index
    %c0_22 = arith.constant 0 : index
    %c0_23 = arith.constant 0 : index
    %54 = vector.load %arg12[%c0_21, %c0_22, %c0_23] : memref<1x6x64xf32, #tpu.memory_space<vmem>>, vector<1x6x64xf32>
    %55 = vector.shape_cast %54 : vector<1x6x64xf32> to vector<6x64xf32>
    %56 = vector.shape_cast %53 : vector<6x64xf32> to vector<1x6x64xf32>
    tpu.vector_store %arg12[%c0_21, %c0_22, %c0_23], %56 {strides = array<i32>} : memref<1x6x64xf32, #tpu.memory_space<vmem>>, vector<1x6x64xf32>,
    %cst_24 = arith.constant dense<0xFF800000> : vector<64xf32>
    %57 = vector.multi_reduction <maximumf>, %46, %cst_24 [0] : vector<24x64xf32> to vector<64xf32>
    %58 = vector.shape_cast %57 : vector<64xf32> to vector<1x64xf32>
    %59 = arith.truncf %58 : vector<1x64xf32> to vector<1x64xbf16>
    %c0_25 = arith.constant 0 : index
    %c0_26 = arith.constant 0 : index
    %60 = vector.load %arg6[%c0_25, %c0_26] : memref<64x256xbf16, #tpu.memory_space<vmem>>, vector<64x256xbf16>
    %cst_27 = arith.constant dense<0.000000e+00> : vector<1x256xf32>
    %61 = tpu.matmul %59, %60, %cst_27 {dimension_numbers = #tpu.dot_dimension_numbers<[1], [0], [0], [1], [0, 0, 1, 1], [], []>} : vector<1x64xbf16>, vector<64x256xbf16>, vector<1x256xf32> -> vector<1x256xf32>
    %62 = vector.extract_strided_slice %1 {offsets = [0, 0], sizes = [1, 256], strides = [1, 1]} : vector<3x256xf32> to vector<1x256xf32>
    %63 = arith.addf %61, %62 : vector<1x256xf32>
    %64 = vector.extract_strided_slice %1 {offsets = [1, 0], sizes = [1, 256], strides = [1, 1]} : vector<3x256xf32> to vector<1x256xf32>
    %65 = vector.extract_strided_slice %1 {offsets = [2, 0], sizes = [1, 256], strides = [1, 1]} : vector<3x256xf32> to vector<1x256xf32>
    %c0_28 = arith.constant 0 : index
    %c0_29 = arith.constant 0 : index
    %66 = vector.load %arg8[%c0_28, %c0_29] : memref<256x32xf32, #tpu.memory_space<vmem>>, vector<256x32xf32>
    %c0_30 = arith.constant 0 : index
    %c0_31 = arith.constant 0 : index
    %67 = vector.load %arg9[%c0_30, %c0_31] : memref<32x256xf32, #tpu.memory_space<vmem>>, vector<32x256xf32>
    %cst_32 = arith.constant dense<0.000000e+00> : vector<256xf32>
    %68 = vector.multi_reduction <add>, %63, %cst_32 [0] : vector<1x256xf32> to vector<256xf32>
    %69 = vector.shape_cast %68 : vector<256xf32> to vector<1x256xf32>
    %70 = arith.mulf %63, %63 : vector<1x256xf32>
    %cst_33 = arith.constant dense<0.000000e+00> : vector<256xf32>
    %71 = vector.multi_reduction <add>, %70, %cst_33 [0] : vector<1x256xf32> to vector<256xf32>
    %72 = vector.shape_cast %71 : vector<256xf32> to vector<1x256xf32>
    %73 = tpu.concatenate %69, %72 in 0 : vector<1x256xf32>, vector<1x256xf32> -> vector<2x256xf32>
    %cst_34 = arith.constant dense<0.000000e+00> : vector<2x32xf32>
    %74 = tpu.matmul %73, %66, %cst_34 {dimension_numbers = #tpu.dot_dimension_numbers<[1], [0], [0], [1], [0, 0, 1, 1], [], []>} : vector<2x256xf32>, vector<256x32xf32>, vector<2x32xf32> -> vector<2x32xf32>
    %cst_35 = arith.constant 8.000000e+00 : f32
    %75 = vector.broadcast %cst_35 : f32 to vector<2x32xf32>
    %76 = arith.divf %74, %75 : vector<2x32xf32>
    %77 = vector.extract_strided_slice %76 {offsets = [0, 0], sizes = [1, 32], strides = [1, 1]} : vector<2x32xf32> to vector<1x32xf32>
    %78 = vector.extract_strided_slice %76 {offsets = [1, 0], sizes = [1, 32], strides = [1, 1]} : vector<2x32xf32> to vector<1x32xf32>
    %79 = arith.mulf %77, %77 : vector<1x32xf32>
    %80 = arith.subf %78, %79 : vector<1x32xf32>
    %cst_36 = arith.constant 0.000000e+00 : f32
    %81 = vector.broadcast %cst_36 : f32 to vector<1x32xf32>
    %82 = arith.maximumf %80, %81 : vector<1x32xf32>
    %cst_37 = arith.constant 9.99999974E-6 : f32
    %83 = vector.broadcast %cst_37 : f32 to vector<1x32xf32>
    %84 = arith.addf %82, %83 : vector<1x32xf32>
    %85 = math.rsqrt %84 : vector<1x32xf32>
    %86 = tpu.concatenate %77, %85 in 0 : vector<1x32xf32>, vector<1x32xf32> -> vector<2x32xf32>
    %cst_38 = arith.constant dense<0.000000e+00> : vector<2x256xf32>
    %87 = tpu.matmul %86, %67, %cst_38 {dimension_numbers = #tpu.dot_dimension_numbers<[1], [0], [0], [1], [0, 0, 1, 1], [], []>} : vector<2x32xf32>, vector<32x256xf32>, vector<2x256xf32> -> vector<2x256xf32>
    %88 = vector.extract_strided_slice %87 {offsets = [1, 0], sizes = [1, 256], strides = [1, 1]} : vector<2x256xf32> to vector<1x256xf32>
    %89 = arith.mulf %88, %64 : vector<1x256xf32>
    %90 = vector.extract_strided_slice %87 {offsets = [0, 0], sizes = [1, 256], strides = [1, 1]} : vector<2x256xf32> to vector<1x256xf32>
    %91 = arith.mulf %90, %89 : vector<1x256xf32>
    %92 = arith.subf %65, %91 : vector<1x256xf32>
    %93 = arith.mulf %63, %89 : vector<1x256xf32>
    %94 = arith.addf %93, %92 : vector<1x256xf32>
    %cst_39 = arith.constant 0.000000e+00 : f32
    %95 = vector.broadcast %cst_39 : f32 to vector<1x256xf32>
    %96 = arith.cmpf oge, %94, %95 : vector<1x256xf32>
    %cst_40 = arith.constant 2.000000e-01 : f32
    %97 = vector.broadcast %cst_40 : f32 to vector<1x256xf32>
    %98 = arith.mulf %97, %94 : vector<1x256xf32>
    %99 = arith.select %96, %94, %98 : vector<1x256xi1>, vector<1x256xf32>
    %100 = arith.truncf %99 : vector<1x256xf32> to vector<1x256xbf16>
    %c0_41 = arith.constant 0 : index
    %c0_42 = arith.constant 0 : index
    %101 = vector.load %arg10[%c0_41, %c0_42] : memref<256x2xbf16, #tpu.memory_space<vmem>>, vector<256x2xbf16>
    %cst_43 = arith.constant dense<0.000000e+00> : vector<1x2xf32>
    %102 = tpu.matmul %100, %101, %cst_43 {dimension_numbers = #tpu.dot_dimension_numbers<[1], [0], [0], [1], [0, 0, 1, 1], [], []>} : vector<1x256xbf16>, vector<256x2xbf16>, vector<1x2xf32> -> vector<1x2xf32>
    %c0_44 = arith.constant 0 : index
    %c0_45 = arith.constant 0 : index
    %103 = vector.load %arg11[%c0_44, %c0_45] : memref<1x2xf32, #tpu.memory_space<vmem>>, vector<1x2xf32>
    %104 = arith.addf %102, %103 : vector<1x2xf32>
    %c0_46 = arith.constant 0 : index
    %c0_47 = arith.constant 0 : index
    %c0_48 = arith.constant 0 : index
    %105 = vector.load %arg13[%c0_46, %c0_47, %c0_48] : memref<1x1x2xf32, #tpu.memory_space<vmem>>, vector<1x1x2xf32>
    %106 = vector.shape_cast %105 : vector<1x1x2xf32> to vector<1x2xf32>
    %107 = vector.shape_cast %104 : vector<1x2xf32> to vector<1x1x2xf32>
    tpu.vector_store %arg13[%c0_46, %c0_47, %c0_48], %107 {strides = array<i32>} : memref<1x1x2xf32, #tpu.memory_space<vmem>>, vector<1x1x2xf32>,
    return
  }
  func.func @transform_0(%arg0: i32) -> (i32, i32, i32) {
    %c0_i32 = arith.constant 0 : i32
    %c0_i32_0 = arith.constant 0 : i32
    %c0_i32_1 = arith.constant 0 : i32
    return %arg0, %c0_i32, %c0_i32_0 : i32, i32, i32
  }
  func.func @transform_1(%arg0: i32) -> (i32, i32) {
    %c0_i32 = arith.constant 0 : i32
    %c0_i32_0 = arith.constant 0 : i32
    %c0_i32_1 = arith.constant 0 : i32
    return %c0_i32, %c0_i32_0 : i32, i32
  }
  func.func @transform_2(%arg0: i32) -> (i32, i32) {
    %c0_i32 = arith.constant 0 : i32
    %c0_i32_0 = arith.constant 0 : i32
    %c0_i32_1 = arith.constant 0 : i32
    return %c0_i32, %c0_i32_0 : i32, i32
  }
  func.func @transform_3(%arg0: i32) -> (i32, i32) {
    %c0_i32 = arith.constant 0 : i32
    %c0_i32_0 = arith.constant 0 : i32
    %c0_i32_1 = arith.constant 0 : i32
    return %c0_i32, %c0_i32_0 : i32, i32
  }
  func.func @transform_4(%arg0: i32) -> (i32, i32) {
    %c0_i32 = arith.constant 0 : i32
    %c0_i32_0 = arith.constant 0 : i32
    %c0_i32_1 = arith.constant 0 : i32
    return %c0_i32, %c0_i32_0 : i32, i32
  }
  func.func @transform_5(%arg0: i32) -> (i32, i32) {
    %c0_i32 = arith.constant 0 : i32
    %c0_i32_0 = arith.constant 0 : i32
    %c0_i32_1 = arith.constant 0 : i32
    return %c0_i32, %c0_i32_0 : i32, i32
  }
  func.func @transform_6(%arg0: i32) -> (i32, i32) {
    %c0_i32 = arith.constant 0 : i32
    %c0_i32_0 = arith.constant 0 : i32
    %c0_i32_1 = arith.constant 0 : i32
    return %c0_i32, %c0_i32_0 : i32, i32
  }
  func.func @transform_7(%arg0: i32) -> (i32, i32) {
    %c0_i32 = arith.constant 0 : i32
    %c0_i32_0 = arith.constant 0 : i32
    %c0_i32_1 = arith.constant 0 : i32
    return %c0_i32, %c0_i32_0 : i32, i32
  }
  func.func @transform_8(%arg0: i32) -> (i32, i32) {
    %c0_i32 = arith.constant 0 : i32
    %c0_i32_0 = arith.constant 0 : i32
    %c0_i32_1 = arith.constant 0 : i32
    return %c0_i32, %c0_i32_0 : i32, i32
  }
  func.func @transform_9(%arg0: i32) -> (i32, i32) {
    %c0_i32 = arith.constant 0 : i32
    %c0_i32_0 = arith.constant 0 : i32
    %c0_i32_1 = arith.constant 0 : i32
    return %c0_i32, %c0_i32_0 : i32, i32
  }
  func.func @transform_10(%arg0: i32) -> (i32, i32) {
    %c0_i32 = arith.constant 0 : i32
    %c0_i32_0 = arith.constant 0 : i32
    %c0_i32_1 = arith.constant 0 : i32
    return %c0_i32, %c0_i32_0 : i32, i32
  }
  func.func @transform_11(%arg0: i32) -> (i32, i32, i32) {
    %c0_i32 = arith.constant 0 : i32
    %c0_i32_0 = arith.constant 0 : i32
    %c0_i32_1 = arith.constant 0 : i32
    return %arg0, %c0_i32, %c0_i32_0 : i32, i32, i32
  }
  func.func @transform_12(%arg0: i32) -> (i32, i32, i32) {
    %c0_i32 = arith.constant 0 : i32
    %c0_i32_0 = arith.constant 0 : i32
    %c0_i32_1 = arith.constant 0 : i32
    return %arg0, %c0_i32, %c0_i32_0 : i32, i32, i32
  }
}

</mosaic_0001>

<llo_original>
// kernel: discriminator_forward.4
$region0: #{discriminator_forward.4}
  #allocation0 [shape = 'u32[]', space=smem, size = 0x4, offset = 0x4, fixed_abs, tag = 'smem constant byte address 0x4 - core index']
  #allocation1 [shape = 'u32[144,128]{1,0:T(1,128)}', space=vmem, size = 0x12000, scoped, tag = 'internal scratch']
  %s0 = inlined_call_operand.vmem [shape: bf16[2,512,20], index: 0, kind: input, shape index: {}]
  %s1 = inlined_call_operand.vmem [shape: bf16[20,64], index: 1, kind: input, shape index: {}]
  %s2 = inlined_call_operand.vmem [shape: bf16[64,64], index: 2, kind: input, shape index: {}]
  %s3 = inlined_call_operand.vmem [shape: f32[6,64], index: 3, kind: input, shape index: {}]
  %s4 = inlined_call_operand.vmem [shape: f32[64,32], index: 4, kind: input, shape index: {}]
  %s5 = inlined_call_operand.vmem [shape: f32[32,64], index: 5, kind: input, shape index: {}]
  %s6 = inlined_call_operand.vmem [shape: f32[2,128,64], index: 6, kind: output, shape index: {}]
  %s7 = sld [smem:[#allocation0]]
  $region57: #{discriminator_forward.4} parent=0
    _
  %s9 = ssub.s32 1, %s7
  %s10 = scalar_select 0, %s9, %s7
  loop: start=0, step=1, limit=4
  $region2: #{discriminator_forward.4} parent=0 // loop_pre_header
    _
  $region3: #{discriminator_forward.4} parent=0 // loop_header
    %s12 = sphi 0, %s16
    %p13 = scmp.ge.s32.totalorder %s12, 4
    %s22 = sphi 0, %s24
    %s25 = sphi 0, %s22
    %s26 = sphi 0, %s25
    %s42 = sphi 0, %s26
    %s46 = sphi 0, %s46
    %s48 = sphi 0, %s46
    %s49 = sphi 0, %s48
    %s63 = sphi 0, %s49
    %s67 = sphi 0, %s67
    %s69 = sphi 0, %s67
    %s70 = sphi 0, %s69
    %s84 = sphi 0, %s70
    %s88 = sphi 0, %s88
    %s90 = sphi 0, %s88
    %s91 = sphi 0, %s90
    %s105 = sphi 0, %s91
    %s109 = sphi 0, %s109
    %s111 = sphi 0, %s109
    %s112 = sphi 0, %s111
    %s126 = sphi 0, %s112
    %s130 = sphi 0, %s130
    %s132 = sphi 0, %s130
    %s133 = sphi 0, %s132
    %s147 = sphi 0, %s133
    %s153 = sphi 0, %s155
    %s156 = sphi 0, %s153
    %s157 = sphi 0, %s156
    %s173 = sphi 0, %s157
  $region4: #{discriminator_forward.4} parent=0 // loop_header_branch
    %15 = sbr.rel (%p13) target = $region8
  $region5: #{discriminator_forward.4} parent=0 // loop_body
    %s17 = ssub.s32 %s12, 1
    %s18 = ssub.s32 %s12, 2
    %s19 = sadd.s32 %s12, 1
    %s20 = ssub.s32 %s12, %s19
    %p21 = scmp.eq.s32.totalorder %s20, 0
    %s23 = sadd.s32 %s22, 1
    %s24 = scalar_select %p21, %s22, %s23
    %p27 = pneg %p21
    %p28 = scmp.eq.s32.totalorder %s12, 1
    %p29 = por %p27, %p28
    %p30 = scmp.ne.s32.totalorder %s22, %s25
    %p31 = scmp.eq.s32.totalorder %s12, 0
    %p32 = por %p30, %p31
    %p33 = scmp.ne.s32.totalorder %s22, %s25
    %p34 = scmp.eq.s32.totalorder %s17, 1
    %p35 = por %p33, %p34
    %p36 = scmp.ne.s32.totalorder %s25, %s26
    %p37 = scmp.eq.s32.totalorder %s17, 0
    %p38 = por %p36, %p37
    %p39 = scmp.ne.s32.totalorder %s25, %s26
    %p40 = scmp.eq.s32.totalorder %s18, 1
    %p41 = por %p39, %p40
    %p43 = scmp.ne.s32.totalorder %s26, %s42
    %p44 = scmp.eq.s32.totalorder %s18, 0
    %p45 = por %p43, %p44
    %s47 = sadd.s32 %s46, 1
    %p50 = scmp.eq.s32.totalorder %s12, 1
    %p51 = scmp.ne.s32.totalorder %s46, %s48
    %p52 = scmp.eq.s32.totalorder %s12, 0
    %p53 = por %p51, %p52
    %p54 = scmp.ne.s32.totalorder %s46, %s48
    %p55 = scmp.eq.s32.totalorder %s17, 1
    %p56 = por %p54, %p55
    %p57 = scmp.ne.s32.totalorder %s48, %s49
    %p58 = scmp.eq.s32.totalorder %s17, 0
    %p59 = por %p57, %p58
    %p60 = scmp.ne.s32.totalorder %s48, %s49
    %p61 = scmp.eq.s32.totalorder %s18, 1
    %p62 = por %p60, %p61
    %p64 = scmp.ne.s32.totalorder %s49, %s63
    %p65 = scmp.eq.s32.totalorder %s18, 0
    %p66 = por %p64, %p65
    %s68 = sadd.s32 %s67, 1
    %p71 = scmp.eq.s32.totalorder %s12, 1
    %p72 = scmp.ne.s32.totalorder %s67, %s69
    %p73 = scmp.eq.s32.totalorder %s12, 0
    %p74 = por %p72, %p73
    %p75 = scmp.ne.s32.totalorder %s67, %s69
    %p76 = scmp.eq.s32.totalorder %s17, 1
    %p77 = por %p75, %p76
    %p78 = scmp.ne.s32.totalorder %s69, %s70
    %p79 = scmp.eq.s32.totalorder %s17, 0
    %p80 = por %p78, %p79
    %p81 = scmp.ne.s32.totalorder %s69, %s70
    %p82 = scmp.eq.s32.totalorder %s18, 1
    %p83 = por %p81, %p82
    %p85 = scmp.ne.s32.totalorder %s70, %s84
    %p86 = scmp.eq.s32.totalorder %s18, 0
    %p87 = por %p85, %p86
    %s89 = sadd.s32 %s88, 1
    %p92 = scmp.eq.s32.totalorder %s12, 1
    %p93 = scmp.ne.s32.totalorder %s88, %s90
    %p94 = scmp.eq.s32.totalorder %s12, 0
    %p95 = por %p93, %p94
    %p96 = scmp.ne.s32.totalorder %s88, %s90
    %p97 = scmp.eq.s32.totalorder %s17, 1
    %p98 = por %p96, %p97
    %p99 = scmp.ne.s32.totalorder %s90, %s91
    %p100 = scmp.eq.s32.totalorder %s17, 0
    %p101 = por %p99, %p100
    %p102 = scmp.ne.s32.totalorder %s90, %s91
    %p103 = scmp.eq.s32.totalorder %s18, 1
    %p104 = por %p102, %p103
    %p106 = scmp.ne.s32.totalorder %s91, %s105
    %p107 = scmp.eq.s32.totalorder %s18, 0
    %p108 = por %p106, %p107
    %s110 = sadd.s32 %s109, 1
    %p113 = scmp.eq.s32.totalorder %s12, 1
    %p114 = scmp.ne.s32.totalorder %s109, %s111
    %p115 = scmp.eq.s32.totalorder %s12, 0
    %p116 = por %p114, %p115
    %p117 = scmp.ne.s32.totalorder %s109, %s111
    %p118 = scmp.eq.s32.totalorder %s17, 1
    %p119 = por %p117, %p118
    %p120 = scmp.ne.s32.totalorder %s111, %s112
    %p121 = scmp.eq.s32.totalorder %s17, 0
    %p122 = por %p120, %p121
    %p123 = scmp.ne.s32.totalorder %s111, %s112
    %p124 = scmp.eq.s32.totalorder %s18, 1
    %p125 = por %p123, %p124
    %p127 = scmp.ne.s32.totalorder %s112, %s126
    %p128 = scmp.eq.s32.totalorder %s18, 0
    %p129 = por %p127, %p128
    %s131 = sadd.s32 %s130, 1
    %p134 = scmp.eq.s32.totalorder %s12, 1
    %p135 = scmp.ne.s32.totalorder %s130, %s132
    %p136 = scmp.eq.s32.totalorder %s12, 0
    %p137 = por %p135, %p136
    %p138 = scmp.ne.s32.totalorder %s130, %s132
    %p139 = scmp.eq.s32.totalorder %s17, 1
    %p140 = por %p138, %p139
    %p141 = scmp.ne.s32.totalorder %s132, %s133
    %p142 = scmp.eq.s32.totalorder %s17, 0
    %p143 = por %p141, %p142
    %p144 = scmp.ne.s32.totalorder %s132, %s133
    %p145 = scmp.eq.s32.totalorder %s18, 1
    %p146 = por %p144, %p145
    %p148 = scmp.ne.s32.totalorder %s133, %s147
    %p149 = scmp.eq.s32.totalorder %s18, 0
    %p150 = por %p148, %p149
    %s151 = ssub.s32 %s12, %s19
    %p152 = scmp.eq.s32.totalorder %s151, 0
    %s154 = sadd.s32 %s153, 1
    %s155 = scalar_select %p152, %s153, %s154
    %p158 = pneg %p152
    %p159 = scmp.eq.s32.totalorder %s12, 1
    %p160 = por %p158, %p159
    %p161 = scmp.ne.s32.totalorder %s153, %s156
    %p162 = scmp.eq.s32.totalorder %s12, 0
    %p163 = por %p161, %p162
    %p164 = scmp.ne.s32.totalorder %s153, %s156
    %p165 = scmp.eq.s32.totalorder %s17, 1
    %p166 = por %p164, %p165
    %p167 = scmp.ne.s32.totalorder %s156, %s157
    %p168 = scmp.eq.s32.totalorder %s17, 0
    %p169 = por %p167, %p168
    %p170 = scmp.ne.s32.totalorder %s156, %s157
    %p171 = scmp.eq.s32.totalorder %s18, 1
    %p172 = por %p170, %p171
    %p174 = scmp.ne.s32.totalorder %s157, %s173
    %p175 = scmp.eq.s32.totalorder %s18, 0
    %p176 = por %p174, %p175
    %p177 = scmp.le.s32.totalorder 1, %s12
    %p178 = scmp.lt.s32.totalorder %s12, 3
    %p179 = pnand %p177, %p178
    %p180 = pneg %p179
    // Predicated region
    $region9: #{discriminator_forward.4} parent=5 // pred_check
      _
    $region10: #{discriminator_forward.4} parent=5 // pred_check_branch
      %182 = sbr.rel (%p179) target = $region12
    $region11: #{discriminator_forward.4} parent=5 // pred_region
      %s183 = ssub.s32 %s12, 1
      // Predicated region
      $region13: #{discriminator_forward.4} parent=11 // pred_check
        %p184 = pneg %p59
      $region14: #{discriminator_forward.4} parent=11 // pred_check_branch
        %186 = sbr.rel (%p184) target = $region16
      $region15: #{discriminator_forward.4} parent=11 // pred_region
        _
      $region16: #{discriminator_forward.4} parent=11 // pred_fallthru
        _
      // Predicated region
      $region17: #{discriminator_forward.4} parent=11 // pred_check
        %p187 = pneg %p80
      $region18: #{discriminator_forward.4} parent=11 // pred_check_branch
        %189 = sbr.rel (%p187) target = $region20
      $region19: #{discriminator_forward.4} parent=11 // pred_region
        _
      $region20: #{discriminator_forward.4} parent=11 // pred_fallthru
        _
      // Predicated region
      $region21: #{discriminator_forward.4} parent=11 // pred_check
        %p190 = pneg %p101
      $region22: #{discriminator_forward.4} parent=11 // pred_check_branch
        %192 = sbr.rel (%p190) target = $region24
      $region23: #{discriminator_forward.4} parent=11 // pred_region
        _
      $region24: #{discriminator_forward.4} parent=11 // pred_fallthru
        _
      // Predicated region
      $region25: #{discriminator_forward.4} parent=11 // pred_check
        %p193 = pneg %p122
      $region26: #{discriminator_forward.4} parent=11 // pred_check_branch
        %195 = sbr.rel (%p193) target = $region28
      $region27: #{discriminator_forward.4} parent=11 // pred_region
        _
      $region28: #{discriminator_forward.4} parent=11 // pred_fallthru
        _
      // Predicated region
      $region29: #{discriminator_forward.4} parent=11 // pred_check
        %p196 = pneg %p143
      $region30: #{discriminator_forward.4} parent=11 // pred_check_branch
        %198 = sbr.rel (%p196) target = $region32
      $region31: #{discriminator_forward.4} parent=11 // pred_region
        _
      $region32: #{discriminator_forward.4} parent=11 // pred_fallthru
        _
    $region12: #{discriminator_forward.4} parent=5 // pred_fallthru
      _
    %p199 = scmp.lt.s32.totalorder %s12, 2
    // Predicated region
    $region33: #{discriminator_forward.4} parent=5 // pred_check
      %p200 = pneg %p199
    $region34: #{discriminator_forward.4} parent=5 // pred_check_branch
      %202 = sbr.rel (%p200) target = $region36
    $region35: #{discriminator_forward.4} parent=5 // pred_region
      // Predicated region
      $region37: #{discriminator_forward.4} parent=35 // pred_check
        %p203 = pneg %p32
      $region38: #{discriminator_forward.4} parent=35 // pred_check_branch
        %205 = sbr.rel (%p203) target = $region40
      $region39: #{discriminator_forward.4} parent=35 // pred_region
        %p206 = scmp.lt.s32.totalorder %s12, 1
        %s207 = scalar_select %p206, %s12, 1
        %s208 = smul.addr %s207, 64
        %s209 = smul.addr %s208, 4
        %s210 = scalar_lea.vmem %s0, %s209
      $region40: #{discriminator_forward.4} parent=35 // pred_fallthru
        _
    $region36: #{discriminator_forward.4} parent=5 // pred_fallthru
      _
    %p211 = scmp.le.s32.totalorder 1, %s12
    %p212 = scmp.lt.s32.totalorder %s12, 3
    %p213 = pnand %p211, %p212
    %p214 = pneg %p213
    // Predicated region
    $region41: #{discriminator_forward.4} parent=5 // pred_check
      _
    $region42: #{discriminator_forward.4} parent=5 // pred_check_branch
      %216 = sbr.rel (%p213) target = $region44
    $region43: #{discriminator_forward.4} parent=5 // pred_region
      %s217 = ssub.s32 %s12, 1
      %p218 = scmp.lt.s32.totalorder %s17, 1
      %s219 = scalar_select %p218, %s17, 1
      %s220 = smul.addr %s219, 64
      %s221 = smul.addr %s220, 4
      %s222 = scalar_lea.vmem %s0, %s221
      %p223 = pneg %p38
      %p224 = pneg %p35
      %p225 = pneg %p59
      %p226 = pneg %p56
      %p227 = pneg %p80
      %p228 = pneg %p77
      %p229 = pneg %p101
      %p230 = pneg %p98
      %p231 = pneg %p122
      %p232 = pneg %p119
      %p233 = pneg %p143
      %p234 = pneg %p140
      %p235 = pneg %p169
      %p236 = pneg %p166
      %p237 = scmp.lt.s32.totalorder %s17, 1
      %s238 = scalar_select %p237, %s17, 1
      %s239 = smul.addr %s238, 16
      %s240 = smul.addr %s239, 8
      %s241 = scalar_lea.vmem %s6, %s240
      %p242 = scmp.lt.s32.totalorder %s17, 1
      %s243 = scalar_select %p242, %s17, 1
      %s244 = smul.addr %s243, 64
      %s245 = smul.addr %s244, 4
      %s246 = scalar_lea.vmem %s0, %s245
      %p247 = scmp.lt.s32.totalorder %s17, 1
      %s248 = scalar_select %p247, %s17, 1
      %s249 = smul.addr %s248, 16
      %s250 = smul.addr %s249, 8
      %s251 = scalar_lea.vmem %s6, %s250
      %v253 = vld [vmem:[%s4] sm:$0xff]
      %v254 = vld [vmem:[%s4 + $0x8] sm:$0xff]
      %v255 = vld [vmem:[%s4 + $0x10] sm:$0xff]
      %v256 = vld [vmem:[%s4 + $0x18] sm:$0xff]
      %v257 = vld [vmem:[%s4 + $0x20] sm:$0xff]
      %v258 = vld [vmem:[%s4 + $0x28] sm:$0xff]
      %v259 = vld [vmem:[%s4 + $0x30] sm:$0xff]
      %v260 = vld [vmem:[%s4 + $0x38] sm:$0xff]
      %v261 = vld [vmem:[%s5] sm:$0xff]
      %v262 = vld [vmem:[%s5 + $0x8] sm:$0xff]
      %v263 = vld [vmem:[%s5 + $0x10] sm:$0xff]
      %v264 = vld [vmem:[%s5 + $0x18] sm:$0xff]
      %v265 = vld [vmem:[%s3] sm:$0x3f]
      %v266 = vld [vmem:[%s246] sm:$0xf]
      %v267 = vld [vmem:[%s246 + $0x4] sm:$0xf]
      %v268 = vld [vmem:[%s246 + $0x8] sm:$0xf]
      %v269 = vld [vmem:[%s246 + $0xc] sm:$0xf]
      %v270 = vld [vmem:[%s246 + $0x10] sm:$0xf]
      %v271 = vld [vmem:[%s246 + $0x14] sm:$0xf]
      %v272 = vld [vmem:[%s246 + $0x18] sm:$0xf]
      %v273 = vld [vmem:[%s246 + $0x1c] sm:$0xf]
      %v274 = vld [vmem:[%s246 + $0x20] sm:$0xf]
      %v275 = vld [vmem:[%s246 + $0x24] sm:$0xf]
      %v276 = vld [vmem:[%s246 + $0x28] sm:$0xf]
      %v277 = vld [vmem:[%s246 + $0x2c] sm:$0xf]
      %v278 = vld [vmem:[%s246 + $0x30] sm:$0xf]
      %v279 = vld [vmem:[%s246 + $0x34] sm:$0xf]
      %v280 = vld [vmem:[%s246 + $0x38] sm:$0xf]
      %v281 = vld [vmem:[%s246 + $0x3c] sm:$0xf]
      %v282 = vld [vmem:[%s246 + $0x40] sm:$0xf]
      %v283 = vld [vmem:[%s246 + $0x44] sm:$0xf]
      %v284 = vld [vmem:[%s246 + $0x48] sm:$0xf]
      %v285 = vld [vmem:[%s246 + $0x4c] sm:$0xf]
      %v286 = vld [vmem:[%s246 + $0x50] sm:$0xf]
      %v287 = vld [vmem:[%s246 + $0x54] sm:$0xf]
      %v288 = vld [vmem:[%s246 + $0x58] sm:$0xf]
      %v289 = vld [vmem:[%s246 + $0x5c] sm:$0xf]
      %v290 = vld [vmem:[%s246 + $0x60] sm:$0xf]
      %v291 = vld [vmem:[%s246 + $0x64] sm:$0xf]
      %v292 = vld [vmem:[%s246 + $0x68] sm:$0xf]
      %v293 = vld [vmem:[%s246 + $0x6c] sm:$0xf]
      %v294 = vld [vmem:[%s246 + $0x70] sm:$0xf]
      %v295 = vld [vmem:[%s246 + $0x74] sm:$0xf]
      %v296 = vld [vmem:[%s246 + $0x78] sm:$0xf]
      %v297 = vld [vmem:[%s246 + $0x7c] sm:$0xf]
      %v298 = vld [vmem:[%s246 + $0x80] sm:$0xf]
      %v299 = vld [vmem:[%s246 + $0x84] sm:$0xf]
      %v300 = vld [vmem:[%s246 + $0x88] sm:$0xf]
      %v301 = vld [vmem:[%s246 + $0x8c] sm:$0xf]
      %v302 = vld [vmem:[%s246 + $0x90] sm:$0xf]
      %v303 = vld [vmem:[%s246 + $0x94] sm:$0xf]
      %v304 = vld [vmem:[%s246 + $0x98] sm:$0xf]
      %v305 = vld [vmem:[%s246 + $0x9c] sm:$0xf]
      %v306 = vld [vmem:[%s246 + $0xa0] sm:$0xf]
      %v307 = vld [vmem:[%s246 + $0xa4] sm:$0xf]
      %v308 = vld [vmem:[%s246 + $0xa8] sm:$0xf]
      %v309 = vld [vmem:[%s246 + $0xac] sm:$0xf]
      %v310 = vld [vmem:[%s246 + $0xb0] sm:$0xf]
      %v311 = vld [vmem:[%s246 + $0xb4] sm:$0xf]
      %v312 = vld [vmem:[%s246 + $0xb8] sm:$0xf]
      %v313 = vld [vmem:[%s246 + $0xbc] sm:$0xf]
      %v314 = vld [vmem:[%s246 + $0xc0] sm:$0xf]
      %v315 = vld [vmem:[%s246 + $0xc4] sm:$0xf]
      %v316 = vld [vmem:[%s246 + $0xc8] sm:$0xf]
      %v317 = vld [vmem:[%s246 + $0xcc] sm:$0xf]
      %v318 = vld [vmem:[%s246 + $0xd0] sm:$0xf]
      %v319 = vld [vmem:[%s246 + $0xd4] sm:$0xf]
      %v320 = vld [vmem:[%s246 + $0xd8] sm:$0xf]
      %v321 = vld [vmem:[%s246 + $0xdc] sm:$0xf]
      %v322 = vld [vmem:[%s246 + $0xe0] sm:$0xf]
      %v323 = vld [vmem:[%s246 + $0xe4] sm:$0xf]
      %v324 = vld [vmem:[%s246 + $0xe8] sm:$0xf]
      %v325 = vld [vmem:[%s246 + $0xec] sm:$0xf]
      %v326 = vld [vmem:[%s246 + $0xf0] sm:$0xf]
      %v327 = vld [vmem:[%s246 + $0xf4] sm:$0xf]
      %v328 = vld [vmem:[%s246 + $0xf8] sm:$0xf]
      %v329 = vld [vmem:[%s246 + $0xfc] sm:$0xf]
      %v330 = vld [vmem:[%s1] sm:$0xf]
      %v331 = vld [vmem:[%s1 + $0x4] sm:$0xf]
      %v332 = vld [vmem:[%s1 + $0x8] sm:$0x3]
      %v333 = vlaneseq
      %v334 = vshrl.u32 %v333, 7
      %v335 = vsub.s32 0, %v334
      %v336 = vrot.slane %v265, %v335
      %v401 = vunpack.c.l.b16 %v266
      %v402 = vunpack.c.l.b16 %v267
      %v403 = vunpack.c.l.b16 %v268
      %v404 = vunpack.c.l.b16 %v269
      %v405 = vunpack.c.l.b16 %v270
      %v406 = vunpack.c.l.b16 %v271
      %v407 = vunpack.c.l.b16 %v272
      %v408 = vunpack.c.l.b16 %v273
      %v409 = vunpack.c.l.b16 %v274
      %v410 = vunpack.c.l.b16 %v275
      %v411 = vunpack.c.l.b16 %v276
      %v412 = vunpack.c.l.b16 %v277
      %v413 = vunpack.c.l.b16 %v278
      %v414 = vunpack.c.l.b16 %v279
      %v415 = vunpack.c.l.b16 %v280
      %v416 = vunpack.c.l.b16 %v281
      %v417 = vunpack.c.l.b16 %v282
      %v418 = vunpack.c.l.b16 %v283
      %v419 = vunpack.c.l.b16 %v284
      %v420 = vunpack.c.l.b16 %v285
      %v421 = vunpack.c.l.b16 %v286
      %v422 = vunpack.c.l.b16 %v287
      %v423 = vunpack.c.l.b16 %v288
      %v424 = vunpack.c.l.b16 %v289
      %v425 = vunpack.c.l.b16 %v290
      %v426 = vunpack.c.l.b16 %v291
      %v427 = vunpack.c.l.b16 %v292
      %v428 = vunpack.c.l.b16 %v293
      %v429 = vunpack.c.l.b16 %v294
      %v430 = vunpack.c.l.b16 %v295
      %v431 = vunpack.c.l.b16 %v296
      %v432 = vunpack.c.l.b16 %v297
      %v433 = vunpack.c.l.b16 %v298
      %v434 = vunpack.c.l.b16 %v299
      %v435 = vunpack.c.l.b16 %v300
      %v436 = vunpack.c.l.b16 %v301
      %v437 = vunpack.c.l.b16 %v302
      %v438 = vunpack.c.l.b16 %v303
      %v439 = vunpack.c.l.b16 %v304
      %v440 = vunpack.c.l.b16 %v305
      %v441 = vunpack.c.l.b16 %v306
      %v442 = vunpack.c.l.b16 %v307
      %v443 = vunpack.c.l.b16 %v308
      %v444 = vunpack.c.l.b16 %v309
      %v445 = vunpack.c.l.b16 %v310
      %v446 = vunpack.c.l.b16 %v311
      %v447 = vunpack.c.l.b16 %v312
      %v448 = vunpack.c.l.b16 %v313
      %v449 = vunpack.c.l.b16 %v314
      %v450 = vunpack.c.l.b16 %v315
      %v451 = vunpack.c.l.b16 %v316
      %v452 = vunpack.c.l.b16 %v317
      %v453 = vunpack.c.l.b16 %v318
      %v454 = vunpack.c.l.b16 %v319
      %v455 = vunpack.c.l.b16 %v320
      %v456 = vunpack.c.l.b16 %v321
      %v457 = vunpack.c.l.b16 %v322
      %v458 = vunpack.c.l.b16 %v323
      %v459 = vunpack.c.l.b16 %v324
      %v460 = vunpack.c.l.b16 %v325
      %v461 = vunpack.c.l.b16 %v326
      %v462 = vunpack.c.l.b16 %v327
      %v463 = vunpack.c.l.b16 %v328
      %v464 = vunpack.c.l.b16 %v329
      %v465 = vpack.c.b16 %v402, %v401
      %v466 = vpack.c.b16 %v404, %v403
      %v467 = vpack.c.b16 %v406, %v405
      %v468 = vpack.c.b16 %v408, %v407
      %v469 = vpack.c.b16 %v410, %v409
      %v470 = vpack.c.b16 %v412, %v411
      %v471 = vpack.c.b16 %v414, %v413
      %v472 = vpack.c.b16 %v416, %v415
      %v473 = vpack.c.b16 %v418, %v417
      %v474 = vpack.c.b16 %v420, %v419
      %v475 = vpack.c.b16 %v422, %v421
      %v476 = vpack.c.b16 %v424, %v423
      %v477 = vpack.c.b16 %v426, %v425
      %v478 = vpack.c.b16 %v428, %v427
      %v479 = vpack.c.b16 %v430, %v429
      %v480 = vpack.c.b16 %v432, %v431
      %v481 = vpack.c.b16 %v434, %v433
      %v482 = vpack.c.b16 %v436, %v435
      %v483 = vpack.c.b16 %v438, %v437
      %v484 = vpack.c.b16 %v440, %v439
      %v485 = vpack.c.b16 %v442, %v441
      %v486 = vpack.c.b16 %v444, %v443
      %v487 = vpack.c.b16 %v446, %v445
      %v488 = vpack.c.b16 %v448, %v447
      %v489 = vpack.c.b16 %v450, %v449
      %v490 = vpack.c.b16 %v452, %v451
      %v491 = vpack.c.b16 %v454, %v453
      %v492 = vpack.c.b16 %v456, %v455
      %v493 = vpack.c.b16 %v458, %v457
      %v494 = vpack.c.b16 %v460, %v459
      %v495 = vpack.c.b16 %v462, %v461
      %v496 = vpack.c.b16 %v464, %v463
      %v500 = vunpack.c.l.b16 %v330
      %v501 = vunpack.c.l.b16 %v331
      %v502 = vunpack.c.l.b16 %v332
      %v503 = vpack.c.b16 %v501, %v500
      %v504 = vpack.c.b16 %v502, %v502
      %vm506 = vcmask 162816
      %v508 = vsel %vm506, %v465, 0
      %v511 = vsel %vm506, %v466, 0
      %v514 = vsel %vm506, %v467, 0
      %v517 = vsel %vm506, %v468, 0
      %v520 = vsel %vm506, %v469, 0
      %v523 = vsel %vm506, %v470, 0
      %v526 = vsel %vm506, %v471, 0
      %v529 = vsel %vm506, %v472, 0
      %v532 = vsel %vm506, %v473, 0
      %v535 = vsel %vm506, %v474, 0
      %v538 = vsel %vm506, %v475, 0
      %v541 = vsel %vm506, %v476, 0
      %v544 = vsel %vm506, %v477, 0
      %v547 = vsel %vm506, %v478, 0
      %v550 = vsel %vm506, %v479, 0
      %v553 = vsel %vm506, %v480, 0
      %v556 = vsel %vm506, %v481, 0
      %v559 = vsel %vm506, %v482, 0
      %v562 = vsel %vm506, %v483, 0
      %v565 = vsel %vm506, %v484, 0
      %v568 = vsel %vm506, %v485, 0
      %v571 = vsel %vm506, %v486, 0
      %v574 = vsel %vm506, %v487, 0
      %v577 = vsel %vm506, %v488, 0
      %v580 = vsel %vm506, %v489, 0
      %v583 = vsel %vm506, %v490, 0
      %v586 = vsel %vm506, %v491, 0
      %v589 = vsel %vm506, %v492, 0
      %v592 = vsel %vm506, %v493, 0
      %v595 = vsel %vm506, %v494, 0
      %v598 = vsel %vm506, %v495, 0
      %v601 = vsel %vm506, %v496, 0
      %vm603 = vcmask 1041408
      %v605 = vsel %vm603, %v504, 0
      %607 = vmatprep.subr.bf16.mxu0 0
      %608 = vmatpush1.bf16.msra.mxu0 %v503
      %609 = vmatprep.subr.bf16.mxu0 0
      %610 = vmatpush1.bf16.msra.mxu0 %v605
      %611 = vmatprep.subr.bf16.mxu0 0
      %612 = vmatpush1.bf16.msra.mxu0 0
      %613 = vmatprep.subr.bf16.mxu0 0
      %614 = vmatpush1.bf16.msra.mxu0 0
      %615 = vmatprep.subr.bf16.mxu0 0
      %616 = vmatpush1.bf16.msra.mxu0 0
      %617 = vmatprep.subr.bf16.mxu0 0
      %618 = vmatpush1.bf16.msra.mxu0 0
      %619 = vmatprep.subr.bf16.mxu0 0
      %620 = vmatpush1.bf16.msra.mxu0 0
      %621 = vmatprep.subr.bf16.mxu0 0
      %622 = vmatpush1.bf16.msra.mxu0 0
      %623 = vmatprep.subr.bf16.mxu0 0
      %624 = vmatpush1.bf16.msra.mxu0 0
      %625 = vmatprep.subr.bf16.mxu0 0
      %626 = vmatpush1.bf16.msra.mxu0 0
      %627 = vmatprep.subr.bf16.mxu0 0
      %628 = vmatpush1.bf16.msra.mxu0 0
      %629 = vmatprep.subr.bf16.mxu0 0
      %630 = vmatpush1.bf16.msra.mxu0 0
      %631 = vmatprep.subr.bf16.mxu0 0
      %632 = vmatpush1.bf16.msra.mxu0 0
      %633 = vmatprep.subr.bf16.mxu0 0
      %634 = vmatpush1.bf16.msra.mxu0 0
      %635 = vmatprep.subr.bf16.mxu0 0
      %636 = vmatpush1.bf16.msra.mxu0 0
      %637 = vmatprep.subr.bf16.mxu0 0
      %638 = vmatpush1.bf16.msra.mxu0 0
      %639 = vmatprep.mubr.bf16.mxu0 0
      %640 = vmatmul.mubr.bf16.gmra.mrb[0].mxu0 %v508
      %v641 = vpop.f32.mrb[0].mxu0
      %v642 = vadd.f32 %v336, %v641
      %v643 = vpop.f32.mrb[0].mxu0
      %v644 = vpop.f32.mrb[0].mxu0
      %v645 = vadd.f32 %v336, %v644
      %v646 = vpop.f32.mrb[0].mxu0
      %647 = vmatprep.mubr.bf16.mxu0 0
      %648 = vmatmul.mubr.bf16.gmra.mrb[0].mxu0 %v511
      %v649 = vpop.f32.mrb[0].mxu0
      %v650 = vadd.f32 %v336, %v649
      %v651 = vpop.f32.mrb[0].mxu0
      %v652 = vpop.f32.mrb[0].mxu0
      %v653 = vadd.f32 %v336, %v652
      %v654 = vpop.f32.mrb[0].mxu0
      %655 = vmatprep.mubr.bf16.mxu0 0
      %656 = vmatmul.mubr.bf16.gmra.mrb[0].mxu0 %v514
      %v657 = vpop.f32.mrb[0].mxu0
      %v658 = vadd.f32 %v336, %v657
      %v659 = vpop.f32.mrb[0].mxu0
      %v660 = vpop.f32.mrb[0].mxu0
      %v661 = vadd.f32 %v336, %v660
      %v662 = vpop.f32.mrb[0].mxu0
      %663 = vmatprep.mubr.bf16.mxu0 0
      %664 = vmatmul.mubr.bf16.gmra.mrb[0].mxu0 %v517
      %v665 = vpop.f32.mrb[0].mxu0
      %v666 = vadd.f32 %v336, %v665
      %v667 = vpop.f32.mrb[0].mxu0
      %v668 = vpop.f32.mrb[0].mxu0
      %v669 = vadd.f32 %v336, %v668
      %v670 = vpop.f32.mrb[0].mxu0
      %671 = vmatprep.mubr.bf16.mxu0 0
      %672 = vmatmul.mubr.bf16.gmra.mrb[0].mxu0 %v520
      %v673 = vpop.f32.mrb[0].mxu0
      %v674 = vadd.f32 %v336, %v673
      %v675 = vpop.f32.mrb[0].mxu0
      %v676 = vpop.f32.mrb[0].mxu0
      %v677 = vadd.f32 %v336, %v676
      %v678 = vpop.f32.mrb[0].mxu0
      %679 = vmatprep.mubr.bf16.mxu0 0
      %680 = vmatmul.mubr.bf16.gmra.mrb[0].mxu0 %v523
      %v681 = vpop.f32.mrb[0].mxu0
      %v682 = vadd.f32 %v336, %v681
      %v683 = vpop.f32.mrb[0].mxu0
      %v684 = vpop.f32.mrb[0].mxu0
      %v685 = vadd.f32 %v336, %v684
      %v686 = vpop.f32.mrb[0].mxu0
      %687 = vmatprep.mubr.bf16.mxu0 0
      %688 = vmatmul.mubr.bf16.gmra.mrb[0].mxu0 %v526
      %v689 = vpop.f32.mrb[0].mxu0
      %v690 = vadd.f32 %v336, %v689
      %v691 = vpop.f32.mrb[0].mxu0
      %v692 = vpop.f32.mrb[0].mxu0
      %v693 = vadd.f32 %v336, %v692
      %v694 = vpop.f32.mrb[0].mxu0
      %695 = vmatprep.mubr.bf16.mxu0 0
      %696 = vmatmul.mubr.bf16.gmra.mrb[0].mxu0 %v529
      %v697 = vpop.f32.mrb[0].mxu0
      %v698 = vadd.f32 %v336, %v697
      %v699 = vpop.f32.mrb[0].mxu0
      %v700 = vpop.f32.mrb[0].mxu0
      %v701 = vadd.f32 %v336, %v700
      %v702 = vpop.f32.mrb[0].mxu0
      %703 = vmatprep.mubr.bf16.mxu0 0
      %704 = vmatmul.mubr.bf16.gmra.mrb[0].mxu0 %v532
      %v705 = vpop.f32.mrb[0].mxu0
      %v706 = vadd.f32 %v336, %v705
      %v707 = vpop.f32.mrb[0].mxu0
      %v708 = vpop.f32.mrb[0].mxu0
      %v709 = vadd.f32 %v336, %v708
      %v710 = vpop.f32.mrb[0].mxu0
      %711 = vmatprep.mubr.bf16.mxu0 0
      %712 = vmatmul.mubr.bf16.gmra.mrb[0].mxu0 %v535
      %v713 = vpop.f32.mrb[0].mxu0
      %v714 = vadd.f32 %v336, %v713
      %v715 = vpop.f32.mrb[0].mxu0
      %v716 = vpop.f32.mrb[0].mxu0
      %v717 = vadd.f32 %v336, %v716
      %v718 = vpop.f32.mrb[0].mxu0
      %719 = vmatprep.mubr.bf16.mxu0 0
      %720 = vmatmul.mubr.bf16.gmra.mrb[0].mxu0 %v538
      %v721 = vpop.f32.mrb[0].mxu0
      %v722 = vadd.f32 %v336, %v721
      %v723 = vpop.f32.mrb[0].mxu0
      %v724 = vpop.f32.mrb[0].mxu0
      %v725 = vadd.f32 %v336, %v724
      %v726 = vpop.f32.mrb[0].mxu0
      %727 = vmatprep.mubr.bf16.mxu0 0
      %728 = vmatmul.mubr.bf16.gmra.mrb[0].mxu0 %v541
      %v729 = vpop.f32.mrb[0].mxu0
      %v730 = vadd.f32 %v336, %v729
      %v731 = vpop.f32.mrb[0].mxu0
      %v732 = vpop.f32.mrb[0].mxu0
      %v733 = vadd.f32 %v336, %v732
      %v734 = vpop.f32.mrb[0].mxu0
      %735 = vmatprep.mubr.bf16.mxu0 0
      %736 = vmatmul.mubr.bf16.gmra.mrb[0].mxu0 %v544
      %v737 = vpop.f32.mrb[0].mxu0
      %v738 = vadd.f32 %v336, %v737
      %v739 = vpop.f32.mrb[0].mxu0
      %v740 = vpop.f32.mrb[0].mxu0
      %v741 = vadd.f32 %v336, %v740
      %v742 = vpop.f32.mrb[0].mxu0
      %743 = vmatprep.mubr.bf16.mxu0 0
      %744 = vmatmul.mubr.bf16.gmra.mrb[0].mxu0 %v547
      %v745 = vpop.f32.mrb[0].mxu0
      %v746 = vadd.f32 %v336, %v745
      %v747 = vpop.f32.mrb[0].mxu0
      %v748 = vpop.f32.mrb[0].mxu0
      %v749 = vadd.f32 %v336, %v748
      %v750 = vpop.f32.mrb[0].mxu0
      %751 = vmatprep.mubr.bf16.mxu0 0
      %752 = vmatmul.mubr.bf16.gmra.mrb[0].mxu0 %v550
      %v753 = vpop.f32.mrb[0].mxu0
      %v754 = vadd.f32 %v336, %v753
      %v755 = vpop.f32.mrb[0].mxu0
      %v756 = vpop.f32.mrb[0].mxu0
      %v757 = vadd.f32 %v336, %v756
      %v758 = vpop.f32.mrb[0].mxu0
      %759 = vmatprep.mubr.bf16.mxu0 0
      %760 = vmatmul.mubr.bf16.gmra.mrb[0].mxu0 %v553
      %v761 = vpop.f32.mrb[0].mxu0
      %v762 = vadd.f32 %v336, %v761
      %v763 = vpop.f32.mrb[0].mxu0
      %v764 = vpop.f32.mrb[0].mxu0
      %v765 = vadd.f32 %v336, %v764
      %v766 = vpop.f32.mrb[0].mxu0
      %767 = vmatprep.mubr.bf16.mxu0 0
      %768 = vmatmul.mubr.bf16.gmra.mrb[0].mxu0 %v556
      %v769 = vpop.f32.mrb[0].mxu0
      %v770 = vadd.f32 %v336, %v769
      %v771 = vpop.f32.mrb[0].mxu0
      %v772 = vpop.f32.mrb[0].mxu0
      %v773 = vadd.f32 %v336, %v772
      %v774 = vpop.f32.mrb[0].mxu0
      %775 = vmatprep.mubr.bf16.mxu0 0
      %776 = vmatmul.mubr.bf16.gmra.mrb[0].mxu0 %v559
      %v777 = vpop.f32.mrb[0].mxu0
      %v778 = vadd.f32 %v336, %v777
      %v779 = vpop.f32.mrb[0].mxu0
      %v780 = vpop.f32.mrb[0].mxu0
      %v781 = vadd.f32 %v336, %v780
      %v782 = vpop.f32.mrb[0].mxu0
      %783 = vmatprep.mubr.bf16.mxu0 0
      %784 = vmatmul.mubr.bf16.gmra.mrb[0].mxu0 %v562
      %v785 = vpop.f32.mrb[0].mxu0
      %v786 = vadd.f32 %v336, %v785
      %v787 = vpop.f32.mrb[0].mxu0
      %v788 = vpop.f32.mrb[0].mxu0
      %v789 = vadd.f32 %v336, %v788
      %v790 = vpop.f32.mrb[0].mxu0
      %791 = vmatprep.mubr.bf16.mxu0 0
      %792 = vmatmul.mubr.bf16.gmra.mrb[0].mxu0 %v565
      %v793 = vpop.f32.mrb[0].mxu0
      %v794 = vadd.f32 %v336, %v793
      %v795 = vpop.f32.mrb[0].mxu0
      %v796 = vpop.f32.mrb[0].mxu0
      %v797 = vadd.f32 %v336, %v796
      %v798 = vpop.f32.mrb[0].mxu0
      %799 = vmatprep.mubr.bf16.mxu0 0
      %800 = vmatmul.mubr.bf16.gmra.mrb[0].mxu0 %v568
      %v801 = vpop.f32.mrb[0].mxu0
      %v802 = vadd.f32 %v336, %v801
      %v803 = vpop.f32.mrb[0].mxu0
      %v804 = vpop.f32.mrb[0].mxu0
      %v805 = vadd.f32 %v336, %v804
      %v806 = vpop.f32.mrb[0].mxu0
      %807 = vmatprep.mubr.bf16.mxu0 0
      %808 = vmatmul.mubr.bf16.gmra.mrb[0].mxu0 %v571
      %v809 = vpop.f32.mrb[0].mxu0
      %v810 = vadd.f32 %v336, %v809
      %v811 = vpop.f32.mrb[0].mxu0
      %v812 = vpop.f32.mrb[0].mxu0
      %v813 = vadd.f32 %v336, %v812
      %v814 = vpop.f32.mrb[0].mxu0
      %815 = vmatprep.mubr.bf16.mxu0 0
      %816 = vmatmul.mubr.bf16.gmra.mrb[0].mxu0 %v574
      %v817 = vpop.f32.mrb[0].mxu0
      %v818 = vadd.f32 %v336, %v817
      %v819 = vpop.f32.mrb[0].mxu0
      %v820 = vpop.f32.mrb[0].mxu0
      %v821 = vadd.f32 %v336, %v820
      %v822 = vpop.f32.mrb[0].mxu0
      %823 = vmatprep.mubr.bf16.mxu0 0
      %824 = vmatmul.mubr.bf16.gmra.mrb[0].mxu0 %v577
      %v825 = vpop.f32.mrb[0].mxu0
      %v826 = vadd.f32 %v336, %v825
      %v827 = vpop.f32.mrb[0].mxu0
      %v828 = vpop.f32.mrb[0].mxu0
      %v829 = vadd.f32 %v336, %v828
      %v830 = vpop.f32.mrb[0].mxu0
      %831 = vmatprep.mubr.bf16.mxu0 0
      %832 = vmatmul.mubr.bf16.gmra.mrb[0].mxu0 %v580
      %v833 = vpop.f32.mrb[0].mxu0
      %v834 = vadd.f32 %v336, %v833
      %v835 = vpop.f32.mrb[0].mxu0
      %v836 = vpop.f32.mrb[0].mxu0
      %v837 = vadd.f32 %v336, %v836
      %v838 = vpop.f32.mrb[0].mxu0
      %839 = vmatprep.mubr.bf16.mxu0 0
      %840 = vmatmul.mubr.bf16.gmra.mrb[0].mxu0 %v583
      %v841 = vpop.f32.mrb[0].mxu0
      %v842 = vadd.f32 %v336, %v841
      %v843 = vpop.f32.mrb[0].mxu0
      %v844 = vpop.f32.mrb[0].mxu0
      %v845 = vadd.f32 %v336, %v844
      %v846 = vpop.f32.mrb[0].mxu0
      %847 = vmatprep.mubr.bf16.mxu0 0
      %848 = vmatmul.mubr.bf16.gmra.mrb[0].mxu0 %v586
      %v849 = vpop.f32.mrb[0].mxu0
      %v850 = vadd.f32 %v336, %v849
      %v851 = vpop.f32.mrb[0].mxu0
      %v852 = vpop.f32.mrb[0].mxu0
      %v853 = vadd.f32 %v336, %v852
      %v854 = vpop.f32.mrb[0].mxu0
      %855 = vmatprep.mubr.bf16.mxu0 0
      %856 = vmatmul.mubr.bf16.gmra.mrb[0].mxu0 %v589
      %v857 = vpop.f32.mrb[0].mxu0
      %v858 = vadd.f32 %v336, %v857
      %v859 = vpop.f32.mrb[0].mxu0
      %v860 = vpop.f32.mrb[0].mxu0
      %v861 = vadd.f32 %v336, %v860
      %v862 = vpop.f32.mrb[0].mxu0
      %863 = vmatprep.mubr.bf16.mxu0 0
      %864 = vmatmul.mubr.bf16.gmra.mrb[0].mxu0 %v592
      %v865 = vpop.f32.mrb[0].mxu0
      %v866 = vadd.f32 %v336, %v865
      %v867 = vpop.f32.mrb[0].mxu0
      %v868 = vpop.f32.mrb[0].mxu0
      %v869 = vadd.f32 %v336, %v868
      %v870 = vpop.f32.mrb[0].mxu0
      %871 = vmatprep.mubr.bf16.mxu0 0
      %872 = vmatmul.mubr.bf16.gmra.mrb[0].mxu0 %v595
      %v873 = vpop.f32.mrb[0].mxu0
      %v874 = vadd.f32 %v336, %v873
      %v875 = vpop.f32.mrb[0].mxu0
      %v876 = vpop.f32.mrb[0].mxu0
      %v877 = vadd.f32 %v336, %v876
      %v878 = vpop.f32.mrb[0].mxu0
      %879 = vmatprep.mubr.bf16.mxu0 0
      %880 = vmatmul.mubr.bf16.gmra.mrb[0].mxu0 %v598
      %v881 = vpop.f32.mrb[0].mxu0
      %v882 = vadd.f32 %v336, %v881
      %v883 = vpop.f32.mrb[0].mxu0
      %v884 = vpop.f32.mrb[0].mxu0
      %v885 = vadd.f32 %v336, %v884
      %v886 = vpop.f32.mrb[0].mxu0
      %887 = vmatprep.mubr.bf16.mxu0 0
      %888 = vmatmul.mubr.bf16.gmra.mrb[0].mxu0 %v601
      %v889 = vpop.f32.mrb[0].mxu0
      %v890 = vadd.f32 %v336, %v889
      %v891 = vpop.f32.mrb[0].mxu0
      %v892 = vpop.f32.mrb[0].mxu0
      %v893 = vadd.f32 %v336, %v892
      %v894 = vpop.f32.mrb[0].mxu0
      %895 = vdwg.mxu0
      %vm896 = vcmask 523264
      %v897 = vsel %vm896, %v642, 0.0
      %v898 = vsel %vm896, %v645, 0.0
      %v899 = vadd.f32 %v897, %v898
      %v900 = vsel %vm896, %v650, 0.0
      %v901 = vadd.f32 %v899, %v900
      %v902 = vsel %vm896, %v653, 0.0
      %v903 = vadd.f32 %v901, %v902
      %v904 = vsel %vm896, %v658, 0.0
      %v905 = vadd.f32 %v903, %v904
      %v906 = vsel %vm896, %v661, 0.0
      %v907 = vadd.f32 %v905, %v906
      %v908 = vsel %vm896, %v666, 0.0
      %v909 = vadd.f32 %v907, %v908
      %v910 = vsel %vm896, %v669, 0.0
      %v911 = vadd.f32 %v909, %v910
      %v912 = vsel %vm896, %v674, 0.0
      %v913 = vadd.f32 %v911, %v912
      %v914 = vsel %vm896, %v677, 0.0
      %v915 = vadd.f32 %v913, %v914
      %v916 = vsel %vm896, %v682, 0.0
      %v917 = vadd.f32 %v915, %v916
      %v918 = vsel %vm896, %v685, 0.0
      %v919 = vadd.f32 %v917, %v918
      %v920 = vsel %vm896, %v690, 0.0
      %v921 = vadd.f32 %v919, %v920
      %v922 = vsel %vm896, %v693, 0.0
      %v923 = vadd.f32 %v921, %v922
      %v924 = vsel %vm896, %v698, 0.0
      %v925 = vadd.f32 %v923, %v924
      %v926 = vsel %vm896, %v701, 0.0
      %v927 = vadd.f32 %v925, %v926
      %v928 = vsel %vm896, %v706, 0.0
      %v929 = vadd.f32 %v927, %v928
      %v930 = vsel %vm896, %v709, 0.0
      %v931 = vadd.f32 %v929, %v930
      %v932 = vsel %vm896, %v714, 0.0
      %v933 = vadd.f32 %v931, %v932
      %v934 = vsel %vm896, %v717, 0.0
      %v935 = vadd.f32 %v933, %v934
      %v936 = vsel %vm896, %v722, 0.0
      %v937 = vadd.f32 %v935, %v936
      %v938 = vsel %vm896, %v725, 0.0
      %v939 = vadd.f32 %v937, %v938
      %v940 = vsel %vm896, %v730, 0.0
      %v941 = vadd.f32 %v939, %v940
      %v942 = vsel %vm896, %v733, 0.0
      %v943 = vadd.f32 %v941, %v942
      %v944 = vsel %vm896, %v738, 0.0
      %v945 = vadd.f32 %v943, %v944
      %v946 = vsel %vm896, %v741, 0.0
      %v947 = vadd.f32 %v945, %v946
      %v948 = vsel %vm896, %v746, 0.0
      %v949 = vadd.f32 %v947, %v948
      %v950 = vsel %vm896, %v749, 0.0
      %v951 = vadd.f32 %v949, %v950
      %v952 = vsel %vm896, %v754, 0.0
      %v953 = vadd.f32 %v951, %v952
      %v954 = vsel %vm896, %v757, 0.0
      %v955 = vadd.f32 %v953, %v954
      %v956 = vsel %vm896, %v762, 0.0
      %v957 = vadd.f32 %v955, %v956
      %v958 = vsel %vm896, %v765, 0.0
      %v959 = vadd.f32 %v957, %v958
      %v960 = vsel %vm896, %v770, 0.0
      %v961 = vadd.f32 %v959, %v960
      %v962 = vsel %vm896, %v773, 0.0
      %v963 = vadd.f32 %v961, %v962
      %v964 = vsel %vm896, %v778, 0.0
      %v965 = vadd.f32 %v963, %v964
      %v966 = vsel %vm896, %v781, 0.0
      %v967 = vadd.f32 %v965, %v966
      %v968 = vsel %vm896, %v786, 0.0
      %v969 = vadd.f32 %v967, %v968
      %v970 = vsel %vm896, %v789, 0.0
      %v971 = vadd.f32 %v969, %v970
      %v972 = vsel %vm896, %v794, 0.0
      %v973 = vadd.f32 %v971, %v972
      %v974 = vsel %vm896, %v797, 0.0
      %v975 = vadd.f32 %v973, %v974
      %v976 = vsel %vm896, %v802, 0.0
      %v977 = vadd.f32 %v975, %v976
      %v978 = vsel %vm896, %v805, 0.0
      %v979 = vadd.f32 %v977, %v978
      %v980 = vsel %vm896, %v810, 0.0
      %v981 = vadd.f32 %v979, %v980
      %v982 = vsel %vm896, %v813, 0.0
      %v983 = vadd.f32 %v981, %v982
      %v984 = vsel %vm896, %v818, 0.0
      %v985 = vadd.f32 %v983, %v984
      %v986 = vsel %vm896, %v821, 0.0
      %v987 = vadd.f32 %v985, %v986
      %v988 = vsel %vm896, %v826, 0.0
      %v989 = vadd.f32 %v987, %v988
      %v990 = vsel %vm896, %v829, 0.0
      %v991 = vadd.f32 %v989, %v990
      %v992 = vsel %vm896, %v834, 0.0
      %v993 = vadd.f32 %v991, %v992
      %v994 = vsel %vm896, %v837, 0.0
      %v995 = vadd.f32 %v993, %v994
      %v996 = vsel %vm896, %v842, 0.0
      %v997 = vadd.f32 %v995, %v996
      %v998 = vsel %vm896, %v845, 0.0
      %v999 = vadd.f32 %v997, %v998
      %v1000 = vsel %vm896, %v850, 0.0
      %v1001 = vadd.f32 %v999, %v1000
      %v1002 = vsel %vm896, %v853, 0.0
      %v1003 = vadd.f32 %v1001, %v1002
      %v1004 = vsel %vm896, %v858, 0.0
      %v1005 = vadd.f32 %v1003, %v1004
      %v1006 = vsel %vm896, %v861, 0.0
      %v1007 = vadd.f32 %v1005, %v1006
      %v1008 = vsel %vm896, %v866, 0.0
      %v1009 = vadd.f32 %v1007, %v1008
      %v1010 = vsel %vm896, %v869, 0.0
      %v1011 = vadd.f32 %v1009, %v1010
      %v1012 = vsel %vm896, %v874, 0.0
      %v1013 = vadd.f32 %v1011, %v1012
      %v1014 = vsel %vm896, %v877, 0.0
      %v1015 = vadd.f32 %v1013, %v1014
      %v1016 = vsel %vm896, %v882, 0.0
      %v1017 = vadd.f32 %v1015, %v1016
      %v1018 = vsel %vm896, %v885, 0.0
      %v1019 = vadd.f32 %v1017, %v1018
      %v1020 = vsel %vm896, %v890, 0.0
      %v1021 = vadd.f32 %v1019, %v1020
      %v1022 = vsel %vm896, %v893, 0.0
      %v1023 = vadd.f32 %v1021, %v1022
      %v1024 = vrot.slane %v1023, 4
      %v1025 = vadd.f32 %v1023, %v1024
      %v1026 = vrot.slane %v1025, 2
      %v1027 = vadd.f32 %v1025, %v1026
      %v1028 = vrot.slane %v1027, 1
      %v1029 = vadd.f32 %v1027, %v1028
      %v1030 = vmul.f32 %v642, %v642
      %v1031 = vmul.f32 %v645, %v645
      %v1032 = vmul.f32 %v650, %v650
      %v1033 = vmul.f32 %v653, %v653
      %v1034 = vmul.f32 %v658, %v658
      %v1035 = vmul.f32 %v661, %v661
      %v1036 = vmul.f32 %v666, %v666
      %v1037 = vmul.f32 %v669, %v669
      %v1038 = vmul.f32 %v674, %v674
      %v1039 = vmul.f32 %v677, %v677
      %v1040 = vmul.f32 %v682, %v682
      %v1041 = vmul.f32 %v685, %v685
      %v1042 = vmul.f32 %v690, %v690
      %v1043 = vmul.f32 %v693, %v693
      %v1044 = vmul.f32 %v698, %v698
      %v1045 = vmul.f32 %v701, %v701
      %v1046 = vmul.f32 %v706, %v706
      %v1047 = vmul.f32 %v709, %v709
      %v1048 = vmul.f32 %v714, %v714
      %v1049 = vmul.f32 %v717, %v717
      %v1050 = vmul.f32 %v722, %v722
      %v1051 = vmul.f32 %v725, %v725
      %v1052 = vmul.f32 %v730, %v730
      %v1053 = vmul.f32 %v733, %v733
      %v1054 = vmul.f32 %v738, %v738
      %v1055 = vmul.f32 %v741, %v741
      %v1056 = vmul.f32 %v746, %v746
      %v1057 = vmul.f32 %v749, %v749
      %v1058 = vmul.f32 %v754, %v754
      %v1059 = vmul.f32 %v757, %v757
      %v1060 = vmul.f32 %v762, %v762
      %v1061 = vmul.f32 %v765, %v765
      %v1062 = vmul.f32 %v770, %v770
      %v1063 = vmul.f32 %v773, %v773
      %v1064 = vmul.f32 %v778, %v778
      %v1065 = vmul.f32 %v781, %v781
      %v1066 = vmul.f32 %v786, %v786
      %v1067 = vmul.f32 %v789, %v789
      %v1068 = vmul.f32 %v794, %v794
      %v1069 = vmul.f32 %v797, %v797
      %v1070 = vmul.f32 %v802, %v802
      %v1071 = vmul.f32 %v805, %v805
      %v1072 = vmul.f32 %v810, %v810
      %v1073 = vmul.f32 %v813, %v813
      %v1074 = vmul.f32 %v818, %v818
      %v1075 = vmul.f32 %v821, %v821
      %v1076 = vmul.f32 %v826, %v826
      %v1077 = vmul.f32 %v829, %v829
      %v1078 = vmul.f32 %v834, %v834
      %v1079 = vmul.f32 %v837, %v837
      %v1080 = vmul.f32 %v842, %v842
      %v1081 = vmul.f32 %v845, %v845
      %v1082 = vmul.f32 %v850, %v850
      %v1083 = vmul.f32 %v853, %v853
      %v1084 = vmul.f32 %v858, %v858
      %v1085 = vmul.f32 %v861, %v861
      %v1086 = vmul.f32 %v866, %v866
      %v1087 = vmul.f32 %v869, %v869
      %v1088 = vmul.f32 %v874, %v874
      %v1089 = vmul.f32 %v877, %v877
      %v1090 = vmul.f32 %v882, %v882
      %v1091 = vmul.f32 %v885, %v885
      %v1092 = vmul.f32 %v890, %v890
      %v1093 = vmul.f32 %v893, %v893
      %v1094 = vsel %vm896, %v1030, 0.0
      %v1095 = vsel %vm896, %v1031, 0.0
      %v1096 = vadd.f32 %v1094, %v1095
      %v1097 = vsel %vm896, %v1032, 0.0
      %v1098 = vadd.f32 %v1096, %v1097
      %v1099 = vsel %vm896, %v1033, 0.0
      %v1100 = vadd.f32 %v1098, %v1099
      %v1101 = vsel %vm896, %v1034, 0.0
      %v1102 = vadd.f32 %v1100, %v1101
      %v1103 = vsel %vm896, %v1035, 0.0
      %v1104 = vadd.f32 %v1102, %v1103
      %v1105 = vsel %vm896, %v1036, 0.0
      %v1106 = vadd.f32 %v1104, %v1105
      %v1107 = vsel %vm896, %v1037, 0.0
      %v1108 = vadd.f32 %v1106, %v1107
      %v1109 = vsel %vm896, %v1038, 0.0
      %v1110 = vadd.f32 %v1108, %v1109
      %v1111 = vsel %vm896, %v1039, 0.0
      %v1112 = vadd.f32 %v1110, %v1111
      %v1113 = vsel %vm896, %v1040, 0.0
      %v1114 = vadd.f32 %v1112, %v1113
      %v1115 = vsel %vm896, %v1041, 0.0
      %v1116 = vadd.f32 %v1114, %v1115
      %v1117 = vsel %vm896, %v1042, 0.0
      %v1118 = vadd.f32 %v1116, %v1117
      %v1119 = vsel %vm896, %v1043, 0.0
      %v1120 = vadd.f32 %v1118, %v1119
      %v1121 = vsel %vm896, %v1044, 0.0
      %v1122 = vadd.f32 %v1120, %v1121
      %v1123 = vsel %vm896, %v1045, 0.0
      %v1124 = vadd.f32 %v1122, %v1123
      %v1125 = vsel %vm896, %v1046, 0.0
      %v1126 = vadd.f32 %v1124, %v1125
      %v1127 = vsel %vm896, %v1047, 0.0
      %v1128 = vadd.f32 %v1126, %v1127
      %v1129 = vsel %vm896, %v1048, 0.0
      %v1130 = vadd.f32 %v1128, %v1129
      %v1131 = vsel %vm896, %v1049, 0.0
      %v1132 = vadd.f32 %v1130, %v1131
      %v1133 = vsel %vm896, %v1050, 0.0
      %v1134 = vadd.f32 %v1132, %v1133
      %v1135 = vsel %vm896, %v1051, 0.0
      %v1136 = vadd.f32 %v1134, %v1135
      %v1137 = vsel %vm896, %v1052, 0.0
      %v1138 = vadd.f32 %v1136, %v1137
      %v1139 = vsel %vm896, %v1053, 0.0
      %v1140 = vadd.f32 %v1138, %v1139
      %v1141 = vsel %vm896, %v1054, 0.0
      %v1142 = vadd.f32 %v1140, %v1141
      %v1143 = vsel %vm896, %v1055, 0.0
      %v1144 = vadd.f32 %v1142, %v1143
      %v1145 = vsel %vm896, %v1056, 0.0
      %v1146 = vadd.f32 %v1144, %v1145
      %v1147 = vsel %vm896, %v1057, 0.0
      %v1148 = vadd.f32 %v1146, %v1147
      %v1149 = vsel %vm896, %v1058, 0.0
      %v1150 = vadd.f32 %v1148, %v1149
      %v1151 = vsel %vm896, %v1059, 0.0
      %v1152 = vadd.f32 %v1150, %v1151
      %v1153 = vsel %vm896, %v1060, 0.0
      %v1154 = vadd.f32 %v1152, %v1153
      %v1155 = vsel %vm896, %v1061, 0.0
      %v1156 = vadd.f32 %v1154, %v1155
      %v1157 = vsel %vm896, %v1062, 0.0
      %v1158 = vadd.f32 %v1156, %v1157
      %v1159 = vsel %vm896, %v1063, 0.0
      %v1160 = vadd.f32 %v1158, %v1159
      %v1161 = vsel %vm896, %v1064, 0.0
      %v1162 = vadd.f32 %v1160, %v1161
      %v1163 = vsel %vm896, %v1065, 0.0
      %v1164 = vadd.f32 %v1162, %v1163
      %v1165 = vsel %vm896, %v1066, 0.0
      %v1166 = vadd.f32 %v1164, %v1165
      %v1167 = vsel %vm896, %v1067, 0.0
      %v1168 = vadd.f32 %v1166, %v1167
      %v1169 = vsel %vm896, %v1068, 0.0
      %v1170 = vadd.f32 %v1168, %v1169
      %v1171 = vsel %vm896, %v1069, 0.0
      %v1172 = vadd.f32 %v1170, %v1171
      %v1173 = vsel %vm896, %v1070, 0.0
      %v1174 = vadd.f32 %v1172, %v1173
      %v1175 = vsel %vm896, %v1071, 0.0
      %v1176 = vadd.f32 %v1174, %v1175
      %v1177 = vsel %vm896, %v1072, 0.0
      %v1178 = vadd.f32 %v1176, %v1177
      %v1179 = vsel %vm896, %v1073, 0.0
      %v1180 = vadd.f32 %v1178, %v1179
      %v1181 = vsel %vm896, %v1074, 0.0
      %v1182 = vadd.f32 %v1180, %v1181
      %v1183 = vsel %vm896, %v1075, 0.0
      %v1184 = vadd.f32 %v1182, %v1183
      %v1185 = vsel %vm896, %v1076, 0.0
      %v1186 = vadd.f32 %v1184, %v1185
      %v1187 = vsel %vm896, %v1077, 0.0
      %v1188 = vadd.f32 %v1186, %v1187
      %v1189 = vsel %vm896, %v1078, 0.0
      %v1190 = vadd.f32 %v1188, %v1189
      %v1191 = vsel %vm896, %v1079, 0.0
      %v1192 = vadd.f32 %v1190, %v1191
      %v1193 = vsel %vm896, %v1080, 0.0
      %v1194 = vadd.f32 %v1192, %v1193
      %v1195 = vsel %vm896, %v1081, 0.0
      %v1196 = vadd.f32 %v1194, %v1195
      %v1197 = vsel %vm896, %v1082, 0.0
      %v1198 = vadd.f32 %v1196, %v1197
      %v1199 = vsel %vm896, %v1083, 0.0
      %v1200 = vadd.f32 %v1198, %v1199
      %v1201 = vsel %vm896, %v1084, 0.0
      %v1202 = vadd.f32 %v1200, %v1201
      %v1203 = vsel %vm896, %v1085, 0.0
      %v1204 = vadd.f32 %v1202, %v1203
      %v1205 = vsel %vm896, %v1086, 0.0
      %v1206 = vadd.f32 %v1204, %v1205
      %v1207 = vsel %vm896, %v1087, 0.0
      %v1208 = vadd.f32 %v1206, %v1207
      %v1209 = vsel %vm896, %v1088, 0.0
      %v1210 = vadd.f32 %v1208, %v1209
      %v1211 = vsel %vm896, %v1089, 0.0
      %v1212 = vadd.f32 %v1210, %v1211
      %v1213 = vsel %vm896, %v1090, 0.0
      %v1214 = vadd.f32 %v1212, %v1213
      %v1215 = vsel %vm896, %v1091, 0.0
      %v1216 = vadd.f32 %v1214, %v1215
      %v1217 = vsel %vm896, %v1092, 0.0
      %v1218 = vadd.f32 %v1216, %v1217
      %v1219 = vsel %vm896, %v1093, 0.0
      %v1220 = vadd.f32 %v1218, %v1219
      %v1221 = vrot.slane %v1220, 4
      %v1222 = vadd.f32 %v1220, %v1221
      %v1223 = vrot.slane %v1222, 2
      %v1224 = vadd.f32 %v1222, %v1223
      %v1225 = vrot.slane %v1224, 1
      %v1226 = vadd.f32 %v1224, %v1225
      %vm1227 = vcmask 1040384
      %v1228 = vsel %vm1227, %v1029, %v1226
      %v1230 = vsel %vm896, %v1228, 0
      %1232 = vmatprep.subr.mxu0 0.0
      %1233 = vmatpush1.msra.mxu0 %v253
      %1234 = vmatprep.subr.mxu0 0.0
      %1235 = vmatpush1.msra.mxu0 %v254
      %1236 = vmatprep.subr.mxu0 0.0
      %1237 = vmatpush1.msra.mxu0 %v255
      %1238 = vmatprep.subr.mxu0 0.0
      %1239 = vmatpush1.msra.mxu0 %v256
      %1240 = vmatprep.subr.mxu0 0.0
      %1241 = vmatpush1.msra.mxu0 %v257
      %1242 = vmatprep.subr.mxu0 0.0
      %1243 = vmatpush1.msra.mxu0 %v258
      %1244 = vmatprep.subr.mxu0 0.0
      %1245 = vmatpush1.msra.mxu0 %v259
      %1246 = vmatprep.subr.mxu0 0.0
      %1247 = vmatpush1.msra.mxu0 %v260
      %1248 = vmatprep.subr.mxu0 0.0
      %1249 = vmatpush1.msra.mxu0 0.0
      %1250 = vmatprep.subr.mxu0 0.0
      %1251 = vmatpush1.msra.mxu0 0.0
      %1252 = vmatprep.subr.mxu0 0.0
      %1253 = vmatpush1.msra.mxu0 0.0
      %1254 = vmatprep.subr.mxu0 0.0
      %1255 = vmatpush1.msra.mxu0 0.0
      %1256 = vmatprep.subr.mxu0 0.0
      %1257 = vmatpush1.msra.mxu0 0.0
      %1258 = vmatprep.subr.mxu0 0.0
      %1259 = vmatpush1.msra.mxu0 0.0
      %1260 = vmatprep.subr.mxu0 0.0
      %1261 = vmatpush1.msra.mxu0 0.0
      %1262 = vmatprep.subr.mxu0 0.0
      %1263 = vmatpush1.msra.mxu0 0.0
      %1264 = vmatprep.subr.mxu0 0.0
      %1265 = vmatpush1.msra.mxu0 0.0
      %1266 = vmatprep.subr.mxu0 0.0
      %1267 = vmatpush1.msra.mxu0 0.0
      %1268 = vmatprep.subr.mxu0 0.0
      %1269 = vmatpush1.msra.mxu0 0.0
      %1270 = vmatprep.subr.mxu0 0.0
      %1271 = vmatpush1.msra.mxu0 0.0
      %1272 = vmatprep.subr.mxu0 0.0
      %1273 = vmatpush1.msra.mxu0 0.0
      %1274 = vmatprep.subr.mxu0 0.0
      %1275 = vmatpush1.msra.mxu0 0.0
      %1276 = vmatprep.subr.mxu0 0.0
      %1277 = vmatpush1.msra.mxu0 0.0
      %1278 = vmatprep.subr.mxu0 0.0
      %1279 = vmatpush1.msra.mxu0 0.0
      %1280 = vmatprep.subr.mxu0 0.0
      %1281 = vmatpush1.msra.mxu0 0.0
      %1282 = vmatprep.subr.mxu0 0.0
      %1283 = vmatpush1.msra.mxu0 0.0
      %1284 = vmatprep.subr.mxu0 0.0
      %1285 = vmatpush1.msra.mxu0 0.0
      %1286 = vmatprep.subr.mxu0 0.0
      %1287 = vmatpush1.msra.mxu0 0.0
      %1288 = vmatprep.subr.mxu0 0.0
      %1289 = vmatpush1.msra.mxu0 0.0
      %1290 = vmatprep.subr.mxu0 0.0
      %1291 = vmatpush1.msra.mxu0 0.0
      %1292 = vmatprep.subr.mxu0 0.0
      %1293 = vmatpush1.msra.mxu0 0.0
      %1294 = vmatprep.subr.mxu0 0.0
      %1295 = vmatpush1.msra.mxu0 0.0
      %1296 = vmatprep.mubr.f32.mxu0 0.0
      %1297 = vmatmul.mubr.f32.gmra.mrb[0].mxu0 %v1230
      %v1298 = vpop.f32.mrb[0].mxu0
      %v1299 = vadd.f32 0.0, %v1298
      %v1300 = vpop.f32.mrb[0].mxu0
      %1301 = vdwg.mxu0
      %v1302 = vrcp.pop 1024.0
      %v1303 = vmul.f32 %v1299, %v1302
      %v1304 = vmul.f32 %v1303, %v1303
      %v1306 = vrot.slane %v1304, 7
      %v1308 = vsub.f32 %v1303, %v1306
      %v1309 = vmax.f32 %v1308, 0.0
      %v1310 = vadd.f32 %v1309, 1e-05
      %v1311 = vrsqrt.pop %v1310
      %v1312 = vsel %vm1227, %v1303, %v1311
      %vm1313 = vcmask 261120
      %v1315 = vsel %vm1313, %v1312, 0
      %1317 = vmatprep.subr.mxu0 0.0
      %1318 = vmatpush1.msra.mxu0 %v261
      %1319 = vmatprep.subr.mxu0 0.0
      %1320 = vmatpush1.msra.mxu0 %v262
      %1321 = vmatprep.subr.mxu0 0.0
      %1322 = vmatpush1.msra.mxu0 %v263
      %1323 = vmatprep.subr.mxu0 0.0
      %1324 = vmatpush1.msra.mxu0 %v264
      %1325 = vmatprep.subr.mxu0 0.0
      %1326 = vmatpush1.msra.mxu0 0.0
      %1327 = vmatprep.subr.mxu0 0.0
      %1328 = vmatpush1.msra.mxu0 0.0
      %1329 = vmatprep.subr.mxu0 0.0
      %1330 = vmatpush1.msra.mxu0 0.0
      %1331 = vmatprep.subr.mxu0 0.0
      %1332 = vmatpush1.msra.mxu0 0.0
      %1333 = vmatprep.subr.mxu0 0.0
      %1334 = vmatpush1.msra.mxu0 0.0
      %1335 = vmatprep.subr.mxu0 0.0
      %1336 = vmatpush1.msra.mxu0 0.0
      %1337 = vmatprep.subr.mxu0 0.0
      %1338 = vmatpush1.msra.mxu0 0.0
      %1339 = vmatprep.subr.mxu0 0.0
      %1340 = vmatpush1.msra.mxu0 0.0
      %1341 = vmatprep.subr.mxu0 0.0
      %1342 = vmatpush1.msra.mxu0 0.0
      %1343 = vmatprep.subr.mxu0 0.0
      %1344 = vmatpush1.msra.mxu0 0.0
      %1345 = vmatprep.subr.mxu0 0.0
      %1346 = vmatpush1.msra.mxu0 0.0
      %1347 = vmatprep.subr.mxu0 0.0
      %1348 = vmatpush1.msra.mxu0 0.0
      %1349 = vmatprep.subr.mxu0 0.0
      %1350 = vmatpush1.msra.mxu0 0.0
      %1351 = vmatprep.subr.mxu0 0.0
      %1352 = vmatpush1.msra.mxu0 0.0
      %1353 = vmatprep.subr.mxu0 0.0
      %1354 = vmatpush1.msra.mxu0 0.0
      %1355 = vmatprep.subr.mxu0 0.0
      %1356 = vmatpush1.msra.mxu0 0.0
      %1357 = vmatprep.subr.mxu0 0.0
      %1358 = vmatpush1.msra.mxu0 0.0
      %1359 = vmatprep.subr.mxu0 0.0
      %1360 = vmatpush1.msra.mxu0 0.0
      %1361 = vmatprep.subr.mxu0 0.0
      %1362 = vmatpush1.msra.mxu0 0.0
      %1363 = vmatprep.subr.mxu0 0.0
      %1364 = vmatpush1.msra.mxu0 0.0
      %1365 = vmatprep.subr.mxu0 0.0
      %1366 = vmatpush1.msra.mxu0 0.0
      %1367 = vmatprep.subr.mxu0 0.0
      %1368 = vmatpush1.msra.mxu0 0.0
      %1369 = vmatprep.subr.mxu0 0.0
      %1370 = vmatpush1.msra.mxu0 0.0
      %1371 = vmatprep.subr.mxu0 0.0
      %1372 = vmatpush1.msra.mxu0 0.0
      %1373 = vmatprep.subr.mxu0 0.0
      %1374 = vmatpush1.msra.mxu0 0.0
      %1375 = vmatprep.subr.mxu0 0.0
      %1376 = vmatpush1.msra.mxu0 0.0
      %1377 = vmatprep.subr.mxu0 0.0
      %1378 = vmatpush1.msra.mxu0 0.0
      %1379 = vmatprep.subr.mxu0 0.0
      %1380 = vmatpush1.msra.mxu0 0.0
      %1381 = vmatprep.mubr.f32.mxu0 0.0
      %1382 = vmatmul.mubr.f32.gmra.mrb[0].mxu0 %v1315
      %v1383 = vpop.f32.mrb[0].mxu0
      %v1384 = vadd.f32 0.0, %v1383
      %v1385 = vpop.f32.mrb[0].mxu0
      %1386 = vdwg.mxu0
      %v1387 = vmul.f32 %v1384, %v265
      %v1389 = vrot.slane %v1387, 1
      %v1391 = vmul.f32 %v1384, %v1389
      %v1393 = vrot.slane %v1391, 6
      %v1395 = vsub.f32 %v265, %v1393
      %v1396 = vlaneseq
      %v1397 = vshrl.u32 %v1396, 7
      %v1398 = vsub.s32 1, %v1397
      %v1399 = vrot.slane %v1387, %v1398
      %v1400 = vmul.f32 %v642, %v1399
      %v1401 = vmul.f32 %v645, %v1399
      %v1402 = vmul.f32 %v650, %v1399
      %v1403 = vmul.f32 %v653, %v1399
      %v1404 = vmul.f32 %v658, %v1399
      %v1405 = vmul.f32 %v661, %v1399
      %v1406 = vmul.f32 %v666, %v1399
      %v1407 = vmul.f32 %v669, %v1399
      %v1408 = vmul.f32 %v674, %v1399
      %v1409 = vmul.f32 %v677, %v1399
      %v1410 = vmul.f32 %v682, %v1399
      %v1411 = vmul.f32 %v685, %v1399
      %v1412 = vmul.f32 %v690, %v1399
      %v1413 = vmul.f32 %v693, %v1399
      %v1414 = vmul.f32 %v698, %v1399
      %v1415 = vmul.f32 %v701, %v1399
      %v1416 = vmul.f32 %v706, %v1399
      %v1417 = vmul.f32 %v709, %v1399
      %v1418 = vmul.f32 %v714, %v1399
      %v1419 = vmul.f32 %v717, %v1399
      %v1420 = vmul.f32 %v722, %v1399
      %v1421 = vmul.f32 %v725, %v1399
      %v1422 = vmul.f32 %v730, %v1399
      %v1423 = vmul.f32 %v733, %v1399
      %v1424 = vmul.f32 %v738, %v1399
      %v1425 = vmul.f32 %v741, %v1399
      %v1426 = vmul.f32 %v746, %v1399
      %v1427 = vmul.f32 %v749, %v1399
      %v1428 = vmul.f32 %v754, %v1399
      %v1429 = vmul.f32 %v757, %v1399
      %v1430 = vmul.f32 %v762, %v1399
      %v1431 = vmul.f32 %v765, %v1399
      %v1432 = vmul.f32 %v770, %v1399
      %v1433 = vmul.f32 %v773, %v1399
      %v1434 = vmul.f32 %v778, %v1399
      %v1435 = vmul.f32 %v781, %v1399
      %v1436 = vmul.f32 %v786, %v1399
      %v1437 = vmul.f32 %v789, %v1399
      %v1438 = vmul.f32 %v794, %v1399
      %v1439 = vmul.f32 %v797, %v1399
      %v1440 = vmul.f32 %v802, %v1399
      %v1441 = vmul.f32 %v805, %v1399
      %v1442 = vmul.f32 %v810, %v1399
      %v1443 = vmul.f32 %v813, %v1399
      %v1444 = vmul.f32 %v818, %v1399
      %v1445 = vmul.f32 %v821, %v1399
      %v1446 = vmul.f32 %v826, %v1399
      %v1447 = vmul.f32 %v829, %v1399
      %v1448 = vmul.f32 %v834, %v1399
      %v1449 = vmul.f32 %v837, %v1399
      %v1450 = vmul.f32 %v842, %v1399
      %v1451 = vmul.f32 %v845, %v1399
      %v1452 = vmul.f32 %v850, %v1399
      %v1453 = vmul.f32 %v853, %v1399
      %v1454 = vmul.f32 %v858, %v1399
      %v1455 = vmul.f32 %v861, %v1399
      %v1456 = vmul.f32 %v866, %v1399
      %v1457 = vmul.f32 %v869, %v1399
      %v1458 = vmul.f32 %v874, %v1399
      %v1459 = vmul.f32 %v877, %v1399
      %v1460 = vmul.f32 %v882, %v1399
      %v1461 = vmul.f32 %v885, %v1399
      %v1462 = vmul.f32 %v890, %v1399
      %v1463 = vmul.f32 %v893, %v1399
      %v1464 = vlaneseq
      %v1465 = vshrl.u32 %v1464, 7
      %v1466 = vsub.s32 2, %v1465
      %v1467 = vrot.slane %v1395, %v1466
      %v1468 = vadd.f32 %v1400, %v1467
      %v1469 = vadd.f32 %v1401, %v1467
      %v1470 = vadd.f32 %v1402, %v1467
      %v1471 = vadd.f32 %v1403, %v1467
      %v1472 = vadd.f32 %v1404, %v1467
      %v1473 = vadd.f32 %v1405, %v1467
      %v1474 = vadd.f32 %v1406, %v1467
      %v1475 = vadd.f32 %v1407, %v1467
      %v1476 = vadd.f32 %v1408, %v1467
      %v1477 = vadd.f32 %v1409, %v1467
      %v1478 = vadd.f32 %v1410, %v1467
      %v1479 = vadd.f32 %v1411, %v1467
      %v1480 = vadd.f32 %v1412, %v1467
      %v1481 = vadd.f32 %v1413, %v1467
      %v1482 = vadd.f32 %v1414, %v1467
      %v1483 = vadd.f32 %v1415, %v1467
      %v1484 = vadd.f32 %v1416, %v1467
      %v1485 = vadd.f32 %v1417, %v1467
      %v1486 = vadd.f32 %v1418, %v1467
      %v1487 = vadd.f32 %v1419, %v1467
      %v1488 = vadd.f32 %v1420, %v1467
      %v1489 = vadd.f32 %v1421, %v1467
      %v1490 = vadd.f32 %v1422, %v1467
      %v1491 = vadd.f32 %v1423, %v1467
      %v1492 = vadd.f32 %v1424, %v1467
      %v1493 = vadd.f32 %v1425, %v1467
      %v1494 = vadd.f32 %v1426, %v1467
      %v1495 = vadd.f32 %v1427, %v1467
      %v1496 = vadd.f32 %v1428, %v1467
      %v1497 = vadd.f32 %v1429, %v1467
      %v1498 = vadd.f32 %v1430, %v1467
      %v1499 = vadd.f32 %v1431, %v1467
      %v1500 = vadd.f32 %v1432, %v1467
      %v1501 = vadd.f32 %v1433, %v1467
      %v1502 = vadd.f32 %v1434, %v1467
      %v1503 = vadd.f32 %v1435, %v1467
      %v1504 = vadd.f32 %v1436, %v1467
      %v1505 = vadd.f32 %v1437, %v1467
      %v1506 = vadd.f32 %v1438, %v1467
      %v1507 = vadd.f32 %v1439, %v1467
      %v1508 = vadd.f32 %v1440, %v1467
      %v1509 = vadd.f32 %v1441, %v1467
      %v1510 = vadd.f32 %v1442, %v1467
      %v1511 = vadd.f32 %v1443, %v1467
      %v1512 = vadd.f32 %v1444, %v1467
      %v1513 = vadd.f32 %v1445, %v1467
      %v1514 = vadd.f32 %v1446, %v1467
      %v1515 = vadd.f32 %v1447, %v1467
      %v1516 = vadd.f32 %v1448, %v1467
      %v1517 = vadd.f32 %v1449, %v1467
      %v1518 = vadd.f32 %v1450, %v1467
      %v1519 = vadd.f32 %v1451, %v1467
      %v1520 = vadd.f32 %v1452, %v1467
      %v1521 = vadd.f32 %v1453, %v1467
      %v1522 = vadd.f32 %v1454, %v1467
      %v1523 = vadd.f32 %v1455, %v1467
      %v1524 = vadd.f32 %v1456, %v1467
      %v1525 = vadd.f32 %v1457, %v1467
      %v1526 = vadd.f32 %v1458, %v1467
      %v1527 = vadd.f32 %v1459, %v1467
      %v1528 = vadd.f32 %v1460, %v1467
      %v1529 = vadd.f32 %v1461, %v1467
      %v1530 = vadd.f32 %v1462, %v1467
      %v1531 = vadd.f32 %v1463, %v1467
      %vm1532 = vcmp.ge.f32.partialorder %v1468, 0.0
      %vm1533 = vcmp.ge.f32.partialorder %v1469, 0.0
      %vm1534 = vcmp.ge.f32.partialorder %v1470, 0.0
      %vm1535 = vcmp.ge.f32.partialorder %v1471, 0.0
      %vm1536 = vcmp.ge.f32.partialorder %v1472, 0.0
      %vm1537 = vcmp.ge.f32.partialorder %v1473, 0.0
      %vm1538 = vcmp.ge.f32.partialorder %v1474, 0.0
      %vm1539 = vcmp.ge.f32.partialorder %v1475, 0.0
      %vm1540 = vcmp.ge.f32.partialorder %v1476, 0.0
      %vm1541 = vcmp.ge.f32.partialorder %v1477, 0.0
      %vm1542 = vcmp.ge.f32.partialorder %v1478, 0.0
      %vm1543 = vcmp.ge.f32.partialorder %v1479, 0.0
      %vm1544 = vcmp.ge.f32.partialorder %v1480, 0.0
      %vm1545 = vcmp.ge.f32.partialorder %v1481, 0.0
      %vm1546 = vcmp.ge.f32.partialorder %v1482, 0.0
      %vm1547 = vcmp.ge.f32.partialorder %v1483, 0.0
      %vm1548 = vcmp.ge.f32.partialorder %v1484, 0.0
      %vm1549 = vcmp.ge.f32.partialorder %v1485, 0.0
      %vm1550 = vcmp.ge.f32.partialorder %v1486, 0.0
      %vm1551 = vcmp.ge.f32.partialorder %v1487, 0.0
      %vm1552 = vcmp.ge.f32.partialorder %v1488, 0.0
      %vm1553 = vcmp.ge.f32.partialorder %v1489, 0.0
      %vm1554 = vcmp.ge.f32.partialorder %v1490, 0.0
      %vm1555 = vcmp.ge.f32.partialorder %v1491, 0.0
      %vm1556 = vcmp.ge.f32.partialorder %v1492, 0.0
      %vm1557 = vcmp.ge.f32.partialorder %v1493, 0.0
      %vm1558 = vcmp.ge.f32.partialorder %v1494, 0.0
      %vm1559 = vcmp.ge.f32.partialorder %v1495, 0.0
      %vm1560 = vcmp.ge.f32.partialorder %v1496, 0.0
      %vm1561 = vcmp.ge.f32.partialorder %v1497, 0.0
      %vm1562 = vcmp.ge.f32.partialorder %v1498, 0.0
      %vm1563 = vcmp.ge.f32.partialorder %v1499, 0.0
      %vm1564 = vcmp.ge.f32.partialorder %v1500, 0.0
      %vm1565 = vcmp.ge.f32.partialorder %v1501, 0.0
      %vm1566 = vcmp.ge.f32.partialorder %v1502, 0.0
      %vm1567 = vcmp.ge.f32.partialorder %v1503, 0.0
      %vm1568 = vcmp.ge.f32.partialorder %v1504, 0.0
      %vm1569 = vcmp.ge.f32.partialorder %v1505, 0.0
      %vm1570 = vcmp.ge.f32.partialorder %v1506, 0.0
      %vm1571 = vcmp.ge.f32.partialorder %v1507, 0.0
      %vm1572 = vcmp.ge.f32.partialorder %v1508, 0.0
      %vm1573 = vcmp.ge.f32.partialorder %v1509, 0.0
      %vm1574 = vcmp.ge.f32.partialorder %v1510, 0.0
      %vm1575 = vcmp.ge.f32.partialorder %v1511, 0.0
      %vm1576 = vcmp.ge.f32.partialorder %v1512, 0.0
      %vm1577 = vcmp.ge.f32.partialorder %v1513, 0.0
      %vm1578 = vcmp.ge.f32.partialorder %v1514, 0.0
      %vm1579 = vcmp.ge.f32.partialorder %v1515, 0.0
      %vm1580 = vcmp.ge.f32.partialorder %v1516, 0.0
      %vm1581 = vcmp.ge.f32.partialorder %v1517, 0.0
      %vm1582 = vcmp.ge.f32.partialorder %v1518, 0.0
      %vm1583 = vcmp.ge.f32.partialorder %v1519, 0.0
      %vm1584 = vcmp.ge.f32.partialorder %v1520, 0.0
      %vm1585 = vcmp.ge.f32.partialorder %v1521, 0.0
      %vm1586 = vcmp.ge.f32.partialorder %v1522, 0.0
      %vm1587 = vcmp.ge.f32.partialorder %v1523, 0.0
      %vm1588 = vcmp.ge.f32.partialorder %v1524, 0.0
      %vm1589 = vcmp.ge.f32.partialorder %v1525, 0.0
      %vm1590 = vcmp.ge.f32.partialorder %v1526, 0.0
      %vm1591 = vcmp.ge.f32.partialorder %v1527, 0.0
      %vm1592 = vcmp.ge.f32.partialorder %v1528, 0.0
      %vm1593 = vcmp.ge.f32.partialorder %v1529, 0.0
      %vm1594 = vcmp.ge.f32.partialorder %v1530, 0.0
      %vm1595 = vcmp.ge.f32.partialorder %v1531, 0.0
      %v1596 = vmul.f32 %v1468, 0.2
      %v1597 = vmul.f32 %v1469, 0.2
      %v1598 = vmul.f32 %v1470, 0.2
      %v1599 = vmul.f32 %v1471, 0.2
      %v1600 = vmul.f32 %v1472, 0.2
      %v1601 = vmul.f32 %v1473, 0.2
      %v1602 = vmul.f32 %v1474, 0.2
      %v1603 = vmul.f32 %v1475, 0.2
      %v1604 = vmul.f32 %v1476, 0.2
      %v1605 = vmul.f32 %v1477, 0.2
      %v1606 = vmul.f32 %v1478, 0.2
      %v1607 = vmul.f32 %v1479, 0.2
      %v1608 = vmul.f32 %v1480, 0.2
      %v1609 = vmul.f32 %v1481, 0.2
      %v1610 = vmul.f32 %v1482, 0.2
      %v1611 = vmul.f32 %v1483, 0.2
      %v1612 = vmul.f32 %v1484, 0.2
      %v1613 = vmul.f32 %v1485, 0.2
      %v1614 = vmul.f32 %v1486, 0.2
      %v1615 = vmul.f32 %v1487, 0.2
      %v1616 = vmul.f32 %v1488, 0.2
      %v1617 = vmul.f32 %v1489, 0.2
      %v1618 = vmul.f32 %v1490, 0.2
      %v1619 = vmul.f32 %v1491, 0.2
      %v1620 = vmul.f32 %v1492, 0.2
      %v1621 = vmul.f32 %v1493, 0.2
      %v1622 = vmul.f32 %v1494, 0.2
      %v1623 = vmul.f32 %v1495, 0.2
      %v1624 = vmul.f32 %v1496, 0.2
      %v1625 = vmul.f32 %v1497, 0.2
      %v1626 = vmul.f32 %v1498, 0.2
      %v1627 = vmul.f32 %v1499, 0.2
      %v1628 = vmul.f32 %v1500, 0.2
      %v1629 = vmul.f32 %v1501, 0.2
      %v1630 = vmul.f32 %v1502, 0.2
      %v1631 = vmul.f32 %v1503, 0.2
      %v1632 = vmul.f32 %v1504, 0.2
      %v1633 = vmul.f32 %v1505, 0.2
      %v1634 = vmul.f32 %v1506, 0.2
      %v1635 = vmul.f32 %v1507, 0.2
      %v1636 = vmul.f32 %v1508, 0.2
      %v1637 = vmul.f32 %v1509, 0.2
      %v1638 = vmul.f32 %v1510, 0.2
      %v1639 = vmul.f32 %v1511, 0.2
      %v1640 = vmul.f32 %v1512, 0.2
      %v1641 = vmul.f32 %v1513, 0.2
      %v1642 = vmul.f32 %v1514, 0.2
      %v1643 = vmul.f32 %v1515, 0.2
      %v1644 = vmul.f32 %v1516, 0.2
      %v1645 = vmul.f32 %v1517, 0.2
      %v1646 = vmul.f32 %v1518, 0.2
      %v1647 = vmul.f32 %v1519, 0.2
      %v1648 = vmul.f32 %v1520, 0.2
      %v1649 = vmul.f32 %v1521, 0.2
      %v1650 = vmul.f32 %v1522, 0.2
      %v1651 = vmul.f32 %v1523, 0.2
      %v1652 = vmul.f32 %v1524, 0.2
      %v1653 = vmul.f32 %v1525, 0.2
      %v1654 = vmul.f32 %v1526, 0.2
      %v1655 = vmul.f32 %v1527, 0.2
      %v1656 = vmul.f32 %v1528, 0.2
      %v1657 = vmul.f32 %v1529, 0.2
      %v1658 = vmul.f32 %v1530, 0.2
      %v1659 = vmul.f32 %v1531, 0.2
      %v1660 = vsel %vm1532, %v1468, %v1596
      %v1661 = vsel %vm1533, %v1469, %v1597
      %v1662 = vsel %vm1534, %v1470, %v1598
      %v1663 = vsel %vm1535, %v1471, %v1599
      %v1664 = vsel %vm1536, %v1472, %v1600
      %v1665 = vsel %vm1537, %v1473, %v1601
      %v1666 = vsel %vm1538, %v1474, %v1602
      %v1667 = vsel %vm1539, %v1475, %v1603
      %v1668 = vsel %vm1540, %v1476, %v1604
      %v1669 = vsel %vm1541, %v1477, %v1605
      %v1670 = vsel %vm1542, %v1478, %v1606
      %v1671 = vsel %vm1543, %v1479, %v1607
      %v1672 = vsel %vm1544, %v1480, %v1608
      %v1673 = vsel %vm1545, %v1481, %v1609
      %v1674 = vsel %vm1546, %v1482, %v1610
      %v1675 = vsel %vm1547, %v1483, %v1611
      %v1676 = vsel %vm1548, %v1484, %v1612
      %v1677 = vsel %vm1549, %v1485, %v1613
      %v1678 = vsel %vm1550, %v1486, %v1614
      %v1679 = vsel %vm1551, %v1487, %v1615
      %v1680 = vsel %vm1552, %v1488, %v1616
      %v1681 = vsel %vm1553, %v1489, %v1617
      %v1682 = vsel %vm1554, %v1490, %v1618
      %v1683 = vsel %vm1555, %v1491, %v1619
      %v1684 = vsel %vm1556, %v1492, %v1620
      %v1685 = vsel %vm1557, %v1493, %v1621
      %v1686 = vsel %vm1558, %v1494, %v1622
      %v1687 = vsel %vm1559, %v1495, %v1623
      %v1688 = vsel %vm1560, %v1496, %v1624
      %v1689 = vsel %vm1561, %v1497, %v1625
      %v1690 = vsel %vm1562, %v1498, %v1626
      %v1691 = vsel %vm1563, %v1499, %v1627
      %v1692 = vsel %vm1564, %v1500, %v1628
      %v1693 = vsel %vm1565, %v1501, %v1629
      %v1694 = vsel %vm1566, %v1502, %v1630
      %v1695 = vsel %vm1567, %v1503, %v1631
      %v1696 = vsel %vm1568, %v1504, %v1632
      %v1697 = vsel %vm1569, %v1505, %v1633
      %v1698 = vsel %vm1570, %v1506, %v1634
      %v1699 = vsel %vm1571, %v1507, %v1635
      %v1700 = vsel %vm1572, %v1508, %v1636
      %v1701 = vsel %vm1573, %v1509, %v1637
      %v1702 = vsel %vm1574, %v1510, %v1638
      %v1703 = vsel %vm1575, %v1511, %v1639
      %v1704 = vsel %vm1576, %v1512, %v1640
      %v1705 = vsel %vm1577, %v1513, %v1641
      %v1706 = vsel %vm1578, %v1514, %v1642
      %v1707 = vsel %vm1579, %v1515, %v1643
      %v1708 = vsel %vm1580, %v1516, %v1644
      %v1709 = vsel %vm1581, %v1517, %v1645
      %v1710 = vsel %vm1582, %v1518, %v1646
      %v1711 = vsel %vm1583, %v1519, %v1647
      %v1712 = vsel %vm1584, %v1520, %v1648
      %v1713 = vsel %vm1585, %v1521, %v1649
      %v1714 = vsel %vm1586, %v1522, %v1650
      %v1715 = vsel %vm1587, %v1523, %v1651
      %v1716 = vsel %vm1588, %v1524, %v1652
      %v1717 = vsel %vm1589, %v1525, %v1653
      %v1718 = vsel %vm1590, %v1526, %v1654
      %v1719 = vsel %vm1591, %v1527, %v1655
      %v1720 = vsel %vm1592, %v1528, %v1656
      %v1721 = vsel %vm1593, %v1529, %v1657
      %v1722 = vsel %vm1594, %v1530, %v1658
      %v1723 = vsel %vm1595, %v1531, %v1659
      %v1724 = vpack.c.bf16 %v1661, %v1660
      %v1725 = vpack.c.bf16 %v1663, %v1662
      %v1726 = vpack.c.bf16 %v1665, %v1664
      %v1727 = vpack.c.bf16 %v1667, %v1666
      %v1728 = vpack.c.bf16 %v1669, %v1668
      %v1729 = vpack.c.bf16 %v1671, %v1670
      %v1730 = vpack.c.bf16 %v1673, %v1672
      %v1731 = vpack.c.bf16 %v1675, %v1674
      %v1732 = vpack.c.bf16 %v1677, %v1676
      %v1733 = vpack.c.bf16 %v1679, %v1678
      %v1734 = vpack.c.bf16 %v1681, %v1680
      %v1735 = vpack.c.bf16 %v1683, %v1682
      %v1736 = vpack.c.bf16 %v1685, %v1684
      %v1737 = vpack.c.bf16 %v1687, %v1686
      %v1738 = vpack.c.bf16 %v1689, %v1688
      %v1739 = vpack.c.bf16 %v1691, %v1690
      %v1740 = vpack.c.bf16 %v1693, %v1692
      %v1741 = vpack.c.bf16 %v1695, %v1694
      %v1742 = vpack.c.bf16 %v1697, %v1696
      %v1743 = vpack.c.bf16 %v1699, %v1698
      %v1744 = vpack.c.bf16 %v1701, %v1700
      %v1745 = vpack.c.bf16 %v1703, %v1702
      %v1746 = vpack.c.bf16 %v1705, %v1704
      %v1747 = vpack.c.bf16 %v1707, %v1706
      %v1748 = vpack.c.bf16 %v1709, %v1708
      %v1749 = vpack.c.bf16 %v1711, %v1710
      %v1750 = vpack.c.bf16 %v1713, %v1712
      %v1751 = vpack.c.bf16 %v1715, %v1714
      %v1752 = vpack.c.bf16 %v1717, %v1716
      %v1753 = vpack.c.bf16 %v1719, %v1718
      %v1754 = vpack.c.bf16 %v1721, %v1720
      %v1755 = vpack.c.bf16 %v1723, %v1722
      %v1756 = vld [vmem:[%s2] sm:$0xf]
      %v1757 = vld [vmem:[%s2 + $0x4] sm:$0xf]
      %v1758 = vld [vmem:[%s2 + $0x8] sm:$0xf]
      %v1759 = vld [vmem:[%s2 + $0xc] sm:$0xf]
      %v1760 = vld [vmem:[%s2 + $0x10] sm:$0xf]
      %v1761 = vld [vmem:[%s2 + $0x14] sm:$0xf]
      %v1762 = vld [vmem:[%s2 + $0x18] sm:$0xf]
      %v1763 = vld [vmem:[%s2 + $0x1c] sm:$0xf]
      %v1764 = vlaneseq
      %v1765 = vshrl.u32 %v1764, 7
      %v1766 = vsub.s32 3, %v1765
      %v1767 = vrot.slane %v265, %v1766
      %v1776 = vunpack.c.l.b16 %v1756
      %v1777 = vunpack.c.l.b16 %v1757
      %v1778 = vunpack.c.l.b16 %v1758
      %v1779 = vunpack.c.l.b16 %v1759
      %v1780 = vunpack.c.l.b16 %v1760
      %v1781 = vunpack.c.l.b16 %v1761
      %v1782 = vunpack.c.l.b16 %v1762
      %v1783 = vunpack.c.l.b16 %v1763
      %v1784 = vpack.c.b16 %v1777, %v1776
      %v1785 = vpack.c.b16 %v1779, %v1778
      %v1786 = vpack.c.b16 %v1781, %v1780
      %v1787 = vpack.c.b16 %v1783, %v1782
      %v1793 = vsel %vm896, %v1724, 0
      %v1796 = vsel %vm896, %v1725, 0
      %v1799 = vsel %vm896, %v1726, 0
      %v1802 = vsel %vm896, %v1727, 0
      %v1805 = vsel %vm896, %v1728, 0
      %v1808 = vsel %vm896, %v1729, 0
      %v1811 = vsel %vm896, %v1730, 0
      %v1814 = vsel %vm896, %v1731, 0
      %v1817 = vsel %vm896, %v1732, 0
      %v1820 = vsel %vm896, %v1733, 0
      %v1823 = vsel %vm896, %v1734, 0
      %v1826 = vsel %vm896, %v1735, 0
      %v1829 = vsel %vm896, %v1736, 0
      %v1832 = vsel %vm896, %v1737, 0
      %v1835 = vsel %vm896, %v1738, 0
      %v1838 = vsel %vm896, %v1739, 0
      %v1841 = vsel %vm896, %v1740, 0
      %v1844 = vsel %vm896, %v1741, 0
      %v1847 = vsel %vm896, %v1742, 0
      %v1850 = vsel %vm896, %v1743, 0
      %v1853 = vsel %vm896, %v1744, 0
      %v1856 = vsel %vm896, %v1745, 0
      %v1859 = vsel %vm896, %v1746, 0
      %v1862 = vsel %vm896, %v1747, 0
      %v1865 = vsel %vm896, %v1748, 0
      %v1868 = vsel %vm896, %v1749, 0
      %v1871 = vsel %vm896, %v1750, 0
      %v1874 = vsel %vm896, %v1751, 0
      %v1877 = vsel %vm896, %v1752, 0
      %v1880 = vsel %vm896, %v1753, 0
      %v1883 = vsel %vm896, %v1754, 0
      %v1886 = vsel %vm896, %v1755, 0
      %1888 = vmatprep.subr.bf16.mxu0 0
      %1889 = vmatpush1.bf16.msra.mxu0 %v1784
      %1890 = vmatprep.subr.bf16.mxu0 0
      %1891 = vmatpush1.bf16.msra.mxu0 %v1785
      %1892 = vmatprep.subr.bf16.mxu0 0
      %1893 = vmatpush1.bf16.msra.mxu0 %v1786
      %1894 = vmatprep.subr.bf16.mxu0 0
      %1895 = vmatpush1.bf16.msra.mxu0 %v1787
      %1896 = vmatprep.subr.bf16.mxu0 0
      %1897 = vmatpush1.bf16.msra.mxu0 0
      %1898 = vmatprep.subr.bf16.mxu0 0
      %1899 = vmatpush1.bf16.msra.mxu0 0
      %1900 = vmatprep.subr.bf16.mxu0 0
      %1901 = vmatpush1.bf16.msra.mxu0 0
      %1902 = vmatprep.subr.bf16.mxu0 0
      %1903 = vmatpush1.bf16.msra.mxu0 0
      %1904 = vmatprep.subr.bf16.mxu0 0
      %1905 = vmatpush1.bf16.msra.mxu0 0
      %1906 = vmatprep.subr.bf16.mxu0 0
      %1907 = vmatpush1.bf16.msra.mxu0 0
      %1908 = vmatprep.subr.bf16.mxu0 0
      %1909 = vmatpush1.bf16.msra.mxu0 0
      %1910 = vmatprep.subr.bf16.mxu0 0
      %1911 = vmatpush1.bf16.msra.mxu0 0
      %1912 = vmatprep.subr.bf16.mxu0 0
      %1913 = vmatpush1.bf16.msra.mxu0 0
      %1914 = vmatprep.subr.bf16.mxu0 0
      %1915 = vmatpush1.bf16.msra.mxu0 0
      %1916 = vmatprep.subr.bf16.mxu0 0
      %1917 = vmatpush1.bf16.msra.mxu0 0
      %1918 = vmatprep.subr.bf16.mxu0 0
      %1919 = vmatpush1.bf16.msra.mxu0 0
      %1920 = vmatprep.mubr.bf16.mxu0 0
      %1921 = vmatmul.mubr.bf16.gmra.mrb[0].mxu0 %v1793
      %v1922 = vpop.f32.mrb[0].mxu0
      %v1923 = vadd.f32 %v1767, %v1922
      %v1924 = vpop.f32.mrb[0].mxu0
      %v1925 = vpop.f32.mrb[0].mxu0
      %v1926 = vadd.f32 %v1767, %v1925
      %v1927 = vpop.f32.mrb[0].mxu0
      %1928 = vmatprep.mubr.bf16.mxu0 0
      %1929 = vmatmul.mubr.bf16.gmra.mrb[0].mxu0 %v1796
      %v1930 = vpop.f32.mrb[0].mxu0
      %v1931 = vadd.f32 %v1767, %v1930
      %v1932 = vpop.f32.mrb[0].mxu0
      %v1933 = vpop.f32.mrb[0].mxu0
      %v1934 = vadd.f32 %v1767, %v1933
      %v1935 = vpop.f32.mrb[0].mxu0
      %1936 = vmatprep.mubr.bf16.mxu0 0
      %1937 = vmatmul.mubr.bf16.gmra.mrb[0].mxu0 %v1799
      %v1938 = vpop.f32.mrb[0].mxu0
      %v1939 = vadd.f32 %v1767, %v1938
      %v1940 = vpop.f32.mrb[0].mxu0
      %v1941 = vpop.f32.mrb[0].mxu0
      %v1942 = vadd.f32 %v1767, %v1941
      %v1943 = vpop.f32.mrb[0].mxu0
      %1944 = vmatprep.mubr.bf16.mxu0 0
      %1945 = vmatmul.mubr.bf16.gmra.mrb[0].mxu0 %v1802
      %v1946 = vpop.f32.mrb[0].mxu0
      %v1947 = vadd.f32 %v1767, %v1946
      %v1948 = vpop.f32.mrb[0].mxu0
      %v1949 = vpop.f32.mrb[0].mxu0
      %v1950 = vadd.f32 %v1767, %v1949
      %v1951 = vpop.f32.mrb[0].mxu0
      %1952 = vmatprep.mubr.bf16.mxu0 0
      %1953 = vmatmul.mubr.bf16.gmra.mrb[0].mxu0 %v1805
      %v1954 = vpop.f32.mrb[0].mxu0
      %v1955 = vadd.f32 %v1767, %v1954
      %v1956 = vpop.f32.mrb[0].mxu0
      %v1957 = vpop.f32.mrb[0].mxu0
      %v1958 = vadd.f32 %v1767, %v1957
      %v1959 = vpop.f32.mrb[0].mxu0
      %1960 = vmatprep.mubr.bf16.mxu0 0
      %1961 = vmatmul.mubr.bf16.gmra.mrb[0].mxu0 %v1808
      %v1962 = vpop.f32.mrb[0].mxu0
      %v1963 = vadd.f32 %v1767, %v1962
      %v1964 = vpop.f32.mrb[0].mxu0
      %v1965 = vpop.f32.mrb[0].mxu0
      %v1966 = vadd.f32 %v1767, %v1965
      %v1967 = vpop.f32.mrb[0].mxu0
      %1968 = vmatprep.mubr.bf16.mxu0 0
      %1969 = vmatmul.mubr.bf16.gmra.mrb[0].mxu0 %v1811
      %v1970 = vpop.f32.mrb[0].mxu0
      %v1971 = vadd.f32 %v1767, %v1970
      %v1972 = vpop.f32.mrb[0].mxu0
      %v1973 = vpop.f32.mrb[0].mxu0
      %v1974 = vadd.f32 %v1767, %v1973
      %v1975 = vpop.f32.mrb[0].mxu0
      %1976 = vmatprep.mubr.bf16.mxu0 0
      %1977 = vmatmul.mubr.bf16.gmra.mrb[0].mxu0 %v1814
      %v1978 = vpop.f32.mrb[0].mxu0
      %v1979 = vadd.f32 %v1767, %v1978
      %v1980 = vpop.f32.mrb[0].mxu0
      %v1981 = vpop.f32.mrb[0].mxu0
      %v1982 = vadd.f32 %v1767, %v1981
      %v1983 = vpop.f32.mrb[0].mxu0
      %1984 = vmatprep.mubr.bf16.mxu0 0
      %1985 = vmatmul.mubr.bf16.gmra.mrb[0].mxu0 %v1817
      %v1986 = vpop.f32.mrb[0].mxu0
      %v1987 = vadd.f32 %v1767, %v1986
      %v1988 = vpop.f32.mrb[0].mxu0
      %v1989 = vpop.f32.mrb[0].mxu0
      %v1990 = vadd.f32 %v1767, %v1989
      %v1991 = vpop.f32.mrb[0].mxu0
      %1992 = vmatprep.mubr.bf16.mxu0 0
      %1993 = vmatmul.mubr.bf16.gmra.mrb[0].mxu0 %v1820
      %v1994 = vpop.f32.mrb[0].mxu0
      %v1995 = vadd.f32 %v1767, %v1994
      %v1996 = vpop.f32.mrb[0].mxu0
      %v1997 = vpop.f32.mrb[0].mxu0
      %v1998 = vadd.f32 %v1767, %v1997
      %v1999 = vpop.f32.mrb[0].mxu0
      %2000 = vmatprep.mubr.bf16.mxu0 0
      %2001 = vmatmul.mubr.bf16.gmra.mrb[0].mxu0 %v1823
      %v2002 = vpop.f32.mrb[0].mxu0
      %v2003 = vadd.f32 %v1767, %v2002
      %v2004 = vpop.f32.mrb[0].mxu0
      %v2005 = vpop.f32.mrb[0].mxu0
      %v2006 = vadd.f32 %v1767, %v2005
      %v2007 = vpop.f32.mrb[0].mxu0
      %2008 = vmatprep.mubr.bf16.mxu0 0
      %2009 = vmatmul.mubr.bf16.gmra.mrb[0].mxu0 %v1826
      %v2010 = vpop.f32.mrb[0].mxu0
      %v2011 = vadd.f32 %v1767, %v2010
      %v2012 = vpop.f32.mrb[0].mxu0
      %v2013 = vpop.f32.mrb[0].mxu0
      %v2014 = vadd.f32 %v1767, %v2013
      %v2015 = vpop.f32.mrb[0].mxu0
      %2016 = vmatprep.mubr.bf16.mxu0 0
      %2017 = vmatmul.mubr.bf16.gmra.mrb[0].mxu0 %v1829
      %v2018 = vpop.f32.mrb[0].mxu0
      %v2019 = vadd.f32 %v1767, %v2018
      %v2020 = vpop.f32.mrb[0].mxu0
      %v2021 = vpop.f32.mrb[0].mxu0
      %v2022 = vadd.f32 %v1767, %v2021
      %v2023 = vpop.f32.mrb[0].mxu0
      %2024 = vmatprep.mubr.bf16.mxu0 0
      %2025 = vmatmul.mubr.bf16.gmra.mrb[0].mxu0 %v1832
      %v2026 = vpop.f32.mrb[0].mxu0
      %v2027 = vadd.f32 %v1767, %v2026
      %v2028 = vpop.f32.mrb[0].mxu0
      %v2029 = vpop.f32.mrb[0].mxu0
      %v2030 = vadd.f32 %v1767, %v2029
      %v2031 = vpop.f32.mrb[0].mxu0
      %2032 = vmatprep.mubr.bf16.mxu0 0
      %2033 = vmatmul.mubr.bf16.gmra.mrb[0].mxu0 %v1835
      %v2034 = vpop.f32.mrb[0].mxu0
      %v2035 = vadd.f32 %v1767, %v2034
      %v2036 = vpop.f32.mrb[0].mxu0
      %v2037 = vpop.f32.mrb[0].mxu0
      %v2038 = vadd.f32 %v1767, %v2037
      %v2039 = vpop.f32.mrb[0].mxu0
      %2040 = vmatprep.mubr.bf16.mxu0 0
      %2041 = vmatmul.mubr.bf16.gmra.mrb[0].mxu0 %v1838
      %v2042 = vpop.f32.mrb[0].mxu0
      %v2043 = vadd.f32 %v1767, %v2042
      %v2044 = vpop.f32.mrb[0].mxu0
      %v2045 = vpop.f32.mrb[0].mxu0
      %v2046 = vadd.f32 %v1767, %v2045
      %v2047 = vpop.f32.mrb[0].mxu0
      %2048 = vmatprep.mubr.bf16.mxu0 0
      %2049 = vmatmul.mubr.bf16.gmra.mrb[0].mxu0 %v1841
      %v2050 = vpop.f32.mrb[0].mxu0
      %v2051 = vadd.f32 %v1767, %v2050
      %v2052 = vpop.f32.mrb[0].mxu0
      %v2053 = vpop.f32.mrb[0].mxu0
      %v2054 = vadd.f32 %v1767, %v2053
      %v2055 = vpop.f32.mrb[0].mxu0
      %2056 = vmatprep.mubr.bf16.mxu0 0
      %2057 = vmatmul.mubr.bf16.gmra.mrb[0].mxu0 %v1844
      %v2058 = vpop.f32.mrb[0].mxu0
      %v2059 = vadd.f32 %v1767, %v2058
      %v2060 = vpop.f32.mrb[0].mxu0
      %v2061 = vpop.f32.mrb[0].mxu0
      %v2062 = vadd.f32 %v1767, %v2061
      %v2063 = vpop.f32.mrb[0].mxu0
      %2064 = vmatprep.mubr.bf16.mxu0 0
      %2065 = vmatmul.mubr.bf16.gmra.mrb[0].mxu0 %v1847
      %v2066 = vpop.f32.mrb[0].mxu0
      %v2067 = vadd.f32 %v1767, %v2066
      %v2068 = vpop.f32.mrb[0].mxu0
      %v2069 = vpop.f32.mrb[0].mxu0
      %v2070 = vadd.f32 %v1767, %v2069
      %v2071 = vpop.f32.mrb[0].mxu0
      %2072 = vmatprep.mubr.bf16.mxu0 0
      %2073 = vmatmul.mubr.bf16.gmra.mrb[0].mxu0 %v1850
      %v2074 = vpop.f32.mrb[0].mxu0
      %v2075 = vadd.f32 %v1767, %v2074
      %v2076 = vpop.f32.mrb[0].mxu0
      %v2077 = vpop.f32.mrb[0].mxu0
      %v2078 = vadd.f32 %v1767, %v2077
      %v2079 = vpop.f32.mrb[0].mxu0
      %2080 = vmatprep.mubr.bf16.mxu0 0
      %2081 = vmatmul.mubr.bf16.gmra.mrb[0].mxu0 %v1853
      %v2082 = vpop.f32.mrb[0].mxu0
      %v2083 = vadd.f32 %v1767, %v2082
      %v2084 = vpop.f32.mrb[0].mxu0
      %v2085 = vpop.f32.mrb[0].mxu0
      %v2086 = vadd.f32 %v1767, %v2085
      %v2087 = vpop.f32.mrb[0].mxu0
      %2088 = vmatprep.mubr.bf16.mxu0 0
      %2089 = vmatmul.mubr.bf16.gmra.mrb[0].mxu0 %v1856
      %v2090 = vpop.f32.mrb[0].mxu0
      %v2091 = vadd.f32 %v1767, %v2090
      %v2092 = vpop.f32.mrb[0].mxu0
      %v2093 = vpop.f32.mrb[0].mxu0
      %v2094 = vadd.f32 %v1767, %v2093
      %v2095 = vpop.f32.mrb[0].mxu0
      %2096 = vmatprep.mubr.bf16.mxu0 0
      %2097 = vmatmul.mubr.bf16.gmra.mrb[0].mxu0 %v1859
      %v2098 = vpop.f32.mrb[0].mxu0
      %v2099 = vadd.f32 %v1767, %v2098
      %v2100 = vpop.f32.mrb[0].mxu0
      %v2101 = vpop.f32.mrb[0].mxu0
      %v2102 = vadd.f32 %v1767, %v2101
      %v2103 = vpop.f32.mrb[0].mxu0
      %2104 = vmatprep.mubr.bf16.mxu0 0
      %2105 = vmatmul.mubr.bf16.gmra.mrb[0].mxu0 %v1862
      %v2106 = vpop.f32.mrb[0].mxu0
      %v2107 = vadd.f32 %v1767, %v2106
      %v2108 = vpop.f32.mrb[0].mxu0
      %v2109 = vpop.f32.mrb[0].mxu0
      %v2110 = vadd.f32 %v1767, %v2109
      %v2111 = vpop.f32.mrb[0].mxu0
      %2112 = vmatprep.mubr.bf16.mxu0 0
      %2113 = vmatmul.mubr.bf16.gmra.mrb[0].mxu0 %v1865
      %v2114 = vpop.f32.mrb[0].mxu0
      %v2115 = vadd.f32 %v1767, %v2114
      %v2116 = vpop.f32.mrb[0].mxu0
      %v2117 = vpop.f32.mrb[0].mxu0
      %v2118 = vadd.f32 %v1767, %v2117
      %v2119 = vpop.f32.mrb[0].mxu0
      %2120 = vmatprep.mubr.bf16.mxu0 0
      %2121 = vmatmul.mubr.bf16.gmra.mrb[0].mxu0 %v1868
      %v2122 = vpop.f32.mrb[0].mxu0
      %v2123 = vadd.f32 %v1767, %v2122
      %v2124 = vpop.f32.mrb[0].mxu0
      %v2125 = vpop.f32.mrb[0].mxu0
      %v2126 = vadd.f32 %v1767, %v2125
      %v2127 = vpop.f32.mrb[0].mxu0
      %2128 = vmatprep.mubr.bf16.mxu0 0
      %2129 = vmatmul.mubr.bf16.gmra.mrb[0].mxu0 %v1871
      %v2130 = vpop.f32.mrb[0].mxu0
      %v2131 = vadd.f32 %v1767, %v2130
      %v2132 = vpop.f32.mrb[0].mxu0
      %v2133 = vpop.f32.mrb[0].mxu0
      %v2134 = vadd.f32 %v1767, %v2133
      %v2135 = vpop.f32.mrb[0].mxu0
      %2136 = vmatprep.mubr.bf16.mxu0 0
      %2137 = vmatmul.mubr.bf16.gmra.mrb[0].mxu0 %v1874
      %v2138 = vpop.f32.mrb[0].mxu0
      %v2139 = vadd.f32 %v1767, %v2138
      %v2140 = vpop.f32.mrb[0].mxu0
      %v2141 = vpop.f32.mrb[0].mxu0
      %v2142 = vadd.f32 %v1767, %v2141
      %v2143 = vpop.f32.mrb[0].mxu0
      %2144 = vmatprep.mubr.bf16.mxu0 0
      %2145 = vmatmul.mubr.bf16.gmra.mrb[0].mxu0 %v1877
      %v2146 = vpop.f32.mrb[0].mxu0
      %v2147 = vadd.f32 %v1767, %v2146
      %v2148 = vpop.f32.mrb[0].mxu0
      %v2149 = vpop.f32.mrb[0].mxu0
      %v2150 = vadd.f32 %v1767, %v2149
      %v2151 = vpop.f32.mrb[0].mxu0
      %2152 = vmatprep.mubr.bf16.mxu0 0
      %2153 = vmatmul.mubr.bf16.gmra.mrb[0].mxu0 %v1880
      %v2154 = vpop.f32.mrb[0].mxu0
      %v2155 = vadd.f32 %v1767, %v2154
      %v2156 = vpop.f32.mrb[0].mxu0
      %v2157 = vpop.f32.mrb[0].mxu0
      %v2158 = vadd.f32 %v1767, %v2157
      %v2159 = vpop.f32.mrb[0].mxu0
      %2160 = vmatprep.mubr.bf16.mxu0 0
      %2161 = vmatmul.mubr.bf16.gmra.mrb[0].mxu0 %v1883
      %v2162 = vpop.f32.mrb[0].mxu0
      %v2163 = vadd.f32 %v1767, %v2162
      %v2164 = vpop.f32.mrb[0].mxu0
      %v2165 = vpop.f32.mrb[0].mxu0
      %v2166 = vadd.f32 %v1767, %v2165
      %v2167 = vpop.f32.mrb[0].mxu0
      %2168 = vmatprep.mubr.bf16.mxu0 0
      %2169 = vmatmul.mubr.bf16.gmra.mrb[0].mxu0 %v1886
      %v2170 = vpop.f32.mrb[0].mxu0
      %v2171 = vadd.f32 %v1767, %v2170
      %v2172 = vpop.f32.mrb[0].mxu0
      %v2173 = vpop.f32.mrb[0].mxu0
      %v2174 = vadd.f32 %v1767, %v2173
      %v2175 = vpop.f32.mrb[0].mxu0
      %2176 = vdwg.mxu0
      %v2177 = vsel %vm896, %v1923, 0.0
      %v2178 = vsel %vm896, %v1926, 0.0
      %v2179 = vadd.f32 %v2177, %v2178
      %v2180 = vsel %vm896, %v1931, 0.0
      %v2181 = vadd.f32 %v2179, %v2180
      %v2182 = vsel %vm896, %v1934, 0.0
      %v2183 = vadd.f32 %v2181, %v2182
      %v2184 = vsel %vm896, %v1939, 0.0
      %v2185 = vadd.f32 %v2183, %v2184
      %v2186 = vsel %vm896, %v1942, 0.0
      %v2187 = vadd.f32 %v2185, %v2186
      %v2188 = vsel %vm896, %v1947, 0.0
      %v2189 = vadd.f32 %v2187, %v2188
      %v2190 = vsel %vm896, %v1950, 0.0
      %v2191 = vadd.f32 %v2189, %v2190
      %v2192 = vsel %vm896, %v1955, 0.0
      %v2193 = vadd.f32 %v2191, %v2192
      %v2194 = vsel %vm896, %v1958, 0.0
      %v2195 = vadd.f32 %v2193, %v2194
      %v2196 = vsel %vm896, %v1963, 0.0
      %v2197 = vadd.f32 %v2195, %v2196
      %v2198 = vsel %vm896, %v1966, 0.0
      %v2199 = vadd.f32 %v2197, %v2198
      %v2200 = vsel %vm896, %v1971, 0.0
      %v2201 = vadd.f32 %v2199, %v2200
      %v2202 = vsel %vm896, %v1974, 0.0
      %v2203 = vadd.f32 %v2201, %v2202
      %v2204 = vsel %vm896, %v1979, 0.0
      %v2205 = vadd.f32 %v2203, %v2204
      %v2206 = vsel %vm896, %v1982, 0.0
      %v2207 = vadd.f32 %v2205, %v2206
      %v2208 = vsel %vm896, %v1987, 0.0
      %v2209 = vadd.f32 %v2207, %v2208
      %v2210 = vsel %vm896, %v1990, 0.0
      %v2211 = vadd.f32 %v2209, %v2210
      %v2212 = vsel %vm896, %v1995, 0.0
      %v2213 = vadd.f32 %v2211, %v2212
      %v2214 = vsel %vm896, %v1998, 0.0
      %v2215 = vadd.f32 %v2213, %v2214
      %v2216 = vsel %vm896, %v2003, 0.0
      %v2217 = vadd.f32 %v2215, %v2216
      %v2218 = vsel %vm896, %v2006, 0.0
      %v2219 = vadd.f32 %v2217, %v2218
      %v2220 = vsel %vm896, %v2011, 0.0
      %v2221 = vadd.f32 %v2219, %v2220
      %v2222 = vsel %vm896, %v2014, 0.0
      %v2223 = vadd.f32 %v2221, %v2222
      %v2224 = vsel %vm896, %v2019, 0.0
      %v2225 = vadd.f32 %v2223, %v2224
      %v2226 = vsel %vm896, %v2022, 0.0
      %v2227 = vadd.f32 %v2225, %v2226
      %v2228 = vsel %vm896, %v2027, 0.0
      %v2229 = vadd.f32 %v2227, %v2228
      %v2230 = vsel %vm896, %v2030, 0.0
      %v2231 = vadd.f32 %v2229, %v2230
      %v2232 = vsel %vm896, %v2035, 0.0
      %v2233 = vadd.f32 %v2231, %v2232
      %v2234 = vsel %vm896, %v2038, 0.0
      %v2235 = vadd.f32 %v2233, %v2234
      %v2236 = vsel %vm896, %v2043, 0.0
      %v2237 = vadd.f32 %v2235, %v2236
      %v2238 = vsel %vm896, %v2046, 0.0
      %v2239 = vadd.f32 %v2237, %v2238
      %v2240 = vsel %vm896, %v2051, 0.0
      %v2241 = vadd.f32 %v2239, %v2240
      %v2242 = vsel %vm896, %v2054, 0.0
      %v2243 = vadd.f32 %v2241, %v2242
      %v2244 = vsel %vm896, %v2059, 0.0
      %v2245 = vadd.f32 %v2243, %v2244
      %v2246 = vsel %vm896, %v2062, 0.0
      %v2247 = vadd.f32 %v2245, %v2246
      %v2248 = vsel %vm896, %v2067, 0.0
      %v2249 = vadd.f32 %v2247, %v2248
      %v2250 = vsel %vm896, %v2070, 0.0
      %v2251 = vadd.f32 %v2249, %v2250
      %v2252 = vsel %vm896, %v2075, 0.0
      %v2253 = vadd.f32 %v2251, %v2252
      %v2254 = vsel %vm896, %v2078, 0.0
      %v2255 = vadd.f32 %v2253, %v2254
      %v2256 = vsel %vm896, %v2083, 0.0
      %v2257 = vadd.f32 %v2255, %v2256
      %v2258 = vsel %vm896, %v2086, 0.0
      %v2259 = vadd.f32 %v2257, %v2258
      %v2260 = vsel %vm896, %v2091, 0.0
      %v2261 = vadd.f32 %v2259, %v2260
      %v2262 = vsel %vm896, %v2094, 0.0
      %v2263 = vadd.f32 %v2261, %v2262
      %v2264 = vsel %vm896, %v2099, 0.0
      %v2265 = vadd.f32 %v2263, %v2264
      %v2266 = vsel %vm896, %v2102, 0.0
      %v2267 = vadd.f32 %v2265, %v2266
      %v2268 = vsel %vm896, %v2107, 0.0
      %v2269 = vadd.f32 %v2267, %v2268
      %v2270 = vsel %vm896, %v2110, 0.0
      %v2271 = vadd.f32 %v2269, %v2270
      %v2272 = vsel %vm896, %v2115, 0.0
      %v2273 = vadd.f32 %v2271, %v2272
      %v2274 = vsel %vm896, %v2118, 0.0
      %v2275 = vadd.f32 %v2273, %v2274
      %v2276 = vsel %vm896, %v2123, 0.0
      %v2277 = vadd.f32 %v2275, %v2276
      %v2278 = vsel %vm896, %v2126, 0.0
      %v2279 = vadd.f32 %v2277, %v2278
      %v2280 = vsel %vm896, %v2131, 0.0
      %v2281 = vadd.f32 %v2279, %v2280
      %v2282 = vsel %vm896, %v2134, 0.0
      %v2283 = vadd.f32 %v2281, %v2282
      %v2284 = vsel %vm896, %v2139, 0.0
      %v2285 = vadd.f32 %v2283, %v2284
      %v2286 = vsel %vm896, %v2142, 0.0
      %v2287 = vadd.f32 %v2285, %v2286
      %v2288 = vsel %vm896, %v2147, 0.0
      %v2289 = vadd.f32 %v2287, %v2288
      %v2290 = vsel %vm896, %v2150, 0.0
      %v2291 = vadd.f32 %v2289, %v2290
      %v2292 = vsel %vm896, %v2155, 0.0
      %v2293 = vadd.f32 %v2291, %v2292
      %v2294 = vsel %vm896, %v2158, 0.0
      %v2295 = vadd.f32 %v2293, %v2294
      %v2296 = vsel %vm896, %v2163, 0.0
      %v2297 = vadd.f32 %v2295, %v2296
      %v2298 = vsel %vm896, %v2166, 0.0
      %v2299 = vadd.f32 %v2297, %v2298
      %v2300 = vsel %vm896, %v2171, 0.0
      %v2301 = vadd.f32 %v2299, %v2300
      %v2302 = vsel %vm896, %v2174, 0.0
      %v2303 = vadd.f32 %v2301, %v2302
      %v2304 = vrot.slane %v2303, 4
      %v2305 = vadd.f32 %v2303, %v2304
      %v2306 = vrot.slane %v2305, 2
      %v2307 = vadd.f32 %v2305, %v2306
      %v2308 = vrot.slane %v2307, 1
      %v2309 = vadd.f32 %v2307, %v2308
      %v2310 = vmul.f32 %v1923, %v1923
      %v2311 = vmul.f32 %v1926, %v1926
      %v2312 = vmul.f32 %v1931, %v1931
      %v2313 = vmul.f32 %v1934, %v1934
      %v2314 = vmul.f32 %v1939, %v1939
      %v2315 = vmul.f32 %v1942, %v1942
      %v2316 = vmul.f32 %v1947, %v1947
      %v2317 = vmul.f32 %v1950, %v1950
      %v2318 = vmul.f32 %v1955, %v1955
      %v2319 = vmul.f32 %v1958, %v1958
      %v2320 = vmul.f32 %v1963, %v1963
      %v2321 = vmul.f32 %v1966, %v1966
      %v2322 = vmul.f32 %v1971, %v1971
      %v2323 = vmul.f32 %v1974, %v1974
      %v2324 = vmul.f32 %v1979, %v1979
      %v2325 = vmul.f32 %v1982, %v1982
      %v2326 = vmul.f32 %v1987, %v1987
      %v2327 = vmul.f32 %v1990, %v1990
      %v2328 = vmul.f32 %v1995, %v1995
      %v2329 = vmul.f32 %v1998, %v1998
      %v2330 = vmul.f32 %v2003, %v2003
      %v2331 = vmul.f32 %v2006, %v2006
      %v2332 = vmul.f32 %v2011, %v2011
      %v2333 = vmul.f32 %v2014, %v2014
      %v2334 = vmul.f32 %v2019, %v2019
      %v2335 = vmul.f32 %v2022, %v2022
      %v2336 = vmul.f32 %v2027, %v2027
      %v2337 = vmul.f32 %v2030, %v2030
      %v2338 = vmul.f32 %v2035, %v2035
      %v2339 = vmul.f32 %v2038, %v2038
      %v2340 = vmul.f32 %v2043, %v2043
      %v2341 = vmul.f32 %v2046, %v2046
      %v2342 = vmul.f32 %v2051, %v2051
      %v2343 = vmul.f32 %v2054, %v2054
      %v2344 = vmul.f32 %v2059, %v2059
      %v2345 = vmul.f32 %v2062, %v2062
      %v2346 = vmul.f32 %v2067, %v2067
      %v2347 = vmul.f32 %v2070, %v2070
      %v2348 = vmul.f32 %v2075, %v2075
      %v2349 = vmul.f32 %v2078, %v2078
      %v2350 = vmul.f32 %v2083, %v2083
      %v2351 = vmul.f32 %v2086, %v2086
      %v2352 = vmul.f32 %v2091, %v2091
      %v2353 = vmul.f32 %v2094, %v2094
      %v2354 = vmul.f32 %v2099, %v2099
      %v2355 = vmul.f32 %v2102, %v2102
      %v2356 = vmul.f32 %v2107, %v2107
      %v2357 = vmul.f32 %v2110, %v2110
      %v2358 = vmul.f32 %v2115, %v2115
      %v2359 = vmul.f32 %v2118, %v2118
      %v2360 = vmul.f32 %v2123, %v2123
      %v2361 = vmul.f32 %v2126, %v2126
      %v2362 = vmul.f32 %v2131, %v2131
      %v2363 = vmul.f32 %v2134, %v2134
      %v2364 = vmul.f32 %v2139, %v2139
      %v2365 = vmul.f32 %v2142, %v2142
      %v2366 = vmul.f32 %v2147, %v2147
      %v2367 = vmul.f32 %v2150, %v2150
      %v2368 = vmul.f32 %v2155, %v2155
      %v2369 = vmul.f32 %v2158, %v2158
      %v2370 = vmul.f32 %v2163, %v2163
      %v2371 = vmul.f32 %v2166, %v2166
      %v2372 = vmul.f32 %v2171, %v2171
      %v2373 = vmul.f32 %v2174, %v2174
      %v2374 = vsel %vm896, %v2310, 0.0
      %v2375 = vsel %vm896, %v2311, 0.0
      %v2376 = vadd.f32 %v2374, %v2375
      %v2377 = vsel %vm896, %v2312, 0.0
      %v2378 = vadd.f32 %v2376, %v2377
      %v2379 = vsel %vm896, %v2313, 0.0
      %v2380 = vadd.f32 %v2378, %v2379
      %v2381 = vsel %vm896, %v2314, 0.0
      %v2382 = vadd.f32 %v2380, %v2381
      %v2383 = vsel %vm896, %v2315, 0.0
      %v2384 = vadd.f32 %v2382, %v2383
      %v2385 = vsel %vm896, %v2316, 0.0
      %v2386 = vadd.f32 %v2384, %v2385
      %v2387 = vsel %vm896, %v2317, 0.0
      %v2388 = vadd.f32 %v2386, %v2387
      %v2389 = vsel %vm896, %v2318, 0.0
      %v2390 = vadd.f32 %v2388, %v2389
      %v2391 = vsel %vm896, %v2319, 0.0
      %v2392 = vadd.f32 %v2390, %v2391
      %v2393 = vsel %vm896, %v2320, 0.0
      %v2394 = vadd.f32 %v2392, %v2393
      %v2395 = vsel %vm896, %v2321, 0.0
      %v2396 = vadd.f32 %v2394, %v2395
      %v2397 = vsel %vm896, %v2322, 0.0
      %v2398 = vadd.f32 %v2396, %v2397
      %v2399 = vsel %vm896, %v2323, 0.0
      %v2400 = vadd.f32 %v2398, %v2399
      %v2401 = vsel %vm896, %v2324, 0.0
      %v2402 = vadd.f32 %v2400, %v2401
      %v2403 = vsel %vm896, %v2325, 0.0
      %v2404 = vadd.f32 %v2402, %v2403
      %v2405 = vsel %vm896, %v2326, 0.0
      %v2406 = vadd.f32 %v2404, %v2405
      %v2407 = vsel %vm896, %v2327, 0.0
      %v2408 = vadd.f32 %v2406, %v2407
      %v2409 = vsel %vm896, %v2328, 0.0
      %v2410 = vadd.f32 %v2408, %v2409
      %v2411 = vsel %vm896, %v2329, 0.0
      %v2412 = vadd.f32 %v2410, %v2411
      %v2413 = vsel %vm896, %v2330, 0.0
      %v2414 = vadd.f32 %v2412, %v2413
      %v2415 = vsel %vm896, %v2331, 0.0
      %v2416 = vadd.f32 %v2414, %v2415
      %v2417 = vsel %vm896, %v2332, 0.0
      %v2418 = vadd.f32 %v2416, %v2417
      %v2419 = vsel %vm896, %v2333, 0.0
      %v2420 = vadd.f32 %v2418, %v2419
      %v2421 = vsel %vm896, %v2334, 0.0
      %v2422 = vadd.f32 %v2420, %v2421
      %v2423 = vsel %vm896, %v2335, 0.0
      %v2424 = vadd.f32 %v2422, %v2423
      %v2425 = vsel %vm896, %v2336, 0.0
      %v2426 = vadd.f32 %v2424, %v2425
      %v2427 = vsel %vm896, %v2337, 0.0
      %v2428 = vadd.f32 %v2426, %v2427
      %v2429 = vsel %vm896, %v2338, 0.0
      %v2430 = vadd.f32 %v2428, %v2429
      %v2431 = vsel %vm896, %v2339, 0.0
      %v2432 = vadd.f32 %v2430, %v2431
      %v2433 = vsel %vm896, %v2340, 0.0
      %v2434 = vadd.f32 %v2432, %v2433
      %v2435 = vsel %vm896, %v2341, 0.0
      %v2436 = vadd.f32 %v2434, %v2435
      %v2437 = vsel %vm896, %v2342, 0.0
      %v2438 = vadd.f32 %v2436, %v2437
      %v2439 = vsel %vm896, %v2343, 0.0
      %v2440 = vadd.f32 %v2438, %v2439
      %v2441 = vsel %vm896, %v2344, 0.0
      %v2442 = vadd.f32 %v2440, %v2441
      %v2443 = vsel %vm896, %v2345, 0.0
      %v2444 = vadd.f32 %v2442, %v2443
      %v2445 = vsel %vm896, %v2346, 0.0
      %v2446 = vadd.f32 %v2444, %v2445
      %v2447 = vsel %vm896, %v2347, 0.0
      %v2448 = vadd.f32 %v2446, %v2447
      %v2449 = vsel %vm896, %v2348, 0.0
      %v2450 = vadd.f32 %v2448, %v2449
      %v2451 = vsel %vm896, %v2349, 0.0
      %v2452 = vadd.f32 %v2450, %v2451
      %v2453 = vsel %vm896, %v2350, 0.0
      %v2454 = vadd.f32 %v2452, %v2453
      %v2455 = vsel %vm896, %v2351, 0.0
      %v2456 = vadd.f32 %v2454, %v2455
      %v2457 = vsel %vm896, %v2352, 0.0
      %v2458 = vadd.f32 %v2456, %v2457
      %v2459 = vsel %vm896, %v2353, 0.0
      %v2460 = vadd.f32 %v2458, %v2459
      %v2461 = vsel %vm896, %v2354, 0.0
      %v2462 = vadd.f32 %v2460, %v2461
      %v2463 = vsel %vm896, %v2355, 0.0
      %v2464 = vadd.f32 %v2462, %v2463
      %v2465 = vsel %vm896, %v2356, 0.0
      %v2466 = vadd.f32 %v2464, %v2465
      %v2467 = vsel %vm896, %v2357, 0.0
      %v2468 = vadd.f32 %v2466, %v2467
      %v2469 = vsel %vm896, %v2358, 0.0
      %v2470 = vadd.f32 %v2468, %v2469
      %v2471 = vsel %vm896, %v2359, 0.0
      %v2472 = vadd.f32 %v2470, %v2471
      %v2473 = vsel %vm896, %v2360, 0.0
      %v2474 = vadd.f32 %v2472, %v2473
      %v2475 = vsel %vm896, %v2361, 0.0
      %v2476 = vadd.f32 %v2474, %v2475
      %v2477 = vsel %vm896, %v2362, 0.0
      %v2478 = vadd.f32 %v2476, %v2477
      %v2479 = vsel %vm896, %v2363, 0.0
      %v2480 = vadd.f32 %v2478, %v2479
      %v2481 = vsel %vm896, %v2364, 0.0
      %v2482 = vadd.f32 %v2480, %v2481
      %v2483 = vsel %vm896, %v2365, 0.0
      %v2484 = vadd.f32 %v2482, %v2483
      %v2485 = vsel %vm896, %v2366, 0.0
      %v2486 = vadd.f32 %v2484, %v2485
      %v2487 = vsel %vm896, %v2367, 0.0
      %v2488 = vadd.f32 %v2486, %v2487
      %v2489 = vsel %vm896, %v2368, 0.0
      %v2490 = vadd.f32 %v2488, %v2489
      %v2491 = vsel %vm896, %v2369, 0.0
      %v2492 = vadd.f32 %v2490, %v2491
      %v2493 = vsel %vm896, %v2370, 0.0
      %v2494 = vadd.f32 %v2492, %v2493
      %v2495 = vsel %vm896, %v2371, 0.0
      %v2496 = vadd.f32 %v2494, %v2495
      %v2497 = vsel %vm896, %v2372, 0.0
      %v2498 = vadd.f32 %v2496, %v2497
      %v2499 = vsel %vm896, %v2373, 0.0
      %v2500 = vadd.f32 %v2498, %v2499
      %v2501 = vrot.slane %v2500, 4
      %v2502 = vadd.f32 %v2500, %v2501
      %v2503 = vrot.slane %v2502, 2
      %v2504 = vadd.f32 %v2502, %v2503
      %v2505 = vrot.slane %v2504, 1
      %v2506 = vadd.f32 %v2504, %v2505
      %v2507 = vsel %vm1227, %v2309, %v2506
      %v2509 = vsel %vm896, %v2507, 0
      %2511 = vmatprep.subr.mxu0 0.0
      %2512 = vmatpush1.msra.mxu0 %v253
      %2513 = vmatprep.subr.mxu0 0.0
      %2514 = vmatpush1.msra.mxu0 %v254
      %2515 = vmatprep.subr.mxu0 0.0
      %2516 = vmatpush1.msra.mxu0 %v255
      %2517 = vmatprep.subr.mxu0 0.0
      %2518 = vmatpush1.msra.mxu0 %v256
      %2519 = vmatprep.subr.mxu0 0.0
      %2520 = vmatpush1.msra.mxu0 %v257
      %2521 = vmatprep.subr.mxu0 0.0
      %2522 = vmatpush1.msra.mxu0 %v258
      %2523 = vmatprep.subr.mxu0 0.0
      %2524 = vmatpush1.msra.mxu0 %v259
      %2525 = vmatprep.subr.mxu0 0.0
      %2526 = vmatpush1.msra.mxu0 %v260
      %2527 = vmatprep.subr.mxu0 0.0
      %2528 = vmatpush1.msra.mxu0 0.0
      %2529 = vmatprep.subr.mxu0 0.0
      %2530 = vmatpush1.msra.mxu0 0.0
      %2531 = vmatprep.subr.mxu0 0.0
      %2532 = vmatpush1.msra.mxu0 0.0
      %2533 = vmatprep.subr.mxu0 0.0
      %2534 = vmatpush1.msra.mxu0 0.0
      %2535 = vmatprep.subr.mxu0 0.0
      %2536 = vmatpush1.msra.mxu0 0.0
      %2537 = vmatprep.subr.mxu0 0.0
      %2538 = vmatpush1.msra.mxu0 0.0
      %2539 = vmatprep.subr.mxu0 0.0
      %2540 = vmatpush1.msra.mxu0 0.0
      %2541 = vmatprep.subr.mxu0 0.0
      %2542 = vmatpush1.msra.mxu0 0.0
      %2543 = vmatprep.subr.mxu0 0.0
      %2544 = vmatpush1.msra.mxu0 0.0
      %2545 = vmatprep.subr.mxu0 0.0
      %2546 = vmatpush1.msra.mxu0 0.0
      %2547 = vmatprep.subr.mxu0 0.0
      %2548 = vmatpush1.msra.mxu0 0.0
      %2549 = vmatprep.subr.mxu0 0.0
      %2550 = vmatpush1.msra.mxu0 0.0
      %2551 = vmatprep.subr.mxu0 0.0
      %2552 = vmatpush1.msra.mxu0 0.0
      %2553 = vmatprep.subr.mxu0 0.0
      %2554 = vmatpush1.msra.mxu0 0.0
      %2555 = vmatprep.subr.mxu0 0.0
      %2556 = vmatpush1.msra.mxu0 0.0
      %2557 = vmatprep.subr.mxu0 0.0
      %2558 = vmatpush1.msra.mxu0 0.0
      %2559 = vmatprep.subr.mxu0 0.0
      %2560 = vmatpush1.msra.mxu0 0.0
      %2561 = vmatprep.subr.mxu0 0.0
      %2562 = vmatpush1.msra.mxu0 0.0
      %2563 = vmatprep.subr.mxu0 0.0
      %2564 = vmatpush1.msra.mxu0 0.0
      %2565 = vmatprep.subr.mxu0 0.0
      %2566 = vmatpush1.msra.mxu0 0.0
      %2567 = vmatprep.subr.mxu0 0.0
      %2568 = vmatpush1.msra.mxu0 0.0
      %2569 = vmatprep.subr.mxu0 0.0
      %2570 = vmatpush1.msra.mxu0 0.0
      %2571 = vmatprep.subr.mxu0 0.0
      %2572 = vmatpush1.msra.mxu0 0.0
      %2573 = vmatprep.subr.mxu0 0.0
      %2574 = vmatpush1.msra.mxu0 0.0
      %2575 = vmatprep.mubr.f32.mxu0 0.0
      %2576 = vmatmul.mubr.f32.gmra.mrb[0].mxu0 %v2509
      %v2577 = vpop.f32.mrb[0].mxu0
      %v2578 = vadd.f32 0.0, %v2577
      %v2579 = vpop.f32.mrb[0].mxu0
      %2580 = vdwg.mxu0
      %v2581 = vmul.f32 %v2578, %v1302
      %v2582 = vmul.f32 %v2581, %v2581
      %v2584 = vrot.slane %v2582, 7
      %v2586 = vsub.f32 %v2581, %v2584
      %v2587 = vmax.f32 %v2586, 0.0
      %v2588 = vadd.f32 %v2587, 1e-05
      %v2589 = vrsqrt.pop %v2588
      %v2590 = vsel %vm1227, %v2581, %v2589
      %v2592 = vsel %vm1313, %v2590, 0
      %2594 = vmatprep.subr.mxu0 0.0
      %2595 = vmatpush1.msra.mxu0 %v261
      %2596 = vmatprep.subr.mxu0 0.0
      %2597 = vmatpush1.msra.mxu0 %v262
      %2598 = vmatprep.subr.mxu0 0.0
      %2599 = vmatpush1.msra.mxu0 %v263
      %2600 = vmatprep.subr.mxu0 0.0
      %2601 = vmatpush1.msra.mxu0 %v264
      %2602 = vmatprep.subr.mxu0 0.0
      %2603 = vmatpush1.msra.mxu0 0.0
      %2604 = vmatprep.subr.mxu0 0.0
      %2605 = vmatpush1.msra.mxu0 0.0
      %2606 = vmatprep.subr.mxu0 0.0
      %2607 = vmatpush1.msra.mxu0 0.0
      %2608 = vmatprep.subr.mxu0 0.0
      %2609 = vmatpush1.msra.mxu0 0.0
      %2610 = vmatprep.subr.mxu0 0.0
      %2611 = vmatpush1.msra.mxu0 0.0
      %2612 = vmatprep.subr.mxu0 0.0
      %2613 = vmatpush1.msra.mxu0 0.0
      %2614 = vmatprep.subr.mxu0 0.0
      %2615 = vmatpush1.msra.mxu0 0.0
      %2616 = vmatprep.subr.mxu0 0.0
      %2617 = vmatpush1.msra.mxu0 0.0
      %2618 = vmatprep.subr.mxu0 0.0
      %2619 = vmatpush1.msra.mxu0 0.0
      %2620 = vmatprep.subr.mxu0 0.0
      %2621 = vmatpush1.msra.mxu0 0.0
      %2622 = vmatprep.subr.mxu0 0.0
      %2623 = vmatpush1.msra.mxu0 0.0
      %2624 = vmatprep.subr.mxu0 0.0
      %2625 = vmatpush1.msra.mxu0 0.0
      %2626 = vmatprep.subr.mxu0 0.0
      %2627 = vmatpush1.msra.mxu0 0.0
      %2628 = vmatprep.subr.mxu0 0.0
      %2629 = vmatpush1.msra.mxu0 0.0
      %2630 = vmatprep.subr.mxu0 0.0
      %2631 = vmatpush1.msra.mxu0 0.0
      %2632 = vmatprep.subr.mxu0 0.0
      %2633 = vmatpush1.msra.mxu0 0.0
      %2634 = vmatprep.subr.mxu0 0.0
      %2635 = vmatpush1.msra.mxu0 0.0
      %2636 = vmatprep.subr.mxu0 0.0
      %2637 = vmatpush1.msra.mxu0 0.0
      %2638 = vmatprep.subr.mxu0 0.0
      %2639 = vmatpush1.msra.mxu0 0.0
      %2640 = vmatprep.subr.mxu0 0.0
      %2641 = vmatpush1.msra.mxu0 0.0
      %2642 = vmatprep.subr.mxu0 0.0
      %2643 = vmatpush1.msra.mxu0 0.0
      %2644 = vmatprep.subr.mxu0 0.0
      %2645 = vmatpush1.msra.mxu0 0.0
      %2646 = vmatprep.subr.mxu0 0.0
      %2647 = vmatpush1.msra.mxu0 0.0
      %2648 = vmatprep.subr.mxu0 0.0
      %2649 = vmatpush1.msra.mxu0 0.0
      %2650 = vmatprep.subr.mxu0 0.0
      %2651 = vmatpush1.msra.mxu0 0.0
      %2652 = vmatprep.subr.mxu0 0.0
      %2653 = vmatpush1.msra.mxu0 0.0
      %2654 = vmatprep.subr.mxu0 0.0
      %2655 = vmatpush1.msra.mxu0 0.0
      %2656 = vmatprep.subr.mxu0 0.0
      %2657 = vmatpush1.msra.mxu0 0.0
      %2658 = vmatprep.mubr.f32.mxu0 0.0
      %2659 = vmatmul.mubr.f32.gmra.mrb[0].mxu0 %v2592
      %v2660 = vpop.f32.mrb[0].mxu0
      %v2661 = vadd.f32 0.0, %v2660
      %v2662 = vpop.f32.mrb[0].mxu0
      %2663 = vdwg.mxu0
      %v2665 = vrot.slane %v265, 3
      %v2667 = vmul.f32 %v2661, %v2665
      %v2669 = vrot.slane %v2667, 1
      %v2671 = vmul.f32 %v2661, %v2669
      %v2673 = vrot.slane %v2671, 3
      %v2675 = vsub.f32 %v265, %v2673
      %v2676 = vlaneseq
      %v2677 = vshrl.u32 %v2676, 7
      %v2678 = vsub.s32 1, %v2677
      %v2679 = vrot.slane %v2667, %v2678
      %v2680 = vmul.f32 %v1923, %v2679
      %v2681 = vmul.f32 %v1926, %v2679
      %v2682 = vmul.f32 %v1931, %v2679
      %v2683 = vmul.f32 %v1934, %v2679
      %v2684 = vmul.f32 %v1939, %v2679
      %v2685 = vmul.f32 %v1942, %v2679
      %v2686 = vmul.f32 %v1947, %v2679
      %v2687 = vmul.f32 %v1950, %v2679
      %v2688 = vmul.f32 %v1955, %v2679
      %v2689 = vmul.f32 %v1958, %v2679
      %v2690 = vmul.f32 %v1963, %v2679
      %v2691 = vmul.f32 %v1966, %v2679
      %v2692 = vmul.f32 %v1971, %v2679
      %v2693 = vmul.f32 %v1974, %v2679
      %v2694 = vmul.f32 %v1979, %v2679
      %v2695 = vmul.f32 %v1982, %v2679
      %v2696 = vmul.f32 %v1987, %v2679
      %v2697 = vmul.f32 %v1990, %v2679
      %v2698 = vmul.f32 %v1995, %v2679
      %v2699 = vmul.f32 %v1998, %v2679
      %v2700 = vmul.f32 %v2003, %v2679
      %v2701 = vmul.f32 %v2006, %v2679
      %v2702 = vmul.f32 %v2011, %v2679
      %v2703 = vmul.f32 %v2014, %v2679
      %v2704 = vmul.f32 %v2019, %v2679
      %v2705 = vmul.f32 %v2022, %v2679
      %v2706 = vmul.f32 %v2027, %v2679
      %v2707 = vmul.f32 %v2030, %v2679
      %v2708 = vmul.f32 %v2035, %v2679
      %v2709 = vmul.f32 %v2038, %v2679
      %v2710 = vmul.f32 %v2043, %v2679
      %v2711 = vmul.f32 %v2046, %v2679
      %v2712 = vmul.f32 %v2051, %v2679
      %v2713 = vmul.f32 %v2054, %v2679
      %v2714 = vmul.f32 %v2059, %v2679
      %v2715 = vmul.f32 %v2062, %v2679
      %v2716 = vmul.f32 %v2067, %v2679
      %v2717 = vmul.f32 %v2070, %v2679
      %v2718 = vmul.f32 %v2075, %v2679
      %v2719 = vmul.f32 %v2078, %v2679
      %v2720 = vmul.f32 %v2083, %v2679
      %v2721 = vmul.f32 %v2086, %v2679
      %v2722 = vmul.f32 %v2091, %v2679
      %v2723 = vmul.f32 %v2094, %v2679
      %v2724 = vmul.f32 %v2099, %v2679
      %v2725 = vmul.f32 %v2102, %v2679
      %v2726 = vmul.f32 %v2107, %v2679
      %v2727 = vmul.f32 %v2110, %v2679
      %v2728 = vmul.f32 %v2115, %v2679
      %v2729 = vmul.f32 %v2118, %v2679
      %v2730 = vmul.f32 %v2123, %v2679
      %v2731 = vmul.f32 %v2126, %v2679
      %v2732 = vmul.f32 %v2131, %v2679
      %v2733 = vmul.f32 %v2134, %v2679
      %v2734 = vmul.f32 %v2139, %v2679
      %v2735 = vmul.f32 %v2142, %v2679
      %v2736 = vmul.f32 %v2147, %v2679
      %v2737 = vmul.f32 %v2150, %v2679
      %v2738 = vmul.f32 %v2155, %v2679
      %v2739 = vmul.f32 %v2158, %v2679
      %v2740 = vmul.f32 %v2163, %v2679
      %v2741 = vmul.f32 %v2166, %v2679
      %v2742 = vmul.f32 %v2171, %v2679
      %v2743 = vmul.f32 %v2174, %v2679
      %v2744 = vlaneseq
      %v2745 = vshrl.u32 %v2744, 7
      %v2746 = vsub.s32 5, %v2745
      %v2747 = vrot.slane %v2675, %v2746
      %v2748 = vadd.f32 %v2680, %v2747
      %v2749 = vadd.f32 %v2681, %v2747
      %v2750 = vadd.f32 %v2682, %v2747
      %v2751 = vadd.f32 %v2683, %v2747
      %v2752 = vadd.f32 %v2684, %v2747
      %v2753 = vadd.f32 %v2685, %v2747
      %v2754 = vadd.f32 %v2686, %v2747
      %v2755 = vadd.f32 %v2687, %v2747
      %v2756 = vadd.f32 %v2688, %v2747
      %v2757 = vadd.f32 %v2689, %v2747
      %v2758 = vadd.f32 %v2690, %v2747
      %v2759 = vadd.f32 %v2691, %v2747
      %v2760 = vadd.f32 %v2692, %v2747
      %v2761 = vadd.f32 %v2693, %v2747
      %v2762 = vadd.f32 %v2694, %v2747
      %v2763 = vadd.f32 %v2695, %v2747
      %v2764 = vadd.f32 %v2696, %v2747
      %v2765 = vadd.f32 %v2697, %v2747
      %v2766 = vadd.f32 %v2698, %v2747
      %v2767 = vadd.f32 %v2699, %v2747
      %v2768 = vadd.f32 %v2700, %v2747
      %v2769 = vadd.f32 %v2701, %v2747
      %v2770 = vadd.f32 %v2702, %v2747
      %v2771 = vadd.f32 %v2703, %v2747
      %v2772 = vadd.f32 %v2704, %v2747
      %v2773 = vadd.f32 %v2705, %v2747
      %v2774 = vadd.f32 %v2706, %v2747
      %v2775 = vadd.f32 %v2707, %v2747
      %v2776 = vadd.f32 %v2708, %v2747
      %v2777 = vadd.f32 %v2709, %v2747
      %v2778 = vadd.f32 %v2710, %v2747
      %v2779 = vadd.f32 %v2711, %v2747
      %v2780 = vadd.f32 %v2712, %v2747
      %v2781 = vadd.f32 %v2713, %v2747
      %v2782 = vadd.f32 %v2714, %v2747
      %v2783 = vadd.f32 %v2715, %v2747
      %v2784 = vadd.f32 %v2716, %v2747
      %v2785 = vadd.f32 %v2717, %v2747
      %v2786 = vadd.f32 %v2718, %v2747
      %v2787 = vadd.f32 %v2719, %v2747
      %v2788 = vadd.f32 %v2720, %v2747
      %v2789 = vadd.f32 %v2721, %v2747
      %v2790 = vadd.f32 %v2722, %v2747
      %v2791 = vadd.f32 %v2723, %v2747
      %v2792 = vadd.f32 %v2724, %v2747
      %v2793 = vadd.f32 %v2725, %v2747
      %v2794 = vadd.f32 %v2726, %v2747
      %v2795 = vadd.f32 %v2727, %v2747
      %v2796 = vadd.f32 %v2728, %v2747
      %v2797 = vadd.f32 %v2729, %v2747
      %v2798 = vadd.f32 %v2730, %v2747
      %v2799 = vadd.f32 %v2731, %v2747
      %v2800 = vadd.f32 %v2732, %v2747
      %v2801 = vadd.f32 %v2733, %v2747
      %v2802 = vadd.f32 %v2734, %v2747
      %v2803 = vadd.f32 %v2735, %v2747
      %v2804 = vadd.f32 %v2736, %v2747
      %v2805 = vadd.f32 %v2737, %v2747
      %v2806 = vadd.f32 %v2738, %v2747
      %v2807 = vadd.f32 %v2739, %v2747
      %v2808 = vadd.f32 %v2740, %v2747
      %v2809 = vadd.f32 %v2741, %v2747
      %v2810 = vadd.f32 %v2742, %v2747
      %v2811 = vadd.f32 %v2743, %v2747
      %vm2812 = vcmp.ge.f32.partialorder %v2748, 0.0
      %vm2813 = vcmp.ge.f32.partialorder %v2749, 0.0
      %vm2814 = vcmp.ge.f32.partialorder %v2750, 0.0
      %vm2815 = vcmp.ge.f32.partialorder %v2751, 0.0
      %vm2816 = vcmp.ge.f32.partialorder %v2752, 0.0
      %vm2817 = vcmp.ge.f32.partialorder %v2753, 0.0
      %vm2818 = vcmp.ge.f32.partialorder %v2754, 0.0
      %vm2819 = vcmp.ge.f32.partialorder %v2755, 0.0
      %vm2820 = vcmp.ge.f32.partialorder %v2756, 0.0
      %vm2821 = vcmp.ge.f32.partialorder %v2757, 0.0
      %vm2822 = vcmp.ge.f32.partialorder %v2758, 0.0
      %vm2823 = vcmp.ge.f32.partialorder %v2759, 0.0
      %vm2824 = vcmp.ge.f32.partialorder %v2760, 0.0
      %vm2825 = vcmp.ge.f32.partialorder %v2761, 0.0
      %vm2826 = vcmp.ge.f32.partialorder %v2762, 0.0
      %vm2827 = vcmp.ge.f32.partialorder %v2763, 0.0
      %vm2828 = vcmp.ge.f32.partialorder %v2764, 0.0
      %vm2829 = vcmp.ge.f32.partialorder %v2765, 0.0
      %vm2830 = vcmp.ge.f32.partialorder %v2766, 0.0
      %vm2831 = vcmp.ge.f32.partialorder %v2767, 0.0
      %vm2832 = vcmp.ge.f32.partialorder %v2768, 0.0
      %vm2833 = vcmp.ge.f32.partialorder %v2769, 0.0
      %vm2834 = vcmp.ge.f32.partialorder %v2770, 0.0
      %vm2835 = vcmp.ge.f32.partialorder %v2771, 0.0
      %vm2836 = vcmp.ge.f32.partialorder %v2772, 0.0
      %vm2837 = vcmp.ge.f32.partialorder %v2773, 0.0
      %vm2838 = vcmp.ge.f32.partialorder %v2774, 0.0
      %vm2839 = vcmp.ge.f32.partialorder %v2775, 0.0
      %vm2840 = vcmp.ge.f32.partialorder %v2776, 0.0
      %vm2841 = vcmp.ge.f32.partialorder %v2777, 0.0
      %vm2842 = vcmp.ge.f32.partialorder %v2778, 0.0
      %vm2843 = vcmp.ge.f32.partialorder %v2779, 0.0
      %vm2844 = vcmp.ge.f32.partialorder %v2780, 0.0
      %vm2845 = vcmp.ge.f32.partialorder %v2781, 0.0
      %vm2846 = vcmp.ge.f32.partialorder %v2782, 0.0
      %vm2847 = vcmp.ge.f32.partialorder %v2783, 0.0
      %vm2848 = vcmp.ge.f32.partialorder %v2784, 0.0
      %vm2849 = vcmp.ge.f32.partialorder %v2785, 0.0
      %vm2850 = vcmp.ge.f32.partialorder %v2786, 0.0
      %vm2851 = vcmp.ge.f32.partialorder %v2787, 0.0
      %vm2852 = vcmp.ge.f32.partialorder %v2788, 0.0
      %vm2853 = vcmp.ge.f32.partialorder %v2789, 0.0
      %vm2854 = vcmp.ge.f32.partialorder %v2790, 0.0
      %vm2855 = vcmp.ge.f32.partialorder %v2791, 0.0
      %vm2856 = vcmp.ge.f32.partialorder %v2792, 0.0
      %vm2857 = vcmp.ge.f32.partialorder %v2793, 0.0
      %vm2858 = vcmp.ge.f32.partialorder %v2794, 0.0
      %vm2859 = vcmp.ge.f32.partialorder %v2795, 0.0
      %vm2860 = vcmp.ge.f32.partialorder %v2796, 0.0
      %vm2861 = vcmp.ge.f32.partialorder %v2797, 0.0
      %vm2862 = vcmp.ge.f32.partialorder %v2798, 0.0
      %vm2863 = vcmp.ge.f32.partialorder %v2799, 0.0
      %vm2864 = vcmp.ge.f32.partialorder %v2800, 0.0
      %vm2865 = vcmp.ge.f32.partialorder %v2801, 0.0
      %vm2866 = vcmp.ge.f32.partialorder %v2802, 0.0
      %vm2867 = vcmp.ge.f32.partialorder %v2803, 0.0
      %vm2868 = vcmp.ge.f32.partialorder %v2804, 0.0
      %vm2869 = vcmp.ge.f32.partialorder %v2805, 0.0
      %vm2870 = vcmp.ge.f32.partialorder %v2806, 0.0
      %vm2871 = vcmp.ge.f32.partialorder %v2807, 0.0
      %vm2872 = vcmp.ge.f32.partialorder %v2808, 0.0
      %vm2873 = vcmp.ge.f32.partialorder %v2809, 0.0
      %vm2874 = vcmp.ge.f32.partialorder %v2810, 0.0
      %vm2875 = vcmp.ge.f32.partialorder %v2811, 0.0
      %v2876 = vmul.f32 %v2748, 0.2
      %v2877 = vmul.f32 %v2749, 0.2
      %v2878 = vmul.f32 %v2750, 0.2
      %v2879 = vmul.f32 %v2751, 0.2
      %v2880 = vmul.f32 %v2752, 0.2
      %v2881 = vmul.f32 %v2753, 0.2
      %v2882 = vmul.f32 %v2754, 0.2
      %v2883 = vmul.f32 %v2755, 0.2
      %v2884 = vmul.f32 %v2756, 0.2
      %v2885 = vmul.f32 %v2757, 0.2
      %v2886 = vmul.f32 %v2758, 0.2
      %v2887 = vmul.f32 %v2759, 0.2
      %v2888 = vmul.f32 %v2760, 0.2
      %v2889 = vmul.f32 %v2761, 0.2
      %v2890 = vmul.f32 %v2762, 0.2
      %v2891 = vmul.f32 %v2763, 0.2
      %v2892 = vmul.f32 %v2764, 0.2
      %v2893 = vmul.f32 %v2765, 0.2
      %v2894 = vmul.f32 %v2766, 0.2
      %v2895 = vmul.f32 %v2767, 0.2
      %v2896 = vmul.f32 %v2768, 0.2
      %v2897 = vmul.f32 %v2769, 0.2
      %v2898 = vmul.f32 %v2770, 0.2
      %v2899 = vmul.f32 %v2771, 0.2
      %v2900 = vmul.f32 %v2772, 0.2
      %v2901 = vmul.f32 %v2773, 0.2
      %v2902 = vmul.f32 %v2774, 0.2
      %v2903 = vmul.f32 %v2775, 0.2
      %v2904 = vmul.f32 %v2776, 0.2
      %v2905 = vmul.f32 %v2777, 0.2
      %v2906 = vmul.f32 %v2778, 0.2
      %v2907 = vmul.f32 %v2779, 0.2
      %v2908 = vmul.f32 %v2780, 0.2
      %v2909 = vmul.f32 %v2781, 0.2
      %v2910 = vmul.f32 %v2782, 0.2
      %v2911 = vmul.f32 %v2783, 0.2
      %v2912 = vmul.f32 %v2784, 0.2
      %v2913 = vmul.f32 %v2785, 0.2
      %v2914 = vmul.f32 %v2786, 0.2
      %v2915 = vmul.f32 %v2787, 0.2
      %v2916 = vmul.f32 %v2788, 0.2
      %v2917 = vmul.f32 %v2789, 0.2
      %v2918 = vmul.f32 %v2790, 0.2
      %v2919 = vmul.f32 %v2791, 0.2
      %v2920 = vmul.f32 %v2792, 0.2
      %v2921 = vmul.f32 %v2793, 0.2
      %v2922 = vmul.f32 %v2794, 0.2
      %v2923 = vmul.f32 %v2795, 0.2
      %v2924 = vmul.f32 %v2796, 0.2
      %v2925 = vmul.f32 %v2797, 0.2
      %v2926 = vmul.f32 %v2798, 0.2
      %v2927 = vmul.f32 %v2799, 0.2
      %v2928 = vmul.f32 %v2800, 0.2
      %v2929 = vmul.f32 %v2801, 0.2
      %v2930 = vmul.f32 %v2802, 0.2
      %v2931 = vmul.f32 %v2803, 0.2
      %v2932 = vmul.f32 %v2804, 0.2
      %v2933 = vmul.f32 %v2805, 0.2
      %v2934 = vmul.f32 %v2806, 0.2
      %v2935 = vmul.f32 %v2807, 0.2
      %v2936 = vmul.f32 %v2808, 0.2
      %v2937 = vmul.f32 %v2809, 0.2
      %v2938 = vmul.f32 %v2810, 0.2
      %v2939 = vmul.f32 %v2811, 0.2
      %v2940 = vsel %vm2812, %v2748, %v2876
      %v2941 = vsel %vm2813, %v2749, %v2877
      %v2942 = vsel %vm2814, %v2750, %v2878
      %v2943 = vsel %vm2815, %v2751, %v2879
      %v2944 = vsel %vm2816, %v2752, %v2880
      %v2945 = vsel %vm2817, %v2753, %v2881
      %v2946 = vsel %vm2818, %v2754, %v2882
      %v2947 = vsel %vm2819, %v2755, %v2883
      %v2948 = vsel %vm2820, %v2756, %v2884
      %v2949 = vsel %vm2821, %v2757, %v2885
      %v2950 = vsel %vm2822, %v2758, %v2886
      %v2951 = vsel %vm2823, %v2759, %v2887
      %v2952 = vsel %vm2824, %v2760, %v2888
      %v2953 = vsel %vm2825, %v2761, %v2889
      %v2954 = vsel %vm2826, %v2762, %v2890
      %v2955 = vsel %vm2827, %v2763, %v2891
      %v2956 = vsel %vm2828, %v2764, %v2892
      %v2957 = vsel %vm2829, %v2765, %v2893
      %v2958 = vsel %vm2830, %v2766, %v2894
      %v2959 = vsel %vm2831, %v2767, %v2895
      %v2960 = vsel %vm2832, %v2768, %v2896
      %v2961 = vsel %vm2833, %v2769, %v2897
      %v2962 = vsel %vm2834, %v2770, %v2898
      %v2963 = vsel %vm2835, %v2771, %v2899
      %v2964 = vsel %vm2836, %v2772, %v2900
      %v2965 = vsel %vm2837, %v2773, %v2901
      %v2966 = vsel %vm2838, %v2774, %v2902
      %v2967 = vsel %vm2839, %v2775, %v2903
      %v2968 = vsel %vm2840, %v2776, %v2904
      %v2969 = vsel %vm2841, %v2777, %v2905
      %v2970 = vsel %vm2842, %v2778, %v2906
      %v2971 = vsel %vm2843, %v2779, %v2907
      %v2972 = vsel %vm2844, %v2780, %v2908
      %v2973 = vsel %vm2845, %v2781, %v2909
      %v2974 = vsel %vm2846, %v2782, %v2910
      %v2975 = vsel %vm2847, %v2783, %v2911
      %v2976 = vsel %vm2848, %v2784, %v2912
      %v2977 = vsel %vm2849, %v2785, %v2913
      %v2978 = vsel %vm2850, %v2786, %v2914
      %v2979 = vsel %vm2851, %v2787, %v2915
      %v2980 = vsel %vm2852, %v2788, %v2916
      %v2981 = vsel %vm2853, %v2789, %v2917
      %v2982 = vsel %vm2854, %v2790, %v2918
      %v2983 = vsel %vm2855, %v2791, %v2919
      %v2984 = vsel %vm2856, %v2792, %v2920
      %v2985 = vsel %vm2857, %v2793, %v2921
      %v2986 = vsel %vm2858, %v2794, %v2922
      %v2987 = vsel %vm2859, %v2795, %v2923
      %v2988 = vsel %vm2860, %v2796, %v2924
      %v2989 = vsel %vm2861, %v2797, %v2925
      %v2990 = vsel %vm2862, %v2798, %v2926
      %v2991 = vsel %vm2863, %v2799, %v2927
      %v2992 = vsel %vm2864, %v2800, %v2928
      %v2993 = vsel %vm2865, %v2801, %v2929
      %v2994 = vsel %vm2866, %v2802, %v2930
      %v2995 = vsel %vm2867, %v2803, %v2931
      %v2996 = vsel %vm2868, %v2804, %v2932
      %v2997 = vsel %vm2869, %v2805, %v2933
      %v2998 = vsel %vm2870, %v2806, %v2934
      %v2999 = vsel %vm2871, %v2807, %v2935
      %v3000 = vsel %vm2872, %v2808, %v2936
      %v3001 = vsel %vm2873, %v2809, %v2937
      %v3002 = vsel %vm2874, %v2810, %v2938
      %v3003 = vsel %vm2875, %v2811, %v2939
      %v3004 = vmax.f32 %v2940, %v2956
      %v3005 = vmax.f32 %v2941, %v2957
      %v3006 = vmax.f32 %v2942, %v2958
      %v3007 = vmax.f32 %v2943, %v2959
      %v3008 = vmax.f32 %v2944, %v2960
      %v3009 = vmax.f32 %v2945, %v2961
      %v3010 = vmax.f32 %v2946, %v2962
      %v3011 = vmax.f32 %v2947, %v2963
      %v3012 = vmax.f32 %v2948, %v2964
      %v3013 = vmax.f32 %v2949, %v2965
      %v3014 = vmax.f32 %v2950, %v2966
      %v3015 = vmax.f32 %v2951, %v2967
      %v3016 = vmax.f32 %v2952, %v2968
      %v3017 = vmax.f32 %v2953, %v2969
      %v3018 = vmax.f32 %v2954, %v2970
      %v3019 = vmax.f32 %v2955, %v2971
      %v3020 = vmax.f32 %v3004, %v2972
      %v3021 = vmax.f32 %v3005, %v2973
      %v3022 = vmax.f32 %v3006, %v2974
      %v3023 = vmax.f32 %v3007, %v2975
      %v3024 = vmax.f32 %v3008, %v2976
      %v3025 = vmax.f32 %v3009, %v2977
      %v3026 = vmax.f32 %v3010, %v2978
      %v3027 = vmax.f32 %v3011, %v2979
      %v3028 = vmax.f32 %v3012, %v2980
      %v3029 = vmax.f32 %v3013, %v2981
      %v3030 = vmax.f32 %v3014, %v2982
      %v3031 = vmax.f32 %v3015, %v2983
      %v3032 = vmax.f32 %v3016, %v2984
      %v3033 = vmax.f32 %v3017, %v2985
      %v3034 = vmax.f32 %v3018, %v2986
      %v3035 = vmax.f32 %v3019, %v2987
      %v3036 = vmax.f32 %v3020, %v2988
      %v3037 = vmax.f32 %v3021, %v2989
      %v3038 = vmax.f32 %v3022, %v2990
      %v3039 = vmax.f32 %v3023, %v2991
      %v3040 = vmax.f32 %v3024, %v2992
      %v3041 = vmax.f32 %v3025, %v2993
      %v3042 = vmax.f32 %v3026, %v2994
      %v3043 = vmax.f32 %v3027, %v2995
      %v3044 = vmax.f32 %v3028, %v2996
      %v3045 = vmax.f32 %v3029, %v2997
      %v3046 = vmax.f32 %v3030, %v2998
      %v3047 = vmax.f32 %v3031, %v2999
      %v3048 = vmax.f32 %v3032, %v3000
      %v3049 = vmax.f32 %v3033, %v3001
      %v3050 = vmax.f32 %v3034, %v3002
      %v3051 = vmax.f32 %v3035, %v3003
      %3052 = vst.msk [vmem:[%s251] sm:$0xff] %vm896, %v3036
      %3053 = vst.msk [vmem:[%s251 + $0x8] sm:$0xff] %vm896, %v3037
      %3054 = vst.msk [vmem:[%s251 + $0x10] sm:$0xff] %vm896, %v3038
      %3055 = vst.msk [vmem:[%s251 + $0x18] sm:$0xff] %vm896, %v3039
      %3056 = vst.msk [vmem:[%s251 + $0x20] sm:$0xff] %vm896, %v3040
      %3057 = vst.msk [vmem:[%s251 + $0x28] sm:$0xff] %vm896, %v3041
      %3058 = vst.msk [vmem:[%s251 + $0x30] sm:$0xff] %vm896, %v3042
      %3059 = vst.msk [vmem:[%s251 + $0x38] sm:$0xff] %vm896, %v3043
      %3060 = vst.msk [vmem:[%s251 + $0x40] sm:$0xff] %vm896, %v3044
      %3061 = vst.msk [vmem:[%s251 + $0x48] sm:$0xff] %vm896, %v3045
      %3062 = vst.msk [vmem:[%s251 + $0x50] sm:$0xff] %vm896, %v3046
      %3063 = vst.msk [vmem:[%s251 + $0x58] sm:$0xff] %vm896, %v3047
      %3064 = vst.msk [vmem:[%s251 + $0x60] sm:$0xff] %vm896, %v3048
      %3065 = vst.msk [vmem:[%s251 + $0x68] sm:$0xff] %vm896, %v3049
      %3066 = vst.msk [vmem:[%s251 + $0x70] sm:$0xff] %vm896, %v3050
      %3067 = vst.msk [vmem:[%s251 + $0x78] sm:$0xff] %vm896, %v3051
      %p3068 = scmp.lt.s32.totalorder %s17, 1
      %s3069 = scalar_select %p3068, %s17, 1
      %s3070 = smul.addr %s3069, 16
      %s3071 = smul.addr %s3070, 8
      %s3072 = scalar_lea.vmem %s6, %s3071
      // Predicated region
      $region45: #{discriminator_forward.4} parent=43 // pred_check
        %p3073 = pneg %p166
      $region46: #{discriminator_forward.4} parent=43 // pred_check_branch
        %3075 = sbr.rel (%p3073) target = $region48
      $region47: #{discriminator_forward.4} parent=43 // pred_region
        _
      $region48: #{discriminator_forward.4} parent=43 // pred_fallthru
        _
    $region44: #{discriminator_forward.4} parent=5 // pred_fallthru
      _
    %p3076 = scmp.le.s32.totalorder 2, %s12
    // Predicated region
    $region49: #{discriminator_forward.4} parent=5 // pred_check
      %p3077 = pneg %p3076
    $region50: #{discriminator_forward.4} parent=5 // pred_check_branch
      %3079 = sbr.rel (%p3077) target = $region52
    $region51: #{discriminator_forward.4} parent=5 // pred_region
      %s3080 = ssub.s32 %s12, 2
      // Predicated region
      $region53: #{discriminator_forward.4} parent=51 // pred_check
        %p3081 = pneg %p172
      $region54: #{discriminator_forward.4} parent=51 // pred_check_branch
        %3083 = sbr.rel (%p3081) target = $region56
      $region55: #{discriminator_forward.4} parent=51 // pred_region
        %p3084 = scmp.lt.s32.totalorder %s18, 1
        %s3085 = scalar_select %p3084, %s18, 1
        %s3086 = smul.addr %s3085, 16
        %s3087 = smul.addr %s3086, 8
        %s3088 = scalar_lea.vmem %s6, %s3087
      $region56: #{discriminator_forward.4} parent=51 // pred_fallthru
        _
    $region52: #{discriminator_forward.4} parent=5 // pred_fallthru
      _
  $region6: #{discriminator_forward.4} parent=0 // loop_footer
    %s16 = sadd.s32 1, %s12
  $region7: #{discriminator_forward.4} parent=0 // loop_footer_branch
    %11 = sbr.rel target = $region3
  $region8: #{discriminator_forward.4} parent=0 // loop_exit
    _

// kernel: discriminator_forward.5
$region0: #{discriminator_forward.5}
  #allocation0 [shape = 'u32[]', space=smem, size = 0x4, offset = 0x4, fixed_abs, tag = 'smem constant byte address 0x4 - core index']
  #allocation1 [shape = 'u32[144,128]{1,0:T(1,128)}', space=vmem, size = 0x12000, scoped, tag = 'internal scratch']
  %s0 = inlined_call_operand.vmem [shape: bf16[2,192,132], index: 0, kind: input, shape index: {}]
  %s1 = inlined_call_operand.vmem [shape: bf16[132,64], index: 1, kind: input, shape index: {}]
  %s2 = inlined_call_operand.vmem [shape: bf16[64,64], index: 2, kind: input, shape index: {}]
  %s3 = inlined_call_operand.vmem [shape: f32[6,64], index: 3, kind: input, shape index: {}]
  %s4 = inlined_call_operand.vmem [shape: f32[64,32], index: 4, kind: input, shape index: {}]
  %s5 = inlined_call_operand.vmem [shape: f32[32,64], index: 5, kind: input, shape index: {}]
  %s6 = inlined_call_operand.vmem [shape: f32[2,48,64], index: 6, kind: output, shape index: {}]
  %s7 = sld [smem:[#allocation0]]
  $region57: #{discriminator_forward.5} parent=0
    _
  %s9 = ssub.s32 1, %s7
  %s10 = scalar_select 0, %s9, %s7
  loop: start=0, step=1, limit=4
  $region2: #{discriminator_forward.5} parent=0 // loop_pre_header
    _
  $region3: #{discriminator_forward.5} parent=0 // loop_header
    %s12 = sphi 0, %s16
    %p13 = scmp.ge.s32.totalorder %s12, 4
    %s22 = sphi 0, %s24
    %s25 = sphi 0, %s22
    %s26 = sphi 0, %s25
    %s42 = sphi 0, %s26
    %s46 = sphi 0, %s46
    %s48 = sphi 0, %s46
    %s49 = sphi 0, %s48
    %s63 = sphi 0, %s49
    %s67 = sphi 0, %s67
    %s69 = sphi 0, %s67
    %s70 = sphi 0, %s69
    %s84 = sphi 0, %s70
    %s88 = sphi 0, %s88
    %s90 = sphi 0, %s88
    %s91 = sphi 0, %s90
    %s105 = sphi 0, %s91
    %s109 = sphi 0, %s109
    %s111 = sphi 0, %s109
    %s112 = sphi 0, %s111
    %s126 = sphi 0, %s112
    %s130 = sphi 0, %s130
    %s132 = sphi 0, %s130
    %s133 = sphi 0, %s132
    %s147 = sphi 0, %s133
    %s153 = sphi 0, %s155
    %s156 = sphi 0, %s153
    %s157 = sphi 0, %s156
    %s173 = sphi 0, %s157
  $region4: #{discriminator_forward.5} parent=0 // loop_header_branch
    %15 = sbr.rel (%p13) target = $region8
  $region5: #{discriminator_forward.5} parent=0 // loop_body
    %s17 = ssub.s32 %s12, 1
    %s18 = ssub.s32 %s12, 2
    %s19 = sadd.s32 %s12, 1
    %s20 = ssub.s32 %s12, %s19
    %p21 = scmp.eq.s32.totalorder %s20, 0
    %s23 = sadd.s32 %s22, 1
    %s24 = scalar_select %p21, %s22, %s23
    %p27 = pneg %p21
    %p28 = scmp.eq.s32.totalorder %s12, 1
    %p29 = por %p27, %p28
    %p30 = scmp.ne.s32.totalorder %s22, %s25
    %p31 = scmp.eq.s32.totalorder %s12, 0
    %p32 = por %p30, %p31
    %p33 = scmp.ne.s32.totalorder %s22, %s25
    %p34 = scmp.eq.s32.totalorder %s17, 1
    %p35 = por %p33, %p34
    %p36 = scmp.ne.s32.totalorder %s25, %s26
    %p37 = scmp.eq.s32.totalorder %s17, 0
    %p38 = por %p36, %p37
    %p39 = scmp.ne.s32.totalorder %s25, %s26
    %p40 = scmp.eq.s32.totalorder %s18, 1
    %p41 = por %p39, %p40
    %p43 = scmp.ne.s32.totalorder %s26, %s42
    %p44 = scmp.eq.s32.totalorder %s18, 0
    %p45 = por %p43, %p44
    %s47 = sadd.s32 %s46, 1
    %p50 = scmp.eq.s32.totalorder %s12, 1
    %p51 = scmp.ne.s32.totalorder %s46, %s48
    %p52 = scmp.eq.s32.totalorder %s12, 0
    %p53 = por %p51, %p52
    %p54 = scmp.ne.s32.totalorder %s46, %s48
    %p55 = scmp.eq.s32.totalorder %s17, 1
    %p56 = por %p54, %p55
    %p57 = scmp.ne.s32.totalorder %s48, %s49
    %p58 = scmp.eq.s32.totalorder %s17, 0
    %p59 = por %p57, %p58
    %p60 = scmp.ne.s32.totalorder %s48, %s49
    %p61 = scmp.eq.s32.totalorder %s18, 1
    %p62 = por %p60, %p61
    %p64 = scmp.ne.s32.totalorder %s49, %s63
    %p65 = scmp.eq.s32.totalorder %s18, 0
    %p66 = por %p64, %p65
    %s68 = sadd.s32 %s67, 1
    %p71 = scmp.eq.s32.totalorder %s12, 1
    %p72 = scmp.ne.s32.totalorder %s67, %s69
    %p73 = scmp.eq.s32.totalorder %s12, 0
    %p74 = por %p72, %p73
    %p75 = scmp.ne.s32.totalorder %s67, %s69
    %p76 = scmp.eq.s32.totalorder %s17, 1
    %p77 = por %p75, %p76
    %p78 = scmp.ne.s32.totalorder %s69, %s70
    %p79 = scmp.eq.s32.totalorder %s17, 0
    %p80 = por %p78, %p79
    %p81 = scmp.ne.s32.totalorder %s69, %s70
    %p82 = scmp.eq.s32.totalorder %s18, 1
    %p83 = por %p81, %p82
    %p85 = scmp.ne.s32.totalorder %s70, %s84
    %p86 = scmp.eq.s32.totalorder %s18, 0
    %p87 = por %p85, %p86
    %s89 = sadd.s32 %s88, 1
    %p92 = scmp.eq.s32.totalorder %s12, 1
    %p93 = scmp.ne.s32.totalorder %s88, %s90
    %p94 = scmp.eq.s32.totalorder %s12, 0
    %p95 = por %p93, %p94
    %p96 = scmp.ne.s32.totalorder %s88, %s90
    %p97 = scmp.eq.s32.totalorder %s17, 1
    %p98 = por %p96, %p97
    %p99 = scmp.ne.s32.totalorder %s90, %s91
    %p100 = scmp.eq.s32.totalorder %s17, 0
    %p101 = por %p99, %p100
    %p102 = scmp.ne.s32.totalorder %s90, %s91
    %p103 = scmp.eq.s32.totalorder %s18, 1
    %p104 = por %p102, %p103
    %p106 = scmp.ne.s32.totalorder %s91, %s105
    %p107 = scmp.eq.s32.totalorder %s18, 0
    %p108 = por %p106, %p107
    %s110 = sadd.s32 %s109, 1
    %p113 = scmp.eq.s32.totalorder %s12, 1
    %p114 = scmp.ne.s32.totalorder %s109, %s111
    %p115 = scmp.eq.s32.totalorder %s12, 0
    %p116 = por %p114, %p115
    %p117 = scmp.ne.s32.totalorder %s109, %s111
    %p118 = scmp.eq.s32.totalorder %s17, 1
    %p119 = por %p117, %p118
    %p120 = scmp.ne.s32.totalorder %s111, %s112
    %p121 = scmp.eq.s32.totalorder %s17, 0
    %p122 = por %p120, %p121
    %p123 = scmp.ne.s32.totalorder %s111, %s112
    %p124 = scmp.eq.s32.totalorder %s18, 1
    %p125 = por %p123, %p124
    %p127 = scmp.ne.s32.totalorder %s112, %s126
    %p128 = scmp.eq.s32.totalorder %s18, 0
    %p129 = por %p127, %p128
    %s131 = sadd.s32 %s130, 1
    %p134 = scmp.eq.s32.totalorder %s12, 1
    %p135 = scmp.ne.s32.totalorder %s130, %s132
    %p136 = scmp.eq.s32.totalorder %s12, 0
    %p137 = por %p135, %p136
    %p138 = scmp.ne.s32.totalorder %s130, %s132
    %p139 = scmp.eq.s32.totalorder %s17, 1
    %p140 = por %p138, %p139
    %p141 = scmp.ne.s32.totalorder %s132, %s133
    %p142 = scmp.eq.s32.totalorder %s17, 0
    %p143 = por %p141, %p142
    %p144 = scmp.ne.s32.totalorder %s132, %s133
    %p145 = scmp.eq.s32.totalorder %s18, 1
    %p146 = por %p144, %p145
    %p148 = scmp.ne.s32.totalorder %s133, %s147
    %p149 = scmp.eq.s32.totalorder %s18, 0
    %p150 = por %p148, %p149
    %s151 = ssub.s32 %s12, %s19
    %p152 = scmp.eq.s32.totalorder %s151, 0
    %s154 = sadd.s32 %s153, 1
    %s155 = scalar_select %p152, %s153, %s154
    %p158 = pneg %p152
    %p159 = scmp.eq.s32.totalorder %s12, 1
    %p160 = por %p158, %p159
    %p161 = scmp.ne.s32.totalorder %s153, %s156
    %p162 = scmp.eq.s32.totalorder %s12, 0
    %p163 = por %p161, %p162
    %p164 = scmp.ne.s32.totalorder %s153, %s156
    %p165 = scmp.eq.s32.totalorder %s17, 1
    %p166 = por %p164, %p165
    %p167 = scmp.ne.s32.totalorder %s156, %s157
    %p168 = scmp.eq.s32.totalorder %s17, 0
    %p169 = por %p167, %p168
    %p170 = scmp.ne.s32.totalorder %s156, %s157
    %p171 = scmp.eq.s32.totalorder %s18, 1
    %p172 = por %p170, %p171
    %p174 = scmp.ne.s32.totalorder %s157, %s173
    %p175 = scmp.eq.s32.totalorder %s18, 0
    %p176 = por %p174, %p175
    %p177 = scmp.le.s32.totalorder 1, %s12
    %p178 = scmp.lt.s32.totalorder %s12, 3
    %p179 = pnand %p177, %p178
    %p180 = pneg %p179
    // Predicated region
    $region9: #{discriminator_forward.5} parent=5 // pred_check
      _
    $region10: #{discriminator_forward.5} parent=5 // pred_check_branch
      %182 = sbr.rel (%p179) target = $region12
    $region11: #{discriminator_forward.5} parent=5 // pred_region
      %s183 = ssub.s32 %s12, 1
      // Predicated region
      $region13: #{discriminator_forward.5} parent=11 // pred_check
        %p184 = pneg %p59
      $region14: #{discriminator_forward.5} parent=11 // pred_check_branch
        %186 = sbr.rel (%p184) target = $region16
      $region15: #{discriminator_forward.5} parent=11 // pred_region
        _
      $region16: #{discriminator_forward.5} parent=11 // pred_fallthru
        _
      // Predicated region
      $region17: #{discriminator_forward.5} parent=11 // pred_check
        %p187 = pneg %p80
      $region18: #{discriminator_forward.5} parent=11 // pred_check_branch
        %189 = sbr.rel (%p187) target = $region20
      $region19: #{discriminator_forward.5} parent=11 // pred_region
        _
      $region20: #{discriminator_forward.5} parent=11 // pred_fallthru
        _
      // Predicated region
      $region21: #{discriminator_forward.5} parent=11 // pred_check
        %p190 = pneg %p101
      $region22: #{discriminator_forward.5} parent=11 // pred_check_branch
        %192 = sbr.rel (%p190) target = $region24
      $region23: #{discriminator_forward.5} parent=11 // pred_region
        _
      $region24: #{discriminator_forward.5} parent=11 // pred_fallthru
        _
      // Predicated region
      $region25: #{discriminator_forward.5} parent=11 // pred_check
        %p193 = pneg %p122
      $region26: #{discriminator_forward.5} parent=11 // pred_check_branch
        %195 = sbr.rel (%p193) target = $region28
      $region27: #{discriminator_forward.5} parent=11 // pred_region
        _
      $region28: #{discriminator_forward.5} parent=11 // pred_fallthru
        _
      // Predicated region
      $region29: #{discriminator_forward.5} parent=11 // pred_check
        %p196 = pneg %p143
      $region30: #{discriminator_forward.5} parent=11 // pred_check_branch
        %198 = sbr.rel (%p196) target = $region32
      $region31: #{discriminator_forward.5} parent=11 // pred_region
        _
      $region32: #{discriminator_forward.5} parent=11 // pred_fallthru
        _
    $region12: #{discriminator_forward.5} parent=5 // pred_fallthru
      _
    %p199 = scmp.lt.s32.totalorder %s12, 2
    // Predicated region
    $region33: #{discriminator_forward.5} parent=5 // pred_check
      %p200 = pneg %p199
    $region34: #{discriminator_forward.5} parent=5 // pred_check_branch
      %202 = sbr.rel (%p200) target = $region36
    $region35: #{discriminator_forward.5} parent=5 // pred_region
      // Predicated region
      $region37: #{discriminator_forward.5} parent=35 // pred_check
        %p203 = pneg %p32
      $region38: #{discriminator_forward.5} parent=35 // pred_check_branch
        %205 = sbr.rel (%p203) target = $region40
      $region39: #{discriminator_forward.5} parent=35 // pred_region
        %p206 = scmp.lt.s32.totalorder %s12, 1
        %s207 = scalar_select %p206, %s12, 1
        %s208 = smul.addr %s207, 48
        %s209 = smul.addr %s208, 4
        %s210 = scalar_lea.vmem %s0, %s209
      $region40: #{discriminator_forward.5} parent=35 // pred_fallthru
        _
    $region36: #{discriminator_forward.5} parent=5 // pred_fallthru
      _
    %p211 = scmp.le.s32.totalorder 1, %s12
    %p212 = scmp.lt.s32.totalorder %s12, 3
    %p213 = pnand %p211, %p212
    %p214 = pneg %p213
    // Predicated region
    $region41: #{discriminator_forward.5} parent=5 // pred_check
      _
    $region42: #{discriminator_forward.5} parent=5 // pred_check_branch
      %216 = sbr.rel (%p213) target = $region44
    $region43: #{discriminator_forward.5} parent=5 // pred_region
      %s217 = ssub.s32 %s12, 1
      %p218 = scmp.lt.s32.totalorder %s17, 1
      %s219 = scalar_select %p218, %s17, 1
      %s220 = smul.addr %s219, 48
      %s221 = smul.addr %s220, 4
      %s222 = scalar_lea.vmem %s0, %s221
      %p223 = pneg %p38
      %p224 = pneg %p35
      %p225 = pneg %p59
      %p226 = pneg %p56
      %p227 = pneg %p80
      %p228 = pneg %p77
      %p229 = pneg %p101
      %p230 = pneg %p98
      %p231 = pneg %p122
      %p232 = pneg %p119
      %p233 = pneg %p143
      %p234 = pneg %p140
      %p235 = pneg %p169
      %p236 = pneg %p166
      %p237 = scmp.lt.s32.totalorder %s17, 1
      %s238 = scalar_select %p237, %s17, 1
      %s239 = smul.addr %s238, 6
      %s240 = smul.addr %s239, 8
      %s241 = scalar_lea.vmem %s6, %s240
      %p242 = scmp.lt.s32.totalorder %s17, 1
      %s243 = scalar_select %p242, %s17, 1
      %s244 = smul.addr %s243, 48
      %s245 = smul.addr %s244, 4
      %s246 = scalar_lea.vmem %s0, %s245
      %p247 = scmp.lt.s32.totalorder %s17, 1
      %s248 = scalar_select %p247, %s17, 1
      %s249 = smul.addr %s248, 6
      %s250 = smul.addr %s249, 8
      %s251 = scalar_lea.vmem %s6, %s250
      %v253 = vld [vmem:[%s4] sm:$0xff]
      %v254 = vld [vmem:[%s4 + $0x8] sm:$0xff]
      %v255 = vld [vmem:[%s4 + $0x10] sm:$0xff]
      %v256 = vld [vmem:[%s4 + $0x18] sm:$0xff]
      %v257 = vld [vmem:[%s4 + $0x20] sm:$0xff]
      %v258 = vld [vmem:[%s4 + $0x28] sm:$0xff]
      %v259 = vld [vmem:[%s4 + $0x30] sm:$0xff]
      %v260 = vld [vmem:[%s4 + $0x38] sm:$0xff]
      %v261 = vld [vmem:[%s5] sm:$0xff]
      %v262 = vld [vmem:[%s5 + $0x8] sm:$0xff]
      %v263 = vld [vmem:[%s5 + $0x10] sm:$0xff]
      %v264 = vld [vmem:[%s5 + $0x18] sm:$0xff]
      %v265 = vld [vmem:[%s3] sm:$0x3f]
      %v266 = vld [vmem:[%s246] sm:$0xff]
      %v267 = vld [vmem:[%s246 + $0x8] sm:$0xff]
      %v268 = vld [vmem:[%s246 + $0x10] sm:$0xff]
      %v269 = vld [vmem:[%s246 + $0x18] sm:$0xff]
      %v270 = vld [vmem:[%s246 + $0x20] sm:$0xff]
      %v271 = vld [vmem:[%s246 + $0x28] sm:$0xff]
      %v272 = vld [vmem:[%s246 + $0x30] sm:$0xff]
      %v273 = vld [vmem:[%s246 + $0x38] sm:$0xff]
      %v274 = vld [vmem:[%s246 + $0x40] sm:$0xff]
      %v275 = vld [vmem:[%s246 + $0x48] sm:$0xff]
      %v276 = vld [vmem:[%s246 + $0x50] sm:$0xff]
      %v277 = vld [vmem:[%s246 + $0x58] sm:$0xff]
      %v278 = vld [vmem:[%s246 + $0x60] sm:$0xff]
      %v279 = vld [vmem:[%s246 + $0x68] sm:$0xff]
      %v280 = vld [vmem:[%s246 + $0x70] sm:$0xff]
      %v281 = vld [vmem:[%s246 + $0x78] sm:$0xff]
      %v282 = vld [vmem:[%s246 + $0x80] sm:$0xff]
      %v283 = vld [vmem:[%s246 + $0x88] sm:$0xff]
      %v284 = vld [vmem:[%s246 + $0x90] sm:$0xff]
      %v285 = vld [vmem:[%s246 + $0x98] sm:$0xff]
      %v286 = vld [vmem:[%s246 + $0xa0] sm:$0xff]
      %v287 = vld [vmem:[%s246 + $0xa8] sm:$0xff]
      %v288 = vld [vmem:[%s246 + $0xb0] sm:$0xff]
      %v289 = vld [vmem:[%s246 + $0xb8] sm:$0xff]
      %v290 = vld [vmem:[%s1] sm:$0xf]
      %v291 = vld [vmem:[%s1 + $0x4] sm:$0xf]
      %v292 = vld [vmem:[%s1 + $0x8] sm:$0xf]
      %v293 = vld [vmem:[%s1 + $0xc] sm:$0xf]
      %v294 = vld [vmem:[%s1 + $0x10] sm:$0xf]
      %v295 = vld [vmem:[%s1 + $0x14] sm:$0xf]
      %v296 = vld [vmem:[%s1 + $0x18] sm:$0xf]
      %v297 = vld [vmem:[%s1 + $0x1c] sm:$0xf]
      %v298 = vld [vmem:[%s1 + $0x20] sm:$0xf]
      %v299 = vld [vmem:[%s1 + $0x24] sm:$0xf]
      %v300 = vld [vmem:[%s1 + $0x28] sm:$0xf]
      %v301 = vld [vmem:[%s1 + $0x2c] sm:$0xf]
      %v302 = vld [vmem:[%s1 + $0x30] sm:$0xf]
      %v303 = vld [vmem:[%s1 + $0x34] sm:$0xf]
      %v304 = vld [vmem:[%s1 + $0x38] sm:$0xf]
      %v305 = vld [vmem:[%s1 + $0x3c] sm:$0xf]
      %v306 = vld [vmem:[%s1 + $0x40] sm:$0x3]
      %v307 = vlaneseq
      %v308 = vshrl.u32 %v307, 7
      %v309 = vsub.s32 0, %v308
      %v310 = vrot.slane %v265, %v309
      %v335 = vunpack.c.l.b16 %v266
      %v336 = vunpack.c.h.b16 %v266
      %v337 = vunpack.c.l.b16 %v267
      %v338 = vunpack.c.h.b16 %v267
      %v339 = vunpack.c.l.b16 %v268
      %v340 = vunpack.c.h.b16 %v268
      %v341 = vunpack.c.l.b16 %v269
      %v342 = vunpack.c.h.b16 %v269
      %v343 = vunpack.c.l.b16 %v270
      %v344 = vunpack.c.h.b16 %v270
      %v345 = vunpack.c.l.b16 %v271
      %v346 = vunpack.c.h.b16 %v271
      %v347 = vunpack.c.l.b16 %v272
      %v348 = vunpack.c.h.b16 %v272
      %v349 = vunpack.c.l.b16 %v273
      %v350 = vunpack.c.h.b16 %v273
      %v351 = vunpack.c.l.b16 %v274
      %v352 = vunpack.c.h.b16 %v274
      %v353 = vunpack.c.l.b16 %v275
      %v354 = vunpack.c.h.b16 %v275
      %v355 = vunpack.c.l.b16 %v276
      %v356 = vunpack.c.h.b16 %v276
      %v357 = vunpack.c.l.b16 %v277
      %v358 = vunpack.c.h.b16 %v277
      %v359 = vunpack.c.l.b16 %v278
      %v360 = vunpack.c.h.b16 %v278
      %v361 = vunpack.c.l.b16 %v279
      %v362 = vunpack.c.h.b16 %v279
      %v363 = vunpack.c.l.b16 %v280
      %v364 = vunpack.c.h.b16 %v280
      %v365 = vunpack.c.l.b16 %v281
      %v366 = vunpack.c.h.b16 %v281
      %v367 = vunpack.c.l.b16 %v282
      %v368 = vunpack.c.h.b16 %v282
      %v369 = vunpack.c.l.b16 %v283
      %v370 = vunpack.c.h.b16 %v283
      %v371 = vunpack.c.l.b16 %v284
      %v372 = vunpack.c.h.b16 %v284
      %v373 = vunpack.c.l.b16 %v285
      %v374 = vunpack.c.h.b16 %v285
      %v375 = vunpack.c.l.b16 %v286
      %v376 = vunpack.c.h.b16 %v286
      %v377 = vunpack.c.l.b16 %v287
      %v378 = vunpack.c.h.b16 %v287
      %v379 = vunpack.c.l.b16 %v288
      %v380 = vunpack.c.h.b16 %v288
      %v381 = vunpack.c.l.b16 %v289
      %v382 = vunpack.c.h.b16 %v289
      %v383 = vpack.c.b16 %v337, %v335
      %v384 = vpack.c.b16 %v338, %v336
      %v385 = vpack.c.b16 %v341, %v339
      %v386 = vpack.c.b16 %v342, %v340
      %v387 = vpack.c.b16 %v345, %v343
      %v388 = vpack.c.b16 %v346, %v344
      %v389 = vpack.c.b16 %v349, %v347
      %v390 = vpack.c.b16 %v350, %v348
      %v391 = vpack.c.b16 %v353, %v351
      %v392 = vpack.c.b16 %v354, %v352
      %v393 = vpack.c.b16 %v357, %v355
      %v394 = vpack.c.b16 %v358, %v356
      %v395 = vpack.c.b16 %v361, %v359
      %v396 = vpack.c.b16 %v362, %v360
      %v397 = vpack.c.b16 %v365, %v363
      %v398 = vpack.c.b16 %v366, %v364
      %v399 = vpack.c.b16 %v369, %v367
      %v400 = vpack.c.b16 %v370, %v368
      %v401 = vpack.c.b16 %v373, %v371
      %v402 = vpack.c.b16 %v374, %v372
      %v403 = vpack.c.b16 %v377, %v375
      %v404 = vpack.c.b16 %v378, %v376
      %v405 = vpack.c.b16 %v381, %v379
      %v406 = vpack.c.b16 %v382, %v380
      %v436 = vunpack.c.l.b16 %v290
      %v437 = vunpack.c.l.b16 %v291
      %v438 = vunpack.c.l.b16 %v292
      %v439 = vunpack.c.l.b16 %v293
      %v440 = vunpack.c.l.b16 %v294
      %v441 = vunpack.c.l.b16 %v295
      %v442 = vunpack.c.l.b16 %v296
      %v443 = vunpack.c.l.b16 %v297
      %v444 = vunpack.c.l.b16 %v298
      %v445 = vunpack.c.l.b16 %v299
      %v446 = vunpack.c.l.b16 %v300
      %v447 = vunpack.c.l.b16 %v301
      %v448 = vunpack.c.l.b16 %v302
      %v449 = vunpack.c.l.b16 %v303
      %v450 = vunpack.c.l.b16 %v304
      %v451 = vunpack.c.l.b16 %v305
      %v452 = vunpack.c.l.b16 %v306
      %v453 = vpack.c.b16 %v437, %v436
      %v454 = vpack.c.b16 %v439, %v438
      %v455 = vpack.c.b16 %v441, %v440
      %v456 = vpack.c.b16 %v443, %v442
      %v457 = vpack.c.b16 %v445, %v444
      %v458 = vpack.c.b16 %v447, %v446
      %v459 = vpack.c.b16 %v449, %v448
      %v460 = vpack.c.b16 %v451, %v450
      %v461 = vpack.c.b16 %v452, %v452
      %vm470 = vcmask 31744
      %v472 = vsel %vm470, %v384, 0
      %v475 = vsel %vm470, %v386, 0
      %v478 = vsel %vm470, %v388, 0
      %v481 = vsel %vm470, %v390, 0
      %v484 = vsel %vm470, %v392, 0
      %v487 = vsel %vm470, %v394, 0
      %v490 = vsel %vm470, %v396, 0
      %v493 = vsel %vm470, %v398, 0
      %v496 = vsel %vm470, %v400, 0
      %v499 = vsel %vm470, %v402, 0
      %v502 = vsel %vm470, %v404, 0
      %v505 = vsel %vm470, %v406, 0
      %vm507 = vcmask 1041408
      %v509 = vsel %vm507, %v461, 0
      %511 = vmatprep.subr.bf16.mxu0 0
      %512 = vmatpush1.bf16.msra.mxu0 %v453
      %513 = vmatprep.subr.bf16.mxu0 0
      %514 = vmatpush1.bf16.msra.mxu0 %v454
      %515 = vmatprep.subr.bf16.mxu0 0
      %516 = vmatpush1.bf16.msra.mxu0 %v455
      %517 = vmatprep.subr.bf16.mxu0 0
      %518 = vmatpush1.bf16.msra.mxu0 %v456
      %519 = vmatprep.subr.bf16.mxu0 0
      %520 = vmatpush1.bf16.msra.mxu0 %v457
      %521 = vmatprep.subr.bf16.mxu0 0
      %522 = vmatpush1.bf16.msra.mxu0 %v458
      %523 = vmatprep.subr.bf16.mxu0 0
      %524 = vmatpush1.bf16.msra.mxu0 %v459
      %525 = vmatprep.subr.bf16.mxu0 0
      %526 = vmatpush1.bf16.msra.mxu0 %v460
      %527 = vmatprep.subr.bf16.mxu0 0
      %528 = vmatpush1.bf16.msra.mxu0 %v509
      %529 = vmatprep.subr.bf16.mxu0 0
      %530 = vmatpush1.bf16.msra.mxu0 0
      %531 = vmatprep.subr.bf16.mxu0 0
      %532 = vmatpush1.bf16.msra.mxu0 0
      %533 = vmatprep.subr.bf16.mxu0 0
      %534 = vmatpush1.bf16.msra.mxu0 0
      %535 = vmatprep.subr.bf16.mxu0 0
      %536 = vmatpush1.bf16.msra.mxu0 0
      %537 = vmatprep.subr.bf16.mxu0 0
      %538 = vmatpush1.bf16.msra.mxu0 0
      %539 = vmatprep.subr.bf16.mxu0 0
      %540 = vmatpush1.bf16.msra.mxu0 0
      %541 = vmatprep.subr.bf16.mxu0 0
      %542 = vmatpush1.bf16.msra.mxu0 0
      %543 = vmatprep.mubr.bf16.mxu0 %v472
      %544 = vmatmul.mubr.bf16.gmra.mrb[0].mxu0 %v383
      %v545 = vpop.f32.mrb[0].mxu0
      %v546 = vadd.f32 %v310, %v545
      %v547 = vpop.f32.mrb[0].mxu0
      %v548 = vpop.f32.mrb[0].mxu0
      %v549 = vadd.f32 %v310, %v548
      %v550 = vpop.f32.mrb[0].mxu0
      %551 = vmatprep.mubr.bf16.mxu0 %v475
      %552 = vmatmul.mubr.bf16.gmra.mrb[0].mxu0 %v385
      %v553 = vpop.f32.mrb[0].mxu0
      %v554 = vadd.f32 %v310, %v553
      %v555 = vpop.f32.mrb[0].mxu0
      %v556 = vpop.f32.mrb[0].mxu0
      %v557 = vadd.f32 %v310, %v556
      %v558 = vpop.f32.mrb[0].mxu0
      %559 = vmatprep.mubr.bf16.mxu0 %v478
      %560 = vmatmul.mubr.bf16.gmra.mrb[0].mxu0 %v387
      %v561 = vpop.f32.mrb[0].mxu0
      %v562 = vadd.f32 %v310, %v561
      %v563 = vpop.f32.mrb[0].mxu0
      %v564 = vpop.f32.mrb[0].mxu0
      %v565 = vadd.f32 %v310, %v564
      %v566 = vpop.f32.mrb[0].mxu0
      %567 = vmatprep.mubr.bf16.mxu0 %v481
      %568 = vmatmul.mubr.bf16.gmra.mrb[0].mxu0 %v389
      %v569 = vpop.f32.mrb[0].mxu0
      %v570 = vadd.f32 %v310, %v569
      %v571 = vpop.f32.mrb[0].mxu0
      %v572 = vpop.f32.mrb[0].mxu0
      %v573 = vadd.f32 %v310, %v572
      %v574 = vpop.f32.mrb[0].mxu0
      %575 = vmatprep.mubr.bf16.mxu0 %v484
      %576 = vmatmul.mubr.bf16.gmra.mrb[0].mxu0 %v391
      %v577 = vpop.f32.mrb[0].mxu0
      %v578 = vadd.f32 %v310, %v577
      %v579 = vpop.f32.mrb[0].mxu0
      %v580 = vpop.f32.mrb[0].mxu0
      %v581 = vadd.f32 %v310, %v580
      %v582 = vpop.f32.mrb[0].mxu0
      %583 = vmatprep.mubr.bf16.mxu0 %v487
      %584 = vmatmul.mubr.bf16.gmra.mrb[0].mxu0 %v393
      %v585 = vpop.f32.mrb[0].mxu0
      %v586 = vadd.f32 %v310, %v585
      %v587 = vpop.f32.mrb[0].mxu0
      %v588 = vpop.f32.mrb[0].mxu0
      %v589 = vadd.f32 %v310, %v588
      %v590 = vpop.f32.mrb[0].mxu0
      %591 = vmatprep.mubr.bf16.mxu0 %v490
      %592 = vmatmul.mubr.bf16.gmra.mrb[0].mxu0 %v395
      %v593 = vpop.f32.mrb[0].mxu0
      %v594 = vadd.f32 %v310, %v593
      %v595 = vpop.f32.mrb[0].mxu0
      %v596 = vpop.f32.mrb[0].mxu0
      %v597 = vadd.f32 %v310, %v596
      %v598 = vpop.f32.mrb[0].mxu0
      %599 = vmatprep.mubr.bf16.mxu0 %v493
      %600 = vmatmul.mubr.bf16.gmra.mrb[0].mxu0 %v397
      %v601 = vpop.f32.mrb[0].mxu0
      %v602 = vadd.f32 %v310, %v601
      %v603 = vpop.f32.mrb[0].mxu0
      %v604 = vpop.f32.mrb[0].mxu0
      %v605 = vadd.f32 %v310, %v604
      %v606 = vpop.f32.mrb[0].mxu0
      %607 = vmatprep.mubr.bf16.mxu0 %v496
      %608 = vmatmul.mubr.bf16.gmra.mrb[0].mxu0 %v399
      %v609 = vpop.f32.mrb[0].mxu0
      %v610 = vadd.f32 %v310, %v609
      %v611 = vpop.f32.mrb[0].mxu0
      %v612 = vpop.f32.mrb[0].mxu0
      %v613 = vadd.f32 %v310, %v612
      %v614 = vpop.f32.mrb[0].mxu0
      %615 = vmatprep.mubr.bf16.mxu0 %v499
      %616 = vmatmul.mubr.bf16.gmra.mrb[0].mxu0 %v401
      %v617 = vpop.f32.mrb[0].mxu0
      %v618 = vadd.f32 %v310, %v617
      %v619 = vpop.f32.mrb[0].mxu0
      %v620 = vpop.f32.mrb[0].mxu0
      %v621 = vadd.f32 %v310, %v620
      %v622 = vpop.f32.mrb[0].mxu0
      %623 = vmatprep.mubr.bf16.mxu0 %v502
      %624 = vmatmul.mubr.bf16.gmra.mrb[0].mxu0 %v403
      %v625 = vpop.f32.mrb[0].mxu0
      %v626 = vadd.f32 %v310, %v625
      %v627 = vpop.f32.mrb[0].mxu0
      %v628 = vpop.f32.mrb[0].mxu0
      %v629 = vadd.f32 %v310, %v628
      %v630 = vpop.f32.mrb[0].mxu0
      %631 = vmatprep.mubr.bf16.mxu0 %v505
      %632 = vmatmul.mubr.bf16.gmra.mrb[0].mxu0 %v405
      %v633 = vpop.f32.mrb[0].mxu0
      %v634 = vadd.f32 %v310, %v633
      %v635 = vpop.f32.mrb[0].mxu0
      %v636 = vpop.f32.mrb[0].mxu0
      %v637 = vadd.f32 %v310, %v636
      %v638 = vpop.f32.mrb[0].mxu0
      %639 = vdwg.mxu0
      %vm640 = vcmask 523264
      %v641 = vsel %vm640, %v546, 0.0
      %v642 = vsel %vm640, %v549, 0.0
      %v643 = vadd.f32 %v641, %v642
      %v644 = vsel %vm640, %v554, 0.0
      %v645 = vadd.f32 %v643, %v644
      %v646 = vsel %vm640, %v557, 0.0
      %v647 = vadd.f32 %v645, %v646
      %v648 = vsel %vm640, %v562, 0.0
      %v649 = vadd.f32 %v647, %v648
      %v650 = vsel %vm640, %v565, 0.0
      %v651 = vadd.f32 %v649, %v650
      %v652 = vsel %vm640, %v570, 0.0
      %v653 = vadd.f32 %v651, %v652
      %v654 = vsel %vm640, %v573, 0.0
      %v655 = vadd.f32 %v653, %v654
      %v656 = vsel %vm640, %v578, 0.0
      %v657 = vadd.f32 %v655, %v656
      %v658 = vsel %vm640, %v581, 0.0
      %v659 = vadd.f32 %v657, %v658
      %v660 = vsel %vm640, %v586, 0.0
      %v661 = vadd.f32 %v659, %v660
      %v662 = vsel %vm640, %v589, 0.0
      %v663 = vadd.f32 %v661, %v662
      %v664 = vsel %vm640, %v594, 0.0
      %v665 = vadd.f32 %v663, %v664
      %v666 = vsel %vm640, %v597, 0.0
      %v667 = vadd.f32 %v665, %v666
      %v668 = vsel %vm640, %v602, 0.0
      %v669 = vadd.f32 %v667, %v668
      %v670 = vsel %vm640, %v605, 0.0
      %v671 = vadd.f32 %v669, %v670
      %v672 = vsel %vm640, %v610, 0.0
      %v673 = vadd.f32 %v671, %v672
      %v674 = vsel %vm640, %v613, 0.0
      %v675 = vadd.f32 %v673, %v674
      %v676 = vsel %vm640, %v618, 0.0
      %v677 = vadd.f32 %v675, %v676
      %v678 = vsel %vm640, %v621, 0.0
      %v679 = vadd.f32 %v677, %v678
      %v680 = vsel %vm640, %v626, 0.0
      %v681 = vadd.f32 %v679, %v680
      %v682 = vsel %vm640, %v629, 0.0
      %v683 = vadd.f32 %v681, %v682
      %v684 = vsel %vm640, %v634, 0.0
      %v685 = vadd.f32 %v683, %v684
      %v686 = vsel %vm640, %v637, 0.0
      %v687 = vadd.f32 %v685, %v686
      %v688 = vrot.slane %v687, 4
      %v689 = vadd.f32 %v687, %v688
      %v690 = vrot.slane %v689, 2
      %v691 = vadd.f32 %v689, %v690
      %v692 = vrot.slane %v691, 1
      %v693 = vadd.f32 %v691, %v692
      %v694 = vmul.f32 %v546, %v546
      %v695 = vmul.f32 %v549, %v549
      %v696 = vmul.f32 %v554, %v554
      %v697 = vmul.f32 %v557, %v557
      %v698 = vmul.f32 %v562, %v562
      %v699 = vmul.f32 %v565, %v565
      %v700 = vmul.f32 %v570, %v570
      %v701 = vmul.f32 %v573, %v573
      %v702 = vmul.f32 %v578, %v578
      %v703 = vmul.f32 %v581, %v581
      %v704 = vmul.f32 %v586, %v586
      %v705 = vmul.f32 %v589, %v589
      %v706 = vmul.f32 %v594, %v594
      %v707 = vmul.f32 %v597, %v597
      %v708 = vmul.f32 %v602, %v602
      %v709 = vmul.f32 %v605, %v605
      %v710 = vmul.f32 %v610, %v610
      %v711 = vmul.f32 %v613, %v613
      %v712 = vmul.f32 %v618, %v618
      %v713 = vmul.f32 %v621, %v621
      %v714 = vmul.f32 %v626, %v626
      %v715 = vmul.f32 %v629, %v629
      %v716 = vmul.f32 %v634, %v634
      %v717 = vmul.f32 %v637, %v637
      %v718 = vsel %vm640, %v694, 0.0
      %v719 = vsel %vm640, %v695, 0.0
      %v720 = vadd.f32 %v718, %v719
      %v721 = vsel %vm640, %v696, 0.0
      %v722 = vadd.f32 %v720, %v721
      %v723 = vsel %vm640, %v697, 0.0
      %v724 = vadd.f32 %v722, %v723
      %v725 = vsel %vm640, %v698, 0.0
      %v726 = vadd.f32 %v724, %v725
      %v727 = vsel %vm640, %v699, 0.0
      %v728 = vadd.f32 %v726, %v727
      %v729 = vsel %vm640, %v700, 0.0
      %v730 = vadd.f32 %v728, %v729
      %v731 = vsel %vm640, %v701, 0.0
      %v732 = vadd.f32 %v730, %v731
      %v733 = vsel %vm640, %v702, 0.0
      %v734 = vadd.f32 %v732, %v733
      %v735 = vsel %vm640, %v703, 0.0
      %v736 = vadd.f32 %v734, %v735
      %v737 = vsel %vm640, %v704, 0.0
      %v738 = vadd.f32 %v736, %v737
      %v739 = vsel %vm640, %v705, 0.0
      %v740 = vadd.f32 %v738, %v739
      %v741 = vsel %vm640, %v706, 0.0
      %v742 = vadd.f32 %v740, %v741
      %v743 = vsel %vm640, %v707, 0.0
      %v744 = vadd.f32 %v742, %v743
      %v745 = vsel %vm640, %v708, 0.0
      %v746 = vadd.f32 %v744, %v745
      %v747 = vsel %vm640, %v709, 0.0
      %v748 = vadd.f32 %v746, %v747
      %v749 = vsel %vm640, %v710, 0.0
      %v750 = vadd.f32 %v748, %v749
      %v751 = vsel %vm640, %v711, 0.0
      %v752 = vadd.f32 %v750, %v751
      %v753 = vsel %vm640, %v712, 0.0
      %v754 = vadd.f32 %v752, %v753
      %v755 = vsel %vm640, %v713, 0.0
      %v756 = vadd.f32 %v754, %v755
      %v757 = vsel %vm640, %v714, 0.0
      %v758 = vadd.f32 %v756, %v757
      %v759 = vsel %vm640, %v715, 0.0
      %v760 = vadd.f32 %v758, %v759
      %v761 = vsel %vm640, %v716, 0.0
      %v762 = vadd.f32 %v760, %v761
      %v763 = vsel %vm640, %v717, 0.0
      %v764 = vadd.f32 %v762, %v763
      %v765 = vrot.slane %v764, 4
      %v766 = vadd.f32 %v764, %v765
      %v767 = vrot.slane %v766, 2
      %v768 = vadd.f32 %v766, %v767
      %v769 = vrot.slane %v768, 1
      %v770 = vadd.f32 %v768, %v769
      %vm771 = vcmask 1040384
      %v772 = vsel %vm771, %v693, %v770
      %v774 = vsel %vm640, %v772, 0
      %776 = vmatprep.subr.mxu0 0.0
      %777 = vmatpush1.msra.mxu0 %v253
      %778 = vmatprep.subr.mxu0 0.0
      %779 = vmatpush1.msra.mxu0 %v254
      %780 = vmatprep.subr.mxu0 0.0
      %781 = vmatpush1.msra.mxu0 %v255
      %782 = vmatprep.subr.mxu0 0.0
      %783 = vmatpush1.msra.mxu0 %v256
      %784 = vmatprep.subr.mxu0 0.0
      %785 = vmatpush1.msra.mxu0 %v257
      %786 = vmatprep.subr.mxu0 0.0
      %787 = vmatpush1.msra.mxu0 %v258
      %788 = vmatprep.subr.mxu0 0.0
      %789 = vmatpush1.msra.mxu0 %v259
      %790 = vmatprep.subr.mxu0 0.0
      %791 = vmatpush1.msra.mxu0 %v260
      %792 = vmatprep.subr.mxu0 0.0
      %793 = vmatpush1.msra.mxu0 0.0
      %794 = vmatprep.subr.mxu0 0.0
      %795 = vmatpush1.msra.mxu0 0.0
      %796 = vmatprep.subr.mxu0 0.0
      %797 = vmatpush1.msra.mxu0 0.0
      %798 = vmatprep.subr.mxu0 0.0
      %799 = vmatpush1.msra.mxu0 0.0
      %800 = vmatprep.subr.mxu0 0.0
      %801 = vmatpush1.msra.mxu0 0.0
      %802 = vmatprep.subr.mxu0 0.0
      %803 = vmatpush1.msra.mxu0 0.0
      %804 = vmatprep.subr.mxu0 0.0
      %805 = vmatpush1.msra.mxu0 0.0
      %806 = vmatprep.subr.mxu0 0.0
      %807 = vmatpush1.msra.mxu0 0.0
      %808 = vmatprep.subr.mxu0 0.0
      %809 = vmatpush1.msra.mxu0 0.0
      %810 = vmatprep.subr.mxu0 0.0
      %811 = vmatpush1.msra.mxu0 0.0
      %812 = vmatprep.subr.mxu0 0.0
      %813 = vmatpush1.msra.mxu0 0.0
      %814 = vmatprep.subr.mxu0 0.0
      %815 = vmatpush1.msra.mxu0 0.0
      %816 = vmatprep.subr.mxu0 0.0
      %817 = vmatpush1.msra.mxu0 0.0
      %818 = vmatprep.subr.mxu0 0.0
      %819 = vmatpush1.msra.mxu0 0.0
      %820 = vmatprep.subr.mxu0 0.0
      %821 = vmatpush1.msra.mxu0 0.0
      %822 = vmatprep.subr.mxu0 0.0
      %823 = vmatpush1.msra.mxu0 0.0
      %824 = vmatprep.subr.mxu0 0.0
      %825 = vmatpush1.msra.mxu0 0.0
      %826 = vmatprep.subr.mxu0 0.0
      %827 = vmatpush1.msra.mxu0 0.0
      %828 = vmatprep.subr.mxu0 0.0
      %829 = vmatpush1.msra.mxu0 0.0
      %830 = vmatprep.subr.mxu0 0.0
      %831 = vmatpush1.msra.mxu0 0.0
      %832 = vmatprep.subr.mxu0 0.0
      %833 = vmatpush1.msra.mxu0 0.0
      %834 = vmatprep.subr.mxu0 0.0
      %835 = vmatpush1.msra.mxu0 0.0
      %836 = vmatprep.subr.mxu0 0.0
      %837 = vmatpush1.msra.mxu0 0.0
      %838 = vmatprep.subr.mxu0 0.0
      %839 = vmatpush1.msra.mxu0 0.0
      %840 = vmatprep.mubr.f32.mxu0 0.0
      %841 = vmatmul.mubr.f32.gmra.mrb[0].mxu0 %v774
      %v842 = vpop.f32.mrb[0].mxu0
      %v843 = vadd.f32 0.0, %v842
      %v844 = vpop.f32.mrb[0].mxu0
      %845 = vdwg.mxu0
      %v846 = vrcp.pop 384.0
      %v847 = vmul.f32 %v843, %v846
      %v848 = vmul.f32 %v847, %v847
      %v850 = vrot.slane %v848, 7
      %v852 = vsub.f32 %v847, %v850
      %v853 = vmax.f32 %v852, 0.0
      %v854 = vadd.f32 %v853, 1e-05
      %v855 = vrsqrt.pop %v854
      %v856 = vsel %vm771, %v847, %v855
      %vm857 = vcmask 261120
      %v859 = vsel %vm857, %v856, 0
      %861 = vmatprep.subr.mxu0 0.0
      %862 = vmatpush1.msra.mxu0 %v261
      %863 = vmatprep.subr.mxu0 0.0
      %864 = vmatpush1.msra.mxu0 %v262
      %865 = vmatprep.subr.mxu0 0.0
      %866 = vmatpush1.msra.mxu0 %v263
      %867 = vmatprep.subr.mxu0 0.0
      %868 = vmatpush1.msra.mxu0 %v264
      %869 = vmatprep.subr.mxu0 0.0
      %870 = vmatpush1.msra.mxu0 0.0
      %871 = vmatprep.subr.mxu0 0.0
      %872 = vmatpush1.msra.mxu0 0.0
      %873 = vmatprep.subr.mxu0 0.0
      %874 = vmatpush1.msra.mxu0 0.0
      %875 = vmatprep.subr.mxu0 0.0
      %876 = vmatpush1.msra.mxu0 0.0
      %877 = vmatprep.subr.mxu0 0.0
      %878 = vmatpush1.msra.mxu0 0.0
      %879 = vmatprep.subr.mxu0 0.0
      %880 = vmatpush1.msra.mxu0 0.0
      %881 = vmatprep.subr.mxu0 0.0
      %882 = vmatpush1.msra.mxu0 0.0
      %883 = vmatprep.subr.mxu0 0.0
      %884 = vmatpush1.msra.mxu0 0.0
      %885 = vmatprep.subr.mxu0 0.0
      %886 = vmatpush1.msra.mxu0 0.0
      %887 = vmatprep.subr.mxu0 0.0
      %888 = vmatpush1.msra.mxu0 0.0
      %889 = vmatprep.subr.mxu0 0.0
      %890 = vmatpush1.msra.mxu0 0.0
      %891 = vmatprep.subr.mxu0 0.0
      %892 = vmatpush1.msra.mxu0 0.0
      %893 = vmatprep.subr.mxu0 0.0
      %894 = vmatpush1.msra.mxu0 0.0
      %895 = vmatprep.subr.mxu0 0.0
      %896 = vmatpush1.msra.mxu0 0.0
      %897 = vmatprep.subr.mxu0 0.0
      %898 = vmatpush1.msra.mxu0 0.0
      %899 = vmatprep.subr.mxu0 0.0
      %900 = vmatpush1.msra.mxu0 0.0
      %901 = vmatprep.subr.mxu0 0.0
      %902 = vmatpush1.msra.mxu0 0.0
      %903 = vmatprep.subr.mxu0 0.0
      %904 = vmatpush1.msra.mxu0 0.0
      %905 = vmatprep.subr.mxu0 0.0
      %906 = vmatpush1.msra.mxu0 0.0
      %907 = vmatprep.subr.mxu0 0.0
      %908 = vmatpush1.msra.mxu0 0.0
      %909 = vmatprep.subr.mxu0 0.0
      %910 = vmatpush1.msra.mxu0 0.0
      %911 = vmatprep.subr.mxu0 0.0
      %912 = vmatpush1.msra.mxu0 0.0
      %913 = vmatprep.subr.mxu0 0.0
      %914 = vmatpush1.msra.mxu0 0.0
      %915 = vmatprep.subr.mxu0 0.0
      %916 = vmatpush1.msra.mxu0 0.0
      %917 = vmatprep.subr.mxu0 0.0
      %918 = vmatpush1.msra.mxu0 0.0
      %919 = vmatprep.subr.mxu0 0.0
      %920 = vmatpush1.msra.mxu0 0.0
      %921 = vmatprep.subr.mxu0 0.0
      %922 = vmatpush1.msra.mxu0 0.0
      %923 = vmatprep.subr.mxu0 0.0
      %924 = vmatpush1.msra.mxu0 0.0
      %925 = vmatprep.mubr.f32.mxu0 0.0
      %926 = vmatmul.mubr.f32.gmra.mrb[0].mxu0 %v859
      %v927 = vpop.f32.mrb[0].mxu0
      %v928 = vadd.f32 0.0, %v927
      %v929 = vpop.f32.mrb[0].mxu0
      %930 = vdwg.mxu0
      %v931 = vmul.f32 %v928, %v265
      %v933 = vrot.slane %v931, 1
      %v935 = vmul.f32 %v928, %v933
      %v937 = vrot.slane %v935, 6
      %v939 = vsub.f32 %v265, %v937
      %v940 = vlaneseq
      %v941 = vshrl.u32 %v940, 7
      %v942 = vsub.s32 1, %v941
      %v943 = vrot.slane %v931, %v942
      %v944 = vmul.f32 %v546, %v943
      %v945 = vmul.f32 %v549, %v943
      %v946 = vmul.f32 %v554, %v943
      %v947 = vmul.f32 %v557, %v943
      %v948 = vmul.f32 %v562, %v943
      %v949 = vmul.f32 %v565, %v943
      %v950 = vmul.f32 %v570, %v943
      %v951 = vmul.f32 %v573, %v943
      %v952 = vmul.f32 %v578, %v943
      %v953 = vmul.f32 %v581, %v943
      %v954 = vmul.f32 %v586, %v943
      %v955 = vmul.f32 %v589, %v943
      %v956 = vmul.f32 %v594, %v943
      %v957 = vmul.f32 %v597, %v943
      %v958 = vmul.f32 %v602, %v943
      %v959 = vmul.f32 %v605, %v943
      %v960 = vmul.f32 %v610, %v943
      %v961 = vmul.f32 %v613, %v943
      %v962 = vmul.f32 %v618, %v943
      %v963 = vmul.f32 %v621, %v943
      %v964 = vmul.f32 %v626, %v943
      %v965 = vmul.f32 %v629, %v943
      %v966 = vmul.f32 %v634, %v943
      %v967 = vmul.f32 %v637, %v943
      %v968 = vlaneseq
      %v969 = vshrl.u32 %v968, 7
      %v970 = vsub.s32 2, %v969
      %v971 = vrot.slane %v939, %v970
      %v972 = vadd.f32 %v944, %v971
      %v973 = vadd.f32 %v945, %v971
      %v974 = vadd.f32 %v946, %v971
      %v975 = vadd.f32 %v947, %v971
      %v976 = vadd.f32 %v948, %v971
      %v977 = vadd.f32 %v949, %v971
      %v978 = vadd.f32 %v950, %v971
      %v979 = vadd.f32 %v951, %v971
      %v980 = vadd.f32 %v952, %v971
      %v981 = vadd.f32 %v953, %v971
      %v982 = vadd.f32 %v954, %v971
      %v983 = vadd.f32 %v955, %v971
      %v984 = vadd.f32 %v956, %v971
      %v985 = vadd.f32 %v957, %v971
      %v986 = vadd.f32 %v958, %v971
      %v987 = vadd.f32 %v959, %v971
      %v988 = vadd.f32 %v960, %v971
      %v989 = vadd.f32 %v961, %v971
      %v990 = vadd.f32 %v962, %v971
      %v991 = vadd.f32 %v963, %v971
      %v992 = vadd.f32 %v964, %v971
      %v993 = vadd.f32 %v965, %v971
      %v994 = vadd.f32 %v966, %v971
      %v995 = vadd.f32 %v967, %v971
      %vm996 = vcmp.ge.f32.partialorder %v972, 0.0
      %vm997 = vcmp.ge.f32.partialorder %v973, 0.0
      %vm998 = vcmp.ge.f32.partialorder %v974, 0.0
      %vm999 = vcmp.ge.f32.partialorder %v975, 0.0
      %vm1000 = vcmp.ge.f32.partialorder %v976, 0.0
      %vm1001 = vcmp.ge.f32.partialorder %v977, 0.0
      %vm1002 = vcmp.ge.f32.partialorder %v978, 0.0
      %vm1003 = vcmp.ge.f32.partialorder %v979, 0.0
      %vm1004 = vcmp.ge.f32.partialorder %v980, 0.0
      %vm1005 = vcmp.ge.f32.partialorder %v981, 0.0
      %vm1006 = vcmp.ge.f32.partialorder %v982, 0.0
      %vm1007 = vcmp.ge.f32.partialorder %v983, 0.0
      %vm1008 = vcmp.ge.f32.partialorder %v984, 0.0
      %vm1009 = vcmp.ge.f32.partialorder %v985, 0.0
      %vm1010 = vcmp.ge.f32.partialorder %v986, 0.0
      %vm1011 = vcmp.ge.f32.partialorder %v987, 0.0
      %vm1012 = vcmp.ge.f32.partialorder %v988, 0.0
      %vm1013 = vcmp.ge.f32.partialorder %v989, 0.0
      %vm1014 = vcmp.ge.f32.partialorder %v990, 0.0
      %vm1015 = vcmp.ge.f32.partialorder %v991, 0.0
      %vm1016 = vcmp.ge.f32.partialorder %v992, 0.0
      %vm1017 = vcmp.ge.f32.partialorder %v993, 0.0
      %vm1018 = vcmp.ge.f32.partialorder %v994, 0.0
      %vm1019 = vcmp.ge.f32.partialorder %v995, 0.0
      %v1020 = vmul.f32 %v972, 0.2
      %v1021 = vmul.f32 %v973, 0.2
      %v1022 = vmul.f32 %v974, 0.2
      %v1023 = vmul.f32 %v975, 0.2
      %v1024 = vmul.f32 %v976, 0.2
      %v1025 = vmul.f32 %v977, 0.2
      %v1026 = vmul.f32 %v978, 0.2
      %v1027 = vmul.f32 %v979, 0.2
      %v1028 = vmul.f32 %v980, 0.2
      %v1029 = vmul.f32 %v981, 0.2
      %v1030 = vmul.f32 %v982, 0.2
      %v1031 = vmul.f32 %v983, 0.2
      %v1032 = vmul.f32 %v984, 0.2
      %v1033 = vmul.f32 %v985, 0.2
      %v1034 = vmul.f32 %v986, 0.2
      %v1035 = vmul.f32 %v987, 0.2
      %v1036 = vmul.f32 %v988, 0.2
      %v1037 = vmul.f32 %v989, 0.2
      %v1038 = vmul.f32 %v990, 0.2
      %v1039 = vmul.f32 %v991, 0.2
      %v1040 = vmul.f32 %v992, 0.2
      %v1041 = vmul.f32 %v993, 0.2
      %v1042 = vmul.f32 %v994, 0.2
      %v1043 = vmul.f32 %v995, 0.2
      %v1044 = vsel %vm996, %v972, %v1020
      %v1045 = vsel %vm997, %v973, %v1021
      %v1046 = vsel %vm998, %v974, %v1022
      %v1047 = vsel %vm999, %v975, %v1023
      %v1048 = vsel %vm1000, %v976, %v1024
      %v1049 = vsel %vm1001, %v977, %v1025
      %v1050 = vsel %vm1002, %v978, %v1026
      %v1051 = vsel %vm1003, %v979, %v1027
      %v1052 = vsel %vm1004, %v980, %v1028
      %v1053 = vsel %vm1005, %v981, %v1029
      %v1054 = vsel %vm1006, %v982, %v1030
      %v1055 = vsel %vm1007, %v983, %v1031
      %v1056 = vsel %vm1008, %v984, %v1032
      %v1057 = vsel %vm1009, %v985, %v1033
      %v1058 = vsel %vm1010, %v986, %v1034
      %v1059 = vsel %vm1011, %v987, %v1035
      %v1060 = vsel %vm1012, %v988, %v1036
      %v1061 = vsel %vm1013, %v989, %v1037
      %v1062 = vsel %vm1014, %v990, %v1038
      %v1063 = vsel %vm1015, %v991, %v1039
      %v1064 = vsel %vm1016, %v992, %v1040
      %v1065 = vsel %vm1017, %v993, %v1041
      %v1066 = vsel %vm1018, %v994, %v1042
      %v1067 = vsel %vm1019, %v995, %v1043
      %v1068 = vpack.c.bf16 %v1045, %v1044
      %v1069 = vpack.c.bf16 %v1047, %v1046
      %v1070 = vpack.c.bf16 %v1049, %v1048
      %v1071 = vpack.c.bf16 %v1051, %v1050
      %v1072 = vpack.c.bf16 %v1053, %v1052
      %v1073 = vpack.c.bf16 %v1055, %v1054
      %v1074 = vpack.c.bf16 %v1057, %v1056
      %v1075 = vpack.c.bf16 %v1059, %v1058
      %v1076 = vpack.c.bf16 %v1061, %v1060
      %v1077 = vpack.c.bf16 %v1063, %v1062
      %v1078 = vpack.c.bf16 %v1065, %v1064
      %v1079 = vpack.c.bf16 %v1067, %v1066
      %v1080 = vld [vmem:[%s2] sm:$0xf]
      %v1081 = vld [vmem:[%s2 + $0x4] sm:$0xf]
      %v1082 = vld [vmem:[%s2 + $0x8] sm:$0xf]
      %v1083 = vld [vmem:[%s2 + $0xc] sm:$0xf]
      %v1084 = vld [vmem:[%s2 + $0x10] sm:$0xf]
      %v1085 = vld [vmem:[%s2 + $0x14] sm:$0xf]
      %v1086 = vld [vmem:[%s2 + $0x18] sm:$0xf]
      %v1087 = vld [vmem:[%s2 + $0x1c] sm:$0xf]
      %v1088 = vlaneseq
      %v1089 = vshrl.u32 %v1088, 7
      %v1090 = vsub.s32 3, %v1089
      %v1091 = vrot.slane %v265, %v1090
      %v1100 = vunpack.c.l.b16 %v1080
      %v1101 = vunpack.c.l.b16 %v1081
      %v1102 = vunpack.c.l.b16 %v1082
      %v1103 = vunpack.c.l.b16 %v1083
      %v1104 = vunpack.c.l.b16 %v1084
      %v1105 = vunpack.c.l.b16 %v1085
      %v1106 = vunpack.c.l.b16 %v1086
      %v1107 = vunpack.c.l.b16 %v1087
      %v1108 = vpack.c.b16 %v1101, %v1100
      %v1109 = vpack.c.b16 %v1103, %v1102
      %v1110 = vpack.c.b16 %v1105, %v1104
      %v1111 = vpack.c.b16 %v1107, %v1106
      %v1117 = vsel %vm640, %v1068, 0
      %v1120 = vsel %vm640, %v1069, 0
      %v1123 = vsel %vm640, %v1070, 0
      %v1126 = vsel %vm640, %v1071, 0
      %v1129 = vsel %vm640, %v1072, 0
      %v1132 = vsel %vm640, %v1073, 0
      %v1135 = vsel %vm640, %v1074, 0
      %v1138 = vsel %vm640, %v1075, 0
      %v1141 = vsel %vm640, %v1076, 0
      %v1144 = vsel %vm640, %v1077, 0
      %v1147 = vsel %vm640, %v1078, 0
      %v1150 = vsel %vm640, %v1079, 0
      %1152 = vmatprep.subr.bf16.mxu0 0
      %1153 = vmatpush1.bf16.msra.mxu0 %v1108
      %1154 = vmatprep.subr.bf16.mxu0 0
      %1155 = vmatpush1.bf16.msra.mxu0 %v1109
      %1156 = vmatprep.subr.bf16.mxu0 0
      %1157 = vmatpush1.bf16.msra.mxu0 %v1110
      %1158 = vmatprep.subr.bf16.mxu0 0
      %1159 = vmatpush1.bf16.msra.mxu0 %v1111
      %1160 = vmatprep.subr.bf16.mxu0 0
      %1161 = vmatpush1.bf16.msra.mxu0 0
      %1162 = vmatprep.subr.bf16.mxu0 0
      %1163 = vmatpush1.bf16.msra.mxu0 0
      %1164 = vmatprep.subr.bf16.mxu0 0
      %1165 = vmatpush1.bf16.msra.mxu0 0
      %1166 = vmatprep.subr.bf16.mxu0 0
      %1167 = vmatpush1.bf16.msra.mxu0 0
      %1168 = vmatprep.subr.bf16.mxu0 0
      %1169 = vmatpush1.bf16.msra.mxu0 0
      %1170 = vmatprep.subr.bf16.mxu0 0
      %1171 = vmatpush1.bf16.msra.mxu0 0
      %1172 = vmatprep.subr.bf16.mxu0 0
      %1173 = vmatpush1.bf16.msra.mxu0 0
      %1174 = vmatprep.subr.bf16.mxu0 0
      %1175 = vmatpush1.bf16.msra.mxu0 0
      %1176 = vmatprep.subr.bf16.mxu0 0
      %1177 = vmatpush1.bf16.msra.mxu0 0
      %1178 = vmatprep.subr.bf16.mxu0 0
      %1179 = vmatpush1.bf16.msra.mxu0 0
      %1180 = vmatprep.subr.bf16.mxu0 0
      %1181 = vmatpush1.bf16.msra.mxu0 0
      %1182 = vmatprep.subr.bf16.mxu0 0
      %1183 = vmatpush1.bf16.msra.mxu0 0
      %1184 = vmatprep.mubr.bf16.mxu0 0
      %1185 = vmatmul.mubr.bf16.gmra.mrb[0].mxu0 %v1117
      %v1186 = vpop.f32.mrb[0].mxu0
      %v1187 = vadd.f32 %v1091, %v1186
      %v1188 = vpop.f32.mrb[0].mxu0
      %v1189 = vpop.f32.mrb[0].mxu0
      %v1190 = vadd.f32 %v1091, %v1189
      %v1191 = vpop.f32.mrb[0].mxu0
      %1192 = vmatprep.mubr.bf16.mxu0 0
      %1193 = vmatmul.mubr.bf16.gmra.mrb[0].mxu0 %v1120
      %v1194 = vpop.f32.mrb[0].mxu0
      %v1195 = vadd.f32 %v1091, %v1194
      %v1196 = vpop.f32.mrb[0].mxu0
      %v1197 = vpop.f32.mrb[0].mxu0
      %v1198 = vadd.f32 %v1091, %v1197
      %v1199 = vpop.f32.mrb[0].mxu0
      %1200 = vmatprep.mubr.bf16.mxu0 0
      %1201 = vmatmul.mubr.bf16.gmra.mrb[0].mxu0 %v1123
      %v1202 = vpop.f32.mrb[0].mxu0
      %v1203 = vadd.f32 %v1091, %v1202
      %v1204 = vpop.f32.mrb[0].mxu0
      %v1205 = vpop.f32.mrb[0].mxu0
      %v1206 = vadd.f32 %v1091, %v1205
      %v1207 = vpop.f32.mrb[0].mxu0
      %1208 = vmatprep.mubr.bf16.mxu0 0
      %1209 = vmatmul.mubr.bf16.gmra.mrb[0].mxu0 %v1126
      %v1210 = vpop.f32.mrb[0].mxu0
      %v1211 = vadd.f32 %v1091, %v1210
      %v1212 = vpop.f32.mrb[0].mxu0
      %v1213 = vpop.f32.mrb[0].mxu0
      %v1214 = vadd.f32 %v1091, %v1213
      %v1215 = vpop.f32.mrb[0].mxu0
      %1216 = vmatprep.mubr.bf16.mxu0 0
      %1217 = vmatmul.mubr.bf16.gmra.mrb[0].mxu0 %v1129
      %v1218 = vpop.f32.mrb[0].mxu0
      %v1219 = vadd.f32 %v1091, %v1218
      %v1220 = vpop.f32.mrb[0].mxu0
      %v1221 = vpop.f32.mrb[0].mxu0
      %v1222 = vadd.f32 %v1091, %v1221
      %v1223 = vpop.f32.mrb[0].mxu0
      %1224 = vmatprep.mubr.bf16.mxu0 0
      %1225 = vmatmul.mubr.bf16.gmra.mrb[0].mxu0 %v1132
      %v1226 = vpop.f32.mrb[0].mxu0
      %v1227 = vadd.f32 %v1091, %v1226
      %v1228 = vpop.f32.mrb[0].mxu0
      %v1229 = vpop.f32.mrb[0].mxu0
      %v1230 = vadd.f32 %v1091, %v1229
      %v1231 = vpop.f32.mrb[0].mxu0
      %1232 = vmatprep.mubr.bf16.mxu0 0
      %1233 = vmatmul.mubr.bf16.gmra.mrb[0].mxu0 %v1135
      %v1234 = vpop.f32.mrb[0].mxu0
      %v1235 = vadd.f32 %v1091, %v1234
      %v1236 = vpop.f32.mrb[0].mxu0
      %v1237 = vpop.f32.mrb[0].mxu0
      %v1238 = vadd.f32 %v1091, %v1237
      %v1239 = vpop.f32.mrb[0].mxu0
      %1240 = vmatprep.mubr.bf16.mxu0 0
      %1241 = vmatmul.mubr.bf16.gmra.mrb[0].mxu0 %v1138
      %v1242 = vpop.f32.mrb[0].mxu0
      %v1243 = vadd.f32 %v1091, %v1242
      %v1244 = vpop.f32.mrb[0].mxu0
      %v1245 = vpop.f32.mrb[0].mxu0
      %v1246 = vadd.f32 %v1091, %v1245
      %v1247 = vpop.f32.mrb[0].mxu0
      %1248 = vmatprep.mubr.bf16.mxu0 0
      %1249 = vmatmul.mubr.bf16.gmra.mrb[0].mxu0 %v1141
      %v1250 = vpop.f32.mrb[0].mxu0
      %v1251 = vadd.f32 %v1091, %v1250
      %v1252 = vpop.f32.mrb[0].mxu0
      %v1253 = vpop.f32.mrb[0].mxu0
      %v1254 = vadd.f32 %v1091, %v1253
      %v1255 = vpop.f32.mrb[0].mxu0
      %1256 = vmatprep.mubr.bf16.mxu0 0
      %1257 = vmatmul.mubr.bf16.gmra.mrb[0].mxu0 %v1144
      %v1258 = vpop.f32.mrb[0].mxu0
      %v1259 = vadd.f32 %v1091, %v1258
      %v1260 = vpop.f32.mrb[0].mxu0
      %v1261 = vpop.f32.mrb[0].mxu0
      %v1262 = vadd.f32 %v1091, %v1261
      %v1263 = vpop.f32.mrb[0].mxu0
      %1264 = vmatprep.mubr.bf16.mxu0 0
      %1265 = vmatmul.mubr.bf16.gmra.mrb[0].mxu0 %v1147
      %v1266 = vpop.f32.mrb[0].mxu0
      %v1267 = vadd.f32 %v1091, %v1266
      %v1268 = vpop.f32.mrb[0].mxu0
      %v1269 = vpop.f32.mrb[0].mxu0
      %v1270 = vadd.f32 %v1091, %v1269
      %v1271 = vpop.f32.mrb[0].mxu0
      %1272 = vmatprep.mubr.bf16.mxu0 0
      %1273 = vmatmul.mubr.bf16.gmra.mrb[0].mxu0 %v1150
      %v1274 = vpop.f32.mrb[0].mxu0
      %v1275 = vadd.f32 %v1091, %v1274
      %v1276 = vpop.f32.mrb[0].mxu0
      %v1277 = vpop.f32.mrb[0].mxu0
      %v1278 = vadd.f32 %v1091, %v1277
      %v1279 = vpop.f32.mrb[0].mxu0
      %1280 = vdwg.mxu0
      %v1281 = vsel %vm640, %v1187, 0.0
      %v1282 = vsel %vm640, %v1190, 0.0
      %v1283 = vadd.f32 %v1281, %v1282
      %v1284 = vsel %vm640, %v1195, 0.0
      %v1285 = vadd.f32 %v1283, %v1284
      %v1286 = vsel %vm640, %v1198, 0.0
      %v1287 = vadd.f32 %v1285, %v1286
      %v1288 = vsel %vm640, %v1203, 0.0
      %v1289 = vadd.f32 %v1287, %v1288
      %v1290 = vsel %vm640, %v1206, 0.0
      %v1291 = vadd.f32 %v1289, %v1290
      %v1292 = vsel %vm640, %v1211, 0.0
      %v1293 = vadd.f32 %v1291, %v1292
      %v1294 = vsel %vm640, %v1214, 0.0
      %v1295 = vadd.f32 %v1293, %v1294
      %v1296 = vsel %vm640, %v1219, 0.0
      %v1297 = vadd.f32 %v1295, %v1296
      %v1298 = vsel %vm640, %v1222, 0.0
      %v1299 = vadd.f32 %v1297, %v1298
      %v1300 = vsel %vm640, %v1227, 0.0
      %v1301 = vadd.f32 %v1299, %v1300
      %v1302 = vsel %vm640, %v1230, 0.0
      %v1303 = vadd.f32 %v1301, %v1302
      %v1304 = vsel %vm640, %v1235, 0.0
      %v1305 = vadd.f32 %v1303, %v1304
      %v1306 = vsel %vm640, %v1238, 0.0
      %v1307 = vadd.f32 %v1305, %v1306
      %v1308 = vsel %vm640, %v1243, 0.0
      %v1309 = vadd.f32 %v1307, %v1308
      %v1310 = vsel %vm640, %v1246, 0.0
      %v1311 = vadd.f32 %v1309, %v1310
      %v1312 = vsel %vm640, %v1251, 0.0
      %v1313 = vadd.f32 %v1311, %v1312
      %v1314 = vsel %vm640, %v1254, 0.0
      %v1315 = vadd.f32 %v1313, %v1314
      %v1316 = vsel %vm640, %v1259, 0.0
      %v1317 = vadd.f32 %v1315, %v1316
      %v1318 = vsel %vm640, %v1262, 0.0
      %v1319 = vadd.f32 %v1317, %v1318
      %v1320 = vsel %vm640, %v1267, 0.0
      %v1321 = vadd.f32 %v1319, %v1320
      %v1322 = vsel %vm640, %v1270, 0.0
      %v1323 = vadd.f32 %v1321, %v1322
      %v1324 = vsel %vm640, %v1275, 0.0
      %v1325 = vadd.f32 %v1323, %v1324
      %v1326 = vsel %vm640, %v1278, 0.0
      %v1327 = vadd.f32 %v1325, %v1326
      %v1328 = vrot.slane %v1327, 4
      %v1329 = vadd.f32 %v1327, %v1328
      %v1330 = vrot.slane %v1329, 2
      %v1331 = vadd.f32 %v1329, %v1330
      %v1332 = vrot.slane %v1331, 1
      %v1333 = vadd.f32 %v1331, %v1332
      %v1334 = vmul.f32 %v1187, %v1187
      %v1335 = vmul.f32 %v1190, %v1190
      %v1336 = vmul.f32 %v1195, %v1195
      %v1337 = vmul.f32 %v1198, %v1198
      %v1338 = vmul.f32 %v1203, %v1203
      %v1339 = vmul.f32 %v1206, %v1206
      %v1340 = vmul.f32 %v1211, %v1211
      %v1341 = vmul.f32 %v1214, %v1214
      %v1342 = vmul.f32 %v1219, %v1219
      %v1343 = vmul.f32 %v1222, %v1222
      %v1344 = vmul.f32 %v1227, %v1227
      %v1345 = vmul.f32 %v1230, %v1230
      %v1346 = vmul.f32 %v1235, %v1235
      %v1347 = vmul.f32 %v1238, %v1238
      %v1348 = vmul.f32 %v1243, %v1243
      %v1349 = vmul.f32 %v1246, %v1246
      %v1350 = vmul.f32 %v1251, %v1251
      %v1351 = vmul.f32 %v1254, %v1254
      %v1352 = vmul.f32 %v1259, %v1259
      %v1353 = vmul.f32 %v1262, %v1262
      %v1354 = vmul.f32 %v1267, %v1267
      %v1355 = vmul.f32 %v1270, %v1270
      %v1356 = vmul.f32 %v1275, %v1275
      %v1357 = vmul.f32 %v1278, %v1278
      %v1358 = vsel %vm640, %v1334, 0.0
      %v1359 = vsel %vm640, %v1335, 0.0
      %v1360 = vadd.f32 %v1358, %v1359
      %v1361 = vsel %vm640, %v1336, 0.0
      %v1362 = vadd.f32 %v1360, %v1361
      %v1363 = vsel %vm640, %v1337, 0.0
      %v1364 = vadd.f32 %v1362, %v1363
      %v1365 = vsel %vm640, %v1338, 0.0
      %v1366 = vadd.f32 %v1364, %v1365
      %v1367 = vsel %vm640, %v1339, 0.0
      %v1368 = vadd.f32 %v1366, %v1367
      %v1369 = vsel %vm640, %v1340, 0.0
      %v1370 = vadd.f32 %v1368, %v1369
      %v1371 = vsel %vm640, %v1341, 0.0
      %v1372 = vadd.f32 %v1370, %v1371
      %v1373 = vsel %vm640, %v1342, 0.0
      %v1374 = vadd.f32 %v1372, %v1373
      %v1375 = vsel %vm640, %v1343, 0.0
      %v1376 = vadd.f32 %v1374, %v1375
      %v1377 = vsel %vm640, %v1344, 0.0
      %v1378 = vadd.f32 %v1376, %v1377
      %v1379 = vsel %vm640, %v1345, 0.0
      %v1380 = vadd.f32 %v1378, %v1379
      %v1381 = vsel %vm640, %v1346, 0.0
      %v1382 = vadd.f32 %v1380, %v1381
      %v1383 = vsel %vm640, %v1347, 0.0
      %v1384 = vadd.f32 %v1382, %v1383
      %v1385 = vsel %vm640, %v1348, 0.0
      %v1386 = vadd.f32 %v1384, %v1385
      %v1387 = vsel %vm640, %v1349, 0.0
      %v1388 = vadd.f32 %v1386, %v1387
      %v1389 = vsel %vm640, %v1350, 0.0
      %v1390 = vadd.f32 %v1388, %v1389
      %v1391 = vsel %vm640, %v1351, 0.0
      %v1392 = vadd.f32 %v1390, %v1391
      %v1393 = vsel %vm640, %v1352, 0.0
      %v1394 = vadd.f32 %v1392, %v1393
      %v1395 = vsel %vm640, %v1353, 0.0
      %v1396 = vadd.f32 %v1394, %v1395
      %v1397 = vsel %vm640, %v1354, 0.0
      %v1398 = vadd.f32 %v1396, %v1397
      %v1399 = vsel %vm640, %v1355, 0.0
      %v1400 = vadd.f32 %v1398, %v1399
      %v1401 = vsel %vm640, %v1356, 0.0
      %v1402 = vadd.f32 %v1400, %v1401
      %v1403 = vsel %vm640, %v1357, 0.0
      %v1404 = vadd.f32 %v1402, %v1403
      %v1405 = vrot.slane %v1404, 4
      %v1406 = vadd.f32 %v1404, %v1405
      %v1407 = vrot.slane %v1406, 2
      %v1408 = vadd.f32 %v1406, %v1407
      %v1409 = vrot.slane %v1408, 1
      %v1410 = vadd.f32 %v1408, %v1409
      %v1411 = vsel %vm771, %v1333, %v1410
      %v1413 = vsel %vm640, %v1411, 0
      %1415 = vmatprep.subr.mxu0 0.0
      %1416 = vmatpush1.msra.mxu0 %v253
      %1417 = vmatprep.subr.mxu0 0.0
      %1418 = vmatpush1.msra.mxu0 %v254
      %1419 = vmatprep.subr.mxu0 0.0
      %1420 = vmatpush1.msra.mxu0 %v255
      %1421 = vmatprep.subr.mxu0 0.0
      %1422 = vmatpush1.msra.mxu0 %v256
      %1423 = vmatprep.subr.mxu0 0.0
      %1424 = vmatpush1.msra.mxu0 %v257
      %1425 = vmatprep.subr.mxu0 0.0
      %1426 = vmatpush1.msra.mxu0 %v258
      %1427 = vmatprep.subr.mxu0 0.0
      %1428 = vmatpush1.msra.mxu0 %v259
      %1429 = vmatprep.subr.mxu0 0.0
      %1430 = vmatpush1.msra.mxu0 %v260
      %1431 = vmatprep.subr.mxu0 0.0
      %1432 = vmatpush1.msra.mxu0 0.0
      %1433 = vmatprep.subr.mxu0 0.0
      %1434 = vmatpush1.msra.mxu0 0.0
      %1435 = vmatprep.subr.mxu0 0.0
      %1436 = vmatpush1.msra.mxu0 0.0
      %1437 = vmatprep.subr.mxu0 0.0
      %1438 = vmatpush1.msra.mxu0 0.0
      %1439 = vmatprep.subr.mxu0 0.0
      %1440 = vmatpush1.msra.mxu0 0.0
      %1441 = vmatprep.subr.mxu0 0.0
      %1442 = vmatpush1.msra.mxu0 0.0
      %1443 = vmatprep.subr.mxu0 0.0
      %1444 = vmatpush1.msra.mxu0 0.0
      %1445 = vmatprep.subr.mxu0 0.0
      %1446 = vmatpush1.msra.mxu0 0.0
      %1447 = vmatprep.subr.mxu0 0.0
      %1448 = vmatpush1.msra.mxu0 0.0
      %1449 = vmatprep.subr.mxu0 0.0
      %1450 = vmatpush1.msra.mxu0 0.0
      %1451 = vmatprep.subr.mxu0 0.0
      %1452 = vmatpush1.msra.mxu0 0.0
      %1453 = vmatprep.subr.mxu0 0.0
      %1454 = vmatpush1.msra.mxu0 0.0
      %1455 = vmatprep.subr.mxu0 0.0
      %1456 = vmatpush1.msra.mxu0 0.0
      %1457 = vmatprep.subr.mxu0 0.0
      %1458 = vmatpush1.msra.mxu0 0.0
      %1459 = vmatprep.subr.mxu0 0.0
      %1460 = vmatpush1.msra.mxu0 0.0
      %1461 = vmatprep.subr.mxu0 0.0
      %1462 = vmatpush1.msra.mxu0 0.0
      %1463 = vmatprep.subr.mxu0 0.0
      %1464 = vmatpush1.msra.mxu0 0.0
      %1465 = vmatprep.subr.mxu0 0.0
      %1466 = vmatpush1.msra.mxu0 0.0
      %1467 = vmatprep.subr.mxu0 0.0
      %1468 = vmatpush1.msra.mxu0 0.0
      %1469 = vmatprep.subr.mxu0 0.0
      %1470 = vmatpush1.msra.mxu0 0.0
      %1471 = vmatprep.subr.mxu0 0.0
      %1472 = vmatpush1.msra.mxu0 0.0
      %1473 = vmatprep.subr.mxu0 0.0
      %1474 = vmatpush1.msra.mxu0 0.0
      %1475 = vmatprep.subr.mxu0 0.0
      %1476 = vmatpush1.msra.mxu0 0.0
      %1477 = vmatprep.subr.mxu0 0.0
      %1478 = vmatpush1.msra.mxu0 0.0
      %1479 = vmatprep.mubr.f32.mxu0 0.0
      %1480 = vmatmul.mubr.f32.gmra.mrb[0].mxu0 %v1413
      %v1481 = vpop.f32.mrb[0].mxu0
      %v1482 = vadd.f32 0.0, %v1481
      %v1483 = vpop.f32.mrb[0].mxu0
      %1484 = vdwg.mxu0
      %v1485 = vmul.f32 %v1482, %v846
      %v1486 = vmul.f32 %v1485, %v1485
      %v1488 = vrot.slane %v1486, 7
      %v1490 = vsub.f32 %v1485, %v1488
      %v1491 = vmax.f32 %v1490, 0.0
      %v1492 = vadd.f32 %v1491, 1e-05
      %v1493 = vrsqrt.pop %v1492
      %v1494 = vsel %vm771, %v1485, %v1493
      %v1496 = vsel %vm857, %v1494, 0
      %1498 = vmatprep.subr.mxu0 0.0
      %1499 = vmatpush1.msra.mxu0 %v261
      %1500 = vmatprep.subr.mxu0 0.0
      %1501 = vmatpush1.msra.mxu0 %v262
      %1502 = vmatprep.subr.mxu0 0.0
      %1503 = vmatpush1.msra.mxu0 %v263
      %1504 = vmatprep.subr.mxu0 0.0
      %1505 = vmatpush1.msra.mxu0 %v264
      %1506 = vmatprep.subr.mxu0 0.0
      %1507 = vmatpush1.msra.mxu0 0.0
      %1508 = vmatprep.subr.mxu0 0.0
      %1509 = vmatpush1.msra.mxu0 0.0
      %1510 = vmatprep.subr.mxu0 0.0
      %1511 = vmatpush1.msra.mxu0 0.0
      %1512 = vmatprep.subr.mxu0 0.0
      %1513 = vmatpush1.msra.mxu0 0.0
      %1514 = vmatprep.subr.mxu0 0.0
      %1515 = vmatpush1.msra.mxu0 0.0
      %1516 = vmatprep.subr.mxu0 0.0
      %1517 = vmatpush1.msra.mxu0 0.0
      %1518 = vmatprep.subr.mxu0 0.0
      %1519 = vmatpush1.msra.mxu0 0.0
      %1520 = vmatprep.subr.mxu0 0.0
      %1521 = vmatpush1.msra.mxu0 0.0
      %1522 = vmatprep.subr.mxu0 0.0
      %1523 = vmatpush1.msra.mxu0 0.0
      %1524 = vmatprep.subr.mxu0 0.0
      %1525 = vmatpush1.msra.mxu0 0.0
      %1526 = vmatprep.subr.mxu0 0.0
      %1527 = vmatpush1.msra.mxu0 0.0
      %1528 = vmatprep.subr.mxu0 0.0
      %1529 = vmatpush1.msra.mxu0 0.0
      %1530 = vmatprep.subr.mxu0 0.0
      %1531 = vmatpush1.msra.mxu0 0.0
      %1532 = vmatprep.subr.mxu0 0.0
      %1533 = vmatpush1.msra.mxu0 0.0
      %1534 = vmatprep.subr.mxu0 0.0
      %1535 = vmatpush1.msra.mxu0 0.0
      %1536 = vmatprep.subr.mxu0 0.0
      %1537 = vmatpush1.msra.mxu0 0.0
      %1538 = vmatprep.subr.mxu0 0.0
      %1539 = vmatpush1.msra.mxu0 0.0
      %1540 = vmatprep.subr.mxu0 0.0
      %1541 = vmatpush1.msra.mxu0 0.0
      %1542 = vmatprep.subr.mxu0 0.0
      %1543 = vmatpush1.msra.mxu0 0.0
      %1544 = vmatprep.subr.mxu0 0.0
      %1545 = vmatpush1.msra.mxu0 0.0
      %1546 = vmatprep.subr.mxu0 0.0
      %1547 = vmatpush1.msra.mxu0 0.0
      %1548 = vmatprep.subr.mxu0 0.0
      %1549 = vmatpush1.msra.mxu0 0.0
      %1550 = vmatprep.subr.mxu0 0.0
      %1551 = vmatpush1.msra.mxu0 0.0
      %1552 = vmatprep.subr.mxu0 0.0
      %1553 = vmatpush1.msra.mxu0 0.0
      %1554 = vmatprep.subr.mxu0 0.0
      %1555 = vmatpush1.msra.mxu0 0.0
      %1556 = vmatprep.subr.mxu0 0.0
      %1557 = vmatpush1.msra.mxu0 0.0
      %1558 = vmatprep.subr.mxu0 0.0
      %1559 = vmatpush1.msra.mxu0 0.0
      %1560 = vmatprep.subr.mxu0 0.0
      %1561 = vmatpush1.msra.mxu0 0.0
      %1562 = vmatprep.mubr.f32.mxu0 0.0
      %1563 = vmatmul.mubr.f32.gmra.mrb[0].mxu0 %v1496
      %v1564 = vpop.f32.mrb[0].mxu0
      %v1565 = vadd.f32 0.0, %v1564
      %v1566 = vpop.f32.mrb[0].mxu0
      %1567 = vdwg.mxu0
      %v1569 = vrot.slane %v265, 3
      %v1571 = vmul.f32 %v1565, %v1569
      %v1573 = vrot.slane %v1571, 1
      %v1575 = vmul.f32 %v1565, %v1573
      %v1577 = vrot.slane %v1575, 3
      %v1579 = vsub.f32 %v265, %v1577
      %v1580 = vlaneseq
      %v1581 = vshrl.u32 %v1580, 7
      %v1582 = vsub.s32 1, %v1581
      %v1583 = vrot.slane %v1571, %v1582
      %v1584 = vmul.f32 %v1187, %v1583
      %v1585 = vmul.f32 %v1190, %v1583
      %v1586 = vmul.f32 %v1195, %v1583
      %v1587 = vmul.f32 %v1198, %v1583
      %v1588 = vmul.f32 %v1203, %v1583
      %v1589 = vmul.f32 %v1206, %v1583
      %v1590 = vmul.f32 %v1211, %v1583
      %v1591 = vmul.f32 %v1214, %v1583
      %v1592 = vmul.f32 %v1219, %v1583
      %v1593 = vmul.f32 %v1222, %v1583
      %v1594 = vmul.f32 %v1227, %v1583
      %v1595 = vmul.f32 %v1230, %v1583
      %v1596 = vmul.f32 %v1235, %v1583
      %v1597 = vmul.f32 %v1238, %v1583
      %v1598 = vmul.f32 %v1243, %v1583
      %v1599 = vmul.f32 %v1246, %v1583
      %v1600 = vmul.f32 %v1251, %v1583
      %v1601 = vmul.f32 %v1254, %v1583
      %v1602 = vmul.f32 %v1259, %v1583
      %v1603 = vmul.f32 %v1262, %v1583
      %v1604 = vmul.f32 %v1267, %v1583
      %v1605 = vmul.f32 %v1270, %v1583
      %v1606 = vmul.f32 %v1275, %v1583
      %v1607 = vmul.f32 %v1278, %v1583
      %v1608 = vlaneseq
      %v1609 = vshrl.u32 %v1608, 7
      %v1610 = vsub.s32 5, %v1609
      %v1611 = vrot.slane %v1579, %v1610
      %v1612 = vadd.f32 %v1584, %v1611
      %v1613 = vadd.f32 %v1585, %v1611
      %v1614 = vadd.f32 %v1586, %v1611
      %v1615 = vadd.f32 %v1587, %v1611
      %v1616 = vadd.f32 %v1588, %v1611
      %v1617 = vadd.f32 %v1589, %v1611
      %v1618 = vadd.f32 %v1590, %v1611
      %v1619 = vadd.f32 %v1591, %v1611
      %v1620 = vadd.f32 %v1592, %v1611
      %v1621 = vadd.f32 %v1593, %v1611
      %v1622 = vadd.f32 %v1594, %v1611
      %v1623 = vadd.f32 %v1595, %v1611
      %v1624 = vadd.f32 %v1596, %v1611
      %v1625 = vadd.f32 %v1597, %v1611
      %v1626 = vadd.f32 %v1598, %v1611
      %v1627 = vadd.f32 %v1599, %v1611
      %v1628 = vadd.f32 %v1600, %v1611
      %v1629 = vadd.f32 %v1601, %v1611
      %v1630 = vadd.f32 %v1602, %v1611
      %v1631 = vadd.f32 %v1603, %v1611
      %v1632 = vadd.f32 %v1604, %v1611
      %v1633 = vadd.f32 %v1605, %v1611
      %v1634 = vadd.f32 %v1606, %v1611
      %v1635 = vadd.f32 %v1607, %v1611
      %vm1636 = vcmp.ge.f32.partialorder %v1612, 0.0
      %vm1637 = vcmp.ge.f32.partialorder %v1613, 0.0
      %vm1638 = vcmp.ge.f32.partialorder %v1614, 0.0
      %vm1639 = vcmp.ge.f32.partialorder %v1615, 0.0
      %vm1640 = vcmp.ge.f32.partialorder %v1616, 0.0
      %vm1641 = vcmp.ge.f32.partialorder %v1617, 0.0
      %vm1642 = vcmp.ge.f32.partialorder %v1618, 0.0
      %vm1643 = vcmp.ge.f32.partialorder %v1619, 0.0
      %vm1644 = vcmp.ge.f32.partialorder %v1620, 0.0
      %vm1645 = vcmp.ge.f32.partialorder %v1621, 0.0
      %vm1646 = vcmp.ge.f32.partialorder %v1622, 0.0
      %vm1647 = vcmp.ge.f32.partialorder %v1623, 0.0
      %vm1648 = vcmp.ge.f32.partialorder %v1624, 0.0
      %vm1649 = vcmp.ge.f32.partialorder %v1625, 0.0
      %vm1650 = vcmp.ge.f32.partialorder %v1626, 0.0
      %vm1651 = vcmp.ge.f32.partialorder %v1627, 0.0
      %vm1652 = vcmp.ge.f32.partialorder %v1628, 0.0
      %vm1653 = vcmp.ge.f32.partialorder %v1629, 0.0
      %vm1654 = vcmp.ge.f32.partialorder %v1630, 0.0
      %vm1655 = vcmp.ge.f32.partialorder %v1631, 0.0
      %vm1656 = vcmp.ge.f32.partialorder %v1632, 0.0
      %vm1657 = vcmp.ge.f32.partialorder %v1633, 0.0
      %vm1658 = vcmp.ge.f32.partialorder %v1634, 0.0
      %vm1659 = vcmp.ge.f32.partialorder %v1635, 0.0
      %v1660 = vmul.f32 %v1612, 0.2
      %v1661 = vmul.f32 %v1613, 0.2
      %v1662 = vmul.f32 %v1614, 0.2
      %v1663 = vmul.f32 %v1615, 0.2
      %v1664 = vmul.f32 %v1616, 0.2
      %v1665 = vmul.f32 %v1617, 0.2
      %v1666 = vmul.f32 %v1618, 0.2
      %v1667 = vmul.f32 %v1619, 0.2
      %v1668 = vmul.f32 %v1620, 0.2
      %v1669 = vmul.f32 %v1621, 0.2
      %v1670 = vmul.f32 %v1622, 0.2
      %v1671 = vmul.f32 %v1623, 0.2
      %v1672 = vmul.f32 %v1624, 0.2
      %v1673 = vmul.f32 %v1625, 0.2
      %v1674 = vmul.f32 %v1626, 0.2
      %v1675 = vmul.f32 %v1627, 0.2
      %v1676 = vmul.f32 %v1628, 0.2
      %v1677 = vmul.f32 %v1629, 0.2
      %v1678 = vmul.f32 %v1630, 0.2
      %v1679 = vmul.f32 %v1631, 0.2
      %v1680 = vmul.f32 %v1632, 0.2
      %v1681 = vmul.f32 %v1633, 0.2
      %v1682 = vmul.f32 %v1634, 0.2
      %v1683 = vmul.f32 %v1635, 0.2
      %v1684 = vsel %vm1636, %v1612, %v1660
      %v1685 = vsel %vm1637, %v1613, %v1661
      %v1686 = vsel %vm1638, %v1614, %v1662
      %v1687 = vsel %vm1639, %v1615, %v1663
      %v1688 = vsel %vm1640, %v1616, %v1664
      %v1689 = vsel %vm1641, %v1617, %v1665
      %v1690 = vsel %vm1642, %v1618, %v1666
      %v1691 = vsel %vm1643, %v1619, %v1667
      %v1692 = vsel %vm1644, %v1620, %v1668
      %v1693 = vsel %vm1645, %v1621, %v1669
      %v1694 = vsel %vm1646, %v1622, %v1670
      %v1695 = vsel %vm1647, %v1623, %v1671
      %v1696 = vsel %vm1648, %v1624, %v1672
      %v1697 = vsel %vm1649, %v1625, %v1673
      %v1698 = vsel %vm1650, %v1626, %v1674
      %v1699 = vsel %vm1651, %v1627, %v1675
      %v1700 = vsel %vm1652, %v1628, %v1676
      %v1701 = vsel %vm1653, %v1629, %v1677
      %v1702 = vsel %vm1654, %v1630, %v1678
      %v1703 = vsel %vm1655, %v1631, %v1679
      %v1704 = vsel %vm1656, %v1632, %v1680
      %v1705 = vsel %vm1657, %v1633, %v1681
      %v1706 = vsel %vm1658, %v1634, %v1682
      %v1707 = vsel %vm1659, %v1635, %v1683
      %v1708 = vmax.f32 %v1684, %v1690
      %v1709 = vmax.f32 %v1685, %v1691
      %v1710 = vmax.f32 %v1686, %v1692
      %v1711 = vmax.f32 %v1687, %v1693
      %v1712 = vmax.f32 %v1688, %v1694
      %v1713 = vmax.f32 %v1689, %v1695
      %v1714 = vmax.f32 %v1708, %v1696
      %v1715 = vmax.f32 %v1709, %v1697
      %v1716 = vmax.f32 %v1710, %v1698
      %v1717 = vmax.f32 %v1711, %v1699
      %v1718 = vmax.f32 %v1712, %v1700
      %v1719 = vmax.f32 %v1713, %v1701
      %v1720 = vmax.f32 %v1714, %v1702
      %v1721 = vmax.f32 %v1715, %v1703
      %v1722 = vmax.f32 %v1716, %v1704
      %v1723 = vmax.f32 %v1717, %v1705
      %v1724 = vmax.f32 %v1718, %v1706
      %v1725 = vmax.f32 %v1719, %v1707
      %1726 = vst.msk [vmem:[%s251] sm:$0xff] %vm640, %v1720
      %1727 = vst.msk [vmem:[%s251 + $0x8] sm:$0xff] %vm640, %v1721
      %1728 = vst.msk [vmem:[%s251 + $0x10] sm:$0xff] %vm640, %v1722
      %1729 = vst.msk [vmem:[%s251 + $0x18] sm:$0xff] %vm640, %v1723
      %1730 = vst.msk [vmem:[%s251 + $0x20] sm:$0xff] %vm640, %v1724
      %1731 = vst.msk [vmem:[%s251 + $0x28] sm:$0xff] %vm640, %v1725
      %p1732 = scmp.lt.s32.totalorder %s17, 1
      %s1733 = scalar_select %p1732, %s17, 1
      %s1734 = smul.addr %s1733, 6
      %s1735 = smul.addr %s1734, 8
      %s1736 = scalar_lea.vmem %s6, %s1735
      // Predicated region
      $region45: #{discriminator_forward.5} parent=43 // pred_check
        %p1737 = pneg %p166
      $region46: #{discriminator_forward.5} parent=43 // pred_check_branch
        %1739 = sbr.rel (%p1737) target = $region48
      $region47: #{discriminator_forward.5} parent=43 // pred_region
        _
      $region48: #{discriminator_forward.5} parent=43 // pred_fallthru
        _
    $region44: #{discriminator_forward.5} parent=5 // pred_fallthru
      _
    %p1740 = scmp.le.s32.totalorder 2, %s12
    // Predicated region
    $region49: #{discriminator_forward.5} parent=5 // pred_check
      %p1741 = pneg %p1740
    $region50: #{discriminator_forward.5} parent=5 // pred_check_branch
      %1743 = sbr.rel (%p1741) target = $region52
    $region51: #{discriminator_forward.5} parent=5 // pred_region
      %s1744 = ssub.s32 %s12, 2
      // Predicated region
      $region53: #{discriminator_forward.5} parent=51 // pred_check
        %p1745 = pneg %p172
      $region54: #{discriminator_forward.5} parent=51 // pred_check_branch
        %1747 = sbr.rel (%p1745) target = $region56
      $region55: #{discriminator_forward.5} parent=51 // pred_region
        %p1748 = scmp.lt.s32.totalorder %s18, 1
        %s1749 = scalar_select %p1748, %s18, 1
        %s1750 = smul.addr %s1749, 6
        %s1751 = smul.addr %s1750, 8
        %s1752 = scalar_lea.vmem %s6, %s1751
      $region56: #{discriminator_forward.5} parent=51 // pred_fallthru
        _
    $region52: #{discriminator_forward.5} parent=5 // pred_fallthru
      _
  $region6: #{discriminator_forward.5} parent=0 // loop_footer
    %s16 = sadd.s32 1, %s12
  $region7: #{discriminator_forward.5} parent=0 // loop_footer_branch
    %11 = sbr.rel target = $region3
  $region8: #{discriminator_forward.5} parent=0 // loop_exit
    _

// kernel: discriminator_forward.6
$region0: #{discriminator_forward.6}
  #allocation0 [shape = 'u32[]', space=smem, size = 0x4, offset = 0x4, fixed_abs, tag = 'smem constant byte address 0x4 - core index']
  #allocation1 [shape = 'u32[144,128]{1,0:T(1,128)}', space=vmem, size = 0x12000, scoped, tag = 'internal scratch']
  %s0 = inlined_call_operand.vmem [shape: bf16[2,64,132], index: 0, kind: input, shape index: {}]
  %s1 = inlined_call_operand.vmem [shape: bf16[2,64,132], index: 1, kind: input, shape index: {}]
  %s2 = inlined_call_operand.vmem [shape: bf16[132,64], index: 2, kind: input, shape index: {}]
  %s3 = inlined_call_operand.vmem [shape: bf16[64,64], index: 3, kind: input, shape index: {}]
  %s4 = inlined_call_operand.vmem [shape: bf16[132,64], index: 4, kind: input, shape index: {}]
  %s5 = inlined_call_operand.vmem [shape: bf16[64,64], index: 5, kind: input, shape index: {}]
  %s6 = inlined_call_operand.vmem [shape: bf16[64,64], index: 6, kind: input, shape index: {}]
  %s7 = inlined_call_operand.vmem [shape: bf16[64,64], index: 7, kind: input, shape index: {}]
  %s8 = inlined_call_operand.vmem [shape: f32[15,64], index: 8, kind: input, shape index: {}]
  %s9 = inlined_call_operand.vmem [shape: f32[64,32], index: 9, kind: input, shape index: {}]
  %s10 = inlined_call_operand.vmem [shape: f32[32,64], index: 10, kind: input, shape index: {}]
  %s11 = inlined_call_operand.vmem [shape: f32[2,16,64], index: 11, kind: output, shape index: {}]
  %s12 = sld [smem:[#allocation0]]
  $region77: #{discriminator_forward.6} parent=0
    _
  %s14 = ssub.s32 1, %s12
  %s15 = scalar_select 0, %s14, %s12
  loop: start=0, step=1, limit=4
  $region2: #{discriminator_forward.6} parent=0 // loop_pre_header
    _
  $region3: #{discriminator_forward.6} parent=0 // loop_header
    %s17 = sphi 0, %s21
    %p18 = scmp.ge.s32.totalorder %s17, 4
    %s27 = sphi 0, %s29
    %s30 = sphi 0, %s27
    %s31 = sphi 0, %s30
    %s47 = sphi 0, %s31
    %s53 = sphi 0, %s55
    %s56 = sphi 0, %s53
    %s57 = sphi 0, %s56
    %s73 = sphi 0, %s57
    %s77 = sphi 0, %s77
    %s79 = sphi 0, %s77
    %s80 = sphi 0, %s79
    %s94 = sphi 0, %s80
    %s98 = sphi 0, %s98
    %s100 = sphi 0, %s98
    %s101 = sphi 0, %s100
    %s115 = sphi 0, %s101
    %s119 = sphi 0, %s119
    %s121 = sphi 0, %s119
    %s122 = sphi 0, %s121
    %s136 = sphi 0, %s122
    %s140 = sphi 0, %s140
    %s142 = sphi 0, %s140
    %s143 = sphi 0, %s142
    %s157 = sphi 0, %s143
    %s161 = sphi 0, %s161
    %s163 = sphi 0, %s161
    %s164 = sphi 0, %s163
    %s178 = sphi 0, %s164
    %s182 = sphi 0, %s182
    %s184 = sphi 0, %s182
    %s185 = sphi 0, %s184
    %s199 = sphi 0, %s185
    %s203 = sphi 0, %s203
    %s205 = sphi 0, %s203
    %s206 = sphi 0, %s205
    %s220 = sphi 0, %s206
    %s224 = sphi 0, %s224
    %s226 = sphi 0, %s224
    %s227 = sphi 0, %s226
    %s241 = sphi 0, %s227
    %s245 = sphi 0, %s245
    %s247 = sphi 0, %s245
    %s248 = sphi 0, %s247
    %s262 = sphi 0, %s248
    %s268 = sphi 0, %s270
    %s271 = sphi 0, %s268
    %s272 = sphi 0, %s271
    %s288 = sphi 0, %s272
  $region4: #{discriminator_forward.6} parent=0 // loop_header_branch
    %20 = sbr.rel (%p18) target = $region8
  $region5: #{discriminator_forward.6} parent=0 // loop_body
    %s22 = ssub.s32 %s17, 1
    %s23 = ssub.s32 %s17, 2
    %s24 = sadd.s32 %s17, 1
    %s25 = ssub.s32 %s17, %s24
    %p26 = scmp.eq.s32.totalorder %s25, 0
    %s28 = sadd.s32 %s27, 1
    %s29 = scalar_select %p26, %s27, %s28
    %p32 = pneg %p26
    %p33 = scmp.eq.s32.totalorder %s17, 1
    %p34 = por %p32, %p33
    %p35 = scmp.ne.s32.totalorder %s27, %s30
    %p36 = scmp.eq.s32.totalorder %s17, 0
    %p37 = por %p35, %p36
    %p38 = scmp.ne.s32.totalorder %s27, %s30
    %p39 = scmp.eq.s32.totalorder %s22, 1
    %p40 = por %p38, %p39
    %p41 = scmp.ne.s32.totalorder %s30, %s31
    %p42 = scmp.eq.s32.totalorder %s22, 0
    %p43 = por %p41, %p42
    %p44 = scmp.ne.s32.totalorder %s30, %s31
    %p45 = scmp.eq.s32.totalorder %s23, 1
    %p46 = por %p44, %p45
    %p48 = scmp.ne.s32.totalorder %s31, %s47
    %p49 = scmp.eq.s32.totalorder %s23, 0
    %p50 = por %p48, %p49
    %s51 = ssub.s32 %s17, %s24
    %p52 = scmp.eq.s32.totalorder %s51, 0
    %s54 = sadd.s32 %s53, 1
    %s55 = scalar_select %p52, %s53, %s54
    %p58 = pneg %p52
    %p59 = scmp.eq.s32.totalorder %s17, 1
    %p60 = por %p58, %p59
    %p61 = scmp.ne.s32.totalorder %s53, %s56
    %p62 = scmp.eq.s32.totalorder %s17, 0
    %p63 = por %p61, %p62
    %p64 = scmp.ne.s32.totalorder %s53, %s56
    %p65 = scmp.eq.s32.totalorder %s22, 1
    %p66 = por %p64, %p65
    %p67 = scmp.ne.s32.totalorder %s56, %s57
    %p68 = scmp.eq.s32.totalorder %s22, 0
    %p69 = por %p67, %p68
    %p70 = scmp.ne.s32.totalorder %s56, %s57
    %p71 = scmp.eq.s32.totalorder %s23, 1
    %p72 = por %p70, %p71
    %p74 = scmp.ne.s32.totalorder %s57, %s73
    %p75 = scmp.eq.s32.totalorder %s23, 0
    %p76 = por %p74, %p75
    %s78 = sadd.s32 %s77, 1
    %p81 = scmp.eq.s32.totalorder %s17, 1
    %p82 = scmp.ne.s32.totalorder %s77, %s79
    %p83 = scmp.eq.s32.totalorder %s17, 0
    %p84 = por %p82, %p83
    %p85 = scmp.ne.s32.totalorder %s77, %s79
    %p86 = scmp.eq.s32.totalorder %s22, 1
    %p87 = por %p85, %p86
    %p88 = scmp.ne.s32.totalorder %s79, %s80
    %p89 = scmp.eq.s32.totalorder %s22, 0
    %p90 = por %p88, %p89
    %p91 = scmp.ne.s32.totalorder %s79, %s80
    %p92 = scmp.eq.s32.totalorder %s23, 1
    %p93 = por %p91, %p92
    %p95 = scmp.ne.s32.totalorder %s80, %s94
    %p96 = scmp.eq.s32.totalorder %s23, 0
    %p97 = por %p95, %p96
    %s99 = sadd.s32 %s98, 1
    %p102 = scmp.eq.s32.totalorder %s17, 1
    %p103 = scmp.ne.s32.totalorder %s98, %s100
    %p104 = scmp.eq.s32.totalorder %s17, 0
    %p105 = por %p103, %p104
    %p106 = scmp.ne.s32.totalorder %s98, %s100
    %p107 = scmp.eq.s32.totalorder %s22, 1
    %p108 = por %p106, %p107
    %p109 = scmp.ne.s32.totalorder %s100, %s101
    %p110 = scmp.eq.s32.totalorder %s22, 0
    %p111 = por %p109, %p110
    %p112 = scmp.ne.s32.totalorder %s100, %s101
    %p113 = scmp.eq.s32.totalorder %s23, 1
    %p114 = por %p112, %p113
    %p116 = scmp.ne.s32.totalorder %s101, %s115
    %p117 = scmp.eq.s32.totalorder %s23, 0
    %p118 = por %p116, %p117
    %s120 = sadd.s32 %s119, 1
    %p123 = scmp.eq.s32.totalorder %s17, 1
    %p124 = scmp.ne.s32.totalorder %s119, %s121
    %p125 = scmp.eq.s32.totalorder %s17, 0
    %p126 = por %p124, %p125
    %p127 = scmp.ne.s32.totalorder %s119, %s121
    %p128 = scmp.eq.s32.totalorder %s22, 1
    %p129 = por %p127, %p128
    %p130 = scmp.ne.s32.totalorder %s121, %s122
    %p131 = scmp.eq.s32.totalorder %s22, 0
    %p132 = por %p130, %p131
    %p133 = scmp.ne.s32.totalorder %s121, %s122
    %p134 = scmp.eq.s32.totalorder %s23, 1
    %p135 = por %p133, %p134
    %p137 = scmp.ne.s32.totalorder %s122, %s136
    %p138 = scmp.eq.s32.totalorder %s23, 0
    %p139 = por %p137, %p138
    %s141 = sadd.s32 %s140, 1
    %p144 = scmp.eq.s32.totalorder %s17, 1
    %p145 = scmp.ne.s32.totalorder %s140, %s142
    %p146 = scmp.eq.s32.totalorder %s17, 0
    %p147 = por %p145, %p146
    %p148 = scmp.ne.s32.totalorder %s140, %s142
    %p149 = scmp.eq.s32.totalorder %s22, 1
    %p150 = por %p148, %p149
    %p151 = scmp.ne.s32.totalorder %s142, %s143
    %p152 = scmp.eq.s32.totalorder %s22, 0
    %p153 = por %p151, %p152
    %p154 = scmp.ne.s32.totalorder %s142, %s143
    %p155 = scmp.eq.s32.totalorder %s23, 1
    %p156 = por %p154, %p155
    %p158 = scmp.ne.s32.totalorder %s143, %s157
    %p159 = scmp.eq.s32.totalorder %s23, 0
    %p160 = por %p158, %p159
    %s162 = sadd.s32 %s161, 1
    %p165 = scmp.eq.s32.totalorder %s17, 1
    %p166 = scmp.ne.s32.totalorder %s161, %s163
    %p167 = scmp.eq.s32.totalorder %s17, 0
    %p168 = por %p166, %p167
    %p169 = scmp.ne.s32.totalorder %s161, %s163
    %p170 = scmp.eq.s32.totalorder %s22, 1
    %p171 = por %p169, %p170
    %p172 = scmp.ne.s32.totalorder %s163, %s164
    %p173 = scmp.eq.s32.totalorder %s22, 0
    %p174 = por %p172, %p173
    %p175 = scmp.ne.s32.totalorder %s163, %s164
    %p176 = scmp.eq.s32.totalorder %s23, 1
    %p177 = por %p175, %p176
    %p179 = scmp.ne.s32.totalorder %s164, %s178
    %p180 = scmp.eq.s32.totalorder %s23, 0
    %p181 = por %p179, %p180
    %s183 = sadd.s32 %s182, 1
    %p186 = scmp.eq.s32.totalorder %s17, 1
    %p187 = scmp.ne.s32.totalorder %s182, %s184
    %p188 = scmp.eq.s32.totalorder %s17, 0
    %p189 = por %p187, %p188
    %p190 = scmp.ne.s32.totalorder %s182, %s184
    %p191 = scmp.eq.s32.totalorder %s22, 1
    %p192 = por %p190, %p191
    %p193 = scmp.ne.s32.totalorder %s184, %s185
    %p194 = scmp.eq.s32.totalorder %s22, 0
    %p195 = por %p193, %p194
    %p196 = scmp.ne.s32.totalorder %s184, %s185
    %p197 = scmp.eq.s32.totalorder %s23, 1
    %p198 = por %p196, %p197
    %p200 = scmp.ne.s32.totalorder %s185, %s199
    %p201 = scmp.eq.s32.totalorder %s23, 0
    %p202 = por %p200, %p201
    %s204 = sadd.s32 %s203, 1
    %p207 = scmp.eq.s32.totalorder %s17, 1
    %p208 = scmp.ne.s32.totalorder %s203, %s205
    %p209 = scmp.eq.s32.totalorder %s17, 0
    %p210 = por %p208, %p209
    %p211 = scmp.ne.s32.totalorder %s203, %s205
    %p212 = scmp.eq.s32.totalorder %s22, 1
    %p213 = por %p211, %p212
    %p214 = scmp.ne.s32.totalorder %s205, %s206
    %p215 = scmp.eq.s32.totalorder %s22, 0
    %p216 = por %p214, %p215
    %p217 = scmp.ne.s32.totalorder %s205, %s206
    %p218 = scmp.eq.s32.totalorder %s23, 1
    %p219 = por %p217, %p218
    %p221 = scmp.ne.s32.totalorder %s206, %s220
    %p222 = scmp.eq.s32.totalorder %s23, 0
    %p223 = por %p221, %p222
    %s225 = sadd.s32 %s224, 1
    %p228 = scmp.eq.s32.totalorder %s17, 1
    %p229 = scmp.ne.s32.totalorder %s224, %s226
    %p230 = scmp.eq.s32.totalorder %s17, 0
    %p231 = por %p229, %p230
    %p232 = scmp.ne.s32.totalorder %s224, %s226
    %p233 = scmp.eq.s32.totalorder %s22, 1
    %p234 = por %p232, %p233
    %p235 = scmp.ne.s32.totalorder %s226, %s227
    %p236 = scmp.eq.s32.totalorder %s22, 0
    %p237 = por %p235, %p236
    %p238 = scmp.ne.s32.totalorder %s226, %s227
    %p239 = scmp.eq.s32.totalorder %s23, 1
    %p240 = por %p238, %p239
    %p242 = scmp.ne.s32.totalorder %s227, %s241
    %p243 = scmp.eq.s32.totalorder %s23, 0
    %p244 = por %p242, %p243
    %s246 = sadd.s32 %s245, 1
    %p249 = scmp.eq.s32.totalorder %s17, 1
    %p250 = scmp.ne.s32.totalorder %s245, %s247
    %p251 = scmp.eq.s32.totalorder %s17, 0
    %p252 = por %p250, %p251
    %p253 = scmp.ne.s32.totalorder %s245, %s247
    %p254 = scmp.eq.s32.totalorder %s22, 1
    %p255 = por %p253, %p254
    %p256 = scmp.ne.s32.totalorder %s247, %s248
    %p257 = scmp.eq.s32.totalorder %s22, 0
    %p258 = por %p256, %p257
    %p259 = scmp.ne.s32.totalorder %s247, %s248
    %p260 = scmp.eq.s32.totalorder %s23, 1
    %p261 = por %p259, %p260
    %p263 = scmp.ne.s32.totalorder %s248, %s262
    %p264 = scmp.eq.s32.totalorder %s23, 0
    %p265 = por %p263, %p264
    %s266 = ssub.s32 %s17, %s24
    %p267 = scmp.eq.s32.totalorder %s266, 0
    %s269 = sadd.s32 %s268, 1
    %s270 = scalar_select %p267, %s268, %s269
    %p273 = pneg %p267
    %p274 = scmp.eq.s32.totalorder %s17, 1
    %p275 = por %p273, %p274
    %p276 = scmp.ne.s32.totalorder %s268, %s271
    %p277 = scmp.eq.s32.totalorder %s17, 0
    %p278 = por %p276, %p277
    %p279 = scmp.ne.s32.totalorder %s268, %s271
    %p280 = scmp.eq.s32.totalorder %s22, 1
    %p281 = por %p279, %p280
    %p282 = scmp.ne.s32.totalorder %s271, %s272
    %p283 = scmp.eq.s32.totalorder %s22, 0
    %p284 = por %p282, %p283
    %p285 = scmp.ne.s32.totalorder %s271, %s272
    %p286 = scmp.eq.s32.totalorder %s23, 1
    %p287 = por %p285, %p286
    %p289 = scmp.ne.s32.totalorder %s272, %s288
    %p290 = scmp.eq.s32.totalorder %s23, 0
    %p291 = por %p289, %p290
    %p292 = scmp.le.s32.totalorder 1, %s17
    %p293 = scmp.lt.s32.totalorder %s17, 3
    %p294 = pnand %p292, %p293
    %p295 = pneg %p294
    // Predicated region
    $region9: #{discriminator_forward.6} parent=5 // pred_check
      _
    $region10: #{discriminator_forward.6} parent=5 // pred_check_branch
      %297 = sbr.rel (%p294) target = $region12
    $region11: #{discriminator_forward.6} parent=5 // pred_region
      %s298 = ssub.s32 %s17, 1
      // Predicated region
      $region13: #{discriminator_forward.6} parent=11 // pred_check
        %p299 = pneg %p90
      $region14: #{discriminator_forward.6} parent=11 // pred_check_branch
        %301 = sbr.rel (%p299) target = $region16
      $region15: #{discriminator_forward.6} parent=11 // pred_region
        _
      $region16: #{discriminator_forward.6} parent=11 // pred_fallthru
        _
      // Predicated region
      $region17: #{discriminator_forward.6} parent=11 // pred_check
        %p302 = pneg %p111
      $region18: #{discriminator_forward.6} parent=11 // pred_check_branch
        %304 = sbr.rel (%p302) target = $region20
      $region19: #{discriminator_forward.6} parent=11 // pred_region
        _
      $region20: #{discriminator_forward.6} parent=11 // pred_fallthru
        _
      // Predicated region
      $region21: #{discriminator_forward.6} parent=11 // pred_check
        %p305 = pneg %p132
      $region22: #{discriminator_forward.6} parent=11 // pred_check_branch
        %307 = sbr.rel (%p305) target = $region24
      $region23: #{discriminator_forward.6} parent=11 // pred_region
        _
      $region24: #{discriminator_forward.6} parent=11 // pred_fallthru
        _
      // Predicated region
      $region25: #{discriminator_forward.6} parent=11 // pred_check
        %p308 = pneg %p153
      $region26: #{discriminator_forward.6} parent=11 // pred_check_branch
        %310 = sbr.rel (%p308) target = $region28
      $region27: #{discriminator_forward.6} parent=11 // pred_region
        _
      $region28: #{discriminator_forward.6} parent=11 // pred_fallthru
        _
      // Predicated region
      $region29: #{discriminator_forward.6} parent=11 // pred_check
        %p311 = pneg %p174
      $region30: #{discriminator_forward.6} parent=11 // pred_check_branch
        %313 = sbr.rel (%p311) target = $region32
      $region31: #{discriminator_forward.6} parent=11 // pred_region
        _
      $region32: #{discriminator_forward.6} parent=11 // pred_fallthru
        _
      // Predicated region
      $region33: #{discriminator_forward.6} parent=11 // pred_check
        %p314 = pneg %p195
      $region34: #{discriminator_forward.6} parent=11 // pred_check_branch
        %316 = sbr.rel (%p314) target = $region36
      $region35: #{discriminator_forward.6} parent=11 // pred_region
        _
      $region36: #{discriminator_forward.6} parent=11 // pred_fallthru
        _
      // Predicated region
      $region37: #{discriminator_forward.6} parent=11 // pred_check
        %p317 = pneg %p216
      $region38: #{discriminator_forward.6} parent=11 // pred_check_branch
        %319 = sbr.rel (%p317) target = $region40
      $region39: #{discriminator_forward.6} parent=11 // pred_region
        _
      $region40: #{discriminator_forward.6} parent=11 // pred_fallthru
        _
      // Predicated region
      $region41: #{discriminator_forward.6} parent=11 // pred_check
        %p320 = pneg %p237
      $region42: #{discriminator_forward.6} parent=11 // pred_check_branch
        %322 = sbr.rel (%p320) target = $region44
      $region43: #{discriminator_forward.6} parent=11 // pred_region
        _
      $region44: #{discriminator_forward.6} parent=11 // pred_fallthru
        _
      // Predicated region
      $region45: #{discriminator_forward.6} parent=11 // pred_check
        %p323 = pneg %p258
      $region46: #{discriminator_forward.6} parent=11 // pred_check_branch
        %325 = sbr.rel (%p323) target = $region48
      $region47: #{discriminator_forward.6} parent=11 // pred_region
        _
      $region48: #{discriminator_forward.6} parent=11 // pred_fallthru
        _
    $region12: #{discriminator_forward.6} parent=5 // pred_fallthru
      _
    %p326 = scmp.lt.s32.totalorder %s17, 2
    // Predicated region
    $region49: #{discriminator_forward.6} parent=5 // pred_check
      %p327 = pneg %p326
    $region50: #{discriminator_forward.6} parent=5 // pred_check_branch
      %329 = sbr.rel (%p327) target = $region52
    $region51: #{discriminator_forward.6} parent=5 // pred_region
      // Predicated region
      $region53: #{discriminator_forward.6} parent=51 // pred_check
        %p330 = pneg %p37
      $region54: #{discriminator_forward.6} parent=51 // pred_check_branch
        %332 = sbr.rel (%p330) target = $region56
      $region55: #{discriminator_forward.6} parent=51 // pred_region
        %p333 = scmp.lt.s32.totalorder %s17, 1
        %s334 = scalar_select %p333, %s17, 1
        %s335 = smul.addr %s334, 16
        %s336 = smul.addr %s335, 4
        %s337 = scalar_lea.vmem %s0, %s336
      $region56: #{discriminator_forward.6} parent=51 // pred_fallthru
        _
      // Predicated region
      $region57: #{discriminator_forward.6} parent=51 // pred_check
        %p338 = pneg %p63
      $region58: #{discriminator_forward.6} parent=51 // pred_check_branch
        %340 = sbr.rel (%p338) target = $region60
      $region59: #{discriminator_forward.6} parent=51 // pred_region
        %p341 = scmp.lt.s32.totalorder %s17, 1
        %s342 = scalar_select %p341, %s17, 1
        %s343 = smul.addr %s342, 16
        %s344 = smul.addr %s343, 4
        %s345 = scalar_lea.vmem %s1, %s344
      $region60: #{discriminator_forward.6} parent=51 // pred_fallthru
        _
    $region52: #{discriminator_forward.6} parent=5 // pred_fallthru
      _
    %p346 = scmp.le.s32.totalorder 1, %s17
    %p347 = scmp.lt.s32.totalorder %s17, 3
    %p348 = pnand %p346, %p347
    %p349 = pneg %p348
    // Predicated region
    $region61: #{discriminator_forward.6} parent=5 // pred_check
      _
    $region62: #{discriminator_forward.6} parent=5 // pred_check_branch
      %351 = sbr.rel (%p348) target = $region64
    $region63: #{discriminator_forward.6} parent=5 // pred_region
      %s352 = ssub.s32 %s17, 1
      %p353 = scmp.lt.s32.totalorder %s22, 1
      %s354 = scalar_select %p353, %s22, 1
      %s355 = smul.addr %s354, 16
      %s356 = smul.addr %s355, 4
      %s357 = scalar_lea.vmem %s0, %s356
      %p358 = pneg %p43
      %p359 = pneg %p40
      %p360 = scmp.lt.s32.totalorder %s22, 1
      %s361 = scalar_select %p360, %s22, 1
      %s362 = smul.addr %s361, 16
      %s363 = smul.addr %s362, 4
      %s364 = scalar_lea.vmem %s1, %s363
      %p365 = pneg %p69
      %p366 = pneg %p66
      %p367 = pneg %p90
      %p368 = pneg %p87
      %p369 = pneg %p111
      %p370 = pneg %p108
      %p371 = pneg %p132
      %p372 = pneg %p129
      %p373 = pneg %p153
      %p374 = pneg %p150
      %p375 = pneg %p174
      %p376 = pneg %p171
      %p377 = pneg %p195
      %p378 = pneg %p192
      %p379 = pneg %p216
      %p380 = pneg %p213
      %p381 = pneg %p237
      %p382 = pneg %p234
      %p383 = pneg %p258
      %p384 = pneg %p255
      %p385 = pneg %p284
      %p386 = pneg %p281
      %p387 = scmp.lt.s32.totalorder %s22, 1
      %s388 = scalar_select %p387, %s22, 1
      %s389 = smul.addr %s388, 2
      %s390 = smul.addr %s389, 8
      %s391 = scalar_lea.vmem %s11, %s390
      %p392 = scmp.lt.s32.totalorder %s22, 1
      %s393 = scalar_select %p392, %s22, 1
      %s394 = smul.addr %s393, 16
      %s395 = smul.addr %s394, 4
      %s396 = scalar_lea.vmem %s0, %s395
      %p397 = scmp.lt.s32.totalorder %s22, 1
      %s398 = scalar_select %p397, %s22, 1
      %s399 = smul.addr %s398, 16
      %s400 = smul.addr %s399, 4
      %s401 = scalar_lea.vmem %s1, %s400
      %p402 = scmp.lt.s32.totalorder %s22, 1
      %s403 = scalar_select %p402, %s22, 1
      %s404 = smul.addr %s403, 2
      %s405 = smul.addr %s404, 8
      %s406 = scalar_lea.vmem %s11, %s405
      %v408 = vld [vmem:[%s9] sm:$0xff]
      %v409 = vld [vmem:[%s9 + $0x8] sm:$0xff]
      %v410 = vld [vmem:[%s9 + $0x10] sm:$0xff]
      %v411 = vld [vmem:[%s9 + $0x18] sm:$0xff]
      %v412 = vld [vmem:[%s9 + $0x20] sm:$0xff]
      %v413 = vld [vmem:[%s9 + $0x28] sm:$0xff]
      %v414 = vld [vmem:[%s9 + $0x30] sm:$0xff]
      %v415 = vld [vmem:[%s9 + $0x38] sm:$0xff]
      %v416 = vld [vmem:[%s10] sm:$0xff]
      %v417 = vld [vmem:[%s10 + $0x8] sm:$0xff]
      %v418 = vld [vmem:[%s10 + $0x10] sm:$0xff]
      %v419 = vld [vmem:[%s10 + $0x18] sm:$0xff]
      %v420 = vld [vmem:[%s8] sm:$0xff]
      %v421 = vld [vmem:[%s8 + $0x8] sm:$0x7f]
      %v422 = vld [vmem:[%s396] sm:$0xff]
      %v423 = vld [vmem:[%s396 + $0x8] sm:$0xff]
      %v424 = vld [vmem:[%s396 + $0x10] sm:$0xff]
      %v425 = vld [vmem:[%s396 + $0x18] sm:$0xff]
      %v426 = vld [vmem:[%s396 + $0x20] sm:$0xff]
      %v427 = vld [vmem:[%s396 + $0x28] sm:$0xff]
      %v428 = vld [vmem:[%s396 + $0x30] sm:$0xff]
      %v429 = vld [vmem:[%s396 + $0x38] sm:$0xff]
      %v430 = vld [vmem:[%s2] sm:$0xf]
      %v431 = vld [vmem:[%s2 + $0x4] sm:$0xf]
      %v432 = vld [vmem:[%s2 + $0x8] sm:$0xf]
      %v433 = vld [vmem:[%s2 + $0xc] sm:$0xf]
      %v434 = vld [vmem:[%s2 + $0x10] sm:$0xf]
      %v435 = vld [vmem:[%s2 + $0x14] sm:$0xf]
      %v436 = vld [vmem:[%s2 + $0x18] sm:$0xf]
      %v437 = vld [vmem:[%s2 + $0x1c] sm:$0xf]
      %v438 = vld [vmem:[%s2 + $0x20] sm:$0xf]
      %v439 = vld [vmem:[%s2 + $0x24] sm:$0xf]
      %v440 = vld [vmem:[%s2 + $0x28] sm:$0xf]
      %v441 = vld [vmem:[%s2 + $0x2c] sm:$0xf]
      %v442 = vld [vmem:[%s2 + $0x30] sm:$0xf]
      %v443 = vld [vmem:[%s2 + $0x34] sm:$0xf]
      %v444 = vld [vmem:[%s2 + $0x38] sm:$0xf]
      %v445 = vld [vmem:[%s2 + $0x3c] sm:$0xf]
      %v446 = vld [vmem:[%s2 + $0x40] sm:$0x3]
      %v447 = vlaneseq
      %v448 = vshrl.u32 %v447, 7
      %v449 = vsub.s32 0, %v448
      %v450 = vrot.slane %v420, %v449
      %v459 = vunpack.c.l.b16 %v422
      %v460 = vunpack.c.h.b16 %v422
      %v461 = vunpack.c.l.b16 %v423
      %v462 = vunpack.c.h.b16 %v423
      %v463 = vunpack.c.l.b16 %v424
      %v464 = vunpack.c.h.b16 %v424
      %v465 = vunpack.c.l.b16 %v425
      %v466 = vunpack.c.h.b16 %v425
      %v467 = vunpack.c.l.b16 %v426
      %v468 = vunpack.c.h.b16 %v426
      %v469 = vunpack.c.l.b16 %v427
      %v470 = vunpack.c.h.b16 %v427
      %v471 = vunpack.c.l.b16 %v428
      %v472 = vunpack.c.h.b16 %v428
      %v473 = vunpack.c.l.b16 %v429
      %v474 = vunpack.c.h.b16 %v429
      %v475 = vpack.c.b16 %v461, %v459
      %v476 = vpack.c.b16 %v462, %v460
      %v477 = vpack.c.b16 %v465, %v463
      %v478 = vpack.c.b16 %v466, %v464
      %v479 = vpack.c.b16 %v469, %v467
      %v480 = vpack.c.b16 %v470, %v468
      %v481 = vpack.c.b16 %v473, %v471
      %v482 = vpack.c.b16 %v474, %v472
      %v504 = vunpack.c.l.b16 %v430
      %v505 = vunpack.c.l.b16 %v431
      %v506 = vunpack.c.l.b16 %v432
      %v507 = vunpack.c.l.b16 %v433
      %v508 = vunpack.c.l.b16 %v434
      %v509 = vunpack.c.l.b16 %v435
      %v510 = vunpack.c.l.b16 %v436
      %v511 = vunpack.c.l.b16 %v437
      %v512 = vunpack.c.l.b16 %v438
      %v513 = vunpack.c.l.b16 %v439
      %v514 = vunpack.c.l.b16 %v440
      %v515 = vunpack.c.l.b16 %v441
      %v516 = vunpack.c.l.b16 %v442
      %v517 = vunpack.c.l.b16 %v443
      %v518 = vunpack.c.l.b16 %v444
      %v519 = vunpack.c.l.b16 %v445
      %v520 = vunpack.c.l.b16 %v446
      %v521 = vpack.c.b16 %v505, %v504
      %v522 = vpack.c.b16 %v507, %v506
      %v523 = vpack.c.b16 %v509, %v508
      %v524 = vpack.c.b16 %v511, %v510
      %v525 = vpack.c.b16 %v513, %v512
      %v526 = vpack.c.b16 %v515, %v514
      %v527 = vpack.c.b16 %v517, %v516
      %v528 = vpack.c.b16 %v519, %v518
      %v529 = vpack.c.b16 %v520, %v520
      %vm538 = vcmask 31744
      %v540 = vsel %vm538, %v476, 0
      %v543 = vsel %vm538, %v478, 0
      %v546 = vsel %vm538, %v480, 0
      %v549 = vsel %vm538, %v482, 0
      %vm551 = vcmask 1041408
      %v553 = vsel %vm551, %v529, 0
      %555 = vmatprep.subr.bf16.mxu0 0
      %556 = vmatpush1.bf16.msra.mxu0 %v521
      %557 = vmatprep.subr.bf16.mxu0 0
      %558 = vmatpush1.bf16.msra.mxu0 %v522
      %559 = vmatprep.subr.bf16.mxu0 0
      %560 = vmatpush1.bf16.msra.mxu0 %v523
      %561 = vmatprep.subr.bf16.mxu0 0
      %562 = vmatpush1.bf16.msra.mxu0 %v524
      %563 = vmatprep.subr.bf16.mxu0 0
      %564 = vmatpush1.bf16.msra.mxu0 %v525
      %565 = vmatprep.subr.bf16.mxu0 0
      %566 = vmatpush1.bf16.msra.mxu0 %v526
      %567 = vmatprep.subr.bf16.mxu0 0
      %568 = vmatpush1.bf16.msra.mxu0 %v527
      %569 = vmatprep.subr.bf16.mxu0 0
      %570 = vmatpush1.bf16.msra.mxu0 %v528
      %571 = vmatprep.subr.bf16.mxu0 0
      %572 = vmatpush1.bf16.msra.mxu0 %v553
      %573 = vmatprep.subr.bf16.mxu0 0
      %574 = vmatpush1.bf16.msra.mxu0 0
      %575 = vmatprep.subr.bf16.mxu0 0
      %576 = vmatpush1.bf16.msra.mxu0 0
      %577 = vmatprep.subr.bf16.mxu0 0
      %578 = vmatpush1.bf16.msra.mxu0 0
      %579 = vmatprep.subr.bf16.mxu0 0
      %580 = vmatpush1.bf16.msra.mxu0 0
      %581 = vmatprep.subr.bf16.mxu0 0
      %582 = vmatpush1.bf16.msra.mxu0 0
      %583 = vmatprep.subr.bf16.mxu0 0
      %584 = vmatpush1.bf16.msra.mxu0 0
      %585 = vmatprep.subr.bf16.mxu0 0
      %586 = vmatpush1.bf16.msra.mxu0 0
      %587 = vmatprep.mubr.bf16.mxu0 %v540
      %588 = vmatmul.mubr.bf16.gmra.mrb[0].mxu0 %v475
      %v589 = vpop.f32.mrb[0].mxu0
      %v590 = vadd.f32 %v450, %v589
      %v591 = vpop.f32.mrb[0].mxu0
      %v592 = vpop.f32.mrb[0].mxu0
      %v593 = vadd.f32 %v450, %v592
      %v594 = vpop.f32.mrb[0].mxu0
      %595 = vmatprep.mubr.bf16.mxu0 %v543
      %596 = vmatmul.mubr.bf16.gmra.mrb[0].mxu0 %v477
      %v597 = vpop.f32.mrb[0].mxu0
      %v598 = vadd.f32 %v450, %v597
      %v599 = vpop.f32.mrb[0].mxu0
      %v600 = vpop.f32.mrb[0].mxu0
      %v601 = vadd.f32 %v450, %v600
      %v602 = vpop.f32.mrb[0].mxu0
      %603 = vmatprep.mubr.bf16.mxu0 %v546
      %604 = vmatmul.mubr.bf16.gmra.mrb[0].mxu0 %v479
      %v605 = vpop.f32.mrb[0].mxu0
      %v606 = vadd.f32 %v450, %v605
      %v607 = vpop.f32.mrb[0].mxu0
      %v608 = vpop.f32.mrb[0].mxu0
      %v609 = vadd.f32 %v450, %v608
      %v610 = vpop.f32.mrb[0].mxu0
      %611 = vmatprep.mubr.bf16.mxu0 %v549
      %612 = vmatmul.mubr.bf16.gmra.mrb[0].mxu0 %v481
      %v613 = vpop.f32.mrb[0].mxu0
      %v614 = vadd.f32 %v450, %v613
      %v615 = vpop.f32.mrb[0].mxu0
      %v616 = vpop.f32.mrb[0].mxu0
      %v617 = vadd.f32 %v450, %v616
      %v618 = vpop.f32.mrb[0].mxu0
      %619 = vdwg.mxu0
      %vm620 = vcmask 523264
      %v621 = vsel %vm620, %v590, 0.0
      %v622 = vsel %vm620, %v593, 0.0
      %v623 = vadd.f32 %v621, %v622
      %v624 = vsel %vm620, %v598, 0.0
      %v625 = vadd.f32 %v623, %v624
      %v626 = vsel %vm620, %v601, 0.0
      %v627 = vadd.f32 %v625, %v626
      %v628 = vsel %vm620, %v606, 0.0
      %v629 = vadd.f32 %v627, %v628
      %v630 = vsel %vm620, %v609, 0.0
      %v631 = vadd.f32 %v629, %v630
      %v632 = vsel %vm620, %v614, 0.0
      %v633 = vadd.f32 %v631, %v632
      %v634 = vsel %vm620, %v617, 0.0
      %v635 = vadd.f32 %v633, %v634
      %v636 = vrot.slane %v635, 4
      %v637 = vadd.f32 %v635, %v636
      %v638 = vrot.slane %v637, 2
      %v639 = vadd.f32 %v637, %v638
      %v640 = vrot.slane %v639, 1
      %v641 = vadd.f32 %v639, %v640
      %v642 = vmul.f32 %v590, %v590
      %v643 = vmul.f32 %v593, %v593
      %v644 = vmul.f32 %v598, %v598
      %v645 = vmul.f32 %v601, %v601
      %v646 = vmul.f32 %v606, %v606
      %v647 = vmul.f32 %v609, %v609
      %v648 = vmul.f32 %v614, %v614
      %v649 = vmul.f32 %v617, %v617
      %v650 = vsel %vm620, %v642, 0.0
      %v651 = vsel %vm620, %v643, 0.0
      %v652 = vadd.f32 %v650, %v651
      %v653 = vsel %vm620, %v644, 0.0
      %v654 = vadd.f32 %v652, %v653
      %v655 = vsel %vm620, %v645, 0.0
      %v656 = vadd.f32 %v654, %v655
      %v657 = vsel %vm620, %v646, 0.0
      %v658 = vadd.f32 %v656, %v657
      %v659 = vsel %vm620, %v647, 0.0
      %v660 = vadd.f32 %v658, %v659
      %v661 = vsel %vm620, %v648, 0.0
      %v662 = vadd.f32 %v660, %v661
      %v663 = vsel %vm620, %v649, 0.0
      %v664 = vadd.f32 %v662, %v663
      %v665 = vrot.slane %v664, 4
      %v666 = vadd.f32 %v664, %v665
      %v667 = vrot.slane %v666, 2
      %v668 = vadd.f32 %v666, %v667
      %v669 = vrot.slane %v668, 1
      %v670 = vadd.f32 %v668, %v669
      %vm671 = vcmask 1040384
      %v672 = vsel %vm671, %v641, %v670
      %v674 = vsel %vm620, %v672, 0
      %676 = vmatprep.subr.mxu0 0.0
      %677 = vmatpush1.msra.mxu0 %v408
      %678 = vmatprep.subr.mxu0 0.0
      %679 = vmatpush1.msra.mxu0 %v409
      %680 = vmatprep.subr.mxu0 0.0
      %681 = vmatpush1.msra.mxu0 %v410
      %682 = vmatprep.subr.mxu0 0.0
      %683 = vmatpush1.msra.mxu0 %v411
      %684 = vmatprep.subr.mxu0 0.0
      %685 = vmatpush1.msra.mxu0 %v412
      %686 = vmatprep.subr.mxu0 0.0
      %687 = vmatpush1.msra.mxu0 %v413
      %688 = vmatprep.subr.mxu0 0.0
      %689 = vmatpush1.msra.mxu0 %v414
      %690 = vmatprep.subr.mxu0 0.0
      %691 = vmatpush1.msra.mxu0 %v415
      %692 = vmatprep.subr.mxu0 0.0
      %693 = vmatpush1.msra.mxu0 0.0
      %694 = vmatprep.subr.mxu0 0.0
      %695 = vmatpush1.msra.mxu0 0.0
      %696 = vmatprep.subr.mxu0 0.0
      %697 = vmatpush1.msra.mxu0 0.0
      %698 = vmatprep.subr.mxu0 0.0
      %699 = vmatpush1.msra.mxu0 0.0
      %700 = vmatprep.subr.mxu0 0.0
      %701 = vmatpush1.msra.mxu0 0.0
      %702 = vmatprep.subr.mxu0 0.0
      %703 = vmatpush1.msra.mxu0 0.0
      %704 = vmatprep.subr.mxu0 0.0
      %705 = vmatpush1.msra.mxu0 0.0
      %706 = vmatprep.subr.mxu0 0.0
      %707 = vmatpush1.msra.mxu0 0.0
      %708 = vmatprep.subr.mxu0 0.0
      %709 = vmatpush1.msra.mxu0 0.0
      %710 = vmatprep.subr.mxu0 0.0
      %711 = vmatpush1.msra.mxu0 0.0
      %712 = vmatprep.subr.mxu0 0.0
      %713 = vmatpush1.msra.mxu0 0.0
      %714 = vmatprep.subr.mxu0 0.0
      %715 = vmatpush1.msra.mxu0 0.0
      %716 = vmatprep.subr.mxu0 0.0
      %717 = vmatpush1.msra.mxu0 0.0
      %718 = vmatprep.subr.mxu0 0.0
      %719 = vmatpush1.msra.mxu0 0.0
      %720 = vmatprep.subr.mxu0 0.0
      %721 = vmatpush1.msra.mxu0 0.0
      %722 = vmatprep.subr.mxu0 0.0
      %723 = vmatpush1.msra.mxu0 0.0
      %724 = vmatprep.subr.mxu0 0.0
      %725 = vmatpush1.msra.mxu0 0.0
      %726 = vmatprep.subr.mxu0 0.0
      %727 = vmatpush1.msra.mxu0 0.0
      %728 = vmatprep.subr.mxu0 0.0
      %729 = vmatpush1.msra.mxu0 0.0
      %730 = vmatprep.subr.mxu0 0.0
      %731 = vmatpush1.msra.mxu0 0.0
      %732 = vmatprep.subr.mxu0 0.0
      %733 = vmatpush1.msra.mxu0 0.0
      %734 = vmatprep.subr.mxu0 0.0
      %735 = vmatpush1.msra.mxu0 0.0
      %736 = vmatprep.subr.mxu0 0.0
      %737 = vmatpush1.msra.mxu0 0.0
      %738 = vmatprep.subr.mxu0 0.0
      %739 = vmatpush1.msra.mxu0 0.0
      %740 = vmatprep.mubr.f32.mxu0 0.0
      %741 = vmatmul.mubr.f32.gmra.mrb[0].mxu0 %v674
      %v742 = vpop.f32.mrb[0].mxu0
      %v743 = vadd.f32 0.0, %v742
      %v744 = vpop.f32.mrb[0].mxu0
      %745 = vdwg.mxu0
      %v746 = vrcp.pop 128.0
      %v747 = vmul.f32 %v743, %v746
      %v748 = vmul.f32 %v747, %v747
      %v750 = vrot.slane %v748, 7
      %v752 = vsub.f32 %v747, %v750
      %v753 = vmax.f32 %v752, 0.0
      %v754 = vadd.f32 %v753, 1e-05
      %v755 = vrsqrt.pop %v754
      %v756 = vsel %vm671, %v747, %v755
      %vm757 = vcmask 261120
      %v759 = vsel %vm757, %v756, 0
      %761 = vmatprep.subr.mxu0 0.0
      %762 = vmatpush1.msra.mxu0 %v416
      %763 = vmatprep.subr.mxu0 0.0
      %764 = vmatpush1.msra.mxu0 %v417
      %765 = vmatprep.subr.mxu0 0.0
      %766 = vmatpush1.msra.mxu0 %v418
      %767 = vmatprep.subr.mxu0 0.0
      %768 = vmatpush1.msra.mxu0 %v419
      %769 = vmatprep.subr.mxu0 0.0
      %770 = vmatpush1.msra.mxu0 0.0
      %771 = vmatprep.subr.mxu0 0.0
      %772 = vmatpush1.msra.mxu0 0.0
      %773 = vmatprep.subr.mxu0 0.0
      %774 = vmatpush1.msra.mxu0 0.0
      %775 = vmatprep.subr.mxu0 0.0
      %776 = vmatpush1.msra.mxu0 0.0
      %777 = vmatprep.subr.mxu0 0.0
      %778 = vmatpush1.msra.mxu0 0.0
      %779 = vmatprep.subr.mxu0 0.0
      %780 = vmatpush1.msra.mxu0 0.0
      %781 = vmatprep.subr.mxu0 0.0
      %782 = vmatpush1.msra.mxu0 0.0
      %783 = vmatprep.subr.mxu0 0.0
      %784 = vmatpush1.msra.mxu0 0.0
      %785 = vmatprep.subr.mxu0 0.0
      %786 = vmatpush1.msra.mxu0 0.0
      %787 = vmatprep.subr.mxu0 0.0
      %788 = vmatpush1.msra.mxu0 0.0
      %789 = vmatprep.subr.mxu0 0.0
      %790 = vmatpush1.msra.mxu0 0.0
      %791 = vmatprep.subr.mxu0 0.0
      %792 = vmatpush1.msra.mxu0 0.0
      %793 = vmatprep.subr.mxu0 0.0
      %794 = vmatpush1.msra.mxu0 0.0
      %795 = vmatprep.subr.mxu0 0.0
      %796 = vmatpush1.msra.mxu0 0.0
      %797 = vmatprep.subr.mxu0 0.0
      %798 = vmatpush1.msra.mxu0 0.0
      %799 = vmatprep.subr.mxu0 0.0
      %800 = vmatpush1.msra.mxu0 0.0
      %801 = vmatprep.subr.mxu0 0.0
      %802 = vmatpush1.msra.mxu0 0.0
      %803 = vmatprep.subr.mxu0 0.0
      %804 = vmatpush1.msra.mxu0 0.0
      %805 = vmatprep.subr.mxu0 0.0
      %806 = vmatpush1.msra.mxu0 0.0
      %807 = vmatprep.subr.mxu0 0.0
      %808 = vmatpush1.msra.mxu0 0.0
      %809 = vmatprep.subr.mxu0 0.0
      %810 = vmatpush1.msra.mxu0 0.0
      %811 = vmatprep.subr.mxu0 0.0
      %812 = vmatpush1.msra.mxu0 0.0
      %813 = vmatprep.subr.mxu0 0.0
      %814 = vmatpush1.msra.mxu0 0.0
      %815 = vmatprep.subr.mxu0 0.0
      %816 = vmatpush1.msra.mxu0 0.0
      %817 = vmatprep.subr.mxu0 0.0
      %818 = vmatpush1.msra.mxu0 0.0
      %819 = vmatprep.subr.mxu0 0.0
      %820 = vmatpush1.msra.mxu0 0.0
      %821 = vmatprep.subr.mxu0 0.0
      %822 = vmatpush1.msra.mxu0 0.0
      %823 = vmatprep.subr.mxu0 0.0
      %824 = vmatpush1.msra.mxu0 0.0
      %825 = vmatprep.mubr.f32.mxu0 0.0
      %826 = vmatmul.mubr.f32.gmra.mrb[0].mxu0 %v759
      %v827 = vpop.f32.mrb[0].mxu0
      %v828 = vadd.f32 0.0, %v827
      %v829 = vpop.f32.mrb[0].mxu0
      %830 = vdwg.mxu0
      %v831 = vmul.f32 %v828, %v420
      %v833 = vrot.slane %v831, 1
      %v835 = vmul.f32 %v828, %v833
      %v837 = vrot.slane %v835, 6
      %v839 = vsub.f32 %v420, %v837
      %v840 = vlaneseq
      %v841 = vshrl.u32 %v840, 7
      %v842 = vsub.s32 1, %v841
      %v843 = vrot.slane %v831, %v842
      %v844 = vmul.f32 %v590, %v843
      %v845 = vmul.f32 %v593, %v843
      %v846 = vmul.f32 %v598, %v843
      %v847 = vmul.f32 %v601, %v843
      %v848 = vmul.f32 %v606, %v843
      %v849 = vmul.f32 %v609, %v843
      %v850 = vmul.f32 %v614, %v843
      %v851 = vmul.f32 %v617, %v843
      %v852 = vlaneseq
      %v853 = vshrl.u32 %v852, 7
      %v854 = vsub.s32 2, %v853
      %v855 = vrot.slane %v839, %v854
      %v856 = vadd.f32 %v844, %v855
      %v857 = vadd.f32 %v845, %v855
      %v858 = vadd.f32 %v846, %v855
      %v859 = vadd.f32 %v847, %v855
      %v860 = vadd.f32 %v848, %v855
      %v861 = vadd.f32 %v849, %v855
      %v862 = vadd.f32 %v850, %v855
      %v863 = vadd.f32 %v851, %v855
      %vm864 = vcmp.ge.f32.partialorder %v856, 0.0
      %vm865 = vcmp.ge.f32.partialorder %v857, 0.0
      %vm866 = vcmp.ge.f32.partialorder %v858, 0.0
      %vm867 = vcmp.ge.f32.partialorder %v859, 0.0
      %vm868 = vcmp.ge.f32.partialorder %v860, 0.0
      %vm869 = vcmp.ge.f32.partialorder %v861, 0.0
      %vm870 = vcmp.ge.f32.partialorder %v862, 0.0
      %vm871 = vcmp.ge.f32.partialorder %v863, 0.0
      %v872 = vmul.f32 %v856, 0.2
      %v873 = vmul.f32 %v857, 0.2
      %v874 = vmul.f32 %v858, 0.2
      %v875 = vmul.f32 %v859, 0.2
      %v876 = vmul.f32 %v860, 0.2
      %v877 = vmul.f32 %v861, 0.2
      %v878 = vmul.f32 %v862, 0.2
      %v879 = vmul.f32 %v863, 0.2
      %v880 = vsel %vm864, %v856, %v872
      %v881 = vsel %vm865, %v857, %v873
      %v882 = vsel %vm866, %v858, %v874
      %v883 = vsel %vm867, %v859, %v875
      %v884 = vsel %vm868, %v860, %v876
      %v885 = vsel %vm869, %v861, %v877
      %v886 = vsel %vm870, %v862, %v878
      %v887 = vsel %vm871, %v863, %v879
      %v888 = vpack.c.bf16 %v881, %v880
      %v889 = vpack.c.bf16 %v883, %v882
      %v890 = vpack.c.bf16 %v885, %v884
      %v891 = vpack.c.bf16 %v887, %v886
      %v892 = vld [vmem:[%s3] sm:$0xf]
      %v893 = vld [vmem:[%s3 + $0x4] sm:$0xf]
      %v894 = vld [vmem:[%s3 + $0x8] sm:$0xf]
      %v895 = vld [vmem:[%s3 + $0xc] sm:$0xf]
      %v896 = vld [vmem:[%s3 + $0x10] sm:$0xf]
      %v897 = vld [vmem:[%s3 + $0x14] sm:$0xf]
      %v898 = vld [vmem:[%s3 + $0x18] sm:$0xf]
      %v899 = vld [vmem:[%s3 + $0x1c] sm:$0xf]
      %v900 = vlaneseq
      %v901 = vshrl.u32 %v900, 7
      %v902 = vsub.s32 3, %v901
      %v903 = vrot.slane %v420, %v902
      %v912 = vunpack.c.l.b16 %v892
      %v913 = vunpack.c.l.b16 %v893
      %v914 = vunpack.c.l.b16 %v894
      %v915 = vunpack.c.l.b16 %v895
      %v916 = vunpack.c.l.b16 %v896
      %v917 = vunpack.c.l.b16 %v897
      %v918 = vunpack.c.l.b16 %v898
      %v919 = vunpack.c.l.b16 %v899
      %v920 = vpack.c.b16 %v913, %v912
      %v921 = vpack.c.b16 %v915, %v914
      %v922 = vpack.c.b16 %v917, %v916
      %v923 = vpack.c.b16 %v919, %v918
      %v929 = vsel %vm620, %v888, 0
      %v932 = vsel %vm620, %v889, 0
      %v935 = vsel %vm620, %v890, 0
      %v938 = vsel %vm620, %v891, 0
      %940 = vmatprep.subr.bf16.mxu0 0
      %941 = vmatpush1.bf16.msra.mxu0 %v920
      %942 = vmatprep.subr.bf16.mxu0 0
      %943 = vmatpush1.bf16.msra.mxu0 %v921
      %944 = vmatprep.subr.bf16.mxu0 0
      %945 = vmatpush1.bf16.msra.mxu0 %v922
      %946 = vmatprep.subr.bf16.mxu0 0
      %947 = vmatpush1.bf16.msra.mxu0 %v923
      %948 = vmatprep.subr.bf16.mxu0 0
      %949 = vmatpush1.bf16.msra.mxu0 0
      %950 = vmatprep.subr.bf16.mxu0 0
      %951 = vmatpush1.bf16.msra.mxu0 0
      %952 = vmatprep.subr.bf16.mxu0 0
      %953 = vmatpush1.bf16.msra.mxu0 0
      %954 = vmatprep.subr.bf16.mxu0 0
      %955 = vmatpush1.bf16.msra.mxu0 0
      %956 = vmatprep.subr.bf16.mxu0 0
      %957 = vmatpush1.bf16.msra.mxu0 0
      %958 = vmatprep.subr.bf16.mxu0 0
      %959 = vmatpush1.bf16.msra.mxu0 0
      %960 = vmatprep.subr.bf16.mxu0 0
      %961 = vmatpush1.bf16.msra.mxu0 0
      %962 = vmatprep.subr.bf16.mxu0 0
      %963 = vmatpush1.bf16.msra.mxu0 0
      %964 = vmatprep.subr.bf16.mxu0 0
      %965 = vmatpush1.bf16.msra.mxu0 0
      %966 = vmatprep.subr.bf16.mxu0 0
      %967 = vmatpush1.bf16.msra.mxu0 0
      %968 = vmatprep.subr.bf16.mxu0 0
      %969 = vmatpush1.bf16.msra.mxu0 0
      %970 = vmatprep.subr.bf16.mxu0 0
      %971 = vmatpush1.bf16.msra.mxu0 0
      %972 = vmatprep.mubr.bf16.mxu0 0
      %973 = vmatmul.mubr.bf16.gmra.mrb[0].mxu0 %v929
      %v974 = vpop.f32.mrb[0].mxu0
      %v975 = vadd.f32 %v903, %v974
      %v976 = vpop.f32.mrb[0].mxu0
      %v977 = vpop.f32.mrb[0].mxu0
      %v978 = vadd.f32 %v903, %v977
      %v979 = vpop.f32.mrb[0].mxu0
      %980 = vmatprep.mubr.bf16.mxu0 0
      %981 = vmatmul.mubr.bf16.gmra.mrb[0].mxu0 %v932
      %v982 = vpop.f32.mrb[0].mxu0
      %v983 = vadd.f32 %v903, %v982
      %v984 = vpop.f32.mrb[0].mxu0
      %v985 = vpop.f32.mrb[0].mxu0
      %v986 = vadd.f32 %v903, %v985
      %v987 = vpop.f32.mrb[0].mxu0
      %988 = vmatprep.mubr.bf16.mxu0 0
      %989 = vmatmul.mubr.bf16.gmra.mrb[0].mxu0 %v935
      %v990 = vpop.f32.mrb[0].mxu0
      %v991 = vadd.f32 %v903, %v990
      %v992 = vpop.f32.mrb[0].mxu0
      %v993 = vpop.f32.mrb[0].mxu0
      %v994 = vadd.f32 %v903, %v993
      %v995 = vpop.f32.mrb[0].mxu0
      %996 = vmatprep.mubr.bf16.mxu0 0
      %997 = vmatmul.mubr.bf16.gmra.mrb[0].mxu0 %v938
      %v998 = vpop.f32.mrb[0].mxu0
      %v999 = vadd.f32 %v903, %v998
      %v1000 = vpop.f32.mrb[0].mxu0
      %v1001 = vpop.f32.mrb[0].mxu0
      %v1002 = vadd.f32 %v903, %v1001
      %v1003 = vpop.f32.mrb[0].mxu0
      %1004 = vdwg.mxu0
      %v1005 = vsel %vm620, %v975, 0.0
      %v1006 = vsel %vm620, %v978, 0.0
      %v1007 = vadd.f32 %v1005, %v1006
      %v1008 = vsel %vm620, %v983, 0.0
      %v1009 = vadd.f32 %v1007, %v1008
      %v1010 = vsel %vm620, %v986, 0.0
      %v1011 = vadd.f32 %v1009, %v1010
      %v1012 = vsel %vm620, %v991, 0.0
      %v1013 = vadd.f32 %v1011, %v1012
      %v1014 = vsel %vm620, %v994, 0.0
      %v1015 = vadd.f32 %v1013, %v1014
      %v1016 = vsel %vm620, %v999, 0.0
      %v1017 = vadd.f32 %v1015, %v1016
      %v1018 = vsel %vm620, %v1002, 0.0
      %v1019 = vadd.f32 %v1017, %v1018
      %v1020 = vrot.slane %v1019, 4
      %v1021 = vadd.f32 %v1019, %v1020
      %v1022 = vrot.slane %v1021, 2
      %v1023 = vadd.f32 %v1021, %v1022
      %v1024 = vrot.slane %v1023, 1
      %v1025 = vadd.f32 %v1023, %v1024
      %v1026 = vmul.f32 %v975, %v975
      %v1027 = vmul.f32 %v978, %v978
      %v1028 = vmul.f32 %v983, %v983
      %v1029 = vmul.f32 %v986, %v986
      %v1030 = vmul.f32 %v991, %v991
      %v1031 = vmul.f32 %v994, %v994
      %v1032 = vmul.f32 %v999, %v999
      %v1033 = vmul.f32 %v1002, %v1002
      %v1034 = vsel %vm620, %v1026, 0.0
      %v1035 = vsel %vm620, %v1027, 0.0
      %v1036 = vadd.f32 %v1034, %v1035
      %v1037 = vsel %vm620, %v1028, 0.0
      %v1038 = vadd.f32 %v1036, %v1037
      %v1039 = vsel %vm620, %v1029, 0.0
      %v1040 = vadd.f32 %v1038, %v1039
      %v1041 = vsel %vm620, %v1030, 0.0
      %v1042 = vadd.f32 %v1040, %v1041
      %v1043 = vsel %vm620, %v1031, 0.0
      %v1044 = vadd.f32 %v1042, %v1043
      %v1045 = vsel %vm620, %v1032, 0.0
      %v1046 = vadd.f32 %v1044, %v1045
      %v1047 = vsel %vm620, %v1033, 0.0
      %v1048 = vadd.f32 %v1046, %v1047
      %v1049 = vrot.slane %v1048, 4
      %v1050 = vadd.f32 %v1048, %v1049
      %v1051 = vrot.slane %v1050, 2
      %v1052 = vadd.f32 %v1050, %v1051
      %v1053 = vrot.slane %v1052, 1
      %v1054 = vadd.f32 %v1052, %v1053
      %v1055 = vsel %vm671, %v1025, %v1054
      %v1057 = vsel %vm620, %v1055, 0
      %1059 = vmatprep.subr.mxu0 0.0
      %1060 = vmatpush1.msra.mxu0 %v408
      %1061 = vmatprep.subr.mxu0 0.0
      %1062 = vmatpush1.msra.mxu0 %v409
      %1063 = vmatprep.subr.mxu0 0.0
      %1064 = vmatpush1.msra.mxu0 %v410
      %1065 = vmatprep.subr.mxu0 0.0
      %1066 = vmatpush1.msra.mxu0 %v411
      %1067 = vmatprep.subr.mxu0 0.0
      %1068 = vmatpush1.msra.mxu0 %v412
      %1069 = vmatprep.subr.mxu0 0.0
      %1070 = vmatpush1.msra.mxu0 %v413
      %1071 = vmatprep.subr.mxu0 0.0
      %1072 = vmatpush1.msra.mxu0 %v414
      %1073 = vmatprep.subr.mxu0 0.0
      %1074 = vmatpush1.msra.mxu0 %v415
      %1075 = vmatprep.subr.mxu0 0.0
      %1076 = vmatpush1.msra.mxu0 0.0
      %1077 = vmatprep.subr.mxu0 0.0
      %1078 = vmatpush1.msra.mxu0 0.0
      %1079 = vmatprep.subr.mxu0 0.0
      %1080 = vmatpush1.msra.mxu0 0.0
      %1081 = vmatprep.subr.mxu0 0.0
      %1082 = vmatpush1.msra.mxu0 0.0
      %1083 = vmatprep.subr.mxu0 0.0
      %1084 = vmatpush1.msra.mxu0 0.0
      %1085 = vmatprep.subr.mxu0 0.0
      %1086 = vmatpush1.msra.mxu0 0.0
      %1087 = vmatprep.subr.mxu0 0.0
      %1088 = vmatpush1.msra.mxu0 0.0
      %1089 = vmatprep.subr.mxu0 0.0
      %1090 = vmatpush1.msra.mxu0 0.0
      %1091 = vmatprep.subr.mxu0 0.0
      %1092 = vmatpush1.msra.mxu0 0.0
      %1093 = vmatprep.subr.mxu0 0.0
      %1094 = vmatpush1.msra.mxu0 0.0
      %1095 = vmatprep.subr.mxu0 0.0
      %1096 = vmatpush1.msra.mxu0 0.0
      %1097 = vmatprep.subr.mxu0 0.0
      %1098 = vmatpush1.msra.mxu0 0.0
      %1099 = vmatprep.subr.mxu0 0.0
      %1100 = vmatpush1.msra.mxu0 0.0
      %1101 = vmatprep.subr.mxu0 0.0
      %1102 = vmatpush1.msra.mxu0 0.0
      %1103 = vmatprep.subr.mxu0 0.0
      %1104 = vmatpush1.msra.mxu0 0.0
      %1105 = vmatprep.subr.mxu0 0.0
      %1106 = vmatpush1.msra.mxu0 0.0
      %1107 = vmatprep.subr.mxu0 0.0
      %1108 = vmatpush1.msra.mxu0 0.0
      %1109 = vmatprep.subr.mxu0 0.0
      %1110 = vmatpush1.msra.mxu0 0.0
      %1111 = vmatprep.subr.mxu0 0.0
      %1112 = vmatpush1.msra.mxu0 0.0
      %1113 = vmatprep.subr.mxu0 0.0
      %1114 = vmatpush1.msra.mxu0 0.0
      %1115 = vmatprep.subr.mxu0 0.0
      %1116 = vmatpush1.msra.mxu0 0.0
      %1117 = vmatprep.subr.mxu0 0.0
      %1118 = vmatpush1.msra.mxu0 0.0
      %1119 = vmatprep.subr.mxu0 0.0
      %1120 = vmatpush1.msra.mxu0 0.0
      %1121 = vmatprep.subr.mxu0 0.0
      %1122 = vmatpush1.msra.mxu0 0.0
      %1123 = vmatprep.mubr.f32.mxu0 0.0
      %1124 = vmatmul.mubr.f32.gmra.mrb[0].mxu0 %v1057
      %v1125 = vpop.f32.mrb[0].mxu0
      %v1126 = vadd.f32 0.0, %v1125
      %v1127 = vpop.f32.mrb[0].mxu0
      %1128 = vdwg.mxu0
      %v1129 = vmul.f32 %v1126, %v746
      %v1130 = vmul.f32 %v1129, %v1129
      %v1132 = vrot.slane %v1130, 7
      %v1134 = vsub.f32 %v1129, %v1132
      %v1135 = vmax.f32 %v1134, 0.0
      %v1136 = vadd.f32 %v1135, 1e-05
      %v1137 = vrsqrt.pop %v1136
      %v1138 = vsel %vm671, %v1129, %v1137
      %v1140 = vsel %vm757, %v1138, 0
      %1142 = vmatprep.subr.mxu0 0.0
      %1143 = vmatpush1.msra.mxu0 %v416
      %1144 = vmatprep.subr.mxu0 0.0
      %1145 = vmatpush1.msra.mxu0 %v417
      %1146 = vmatprep.subr.mxu0 0.0
      %1147 = vmatpush1.msra.mxu0 %v418
      %1148 = vmatprep.subr.mxu0 0.0
      %1149 = vmatpush1.msra.mxu0 %v419
      %1150 = vmatprep.subr.mxu0 0.0
      %1151 = vmatpush1.msra.mxu0 0.0
      %1152 = vmatprep.subr.mxu0 0.0
      %1153 = vmatpush1.msra.mxu0 0.0
      %1154 = vmatprep.subr.mxu0 0.0
      %1155 = vmatpush1.msra.mxu0 0.0
      %1156 = vmatprep.subr.mxu0 0.0
      %1157 = vmatpush1.msra.mxu0 0.0
      %1158 = vmatprep.subr.mxu0 0.0
      %1159 = vmatpush1.msra.mxu0 0.0
      %1160 = vmatprep.subr.mxu0 0.0
      %1161 = vmatpush1.msra.mxu0 0.0
      %1162 = vmatprep.subr.mxu0 0.0
      %1163 = vmatpush1.msra.mxu0 0.0
      %1164 = vmatprep.subr.mxu0 0.0
      %1165 = vmatpush1.msra.mxu0 0.0
      %1166 = vmatprep.subr.mxu0 0.0
      %1167 = vmatpush1.msra.mxu0 0.0
      %1168 = vmatprep.subr.mxu0 0.0
      %1169 = vmatpush1.msra.mxu0 0.0
      %1170 = vmatprep.subr.mxu0 0.0
      %1171 = vmatpush1.msra.mxu0 0.0
      %1172 = vmatprep.subr.mxu0 0.0
      %1173 = vmatpush1.msra.mxu0 0.0
      %1174 = vmatprep.subr.mxu0 0.0
      %1175 = vmatpush1.msra.mxu0 0.0
      %1176 = vmatprep.subr.mxu0 0.0
      %1177 = vmatpush1.msra.mxu0 0.0
      %1178 = vmatprep.subr.mxu0 0.0
      %1179 = vmatpush1.msra.mxu0 0.0
      %1180 = vmatprep.subr.mxu0 0.0
      %1181 = vmatpush1.msra.mxu0 0.0
      %1182 = vmatprep.subr.mxu0 0.0
      %1183 = vmatpush1.msra.mxu0 0.0
      %1184 = vmatprep.subr.mxu0 0.0
      %1185 = vmatpush1.msra.mxu0 0.0
      %1186 = vmatprep.subr.mxu0 0.0
      %1187 = vmatpush1.msra.mxu0 0.0
      %1188 = vmatprep.subr.mxu0 0.0
      %1189 = vmatpush1.msra.mxu0 0.0
      %1190 = vmatprep.subr.mxu0 0.0
      %1191 = vmatpush1.msra.mxu0 0.0
      %1192 = vmatprep.subr.mxu0 0.0
      %1193 = vmatpush1.msra.mxu0 0.0
      %1194 = vmatprep.subr.mxu0 0.0
      %1195 = vmatpush1.msra.mxu0 0.0
      %1196 = vmatprep.subr.mxu0 0.0
      %1197 = vmatpush1.msra.mxu0 0.0
      %1198 = vmatprep.subr.mxu0 0.0
      %1199 = vmatpush1.msra.mxu0 0.0
      %1200 = vmatprep.subr.mxu0 0.0
      %1201 = vmatpush1.msra.mxu0 0.0
      %1202 = vmatprep.subr.mxu0 0.0
      %1203 = vmatpush1.msra.mxu0 0.0
      %1204 = vmatprep.subr.mxu0 0.0
      %1205 = vmatpush1.msra.mxu0 0.0
      %1206 = vmatprep.mubr.f32.mxu0 0.0
      %1207 = vmatmul.mubr.f32.gmra.mrb[0].mxu0 %v1140
      %v1208 = vpop.f32.mrb[0].mxu0
      %v1209 = vadd.f32 0.0, %v1208
      %v1210 = vpop.f32.mrb[0].mxu0
      %1211 = vdwg.mxu0
      %v1213 = vrot.slane %v420, 3
      %v1215 = vmul.f32 %v1209, %v1213
      %v1217 = vrot.slane %v1215, 1
      %v1219 = vmul.f32 %v1209, %v1217
      %v1221 = vrot.slane %v1219, 3
      %v1223 = vsub.f32 %v420, %v1221
      %v1224 = vlaneseq
      %v1225 = vshrl.u32 %v1224, 7
      %v1226 = vsub.s32 1, %v1225
      %v1227 = vrot.slane %v1215, %v1226
      %v1228 = vmul.f32 %v975, %v1227
      %v1229 = vmul.f32 %v978, %v1227
      %v1230 = vmul.f32 %v983, %v1227
      %v1231 = vmul.f32 %v986, %v1227
      %v1232 = vmul.f32 %v991, %v1227
      %v1233 = vmul.f32 %v994, %v1227
      %v1234 = vmul.f32 %v999, %v1227
      %v1235 = vmul.f32 %v1002, %v1227
      %v1236 = vlaneseq
      %v1237 = vshrl.u32 %v1236, 7
      %v1238 = vsub.s32 5, %v1237
      %v1239 = vrot.slane %v1223, %v1238
      %v1240 = vadd.f32 %v1228, %v1239
      %v1241 = vadd.f32 %v1229, %v1239
      %v1242 = vadd.f32 %v1230, %v1239
      %v1243 = vadd.f32 %v1231, %v1239
      %v1244 = vadd.f32 %v1232, %v1239
      %v1245 = vadd.f32 %v1233, %v1239
      %v1246 = vadd.f32 %v1234, %v1239
      %v1247 = vadd.f32 %v1235, %v1239
      %vm1248 = vcmp.ge.f32.partialorder %v1240, 0.0
      %vm1249 = vcmp.ge.f32.partialorder %v1241, 0.0
      %vm1250 = vcmp.ge.f32.partialorder %v1242, 0.0
      %vm1251 = vcmp.ge.f32.partialorder %v1243, 0.0
      %vm1252 = vcmp.ge.f32.partialorder %v1244, 0.0
      %vm1253 = vcmp.ge.f32.partialorder %v1245, 0.0
      %vm1254 = vcmp.ge.f32.partialorder %v1246, 0.0
      %vm1255 = vcmp.ge.f32.partialorder %v1247, 0.0
      %v1256 = vmul.f32 %v1240, 0.2
      %v1257 = vmul.f32 %v1241, 0.2
      %v1258 = vmul.f32 %v1242, 0.2
      %v1259 = vmul.f32 %v1243, 0.2
      %v1260 = vmul.f32 %v1244, 0.2
      %v1261 = vmul.f32 %v1245, 0.2
      %v1262 = vmul.f32 %v1246, 0.2
      %v1263 = vmul.f32 %v1247, 0.2
      %v1264 = vsel %vm1248, %v1240, %v1256
      %v1265 = vsel %vm1249, %v1241, %v1257
      %v1266 = vsel %vm1250, %v1242, %v1258
      %v1267 = vsel %vm1251, %v1243, %v1259
      %v1268 = vsel %vm1252, %v1244, %v1260
      %v1269 = vsel %vm1253, %v1245, %v1261
      %v1270 = vsel %vm1254, %v1246, %v1262
      %v1271 = vsel %vm1255, %v1247, %v1263
      %v1272 = vmax.f32 %v1264, %v1266
      %v1273 = vmax.f32 %v1265, %v1267
      %v1274 = vmax.f32 %v1272, %v1268
      %v1275 = vmax.f32 %v1273, %v1269
      %v1276 = vmax.f32 %v1274, %v1270
      %v1277 = vmax.f32 %v1275, %v1271
      %v1278 = vld [vmem:[%s401] sm:$0xff]
      %v1279 = vld [vmem:[%s401 + $0x8] sm:$0xff]
      %v1280 = vld [vmem:[%s401 + $0x10] sm:$0xff]
      %v1281 = vld [vmem:[%s401 + $0x18] sm:$0xff]
      %v1282 = vld [vmem:[%s401 + $0x20] sm:$0xff]
      %v1283 = vld [vmem:[%s401 + $0x28] sm:$0xff]
      %v1284 = vld [vmem:[%s401 + $0x30] sm:$0xff]
      %v1285 = vld [vmem:[%s401 + $0x38] sm:$0xff]
      %v1286 = vld [vmem:[%s4] sm:$0xf]
      %v1287 = vld [vmem:[%s4 + $0x4] sm:$0xf]
      %v1288 = vld [vmem:[%s4 + $0x8] sm:$0xf]
      %v1289 = vld [vmem:[%s4 + $0xc] sm:$0xf]
      %v1290 = vld [vmem:[%s4 + $0x10] sm:$0xf]
      %v1291 = vld [vmem:[%s4 + $0x14] sm:$0xf]
      %v1292 = vld [vmem:[%s4 + $0x18] sm:$0xf]
      %v1293 = vld [vmem:[%s4 + $0x1c] sm:$0xf]
      %v1294 = vld [vmem:[%s4 + $0x20] sm:$0xf]
      %v1295 = vld [vmem:[%s4 + $0x24] sm:$0xf]
      %v1296 = vld [vmem:[%s4 + $0x28] sm:$0xf]
      %v1297 = vld [vmem:[%s4 + $0x2c] sm:$0xf]
      %v1298 = vld [vmem:[%s4 + $0x30] sm:$0xf]
      %v1299 = vld [vmem:[%s4 + $0x34] sm:$0xf]
      %v1300 = vld [vmem:[%s4 + $0x38] sm:$0xf]
      %v1301 = vld [vmem:[%s4 + $0x3c] sm:$0xf]
      %v1302 = vld [vmem:[%s4 + $0x40] sm:$0x3]
      %v1303 = vlaneseq
      %v1304 = vshrl.u32 %v1303, 7
      %v1305 = vsub.s32 6, %v1304
      %v1306 = vrot.slane %v420, %v1305
      %v1315 = vunpack.c.l.b16 %v1278
      %v1316 = vunpack.c.h.b16 %v1278
      %v1317 = vunpack.c.l.b16 %v1279
      %v1318 = vunpack.c.h.b16 %v1279
      %v1319 = vunpack.c.l.b16 %v1280
      %v1320 = vunpack.c.h.b16 %v1280
      %v1321 = vunpack.c.l.b16 %v1281
      %v1322 = vunpack.c.h.b16 %v1281
      %v1323 = vunpack.c.l.b16 %v1282
      %v1324 = vunpack.c.h.b16 %v1282
      %v1325 = vunpack.c.l.b16 %v1283
      %v1326 = vunpack.c.h.b16 %v1283
      %v1327 = vunpack.c.l.b16 %v1284
      %v1328 = vunpack.c.h.b16 %v1284
      %v1329 = vunpack.c.l.b16 %v1285
      %v1330 = vunpack.c.h.b16 %v1285
      %v1331 = vpack.c.b16 %v1317, %v1315
      %v1332 = vpack.c.b16 %v1318, %v1316
      %v1333 = vpack.c.b16 %v1321, %v1319
      %v1334 = vpack.c.b16 %v1322, %v1320
      %v1335 = vpack.c.b16 %v1325, %v1323
      %v1336 = vpack.c.b16 %v1326, %v1324
      %v1337 = vpack.c.b16 %v1329, %v1327
      %v1338 = vpack.c.b16 %v1330, %v1328
      %v1360 = vunpack.c.l.b16 %v1286
      %v1361 = vunpack.c.l.b16 %v1287
      %v1362 = vunpack.c.l.b16 %v1288
      %v1363 = vunpack.c.l.b16 %v1289
      %v1364 = vunpack.c.l.b16 %v1290
      %v1365 = vunpack.c.l.b16 %v1291
      %v1366 = vunpack.c.l.b16 %v1292
      %v1367 = vunpack.c.l.b16 %v1293
      %v1368 = vunpack.c.l.b16 %v1294
      %v1369 = vunpack.c.l.b16 %v1295
      %v1370 = vunpack.c.l.b16 %v1296
      %v1371 = vunpack.c.l.b16 %v1297
      %v1372 = vunpack.c.l.b16 %v1298
      %v1373 = vunpack.c.l.b16 %v1299
      %v1374 = vunpack.c.l.b16 %v1300
      %v1375 = vunpack.c.l.b16 %v1301
      %v1376 = vunpack.c.l.b16 %v1302
      %v1377 = vpack.c.b16 %v1361, %v1360
      %v1378 = vpack.c.b16 %v1363, %v1362
      %v1379 = vpack.c.b16 %v1365, %v1364
      %v1380 = vpack.c.b16 %v1367, %v1366
      %v1381 = vpack.c.b16 %v1369, %v1368
      %v1382 = vpack.c.b16 %v1371, %v1370
      %v1383 = vpack.c.b16 %v1373, %v1372
      %v1384 = vpack.c.b16 %v1375, %v1374
      %v1385 = vpack.c.b16 %v1376, %v1376
      %v1395 = vsel %vm538, %v1332, 0
      %v1398 = vsel %vm538, %v1334, 0
      %v1401 = vsel %vm538, %v1336, 0
      %v1404 = vsel %vm538, %v1338, 0
      %v1407 = vsel %vm551, %v1385, 0
      %1409 = vmatprep.subr.bf16.mxu0 0
      %1410 = vmatpush1.bf16.msra.mxu0 %v1377
      %1411 = vmatprep.subr.bf16.mxu0 0
      %1412 = vmatpush1.bf16.msra.mxu0 %v1378
      %1413 = vmatprep.subr.bf16.mxu0 0
      %1414 = vmatpush1.bf16.msra.mxu0 %v1379
      %1415 = vmatprep.subr.bf16.mxu0 0
      %1416 = vmatpush1.bf16.msra.mxu0 %v1380
      %1417 = vmatprep.subr.bf16.mxu0 0
      %1418 = vmatpush1.bf16.msra.mxu0 %v1381
      %1419 = vmatprep.subr.bf16.mxu0 0
      %1420 = vmatpush1.bf16.msra.mxu0 %v1382
      %1421 = vmatprep.subr.bf16.mxu0 0
      %1422 = vmatpush1.bf16.msra.mxu0 %v1383
      %1423 = vmatprep.subr.bf16.mxu0 0
      %1424 = vmatpush1.bf16.msra.mxu0 %v1384
      %1425 = vmatprep.subr.bf16.mxu0 0
      %1426 = vmatpush1.bf16.msra.mxu0 %v1407
      %1427 = vmatprep.subr.bf16.mxu0 0
      %1428 = vmatpush1.bf16.msra.mxu0 0
      %1429 = vmatprep.subr.bf16.mxu0 0
      %1430 = vmatpush1.bf16.msra.mxu0 0
      %1431 = vmatprep.subr.bf16.mxu0 0
      %1432 = vmatpush1.bf16.msra.mxu0 0
      %1433 = vmatprep.subr.bf16.mxu0 0
      %1434 = vmatpush1.bf16.msra.mxu0 0
      %1435 = vmatprep.subr.bf16.mxu0 0
      %1436 = vmatpush1.bf16.msra.mxu0 0
      %1437 = vmatprep.subr.bf16.mxu0 0
      %1438 = vmatpush1.bf16.msra.mxu0 0
      %1439 = vmatprep.subr.bf16.mxu0 0
      %1440 = vmatpush1.bf16.msra.mxu0 0
      %1441 = vmatprep.mubr.bf16.mxu0 %v1395
      %1442 = vmatmul.mubr.bf16.gmra.mrb[0].mxu0 %v1331
      %v1443 = vpop.f32.mrb[0].mxu0
      %v1444 = vadd.f32 %v1306, %v1443
      %v1445 = vpop.f32.mrb[0].mxu0
      %v1446 = vpop.f32.mrb[0].mxu0
      %v1447 = vadd.f32 %v1306, %v1446
      %v1448 = vpop.f32.mrb[0].mxu0
      %1449 = vmatprep.mubr.bf16.mxu0 %v1398
      %1450 = vmatmul.mubr.bf16.gmra.mrb[0].mxu0 %v1333
      %v1451 = vpop.f32.mrb[0].mxu0
      %v1452 = vadd.f32 %v1306, %v1451
      %v1453 = vpop.f32.mrb[0].mxu0
      %v1454 = vpop.f32.mrb[0].mxu0
      %v1455 = vadd.f32 %v1306, %v1454
      %v1456 = vpop.f32.mrb[0].mxu0
      %1457 = vmatprep.mubr.bf16.mxu0 %v1401
      %1458 = vmatmul.mubr.bf16.gmra.mrb[0].mxu0 %v1335
      %v1459 = vpop.f32.mrb[0].mxu0
      %v1460 = vadd.f32 %v1306, %v1459
      %v1461 = vpop.f32.mrb[0].mxu0
      %v1462 = vpop.f32.mrb[0].mxu0
      %v1463 = vadd.f32 %v1306, %v1462
      %v1464 = vpop.f32.mrb[0].mxu0
      %1465 = vmatprep.mubr.bf16.mxu0 %v1404
      %1466 = vmatmul.mubr.bf16.gmra.mrb[0].mxu0 %v1337
      %v1467 = vpop.f32.mrb[0].mxu0
      %v1468 = vadd.f32 %v1306, %v1467
      %v1469 = vpop.f32.mrb[0].mxu0
      %v1470 = vpop.f32.mrb[0].mxu0
      %v1471 = vadd.f32 %v1306, %v1470
      %v1472 = vpop.f32.mrb[0].mxu0
      %1473 = vdwg.mxu0
      %v1474 = vsel %vm620, %v1444, 0.0
      %v1475 = vsel %vm620, %v1447, 0.0
      %v1476 = vadd.f32 %v1474, %v1475
      %v1477 = vsel %vm620, %v1452, 0.0
      %v1478 = vadd.f32 %v1476, %v1477
      %v1479 = vsel %vm620, %v1455, 0.0
      %v1480 = vadd.f32 %v1478, %v1479
      %v1481 = vsel %vm620, %v1460, 0.0
      %v1482 = vadd.f32 %v1480, %v1481
      %v1483 = vsel %vm620, %v1463, 0.0
      %v1484 = vadd.f32 %v1482, %v1483
      %v1485 = vsel %vm620, %v1468, 0.0
      %v1486 = vadd.f32 %v1484, %v1485
      %v1487 = vsel %vm620, %v1471, 0.0
      %v1488 = vadd.f32 %v1486, %v1487
      %v1489 = vrot.slane %v1488, 4
      %v1490 = vadd.f32 %v1488, %v1489
      %v1491 = vrot.slane %v1490, 2
      %v1492 = vadd.f32 %v1490, %v1491
      %v1493 = vrot.slane %v1492, 1
      %v1494 = vadd.f32 %v1492, %v1493
      %v1495 = vmul.f32 %v1444, %v1444
      %v1496 = vmul.f32 %v1447, %v1447
      %v1497 = vmul.f32 %v1452, %v1452
      %v1498 = vmul.f32 %v1455, %v1455
      %v1499 = vmul.f32 %v1460, %v1460
      %v1500 = vmul.f32 %v1463, %v1463
      %v1501 = vmul.f32 %v1468, %v1468
      %v1502 = vmul.f32 %v1471, %v1471
      %v1503 = vsel %vm620, %v1495, 0.0
      %v1504 = vsel %vm620, %v1496, 0.0
      %v1505 = vadd.f32 %v1503, %v1504
      %v1506 = vsel %vm620, %v1497, 0.0
      %v1507 = vadd.f32 %v1505, %v1506
      %v1508 = vsel %vm620, %v1498, 0.0
      %v1509 = vadd.f32 %v1507, %v1508
      %v1510 = vsel %vm620, %v1499, 0.0
      %v1511 = vadd.f32 %v1509, %v1510
      %v1512 = vsel %vm620, %v1500, 0.0
      %v1513 = vadd.f32 %v1511, %v1512
      %v1514 = vsel %vm620, %v1501, 0.0
      %v1515 = vadd.f32 %v1513, %v1514
      %v1516 = vsel %vm620, %v1502, 0.0
      %v1517 = vadd.f32 %v1515, %v1516
      %v1518 = vrot.slane %v1517, 4
      %v1519 = vadd.f32 %v1517, %v1518
      %v1520 = vrot.slane %v1519, 2
      %v1521 = vadd.f32 %v1519, %v1520
      %v1522 = vrot.slane %v1521, 1
      %v1523 = vadd.f32 %v1521, %v1522
      %v1524 = vsel %vm671, %v1494, %v1523
      %v1526 = vsel %vm620, %v1524, 0
      %1528 = vmatprep.subr.mxu0 0.0
      %1529 = vmatpush1.msra.mxu0 %v408
      %1530 = vmatprep.subr.mxu0 0.0
      %1531 = vmatpush1.msra.mxu0 %v409
      %1532 = vmatprep.subr.mxu0 0.0
      %1533 = vmatpush1.msra.mxu0 %v410
      %1534 = vmatprep.subr.mxu0 0.0
      %1535 = vmatpush1.msra.mxu0 %v411
      %1536 = vmatprep.subr.mxu0 0.0
      %1537 = vmatpush1.msra.mxu0 %v412
      %1538 = vmatprep.subr.mxu0 0.0
      %1539 = vmatpush1.msra.mxu0 %v413
      %1540 = vmatprep.subr.mxu0 0.0
      %1541 = vmatpush1.msra.mxu0 %v414
      %1542 = vmatprep.subr.mxu0 0.0
      %1543 = vmatpush1.msra.mxu0 %v415
      %1544 = vmatprep.subr.mxu0 0.0
      %1545 = vmatpush1.msra.mxu0 0.0
      %1546 = vmatprep.subr.mxu0 0.0
      %1547 = vmatpush1.msra.mxu0 0.0
      %1548 = vmatprep.subr.mxu0 0.0
      %1549 = vmatpush1.msra.mxu0 0.0
      %1550 = vmatprep.subr.mxu0 0.0
      %1551 = vmatpush1.msra.mxu0 0.0
      %1552 = vmatprep.subr.mxu0 0.0
      %1553 = vmatpush1.msra.mxu0 0.0
      %1554 = vmatprep.subr.mxu0 0.0
      %1555 = vmatpush1.msra.mxu0 0.0
      %1556 = vmatprep.subr.mxu0 0.0
      %1557 = vmatpush1.msra.mxu0 0.0
      %1558 = vmatprep.subr.mxu0 0.0
      %1559 = vmatpush1.msra.mxu0 0.0
      %1560 = vmatprep.subr.mxu0 0.0
      %1561 = vmatpush1.msra.mxu0 0.0
      %1562 = vmatprep.subr.mxu0 0.0
      %1563 = vmatpush1.msra.mxu0 0.0
      %1564 = vmatprep.subr.mxu0 0.0
      %1565 = vmatpush1.msra.mxu0 0.0
      %1566 = vmatprep.subr.mxu0 0.0
      %1567 = vmatpush1.msra.mxu0 0.0
      %1568 = vmatprep.subr.mxu0 0.0
      %1569 = vmatpush1.msra.mxu0 0.0
      %1570 = vmatprep.subr.mxu0 0.0
      %1571 = vmatpush1.msra.mxu0 0.0
      %1572 = vmatprep.subr.mxu0 0.0
      %1573 = vmatpush1.msra.mxu0 0.0
      %1574 = vmatprep.subr.mxu0 0.0
      %1575 = vmatpush1.msra.mxu0 0.0
      %1576 = vmatprep.subr.mxu0 0.0
      %1577 = vmatpush1.msra.mxu0 0.0
      %1578 = vmatprep.subr.mxu0 0.0
      %1579 = vmatpush1.msra.mxu0 0.0
      %1580 = vmatprep.subr.mxu0 0.0
      %1581 = vmatpush1.msra.mxu0 0.0
      %1582 = vmatprep.subr.mxu0 0.0
      %1583 = vmatpush1.msra.mxu0 0.0
      %1584 = vmatprep.subr.mxu0 0.0
      %1585 = vmatpush1.msra.mxu0 0.0
      %1586 = vmatprep.subr.mxu0 0.0
      %1587 = vmatpush1.msra.mxu0 0.0
      %1588 = vmatprep.subr.mxu0 0.0
      %1589 = vmatpush1.msra.mxu0 0.0
      %1590 = vmatprep.subr.mxu0 0.0
      %1591 = vmatpush1.msra.mxu0 0.0
      %1592 = vmatprep.mubr.f32.mxu0 0.0
      %1593 = vmatmul.mubr.f32.gmra.mrb[0].mxu0 %v1526
      %v1594 = vpop.f32.mrb[0].mxu0
      %v1595 = vadd.f32 0.0, %v1594
      %v1596 = vpop.f32.mrb[0].mxu0
      %1597 = vdwg.mxu0
      %v1598 = vmul.f32 %v1595, %v746
      %v1599 = vmul.f32 %v1598, %v1598
      %v1601 = vrot.slane %v1599, 7
      %v1603 = vsub.f32 %v1598, %v1601
      %v1604 = vmax.f32 %v1603, 0.0
      %v1605 = vadd.f32 %v1604, 1e-05
      %v1606 = vrsqrt.pop %v1605
      %v1607 = vsel %vm671, %v1598, %v1606
      %v1609 = vsel %vm757, %v1607, 0
      %1611 = vmatprep.subr.mxu0 0.0
      %1612 = vmatpush1.msra.mxu0 %v416
      %1613 = vmatprep.subr.mxu0 0.0
      %1614 = vmatpush1.msra.mxu0 %v417
      %1615 = vmatprep.subr.mxu0 0.0
      %1616 = vmatpush1.msra.mxu0 %v418
      %1617 = vmatprep.subr.mxu0 0.0
      %1618 = vmatpush1.msra.mxu0 %v419
      %1619 = vmatprep.subr.mxu0 0.0
      %1620 = vmatpush1.msra.mxu0 0.0
      %1621 = vmatprep.subr.mxu0 0.0
      %1622 = vmatpush1.msra.mxu0 0.0
      %1623 = vmatprep.subr.mxu0 0.0
      %1624 = vmatpush1.msra.mxu0 0.0
      %1625 = vmatprep.subr.mxu0 0.0
      %1626 = vmatpush1.msra.mxu0 0.0
      %1627 = vmatprep.subr.mxu0 0.0
      %1628 = vmatpush1.msra.mxu0 0.0
      %1629 = vmatprep.subr.mxu0 0.0
      %1630 = vmatpush1.msra.mxu0 0.0
      %1631 = vmatprep.subr.mxu0 0.0
      %1632 = vmatpush1.msra.mxu0 0.0
      %1633 = vmatprep.subr.mxu0 0.0
      %1634 = vmatpush1.msra.mxu0 0.0
      %1635 = vmatprep.subr.mxu0 0.0
      %1636 = vmatpush1.msra.mxu0 0.0
      %1637 = vmatprep.subr.mxu0 0.0
      %1638 = vmatpush1.msra.mxu0 0.0
      %1639 = vmatprep.subr.mxu0 0.0
      %1640 = vmatpush1.msra.mxu0 0.0
      %1641 = vmatprep.subr.mxu0 0.0
      %1642 = vmatpush1.msra.mxu0 0.0
      %1643 = vmatprep.subr.mxu0 0.0
      %1644 = vmatpush1.msra.mxu0 0.0
      %1645 = vmatprep.subr.mxu0 0.0
      %1646 = vmatpush1.msra.mxu0 0.0
      %1647 = vmatprep.subr.mxu0 0.0
      %1648 = vmatpush1.msra.mxu0 0.0
      %1649 = vmatprep.subr.mxu0 0.0
      %1650 = vmatpush1.msra.mxu0 0.0
      %1651 = vmatprep.subr.mxu0 0.0
      %1652 = vmatpush1.msra.mxu0 0.0
      %1653 = vmatprep.subr.mxu0 0.0
      %1654 = vmatpush1.msra.mxu0 0.0
      %1655 = vmatprep.subr.mxu0 0.0
      %1656 = vmatpush1.msra.mxu0 0.0
      %1657 = vmatprep.subr.mxu0 0.0
      %1658 = vmatpush1.msra.mxu0 0.0
      %1659 = vmatprep.subr.mxu0 0.0
      %1660 = vmatpush1.msra.mxu0 0.0
      %1661 = vmatprep.subr.mxu0 0.0
      %1662 = vmatpush1.msra.mxu0 0.0
      %1663 = vmatprep.subr.mxu0 0.0
      %1664 = vmatpush1.msra.mxu0 0.0
      %1665 = vmatprep.subr.mxu0 0.0
      %1666 = vmatpush1.msra.mxu0 0.0
      %1667 = vmatprep.subr.mxu0 0.0
      %1668 = vmatpush1.msra.mxu0 0.0
      %1669 = vmatprep.subr.mxu0 0.0
      %1670 = vmatpush1.msra.mxu0 0.0
      %1671 = vmatprep.subr.mxu0 0.0
      %1672 = vmatpush1.msra.mxu0 0.0
      %1673 = vmatprep.subr.mxu0 0.0
      %1674 = vmatpush1.msra.mxu0 0.0
      %1675 = vmatprep.mubr.f32.mxu0 0.0
      %1676 = vmatmul.mubr.f32.gmra.mrb[0].mxu0 %v1609
      %v1677 = vpop.f32.mrb[0].mxu0
      %v1678 = vadd.f32 0.0, %v1677
      %v1679 = vpop.f32.mrb[0].mxu0
      %1680 = vdwg.mxu0
      %v1681 = vrot.slane %v420, 6
      %v1683 = vmul.f32 %v1678, %v1681
      %v1685 = vrot.slane %v1683, 1
      %v1687 = vmul.f32 %v1678, %v1685
      %v1688 = vsub.f32 %v421, %v1687
      %v1689 = vlaneseq
      %v1690 = vshrl.u32 %v1689, 7
      %v1691 = vsub.s32 1, %v1690
      %v1692 = vrot.slane %v1683, %v1691
      %v1693 = vmul.f32 %v1444, %v1692
      %v1694 = vmul.f32 %v1447, %v1692
      %v1695 = vmul.f32 %v1452, %v1692
      %v1696 = vmul.f32 %v1455, %v1692
      %v1697 = vmul.f32 %v1460, %v1692
      %v1698 = vmul.f32 %v1463, %v1692
      %v1699 = vmul.f32 %v1468, %v1692
      %v1700 = vmul.f32 %v1471, %v1692
      %v1701 = vlaneseq
      %v1702 = vshrl.u32 %v1701, 7
      %v1703 = vsub.s32 0, %v1702
      %v1704 = vrot.slane %v1688, %v1703
      %v1705 = vadd.f32 %v1693, %v1704
      %v1706 = vadd.f32 %v1694, %v1704
      %v1707 = vadd.f32 %v1695, %v1704
      %v1708 = vadd.f32 %v1696, %v1704
      %v1709 = vadd.f32 %v1697, %v1704
      %v1710 = vadd.f32 %v1698, %v1704
      %v1711 = vadd.f32 %v1699, %v1704
      %v1712 = vadd.f32 %v1700, %v1704
      %vm1713 = vcmp.ge.f32.partialorder %v1705, 0.0
      %vm1714 = vcmp.ge.f32.partialorder %v1706, 0.0
      %vm1715 = vcmp.ge.f32.partialorder %v1707, 0.0
      %vm1716 = vcmp.ge.f32.partialorder %v1708, 0.0
      %vm1717 = vcmp.ge.f32.partialorder %v1709, 0.0
      %vm1718 = vcmp.ge.f32.partialorder %v1710, 0.0
      %vm1719 = vcmp.ge.f32.partialorder %v1711, 0.0
      %vm1720 = vcmp.ge.f32.partialorder %v1712, 0.0
      %v1721 = vmul.f32 %v1705, 0.2
      %v1722 = vmul.f32 %v1706, 0.2
      %v1723 = vmul.f32 %v1707, 0.2
      %v1724 = vmul.f32 %v1708, 0.2
      %v1725 = vmul.f32 %v1709, 0.2
      %v1726 = vmul.f32 %v1710, 0.2
      %v1727 = vmul.f32 %v1711, 0.2
      %v1728 = vmul.f32 %v1712, 0.2
      %v1729 = vsel %vm1713, %v1705, %v1721
      %v1730 = vsel %vm1714, %v1706, %v1722
      %v1731 = vsel %vm1715, %v1707, %v1723
      %v1732 = vsel %vm1716, %v1708, %v1724
      %v1733 = vsel %vm1717, %v1709, %v1725
      %v1734 = vsel %vm1718, %v1710, %v1726
      %v1735 = vsel %vm1719, %v1711, %v1727
      %v1736 = vsel %vm1720, %v1712, %v1728
      %v1737 = vpack.c.bf16 %v1730, %v1729
      %v1738 = vpack.c.bf16 %v1732, %v1731
      %v1739 = vpack.c.bf16 %v1734, %v1733
      %v1740 = vpack.c.bf16 %v1736, %v1735
      %v1741 = vld [vmem:[%s5] sm:$0xf]
      %v1742 = vld [vmem:[%s5 + $0x4] sm:$0xf]
      %v1743 = vld [vmem:[%s5 + $0x8] sm:$0xf]
      %v1744 = vld [vmem:[%s5 + $0xc] sm:$0xf]
      %v1745 = vld [vmem:[%s5 + $0x10] sm:$0xf]
      %v1746 = vld [vmem:[%s5 + $0x14] sm:$0xf]
      %v1747 = vld [vmem:[%s5 + $0x18] sm:$0xf]
      %v1748 = vld [vmem:[%s5 + $0x1c] sm:$0xf]
      %v1749 = vlaneseq
      %v1750 = vshrl.u32 %v1749, 7
      %v1751 = vsub.s32 1, %v1750
      %v1752 = vrot.slane %v421, %v1751
      %v1761 = vunpack.c.l.b16 %v1741
      %v1762 = vunpack.c.l.b16 %v1742
      %v1763 = vunpack.c.l.b16 %v1743
      %v1764 = vunpack.c.l.b16 %v1744
      %v1765 = vunpack.c.l.b16 %v1745
      %v1766 = vunpack.c.l.b16 %v1746
      %v1767 = vunpack.c.l.b16 %v1747
      %v1768 = vunpack.c.l.b16 %v1748
      %v1769 = vpack.c.b16 %v1762, %v1761
      %v1770 = vpack.c.b16 %v1764, %v1763
      %v1771 = vpack.c.b16 %v1766, %v1765
      %v1772 = vpack.c.b16 %v1768, %v1767
      %v1778 = vsel %vm620, %v1737, 0
      %v1781 = vsel %vm620, %v1738, 0
      %v1784 = vsel %vm620, %v1739, 0
      %v1787 = vsel %vm620, %v1740, 0
      %1789 = vmatprep.subr.bf16.mxu0 0
      %1790 = vmatpush1.bf16.msra.mxu0 %v1769
      %1791 = vmatprep.subr.bf16.mxu0 0
      %1792 = vmatpush1.bf16.msra.mxu0 %v1770
      %1793 = vmatprep.subr.bf16.mxu0 0
      %1794 = vmatpush1.bf16.msra.mxu0 %v1771
      %1795 = vmatprep.subr.bf16.mxu0 0
      %1796 = vmatpush1.bf16.msra.mxu0 %v1772
      %1797 = vmatprep.subr.bf16.mxu0 0
      %1798 = vmatpush1.bf16.msra.mxu0 0
      %1799 = vmatprep.subr.bf16.mxu0 0
      %1800 = vmatpush1.bf16.msra.mxu0 0
      %1801 = vmatprep.subr.bf16.mxu0 0
      %1802 = vmatpush1.bf16.msra.mxu0 0
      %1803 = vmatprep.subr.bf16.mxu0 0
      %1804 = vmatpush1.bf16.msra.mxu0 0
      %1805 = vmatprep.subr.bf16.mxu0 0
      %1806 = vmatpush1.bf16.msra.mxu0 0
      %1807 = vmatprep.subr.bf16.mxu0 0
      %1808 = vmatpush1.bf16.msra.mxu0 0
      %1809 = vmatprep.subr.bf16.mxu0 0
      %1810 = vmatpush1.bf16.msra.mxu0 0
      %1811 = vmatprep.subr.bf16.mxu0 0
      %1812 = vmatpush1.bf16.msra.mxu0 0
      %1813 = vmatprep.subr.bf16.mxu0 0
      %1814 = vmatpush1.bf16.msra.mxu0 0
      %1815 = vmatprep.subr.bf16.mxu0 0
      %1816 = vmatpush1.bf16.msra.mxu0 0
      %1817 = vmatprep.subr.bf16.mxu0 0
      %1818 = vmatpush1.bf16.msra.mxu0 0
      %1819 = vmatprep.subr.bf16.mxu0 0
      %1820 = vmatpush1.bf16.msra.mxu0 0
      %1821 = vmatprep.mubr.bf16.mxu0 0
      %1822 = vmatmul.mubr.bf16.gmra.mrb[0].mxu0 %v1778
      %v1823 = vpop.f32.mrb[0].mxu0
      %v1824 = vadd.f32 %v1752, %v1823
      %v1825 = vpop.f32.mrb[0].mxu0
      %v1826 = vpop.f32.mrb[0].mxu0
      %v1827 = vadd.f32 %v1752, %v1826
      %v1828 = vpop.f32.mrb[0].mxu0
      %1829 = vmatprep.mubr.bf16.mxu0 0
      %1830 = vmatmul.mubr.bf16.gmra.mrb[0].mxu0 %v1781
      %v1831 = vpop.f32.mrb[0].mxu0
      %v1832 = vadd.f32 %v1752, %v1831
      %v1833 = vpop.f32.mrb[0].mxu0
      %v1834 = vpop.f32.mrb[0].mxu0
      %v1835 = vadd.f32 %v1752, %v1834
      %v1836 = vpop.f32.mrb[0].mxu0
      %1837 = vmatprep.mubr.bf16.mxu0 0
      %1838 = vmatmul.mubr.bf16.gmra.mrb[0].mxu0 %v1784
      %v1839 = vpop.f32.mrb[0].mxu0
      %v1840 = vadd.f32 %v1752, %v1839
      %v1841 = vpop.f32.mrb[0].mxu0
      %v1842 = vpop.f32.mrb[0].mxu0
      %v1843 = vadd.f32 %v1752, %v1842
      %v1844 = vpop.f32.mrb[0].mxu0
      %1845 = vmatprep.mubr.bf16.mxu0 0
      %1846 = vmatmul.mubr.bf16.gmra.mrb[0].mxu0 %v1787
      %v1847 = vpop.f32.mrb[0].mxu0
      %v1848 = vadd.f32 %v1752, %v1847
      %v1849 = vpop.f32.mrb[0].mxu0
      %v1850 = vpop.f32.mrb[0].mxu0
      %v1851 = vadd.f32 %v1752, %v1850
      %v1852 = vpop.f32.mrb[0].mxu0
      %1853 = vdwg.mxu0
      %v1854 = vsel %vm620, %v1824, 0.0
      %v1855 = vsel %vm620, %v1827, 0.0
      %v1856 = vadd.f32 %v1854, %v1855
      %v1857 = vsel %vm620, %v1832, 0.0
      %v1858 = vadd.f32 %v1856, %v1857
      %v1859 = vsel %vm620, %v1835, 0.0
      %v1860 = vadd.f32 %v1858, %v1859
      %v1861 = vsel %vm620, %v1840, 0.0
      %v1862 = vadd.f32 %v1860, %v1861
      %v1863 = vsel %vm620, %v1843, 0.0
      %v1864 = vadd.f32 %v1862, %v1863
      %v1865 = vsel %vm620, %v1848, 0.0
      %v1866 = vadd.f32 %v1864, %v1865
      %v1867 = vsel %vm620, %v1851, 0.0
      %v1868 = vadd.f32 %v1866, %v1867
      %v1869 = vrot.slane %v1868, 4
      %v1870 = vadd.f32 %v1868, %v1869
      %v1871 = vrot.slane %v1870, 2
      %v1872 = vadd.f32 %v1870, %v1871
      %v1873 = vrot.slane %v1872, 1
      %v1874 = vadd.f32 %v1872, %v1873
      %v1875 = vmul.f32 %v1824, %v1824
      %v1876 = vmul.f32 %v1827, %v1827
      %v1877 = vmul.f32 %v1832, %v1832
      %v1878 = vmul.f32 %v1835, %v1835
      %v1879 = vmul.f32 %v1840, %v1840
      %v1880 = vmul.f32 %v1843, %v1843
      %v1881 = vmul.f32 %v1848, %v1848
      %v1882 = vmul.f32 %v1851, %v1851
      %v1883 = vsel %vm620, %v1875, 0.0
      %v1884 = vsel %vm620, %v1876, 0.0
      %v1885 = vadd.f32 %v1883, %v1884
      %v1886 = vsel %vm620, %v1877, 0.0
      %v1887 = vadd.f32 %v1885, %v1886
      %v1888 = vsel %vm620, %v1878, 0.0
      %v1889 = vadd.f32 %v1887, %v1888
      %v1890 = vsel %vm620, %v1879, 0.0
      %v1891 = vadd.f32 %v1889, %v1890
      %v1892 = vsel %vm620, %v1880, 0.0
      %v1893 = vadd.f32 %v1891, %v1892
      %v1894 = vsel %vm620, %v1881, 0.0
      %v1895 = vadd.f32 %v1893, %v1894
      %v1896 = vsel %vm620, %v1882, 0.0
      %v1897 = vadd.f32 %v1895, %v1896
      %v1898 = vrot.slane %v1897, 4
      %v1899 = vadd.f32 %v1897, %v1898
      %v1900 = vrot.slane %v1899, 2
      %v1901 = vadd.f32 %v1899, %v1900
      %v1902 = vrot.slane %v1901, 1
      %v1903 = vadd.f32 %v1901, %v1902
      %v1904 = vsel %vm671, %v1874, %v1903
      %v1906 = vsel %vm620, %v1904, 0
      %1908 = vmatprep.subr.mxu0 0.0
      %1909 = vmatpush1.msra.mxu0 %v408
      %1910 = vmatprep.subr.mxu0 0.0
      %1911 = vmatpush1.msra.mxu0 %v409
      %1912 = vmatprep.subr.mxu0 0.0
      %1913 = vmatpush1.msra.mxu0 %v410
      %1914 = vmatprep.subr.mxu0 0.0
      %1915 = vmatpush1.msra.mxu0 %v411
      %1916 = vmatprep.subr.mxu0 0.0
      %1917 = vmatpush1.msra.mxu0 %v412
      %1918 = vmatprep.subr.mxu0 0.0
      %1919 = vmatpush1.msra.mxu0 %v413
      %1920 = vmatprep.subr.mxu0 0.0
      %1921 = vmatpush1.msra.mxu0 %v414
      %1922 = vmatprep.subr.mxu0 0.0
      %1923 = vmatpush1.msra.mxu0 %v415
      %1924 = vmatprep.subr.mxu0 0.0
      %1925 = vmatpush1.msra.mxu0 0.0
      %1926 = vmatprep.subr.mxu0 0.0
      %1927 = vmatpush1.msra.mxu0 0.0
      %1928 = vmatprep.subr.mxu0 0.0
      %1929 = vmatpush1.msra.mxu0 0.0
      %1930 = vmatprep.subr.mxu0 0.0
      %1931 = vmatpush1.msra.mxu0 0.0
      %1932 = vmatprep.subr.mxu0 0.0
      %1933 = vmatpush1.msra.mxu0 0.0
      %1934 = vmatprep.subr.mxu0 0.0
      %1935 = vmatpush1.msra.mxu0 0.0
      %1936 = vmatprep.subr.mxu0 0.0
      %1937 = vmatpush1.msra.mxu0 0.0
      %1938 = vmatprep.subr.mxu0 0.0
      %1939 = vmatpush1.msra.mxu0 0.0
      %1940 = vmatprep.subr.mxu0 0.0
      %1941 = vmatpush1.msra.mxu0 0.0
      %1942 = vmatprep.subr.mxu0 0.0
      %1943 = vmatpush1.msra.mxu0 0.0
      %1944 = vmatprep.subr.mxu0 0.0
      %1945 = vmatpush1.msra.mxu0 0.0
      %1946 = vmatprep.subr.mxu0 0.0
      %1947 = vmatpush1.msra.mxu0 0.0
      %1948 = vmatprep.subr.mxu0 0.0
      %1949 = vmatpush1.msra.mxu0 0.0
      %1950 = vmatprep.subr.mxu0 0.0
      %1951 = vmatpush1.msra.mxu0 0.0
      %1952 = vmatprep.subr.mxu0 0.0
      %1953 = vmatpush1.msra.mxu0 0.0
      %1954 = vmatprep.subr.mxu0 0.0
      %1955 = vmatpush1.msra.mxu0 0.0
      %1956 = vmatprep.subr.mxu0 0.0
      %1957 = vmatpush1.msra.mxu0 0.0
      %1958 = vmatprep.subr.mxu0 0.0
      %1959 = vmatpush1.msra.mxu0 0.0
      %1960 = vmatprep.subr.mxu0 0.0
      %1961 = vmatpush1.msra.mxu0 0.0
      %1962 = vmatprep.subr.mxu0 0.0
      %1963 = vmatpush1.msra.mxu0 0.0
      %1964 = vmatprep.subr.mxu0 0.0
      %1965 = vmatpush1.msra.mxu0 0.0
      %1966 = vmatprep.subr.mxu0 0.0
      %1967 = vmatpush1.msra.mxu0 0.0
      %1968 = vmatprep.subr.mxu0 0.0
      %1969 = vmatpush1.msra.mxu0 0.0
      %1970 = vmatprep.subr.mxu0 0.0
      %1971 = vmatpush1.msra.mxu0 0.0
      %1972 = vmatprep.mubr.f32.mxu0 0.0
      %1973 = vmatmul.mubr.f32.gmra.mrb[0].mxu0 %v1906
      %v1974 = vpop.f32.mrb[0].mxu0
      %v1975 = vadd.f32 0.0, %v1974
      %v1976 = vpop.f32.mrb[0].mxu0
      %1977 = vdwg.mxu0
      %v1978 = vmul.f32 %v1975, %v746
      %v1979 = vmul.f32 %v1978, %v1978
      %v1981 = vrot.slane %v1979, 7
      %v1983 = vsub.f32 %v1978, %v1981
      %v1984 = vmax.f32 %v1983, 0.0
      %v1985 = vadd.f32 %v1984, 1e-05
      %v1986 = vrsqrt.pop %v1985
      %v1987 = vsel %vm671, %v1978, %v1986
      %v1989 = vsel %vm757, %v1987, 0
      %1991 = vmatprep.subr.mxu0 0.0
      %1992 = vmatpush1.msra.mxu0 %v416
      %1993 = vmatprep.subr.mxu0 0.0
      %1994 = vmatpush1.msra.mxu0 %v417
      %1995 = vmatprep.subr.mxu0 0.0
      %1996 = vmatpush1.msra.mxu0 %v418
      %1997 = vmatprep.subr.mxu0 0.0
      %1998 = vmatpush1.msra.mxu0 %v419
      %1999 = vmatprep.subr.mxu0 0.0
      %2000 = vmatpush1.msra.mxu0 0.0
      %2001 = vmatprep.subr.mxu0 0.0
      %2002 = vmatpush1.msra.mxu0 0.0
      %2003 = vmatprep.subr.mxu0 0.0
      %2004 = vmatpush1.msra.mxu0 0.0
      %2005 = vmatprep.subr.mxu0 0.0
      %2006 = vmatpush1.msra.mxu0 0.0
      %2007 = vmatprep.subr.mxu0 0.0
      %2008 = vmatpush1.msra.mxu0 0.0
      %2009 = vmatprep.subr.mxu0 0.0
      %2010 = vmatpush1.msra.mxu0 0.0
      %2011 = vmatprep.subr.mxu0 0.0
      %2012 = vmatpush1.msra.mxu0 0.0
      %2013 = vmatprep.subr.mxu0 0.0
      %2014 = vmatpush1.msra.mxu0 0.0
      %2015 = vmatprep.subr.mxu0 0.0
      %2016 = vmatpush1.msra.mxu0 0.0
      %2017 = vmatprep.subr.mxu0 0.0
      %2018 = vmatpush1.msra.mxu0 0.0
      %2019 = vmatprep.subr.mxu0 0.0
      %2020 = vmatpush1.msra.mxu0 0.0
      %2021 = vmatprep.subr.mxu0 0.0
      %2022 = vmatpush1.msra.mxu0 0.0
      %2023 = vmatprep.subr.mxu0 0.0
      %2024 = vmatpush1.msra.mxu0 0.0
      %2025 = vmatprep.subr.mxu0 0.0
      %2026 = vmatpush1.msra.mxu0 0.0
      %2027 = vmatprep.subr.mxu0 0.0
      %2028 = vmatpush1.msra.mxu0 0.0
      %2029 = vmatprep.subr.mxu0 0.0
      %2030 = vmatpush1.msra.mxu0 0.0
      %2031 = vmatprep.subr.mxu0 0.0
      %2032 = vmatpush1.msra.mxu0 0.0
      %2033 = vmatprep.subr.mxu0 0.0
      %2034 = vmatpush1.msra.mxu0 0.0
      %2035 = vmatprep.subr.mxu0 0.0
      %2036 = vmatpush1.msra.mxu0 0.0
      %2037 = vmatprep.subr.mxu0 0.0
      %2038 = vmatpush1.msra.mxu0 0.0
      %2039 = vmatprep.subr.mxu0 0.0
      %2040 = vmatpush1.msra.mxu0 0.0
      %2041 = vmatprep.subr.mxu0 0.0
      %2042 = vmatpush1.msra.mxu0 0.0
      %2043 = vmatprep.subr.mxu0 0.0
      %2044 = vmatpush1.msra.mxu0 0.0
      %2045 = vmatprep.subr.mxu0 0.0
      %2046 = vmatpush1.msra.mxu0 0.0
      %2047 = vmatprep.subr.mxu0 0.0
      %2048 = vmatpush1.msra.mxu0 0.0
      %2049 = vmatprep.subr.mxu0 0.0
      %2050 = vmatpush1.msra.mxu0 0.0
      %2051 = vmatprep.subr.mxu0 0.0
      %2052 = vmatpush1.msra.mxu0 0.0
      %2053 = vmatprep.subr.mxu0 0.0
      %2054 = vmatpush1.msra.mxu0 0.0
      %2055 = vmatprep.mubr.f32.mxu0 0.0
      %2056 = vmatmul.mubr.f32.gmra.mrb[0].mxu0 %v1989
      %v2057 = vpop.f32.mrb[0].mxu0
      %v2058 = vadd.f32 0.0, %v2057
      %v2059 = vpop.f32.mrb[0].mxu0
      %2060 = vdwg.mxu0
      %v2062 = vrot.slane %v421, 1
      %v2064 = vmul.f32 %v2058, %v2062
      %v2066 = vrot.slane %v2064, 1
      %v2068 = vmul.f32 %v2058, %v2066
      %v2070 = vrot.slane %v2068, 5
      %v2072 = vsub.f32 %v421, %v2070
      %v2073 = vlaneseq
      %v2074 = vshrl.u32 %v2073, 7
      %v2075 = vsub.s32 1, %v2074
      %v2076 = vrot.slane %v2064, %v2075
      %v2077 = vmul.f32 %v1824, %v2076
      %v2078 = vmul.f32 %v1827, %v2076
      %v2079 = vmul.f32 %v1832, %v2076
      %v2080 = vmul.f32 %v1835, %v2076
      %v2081 = vmul.f32 %v1840, %v2076
      %v2082 = vmul.f32 %v1843, %v2076
      %v2083 = vmul.f32 %v1848, %v2076
      %v2084 = vmul.f32 %v1851, %v2076
      %v2085 = vlaneseq
      %v2086 = vshrl.u32 %v2085, 7
      %v2087 = vsub.s32 3, %v2086
      %v2088 = vrot.slane %v2072, %v2087
      %v2089 = vadd.f32 %v2077, %v2088
      %v2090 = vadd.f32 %v2078, %v2088
      %v2091 = vadd.f32 %v2079, %v2088
      %v2092 = vadd.f32 %v2080, %v2088
      %v2093 = vadd.f32 %v2081, %v2088
      %v2094 = vadd.f32 %v2082, %v2088
      %v2095 = vadd.f32 %v2083, %v2088
      %v2096 = vadd.f32 %v2084, %v2088
      %vm2097 = vcmp.ge.f32.partialorder %v2089, 0.0
      %vm2098 = vcmp.ge.f32.partialorder %v2090, 0.0
      %vm2099 = vcmp.ge.f32.partialorder %v2091, 0.0
      %vm2100 = vcmp.ge.f32.partialorder %v2092, 0.0
      %vm2101 = vcmp.ge.f32.partialorder %v2093, 0.0
      %vm2102 = vcmp.ge.f32.partialorder %v2094, 0.0
      %vm2103 = vcmp.ge.f32.partialorder %v2095, 0.0
      %vm2104 = vcmp.ge.f32.partialorder %v2096, 0.0
      %v2105 = vmul.f32 %v2089, 0.2
      %v2106 = vmul.f32 %v2090, 0.2
      %v2107 = vmul.f32 %v2091, 0.2
      %v2108 = vmul.f32 %v2092, 0.2
      %v2109 = vmul.f32 %v2093, 0.2
      %v2110 = vmul.f32 %v2094, 0.2
      %v2111 = vmul.f32 %v2095, 0.2
      %v2112 = vmul.f32 %v2096, 0.2
      %v2113 = vsel %vm2097, %v2089, %v2105
      %v2114 = vsel %vm2098, %v2090, %v2106
      %v2115 = vsel %vm2099, %v2091, %v2107
      %v2116 = vsel %vm2100, %v2092, %v2108
      %v2117 = vsel %vm2101, %v2093, %v2109
      %v2118 = vsel %vm2102, %v2094, %v2110
      %v2119 = vsel %vm2103, %v2095, %v2111
      %v2120 = vsel %vm2104, %v2096, %v2112
      %v2121 = vmax.f32 %v2113, %v2115
      %v2122 = vmax.f32 %v2114, %v2116
      %v2123 = vmax.f32 %v2121, %v2117
      %v2124 = vmax.f32 %v2122, %v2118
      %v2125 = vmax.f32 %v2123, %v2119
      %v2126 = vmax.f32 %v2124, %v2120
      %v2127 = vpack.c.bf16 %v1277, %v1276
      %v2128 = vld [vmem:[%s6] sm:$0xf]
      %v2129 = vld [vmem:[%s6 + $0x4] sm:$0xf]
      %v2130 = vld [vmem:[%s6 + $0x8] sm:$0xf]
      %v2131 = vld [vmem:[%s6 + $0xc] sm:$0xf]
      %v2132 = vld [vmem:[%s6 + $0x10] sm:$0xf]
      %v2133 = vld [vmem:[%s6 + $0x14] sm:$0xf]
      %v2134 = vld [vmem:[%s6 + $0x18] sm:$0xf]
      %v2135 = vld [vmem:[%s6 + $0x1c] sm:$0xf]
      %v2136 = vpack.c.bf16 %v2126, %v2125
      %v2137 = vld [vmem:[%s7] sm:$0xf]
      %v2138 = vld [vmem:[%s7 + $0x4] sm:$0xf]
      %v2139 = vld [vmem:[%s7 + $0x8] sm:$0xf]
      %v2140 = vld [vmem:[%s7 + $0xc] sm:$0xf]
      %v2141 = vld [vmem:[%s7 + $0x10] sm:$0xf]
      %v2142 = vld [vmem:[%s7 + $0x14] sm:$0xf]
      %v2143 = vld [vmem:[%s7 + $0x18] sm:$0xf]
      %v2144 = vld [vmem:[%s7 + $0x1c] sm:$0xf]
      %v2153 = vunpack.c.l.b16 %v2137
      %v2154 = vunpack.c.l.b16 %v2138
      %v2155 = vunpack.c.l.b16 %v2139
      %v2156 = vunpack.c.l.b16 %v2140
      %v2157 = vunpack.c.l.b16 %v2141
      %v2158 = vunpack.c.l.b16 %v2142
      %v2159 = vunpack.c.l.b16 %v2143
      %v2160 = vunpack.c.l.b16 %v2144
      %v2161 = vpack.c.b16 %v2154, %v2153
      %v2162 = vpack.c.b16 %v2156, %v2155
      %v2163 = vpack.c.b16 %v2158, %v2157
      %v2164 = vpack.c.b16 %v2160, %v2159
      %v2170 = vsel %vm620, %v2136, 0
      %2172 = vmatprep.subr.bf16.mxu0 0
      %2173 = vmatpush1.bf16.msra.mxu0 %v2161
      %2174 = vmatprep.subr.bf16.mxu0 0
      %2175 = vmatpush1.bf16.msra.mxu0 %v2162
      %2176 = vmatprep.subr.bf16.mxu0 0
      %2177 = vmatpush1.bf16.msra.mxu0 %v2163
      %2178 = vmatprep.subr.bf16.mxu0 0
      %2179 = vmatpush1.bf16.msra.mxu0 %v2164
      %2180 = vmatprep.subr.bf16.mxu0 0
      %2181 = vmatpush1.bf16.msra.mxu0 0
      %2182 = vmatprep.subr.bf16.mxu0 0
      %2183 = vmatpush1.bf16.msra.mxu0 0
      %2184 = vmatprep.subr.bf16.mxu0 0
      %2185 = vmatpush1.bf16.msra.mxu0 0
      %2186 = vmatprep.subr.bf16.mxu0 0
      %2187 = vmatpush1.bf16.msra.mxu0 0
      %2188 = vmatprep.subr.bf16.mxu0 0
      %2189 = vmatpush1.bf16.msra.mxu0 0
      %2190 = vmatprep.subr.bf16.mxu0 0
      %2191 = vmatpush1.bf16.msra.mxu0 0
      %2192 = vmatprep.subr.bf16.mxu0 0
      %2193 = vmatpush1.bf16.msra.mxu0 0
      %2194 = vmatprep.subr.bf16.mxu0 0
      %2195 = vmatpush1.bf16.msra.mxu0 0
      %2196 = vmatprep.subr.bf16.mxu0 0
      %2197 = vmatpush1.bf16.msra.mxu0 0
      %2198 = vmatprep.subr.bf16.mxu0 0
      %2199 = vmatpush1.bf16.msra.mxu0 0
      %2200 = vmatprep.subr.bf16.mxu0 0
      %2201 = vmatpush1.bf16.msra.mxu0 0
      %2202 = vmatprep.subr.bf16.mxu0 0
      %2203 = vmatpush1.bf16.msra.mxu0 0
      %2204 = vmatprep.mubr.bf16.mxu0 0
      %2205 = vmatmul.mubr.bf16.gmra.mrb[0].mxu0 %v2170
      %v2206 = vpop.f32.mrb[0].mxu0
      %v2207 = vadd.f32 0.0, %v2206
      %v2208 = vpop.f32.mrb[0].mxu0
      %v2209 = vpop.f32.mrb[0].mxu0
      %v2210 = vadd.f32 0.0, %v2209
      %v2211 = vpop.f32.mrb[0].mxu0
      %2212 = vdwg.mxu0
      %v2221 = vunpack.c.l.b16 %v2128
      %v2222 = vunpack.c.l.b16 %v2129
      %v2223 = vunpack.c.l.b16 %v2130
      %v2224 = vunpack.c.l.b16 %v2131
      %v2225 = vunpack.c.l.b16 %v2132
      %v2226 = vunpack.c.l.b16 %v2133
      %v2227 = vunpack.c.l.b16 %v2134
      %v2228 = vunpack.c.l.b16 %v2135
      %v2229 = vpack.c.b16 %v2222, %v2221
      %v2230 = vpack.c.b16 %v2224, %v2223
      %v2231 = vpack.c.b16 %v2226, %v2225
      %v2232 = vpack.c.b16 %v2228, %v2227
      %v2238 = vsel %vm620, %v2127, 0
      %2240 = vmatprep.subr.bf16.mxu0 0
      %2241 = vmatpush1.bf16.msra.mxu0 %v2229
      %2242 = vmatprep.subr.bf16.mxu0 0
      %2243 = vmatpush1.bf16.msra.mxu0 %v2230
      %2244 = vmatprep.subr.bf16.mxu0 0
      %2245 = vmatpush1.bf16.msra.mxu0 %v2231
      %2246 = vmatprep.subr.bf16.mxu0 0
      %2247 = vmatpush1.bf16.msra.mxu0 %v2232
      %2248 = vmatprep.subr.bf16.mxu0 0
      %2249 = vmatpush1.bf16.msra.mxu0 0
      %2250 = vmatprep.subr.bf16.mxu0 0
      %2251 = vmatpush1.bf16.msra.mxu0 0
      %2252 = vmatprep.subr.bf16.mxu0 0
      %2253 = vmatpush1.bf16.msra.mxu0 0
      %2254 = vmatprep.subr.bf16.mxu0 0
      %2255 = vmatpush1.bf16.msra.mxu0 0
      %2256 = vmatprep.subr.bf16.mxu0 0
      %2257 = vmatpush1.bf16.msra.mxu0 0
      %2258 = vmatprep.subr.bf16.mxu0 0
      %2259 = vmatpush1.bf16.msra.mxu0 0
      %2260 = vmatprep.subr.bf16.mxu0 0
      %2261 = vmatpush1.bf16.msra.mxu0 0
      %2262 = vmatprep.subr.bf16.mxu0 0
      %2263 = vmatpush1.bf16.msra.mxu0 0
      %2264 = vmatprep.subr.bf16.mxu0 0
      %2265 = vmatpush1.bf16.msra.mxu0 0
      %2266 = vmatprep.subr.bf16.mxu0 0
      %2267 = vmatpush1.bf16.msra.mxu0 0
      %2268 = vmatprep.subr.bf16.mxu0 0
      %2269 = vmatpush1.bf16.msra.mxu0 0
      %2270 = vmatprep.subr.bf16.mxu0 0
      %2271 = vmatpush1.bf16.msra.mxu0 0
      %2272 = vmatprep.mubr.bf16.mxu0 0
      %2273 = vmatmul.mubr.bf16.gmra.mrb[0].mxu0 %v2238
      %v2274 = vpop.f32.mrb[0].mxu0
      %v2275 = vadd.f32 %v2207, %v2274
      %v2276 = vpop.f32.mrb[0].mxu0
      %v2277 = vpop.f32.mrb[0].mxu0
      %v2278 = vadd.f32 %v2210, %v2277
      %v2279 = vpop.f32.mrb[0].mxu0
      %2280 = vdwg.mxu0
      %v2281 = vlaneseq
      %v2282 = vshrl.u32 %v2281, 7
      %v2283 = vsub.s32 4, %v2282
      %v2284 = vrot.slane %v421, %v2283
      %v2285 = vadd.f32 %v2275, %v2284
      %v2286 = vadd.f32 %v2278, %v2284
      %v2287 = vsel %vm620, %v2285, 0.0
      %v2288 = vsel %vm620, %v2286, 0.0
      %v2289 = vadd.f32 %v2287, %v2288
      %v2290 = vrot.slane %v2289, 4
      %v2291 = vadd.f32 %v2289, %v2290
      %v2292 = vrot.slane %v2291, 2
      %v2293 = vadd.f32 %v2291, %v2292
      %v2294 = vrot.slane %v2293, 1
      %v2295 = vadd.f32 %v2293, %v2294
      %v2296 = vmul.f32 %v2285, %v2285
      %v2297 = vmul.f32 %v2286, %v2286
      %v2298 = vsel %vm620, %v2296, 0.0
      %v2299 = vsel %vm620, %v2297, 0.0
      %v2300 = vadd.f32 %v2298, %v2299
      %v2301 = vrot.slane %v2300, 4
      %v2302 = vadd.f32 %v2300, %v2301
      %v2303 = vrot.slane %v2302, 2
      %v2304 = vadd.f32 %v2302, %v2303
      %v2305 = vrot.slane %v2304, 1
      %v2306 = vadd.f32 %v2304, %v2305
      %v2307 = vsel %vm671, %v2295, %v2306
      %v2309 = vsel %vm620, %v2307, 0
      %2311 = vmatprep.subr.mxu0 0.0
      %2312 = vmatpush1.msra.mxu0 %v408
      %2313 = vmatprep.subr.mxu0 0.0
      %2314 = vmatpush1.msra.mxu0 %v409
      %2315 = vmatprep.subr.mxu0 0.0
      %2316 = vmatpush1.msra.mxu0 %v410
      %2317 = vmatprep.subr.mxu0 0.0
      %2318 = vmatpush1.msra.mxu0 %v411
      %2319 = vmatprep.subr.mxu0 0.0
      %2320 = vmatpush1.msra.mxu0 %v412
      %2321 = vmatprep.subr.mxu0 0.0
      %2322 = vmatpush1.msra.mxu0 %v413
      %2323 = vmatprep.subr.mxu0 0.0
      %2324 = vmatpush1.msra.mxu0 %v414
      %2325 = vmatprep.subr.mxu0 0.0
      %2326 = vmatpush1.msra.mxu0 %v415
      %2327 = vmatprep.subr.mxu0 0.0
      %2328 = vmatpush1.msra.mxu0 0.0
      %2329 = vmatprep.subr.mxu0 0.0
      %2330 = vmatpush1.msra.mxu0 0.0
      %2331 = vmatprep.subr.mxu0 0.0
      %2332 = vmatpush1.msra.mxu0 0.0
      %2333 = vmatprep.subr.mxu0 0.0
      %2334 = vmatpush1.msra.mxu0 0.0
      %2335 = vmatprep.subr.mxu0 0.0
      %2336 = vmatpush1.msra.mxu0 0.0
      %2337 = vmatprep.subr.mxu0 0.0
      %2338 = vmatpush1.msra.mxu0 0.0
      %2339 = vmatprep.subr.mxu0 0.0
      %2340 = vmatpush1.msra.mxu0 0.0
      %2341 = vmatprep.subr.mxu0 0.0
      %2342 = vmatpush1.msra.mxu0 0.0
      %2343 = vmatprep.subr.mxu0 0.0
      %2344 = vmatpush1.msra.mxu0 0.0
      %2345 = vmatprep.subr.mxu0 0.0
      %2346 = vmatpush1.msra.mxu0 0.0
      %2347 = vmatprep.subr.mxu0 0.0
      %2348 = vmatpush1.msra.mxu0 0.0
      %2349 = vmatprep.subr.mxu0 0.0
      %2350 = vmatpush1.msra.mxu0 0.0
      %2351 = vmatprep.subr.mxu0 0.0
      %2352 = vmatpush1.msra.mxu0 0.0
      %2353 = vmatprep.subr.mxu0 0.0
      %2354 = vmatpush1.msra.mxu0 0.0
      %2355 = vmatprep.subr.mxu0 0.0
      %2356 = vmatpush1.msra.mxu0 0.0
      %2357 = vmatprep.subr.mxu0 0.0
      %2358 = vmatpush1.msra.mxu0 0.0
      %2359 = vmatprep.subr.mxu0 0.0
      %2360 = vmatpush1.msra.mxu0 0.0
      %2361 = vmatprep.subr.mxu0 0.0
      %2362 = vmatpush1.msra.mxu0 0.0
      %2363 = vmatprep.subr.mxu0 0.0
      %2364 = vmatpush1.msra.mxu0 0.0
      %2365 = vmatprep.subr.mxu0 0.0
      %2366 = vmatpush1.msra.mxu0 0.0
      %2367 = vmatprep.subr.mxu0 0.0
      %2368 = vmatpush1.msra.mxu0 0.0
      %2369 = vmatprep.subr.mxu0 0.0
      %2370 = vmatpush1.msra.mxu0 0.0
      %2371 = vmatprep.subr.mxu0 0.0
      %2372 = vmatpush1.msra.mxu0 0.0
      %2373 = vmatprep.subr.mxu0 0.0
      %2374 = vmatpush1.msra.mxu0 0.0
      %2375 = vmatprep.mubr.f32.mxu0 0.0
      %2376 = vmatmul.mubr.f32.gmra.mrb[0].mxu0 %v2309
      %v2377 = vpop.f32.mrb[0].mxu0
      %v2378 = vadd.f32 0.0, %v2377
      %v2379 = vpop.f32.mrb[0].mxu0
      %2380 = vdwg.mxu0
      %v2381 = vrcp.pop 32.0
      %v2382 = vmul.f32 %v2378, %v2381
      %v2383 = vmul.f32 %v2382, %v2382
      %v2385 = vrot.slane %v2383, 7
      %v2387 = vsub.f32 %v2382, %v2385
      %v2388 = vmax.f32 %v2387, 0.0
      %v2389 = vadd.f32 %v2388, 1e-05
      %v2390 = vrsqrt.pop %v2389
      %v2391 = vsel %vm671, %v2382, %v2390
      %v2393 = vsel %vm757, %v2391, 0
      %2395 = vmatprep.subr.mxu0 0.0
      %2396 = vmatpush1.msra.mxu0 %v416
      %2397 = vmatprep.subr.mxu0 0.0
      %2398 = vmatpush1.msra.mxu0 %v417
      %2399 = vmatprep.subr.mxu0 0.0
      %2400 = vmatpush1.msra.mxu0 %v418
      %2401 = vmatprep.subr.mxu0 0.0
      %2402 = vmatpush1.msra.mxu0 %v419
      %2403 = vmatprep.subr.mxu0 0.0
      %2404 = vmatpush1.msra.mxu0 0.0
      %2405 = vmatprep.subr.mxu0 0.0
      %2406 = vmatpush1.msra.mxu0 0.0
      %2407 = vmatprep.subr.mxu0 0.0
      %2408 = vmatpush1.msra.mxu0 0.0
      %2409 = vmatprep.subr.mxu0 0.0
      %2410 = vmatpush1.msra.mxu0 0.0
      %2411 = vmatprep.subr.mxu0 0.0
      %2412 = vmatpush1.msra.mxu0 0.0
      %2413 = vmatprep.subr.mxu0 0.0
      %2414 = vmatpush1.msra.mxu0 0.0
      %2415 = vmatprep.subr.mxu0 0.0
      %2416 = vmatpush1.msra.mxu0 0.0
      %2417 = vmatprep.subr.mxu0 0.0
      %2418 = vmatpush1.msra.mxu0 0.0
      %2419 = vmatprep.subr.mxu0 0.0
      %2420 = vmatpush1.msra.mxu0 0.0
      %2421 = vmatprep.subr.mxu0 0.0
      %2422 = vmatpush1.msra.mxu0 0.0
      %2423 = vmatprep.subr.mxu0 0.0
      %2424 = vmatpush1.msra.mxu0 0.0
      %2425 = vmatprep.subr.mxu0 0.0
      %2426 = vmatpush1.msra.mxu0 0.0
      %2427 = vmatprep.subr.mxu0 0.0
      %2428 = vmatpush1.msra.mxu0 0.0
      %2429 = vmatprep.subr.mxu0 0.0
      %2430 = vmatpush1.msra.mxu0 0.0
      %2431 = vmatprep.subr.mxu0 0.0
      %2432 = vmatpush1.msra.mxu0 0.0
      %2433 = vmatprep.subr.mxu0 0.0
      %2434 = vmatpush1.msra.mxu0 0.0
      %2435 = vmatprep.subr.mxu0 0.0
      %2436 = vmatpush1.msra.mxu0 0.0
      %2437 = vmatprep.subr.mxu0 0.0
      %2438 = vmatpush1.msra.mxu0 0.0
      %2439 = vmatprep.subr.mxu0 0.0
      %2440 = vmatpush1.msra.mxu0 0.0
      %2441 = vmatprep.subr.mxu0 0.0
      %2442 = vmatpush1.msra.mxu0 0.0
      %2443 = vmatprep.subr.mxu0 0.0
      %2444 = vmatpush1.msra.mxu0 0.0
      %2445 = vmatprep.subr.mxu0 0.0
      %2446 = vmatpush1.msra.mxu0 0.0
      %2447 = vmatprep.subr.mxu0 0.0
      %2448 = vmatpush1.msra.mxu0 0.0
      %2449 = vmatprep.subr.mxu0 0.0
      %2450 = vmatpush1.msra.mxu0 0.0
      %2451 = vmatprep.subr.mxu0 0.0
      %2452 = vmatpush1.msra.mxu0 0.0
      %2453 = vmatprep.subr.mxu0 0.0
      %2454 = vmatpush1.msra.mxu0 0.0
      %2455 = vmatprep.subr.mxu0 0.0
      %2456 = vmatpush1.msra.mxu0 0.0
      %2457 = vmatprep.subr.mxu0 0.0
      %2458 = vmatpush1.msra.mxu0 0.0
      %2459 = vmatprep.mubr.f32.mxu0 0.0
      %2460 = vmatmul.mubr.f32.gmra.mrb[0].mxu0 %v2393
      %v2461 = vpop.f32.mrb[0].mxu0
      %v2462 = vadd.f32 0.0, %v2461
      %v2463 = vpop.f32.mrb[0].mxu0
      %2464 = vdwg.mxu0
      %v2465 = vrot.slane %v421, 4
      %v2467 = vmul.f32 %v2462, %v2465
      %v2469 = vrot.slane %v2467, 1
      %v2471 = vmul.f32 %v2462, %v2469
      %v2473 = vrot.slane %v2471, 2
      %v2475 = vsub.f32 %v421, %v2473
      %v2476 = vlaneseq
      %v2477 = vshrl.u32 %v2476, 7
      %v2478 = vsub.s32 1, %v2477
      %v2479 = vrot.slane %v2467, %v2478
      %v2480 = vmul.f32 %v2285, %v2479
      %v2481 = vmul.f32 %v2286, %v2479
      %v2482 = vlaneseq
      %v2483 = vshrl.u32 %v2482, 7
      %v2484 = vsub.s32 6, %v2483
      %v2485 = vrot.slane %v2475, %v2484
      %v2486 = vadd.f32 %v2480, %v2485
      %v2487 = vadd.f32 %v2481, %v2485
      %vm2488 = vcmp.ge.f32.partialorder %v2486, 0.0
      %vm2489 = vcmp.ge.f32.partialorder %v2487, 0.0
      %v2490 = vmul.f32 %v2486, 0.2
      %v2491 = vmul.f32 %v2487, 0.2
      %v2492 = vsel %vm2488, %v2486, %v2490
      %v2493 = vsel %vm2489, %v2487, %v2491
      %2494 = vst.msk [vmem:[%s406] sm:$0xff] %vm620, %v2492
      %2495 = vst.msk [vmem:[%s406 + $0x8] sm:$0xff] %vm620, %v2493
      %p2496 = scmp.lt.s32.totalorder %s22, 1
      %s2497 = scalar_select %p2496, %s22, 1
      %s2498 = smul.addr %s2497, 2
      %s2499 = smul.addr %s2498, 8
      %s2500 = scalar_lea.vmem %s11, %s2499
      // Predicated region
      $region65: #{discriminator_forward.6} parent=63 // pred_check
        %p2501 = pneg %p281
      $region66: #{discriminator_forward.6} parent=63 // pred_check_branch
        %2503 = sbr.rel (%p2501) target = $region68
      $region67: #{discriminator_forward.6} parent=63 // pred_region
        _
      $region68: #{discriminator_forward.6} parent=63 // pred_fallthru
        _
    $region64: #{discriminator_forward.6} parent=5 // pred_fallthru
      _
    %p2504 = scmp.le.s32.totalorder 2, %s17
    // Predicated region
    $region69: #{discriminator_forward.6} parent=5 // pred_check
      %p2505 = pneg %p2504
    $region70: #{discriminator_forward.6} parent=5 // pred_check_branch
      %2507 = sbr.rel (%p2505) target = $region72
    $region71: #{discriminator_forward.6} parent=5 // pred_region
      %s2508 = ssub.s32 %s17, 2
      // Predicated region
      $region73: #{discriminator_forward.6} parent=71 // pred_check
        %p2509 = pneg %p287
      $region74: #{discriminator_forward.6} parent=71 // pred_check_branch
        %2511 = sbr.rel (%p2509) target = $region76
      $region75: #{discriminator_forward.6} parent=71 // pred_region
        %p2512 = scmp.lt.s32.totalorder %s23, 1
        %s2513 = scalar_select %p2512, %s23, 1
        %s2514 = smul.addr %s2513, 2
        %s2515 = smul.addr %s2514, 8
        %s2516 = scalar_lea.vmem %s11, %s2515
      $region76: #{discriminator_forward.6} parent=71 // pred_fallthru
        _
    $region72: #{discriminator_forward.6} parent=5 // pred_fallthru
      _
  $region6: #{discriminator_forward.6} parent=0 // loop_footer
    %s21 = sadd.s32 1, %s17
  $region7: #{discriminator_forward.6} parent=0 // loop_footer_branch
    %16 = sbr.rel target = $region3
  $region8: #{discriminator_forward.6} parent=0 // loop_exit
    _

// kernel: discriminator_forward.7
$region0: #{discriminator_forward.7}
  #allocation0 [shape = 'u32[]', space=smem, size = 0x4, offset = 0x4, fixed_abs, tag = 'smem constant byte address 0x4 - core index']
  #allocation1 [shape = 'u32[144,128]{1,0:T(1,128)}', space=vmem, size = 0x12000, scoped, tag = 'internal scratch']
  %s0 = inlined_call_operand.vmem [shape: bf16[2,24,132], index: 0, kind: input, shape index: {}]
  %s1 = inlined_call_operand.vmem [shape: bf16[132,64], index: 1, kind: input, shape index: {}]
  %s2 = inlined_call_operand.vmem [shape: f32[3,64], index: 2, kind: input, shape index: {}]
  %s3 = inlined_call_operand.vmem [shape: f32[64,32], index: 3, kind: input, shape index: {}]
  %s4 = inlined_call_operand.vmem [shape: f32[32,64], index: 4, kind: input, shape index: {}]
  %s5 = inlined_call_operand.vmem [shape: bf16[64,256], index: 5, kind: input, shape index: {}]
  %s6 = inlined_call_operand.vmem [shape: f32[3,256], index: 6, kind: input, shape index: {}]
  %s7 = inlined_call_operand.vmem [shape: f32[256,32], index: 7, kind: input, shape index: {}]
  %s8 = inlined_call_operand.vmem [shape: f32[32,256], index: 8, kind: input, shape index: {}]
  %s9 = inlined_call_operand.vmem [shape: bf16[256,2], index: 9, kind: input, shape index: {}]
  %s10 = inlined_call_operand.vmem [shape: f32[1,2], index: 10, kind: input, shape index: {}]
  %s11 = inlined_call_operand.vmem [shape: f32[2,6,64], index: 11, kind: output, shape index: {0}]
  %s12 = inlined_call_operand.hbm [shape: f32[2,1,2], index: 12, kind: output, shape index: {1}]
  %13 = xla_tuple %s11, %s12
  %s14 = sld [smem:[#allocation0]]
  $region85: #{discriminator_forward.7} parent=0
    _
  %s16 = ssub.s32 1, %s14
  %s17 = scalar_select 0, %s16, %s14
  $region1: #{discriminator_forward.7} parent=0
    #allocation2 [shape = 'u8[1024]{0}', space=vmem, size = 0x400, scoped, tag = 'output window, operand 1']
    #allocation3 [shape = 's32[2]{0}', space=sflag, size = 0x8, scoped, tag = 'scoped memory for discriminator_forward.7']
    %18 = vsyncpa [#allocation3], 0
    %s19 = scalar_lea.sflag [#allocation3], 1
    %20 = vsyncpa %s19, 0
    loop: start=0, step=1, limit=4
    $region2: #{discriminator_forward.7} parent=1 // loop_pre_header
      _
    $region3: #{discriminator_forward.7} parent=1 // loop_header
      %s22 = sphi 0, %s26
      %p23 = scmp.ge.s32.totalorder %s22, 4
      %s32 = sphi 0, %s34
      %s35 = sphi 0, %s32
      %s36 = sphi 0, %s35
      %s52 = sphi 0, %s36
      %s56 = sphi 0, %s56
      %s58 = sphi 0, %s56
      %s59 = sphi 0, %s58
      %s73 = sphi 0, %s59
      %s77 = sphi 0, %s77
      %s79 = sphi 0, %s77
      %s80 = sphi 0, %s79
      %s94 = sphi 0, %s80
      %s98 = sphi 0, %s98
      %s100 = sphi 0, %s98
      %s101 = sphi 0, %s100
      %s115 = sphi 0, %s101
      %s119 = sphi 0, %s119
      %s121 = sphi 0, %s119
      %s122 = sphi 0, %s121
      %s136 = sphi 0, %s122
      %s140 = sphi 0, %s140
      %s142 = sphi 0, %s140
      %s143 = sphi 0, %s142
      %s157 = sphi 0, %s143
      %s161 = sphi 0, %s161
      %s163 = sphi 0, %s161
      %s164 = sphi 0, %s163
      %s178 = sphi 0, %s164
      %s182 = sphi 0, %s182
      %s184 = sphi 0, %s182
      %s185 = sphi 0, %s184
      %s199 = sphi 0, %s185
      %s203 = sphi 0, %s203
      %s205 = sphi 0, %s203
      %s206 = sphi 0, %s205
      %s220 = sphi 0, %s206
      %s224 = sphi 0, %s224
      %s226 = sphi 0, %s224
      %s227 = sphi 0, %s226
      %s241 = sphi 0, %s227
      %s245 = sphi 0, %s245
      %s247 = sphi 0, %s245
      %s248 = sphi 0, %s247
      %s262 = sphi 0, %s248
      %s268 = sphi 0, %s270
      %s271 = sphi 0, %s268
      %s272 = sphi 0, %s271
      %s288 = sphi 0, %s272
      %s294 = sphi 0, %s296
      %s297 = sphi 0, %s294
      %s298 = sphi 0, %s297
      %s314 = sphi 0, %s298
    $region4: #{discriminator_forward.7} parent=1 // loop_header_branch
      %25 = sbr.rel (%p23) target = $region8
    $region5: #{discriminator_forward.7} parent=1 // loop_body
      %s27 = ssub.s32 %s22, 1
      %s28 = ssub.s32 %s22, 2
      %s29 = sadd.s32 %s22, 1
      %s30 = ssub.s32 %s22, %s29
      %p31 = scmp.eq.s32.totalorder %s30, 0
      %s33 = sadd.s32 %s32, 1
      %s34 = scalar_select %p31, %s32, %s33
      %p37 = pneg %p31
      %p38 = scmp.eq.s32.totalorder %s22, 1
      %p39 = por %p37, %p38
      %p40 = scmp.ne.s32.totalorder %s32, %s35
      %p41 = scmp.eq.s32.totalorder %s22, 0
      %p42 = por %p40, %p41
      %p43 = scmp.ne.s32.totalorder %s32, %s35
      %p44 = scmp.eq.s32.totalorder %s27, 1
      %p45 = por %p43, %p44
      %p46 = scmp.ne.s32.totalorder %s35, %s36
      %p47 = scmp.eq.s32.totalorder %s27, 0
      %p48 = por %p46, %p47
      %p49 = scmp.ne.s32.totalorder %s35, %s36
      %p50 = scmp.eq.s32.totalorder %s28, 1
      %p51 = por %p49, %p50
      %p53 = scmp.ne.s32.totalorder %s36, %s52
      %p54 = scmp.eq.s32.totalorder %s28, 0
      %p55 = por %p53, %p54
      %s57 = sadd.s32 %s56, 1
      %p60 = scmp.eq.s32.totalorder %s22, 1
      %p61 = scmp.ne.s32.totalorder %s56, %s58
      %p62 = scmp.eq.s32.totalorder %s22, 0
      %p63 = por %p61, %p62
      %p64 = scmp.ne.s32.totalorder %s56, %s58
      %p65 = scmp.eq.s32.totalorder %s27, 1
      %p66 = por %p64, %p65
      %p67 = scmp.ne.s32.totalorder %s58, %s59
      %p68 = scmp.eq.s32.totalorder %s27, 0
      %p69 = por %p67, %p68
      %p70 = scmp.ne.s32.totalorder %s58, %s59
      %p71 = scmp.eq.s32.totalorder %s28, 1
      %p72 = por %p70, %p71
      %p74 = scmp.ne.s32.totalorder %s59, %s73
      %p75 = scmp.eq.s32.totalorder %s28, 0
      %p76 = por %p74, %p75
      %s78 = sadd.s32 %s77, 1
      %p81 = scmp.eq.s32.totalorder %s22, 1
      %p82 = scmp.ne.s32.totalorder %s77, %s79
      %p83 = scmp.eq.s32.totalorder %s22, 0
      %p84 = por %p82, %p83
      %p85 = scmp.ne.s32.totalorder %s77, %s79
      %p86 = scmp.eq.s32.totalorder %s27, 1
      %p87 = por %p85, %p86
      %p88 = scmp.ne.s32.totalorder %s79, %s80
      %p89 = scmp.eq.s32.totalorder %s27, 0
      %p90 = por %p88, %p89
      %p91 = scmp.ne.s32.totalorder %s79, %s80
      %p92 = scmp.eq.s32.totalorder %s28, 1
      %p93 = por %p91, %p92
      %p95 = scmp.ne.s32.totalorder %s80, %s94
      %p96 = scmp.eq.s32.totalorder %s28, 0
      %p97 = por %p95, %p96
      %s99 = sadd.s32 %s98, 1
      %p102 = scmp.eq.s32.totalorder %s22, 1
      %p103 = scmp.ne.s32.totalorder %s98, %s100
      %p104 = scmp.eq.s32.totalorder %s22, 0
      %p105 = por %p103, %p104
      %p106 = scmp.ne.s32.totalorder %s98, %s100
      %p107 = scmp.eq.s32.totalorder %s27, 1
      %p108 = por %p106, %p107
      %p109 = scmp.ne.s32.totalorder %s100, %s101
      %p110 = scmp.eq.s32.totalorder %s27, 0
      %p111 = por %p109, %p110
      %p112 = scmp.ne.s32.totalorder %s100, %s101
      %p113 = scmp.eq.s32.totalorder %s28, 1
      %p114 = por %p112, %p113
      %p116 = scmp.ne.s32.totalorder %s101, %s115
      %p117 = scmp.eq.s32.totalorder %s28, 0
      %p118 = por %p116, %p117
      %s120 = sadd.s32 %s119, 1
      %p123 = scmp.eq.s32.totalorder %s22, 1
      %p124 = scmp.ne.s32.totalorder %s119, %s121
      %p125 = scmp.eq.s32.totalorder %s22, 0
      %p126 = por %p124, %p125
      %p127 = scmp.ne.s32.totalorder %s119, %s121
      %p128 = scmp.eq.s32.totalorder %s27, 1
      %p129 = por %p127, %p128
      %p130 = scmp.ne.s32.totalorder %s121, %s122
      %p131 = scmp.eq.s32.totalorder %s27, 0
      %p132 = por %p130, %p131
      %p133 = scmp.ne.s32.totalorder %s121, %s122
      %p134 = scmp.eq.s32.totalorder %s28, 1
      %p135 = por %p133, %p134
      %p137 = scmp.ne.s32.totalorder %s122, %s136
      %p138 = scmp.eq.s32.totalorder %s28, 0
      %p139 = por %p137, %p138
      %s141 = sadd.s32 %s140, 1
      %p144 = scmp.eq.s32.totalorder %s22, 1
      %p145 = scmp.ne.s32.totalorder %s140, %s142
      %p146 = scmp.eq.s32.totalorder %s22, 0
      %p147 = por %p145, %p146
      %p148 = scmp.ne.s32.totalorder %s140, %s142
      %p149 = scmp.eq.s32.totalorder %s27, 1
      %p150 = por %p148, %p149
      %p151 = scmp.ne.s32.totalorder %s142, %s143
      %p152 = scmp.eq.s32.totalorder %s27, 0
      %p153 = por %p151, %p152
      %p154 = scmp.ne.s32.totalorder %s142, %s143
      %p155 = scmp.eq.s32.totalorder %s28, 1
      %p156 = por %p154, %p155
      %p158 = scmp.ne.s32.totalorder %s143, %s157
      %p159 = scmp.eq.s32.totalorder %s28, 0
      %p160 = por %p158, %p159
      %s162 = sadd.s32 %s161, 1
      %p165 = scmp.eq.s32.totalorder %s22, 1
      %p166 = scmp.ne.s32.totalorder %s161, %s163
      %p167 = scmp.eq.s32.totalorder %s22, 0
      %p168 = por %p166, %p167
      %p169 = scmp.ne.s32.totalorder %s161, %s163
      %p170 = scmp.eq.s32.totalorder %s27, 1
      %p171 = por %p169, %p170
      %p172 = scmp.ne.s32.totalorder %s163, %s164
      %p173 = scmp.eq.s32.totalorder %s27, 0
      %p174 = por %p172, %p173
      %p175 = scmp.ne.s32.totalorder %s163, %s164
      %p176 = scmp.eq.s32.totalorder %s28, 1
      %p177 = por %p175, %p176
      %p179 = scmp.ne.s32.totalorder %s164, %s178
      %p180 = scmp.eq.s32.totalorder %s28, 0
      %p181 = por %p179, %p180
      %s183 = sadd.s32 %s182, 1
      %p186 = scmp.eq.s32.totalorder %s22, 1
      %p187 = scmp.ne.s32.totalorder %s182, %s184
      %p188 = scmp.eq.s32.totalorder %s22, 0
      %p189 = por %p187, %p188
      %p190 = scmp.ne.s32.totalorder %s182, %s184
      %p191 = scmp.eq.s32.totalorder %s27, 1
      %p192 = por %p190, %p191
      %p193 = scmp.ne.s32.totalorder %s184, %s185
      %p194 = scmp.eq.s32.totalorder %s27, 0
      %p195 = por %p193, %p194
      %p196 = scmp.ne.s32.totalorder %s184, %s185
      %p197 = scmp.eq.s32.totalorder %s28, 1
      %p198 = por %p196, %p197
      %p200 = scmp.ne.s32.totalorder %s185, %s199
      %p201 = scmp.eq.s32.totalorder %s28, 0
      %p202 = por %p200, %p201
      %s204 = sadd.s32 %s203, 1
      %p207 = scmp.eq.s32.totalorder %s22, 1
      %p208 = scmp.ne.s32.totalorder %s203, %s205
      %p209 = scmp.eq.s32.totalorder %s22, 0
      %p210 = por %p208, %p209
      %p211 = scmp.ne.s32.totalorder %s203, %s205
      %p212 = scmp.eq.s32.totalorder %s27, 1
      %p213 = por %p211, %p212
      %p214 = scmp.ne.s32.totalorder %s205, %s206
      %p215 = scmp.eq.s32.totalorder %s27, 0
      %p216 = por %p214, %p215
      %p217 = scmp.ne.s32.totalorder %s205, %s206
      %p218 = scmp.eq.s32.totalorder %s28, 1
      %p219 = por %p217, %p218
      %p221 = scmp.ne.s32.totalorder %s206, %s220
      %p222 = scmp.eq.s32.totalorder %s28, 0
      %p223 = por %p221, %p222
      %s225 = sadd.s32 %s224, 1
      %p228 = scmp.eq.s32.totalorder %s22, 1
      %p229 = scmp.ne.s32.totalorder %s224, %s226
      %p230 = scmp.eq.s32.totalorder %s22, 0
      %p231 = por %p229, %p230
      %p232 = scmp.ne.s32.totalorder %s224, %s226
      %p233 = scmp.eq.s32.totalorder %s27, 1
      %p234 = por %p232, %p233
      %p235 = scmp.ne.s32.totalorder %s226, %s227
      %p236 = scmp.eq.s32.totalorder %s27, 0
      %p237 = por %p235, %p236
      %p238 = scmp.ne.s32.totalorder %s226, %s227
      %p239 = scmp.eq.s32.totalorder %s28, 1
      %p240 = por %p238, %p239
      %p242 = scmp.ne.s32.totalorder %s227, %s241
      %p243 = scmp.eq.s32.totalorder %s28, 0
      %p244 = por %p242, %p243
      %s246 = sadd.s32 %s245, 1
      %p249 = scmp.eq.s32.totalorder %s22, 1
      %p250 = scmp.ne.s32.totalorder %s245, %s247
      %p251 = scmp.eq.s32.totalorder %s22, 0
      %p252 = por %p250, %p251
      %p253 = scmp.ne.s32.totalorder %s245, %s247
      %p254 = scmp.eq.s32.totalorder %s27, 1
      %p255 = por %p253, %p254
      %p256 = scmp.ne.s32.totalorder %s247, %s248
      %p257 = scmp.eq.s32.totalorder %s27, 0
      %p258 = por %p256, %p257
      %p259 = scmp.ne.s32.totalorder %s247, %s248
      %p260 = scmp.eq.s32.totalorder %s28, 1
      %p261 = por %p259, %p260
      %p263 = scmp.ne.s32.totalorder %s248, %s262
      %p264 = scmp.eq.s32.totalorder %s28, 0
      %p265 = por %p263, %p264
      %s266 = ssub.s32 %s22, %s29
      %p267 = scmp.eq.s32.totalorder %s266, 0
      %s269 = sadd.s32 %s268, 1
      %s270 = scalar_select %p267, %s268, %s269
      %p273 = pneg %p267
      %p274 = scmp.eq.s32.totalorder %s22, 1
      %p275 = por %p273, %p274
      %p276 = scmp.ne.s32.totalorder %s268, %s271
      %p277 = scmp.eq.s32.totalorder %s22, 0
      %p278 = por %p276, %p277
      %p279 = scmp.ne.s32.totalorder %s268, %s271
      %p280 = scmp.eq.s32.totalorder %s27, 1
      %p281 = por %p279, %p280
      %p282 = scmp.ne.s32.totalorder %s271, %s272
      %p283 = scmp.eq.s32.totalorder %s27, 0
      %p284 = por %p282, %p283
      %p285 = scmp.ne.s32.totalorder %s271, %s272
      %p286 = scmp.eq.s32.totalorder %s28, 1
      %p287 = por %p285, %p286
      %p289 = scmp.ne.s32.totalorder %s272, %s288
      %p290 = scmp.eq.s32.totalorder %s28, 0
      %p291 = por %p289, %p290
      %s292 = ssub.s32 %s22, %s29
      %p293 = scmp.eq.s32.totalorder %s292, 0
      %s295 = sadd.s32 %s294, 1
      %s296 = scalar_select %p293, %s294, %s295
      %p299 = pneg %p293
      %p300 = scmp.eq.s32.totalorder %s22, 1
      %p301 = por %p299, %p300
      %p302 = scmp.ne.s32.totalorder %s294, %s297
      %p303 = scmp.eq.s32.totalorder %s22, 0
      %p304 = por %p302, %p303
      %p305 = scmp.ne.s32.totalorder %s294, %s297
      %p306 = scmp.eq.s32.totalorder %s27, 1
      %p307 = por %p305, %p306
      %p308 = scmp.ne.s32.totalorder %s297, %s298
      %p309 = scmp.eq.s32.totalorder %s27, 0
      %p310 = por %p308, %p309
      %p311 = scmp.ne.s32.totalorder %s297, %s298
      %p312 = scmp.eq.s32.totalorder %s28, 1
      %p313 = por %p311, %p312
      %p315 = scmp.ne.s32.totalorder %s298, %s314
      %p316 = scmp.eq.s32.totalorder %s28, 0
      %p317 = por %p315, %p316
      %p318 = scmp.le.s32.totalorder 1, %s22
      %p319 = scmp.lt.s32.totalorder %s22, 3
      %p320 = pnand %p318, %p319
      %p321 = pneg %p320
      // Predicated region
      $region9: #{discriminator_forward.7} parent=5 // pred_check
        _
      $region10: #{discriminator_forward.7} parent=5 // pred_check_branch
        %323 = sbr.rel (%p320) target = $region12
      $region11: #{discriminator_forward.7} parent=5 // pred_region
        %s324 = ssub.s32 %s22, 1
        // Predicated region
        $region13: #{discriminator_forward.7} parent=11 // pred_check
          %p325 = pneg %p69
        $region14: #{discriminator_forward.7} parent=11 // pred_check_branch
          %327 = sbr.rel (%p325) target = $region16
        $region15: #{discriminator_forward.7} parent=11 // pred_region
          _
        $region16: #{discriminator_forward.7} parent=11 // pred_fallthru
          _
        // Predicated region
        $region17: #{discriminator_forward.7} parent=11 // pred_check
          %p328 = pneg %p90
        $region18: #{discriminator_forward.7} parent=11 // pred_check_branch
          %330 = sbr.rel (%p328) target = $region20
        $region19: #{discriminator_forward.7} parent=11 // pred_region
          _
        $region20: #{discriminator_forward.7} parent=11 // pred_fallthru
          _
        // Predicated region
        $region21: #{discriminator_forward.7} parent=11 // pred_check
          %p331 = pneg %p111
        $region22: #{discriminator_forward.7} parent=11 // pred_check_branch
          %333 = sbr.rel (%p331) target = $region24
        $region23: #{discriminator_forward.7} parent=11 // pred_region
          _
        $region24: #{discriminator_forward.7} parent=11 // pred_fallthru
          _
        // Predicated region
        $region25: #{discriminator_forward.7} parent=11 // pred_check
          %p334 = pneg %p132
        $region26: #{discriminator_forward.7} parent=11 // pred_check_branch
          %336 = sbr.rel (%p334) target = $region28
        $region27: #{discriminator_forward.7} parent=11 // pred_region
          _
        $region28: #{discriminator_forward.7} parent=11 // pred_fallthru
          _
        // Predicated region
        $region29: #{discriminator_forward.7} parent=11 // pred_check
          %p337 = pneg %p153
        $region30: #{discriminator_forward.7} parent=11 // pred_check_branch
          %339 = sbr.rel (%p337) target = $region32
        $region31: #{discriminator_forward.7} parent=11 // pred_region
          _
        $region32: #{discriminator_forward.7} parent=11 // pred_fallthru
          _
        // Predicated region
        $region33: #{discriminator_forward.7} parent=11 // pred_check
          %p340 = pneg %p174
        $region34: #{discriminator_forward.7} parent=11 // pred_check_branch
          %342 = sbr.rel (%p340) target = $region36
        $region35: #{discriminator_forward.7} parent=11 // pred_region
          _
        $region36: #{discriminator_forward.7} parent=11 // pred_fallthru
          _
        // Predicated region
        $region37: #{discriminator_forward.7} parent=11 // pred_check
          %p343 = pneg %p195
        $region38: #{discriminator_forward.7} parent=11 // pred_check_branch
          %345 = sbr.rel (%p343) target = $region40
        $region39: #{discriminator_forward.7} parent=11 // pred_region
          _
        $region40: #{discriminator_forward.7} parent=11 // pred_fallthru
          _
        // Predicated region
        $region41: #{discriminator_forward.7} parent=11 // pred_check
          %p346 = pneg %p216
        $region42: #{discriminator_forward.7} parent=11 // pred_check_branch
          %348 = sbr.rel (%p346) target = $region44
        $region43: #{discriminator_forward.7} parent=11 // pred_region
          _
        $region44: #{discriminator_forward.7} parent=11 // pred_fallthru
          _
        // Predicated region
        $region45: #{discriminator_forward.7} parent=11 // pred_check
          %p349 = pneg %p237
        $region46: #{discriminator_forward.7} parent=11 // pred_check_branch
          %351 = sbr.rel (%p349) target = $region48
        $region47: #{discriminator_forward.7} parent=11 // pred_region
          _
        $region48: #{discriminator_forward.7} parent=11 // pred_fallthru
          _
        // Predicated region
        $region49: #{discriminator_forward.7} parent=11 // pred_check
          %p352 = pneg %p258
        $region50: #{discriminator_forward.7} parent=11 // pred_check_branch
          %354 = sbr.rel (%p352) target = $region52
        $region51: #{discriminator_forward.7} parent=11 // pred_region
          _
        $region52: #{discriminator_forward.7} parent=11 // pred_fallthru
          _
      $region12: #{discriminator_forward.7} parent=5 // pred_fallthru
        _
      %p355 = scmp.lt.s32.totalorder %s22, 2
      // Predicated region
      $region53: #{discriminator_forward.7} parent=5 // pred_check
        %p356 = pneg %p355
      $region54: #{discriminator_forward.7} parent=5 // pred_check_branch
        %358 = sbr.rel (%p356) target = $region56
      $region55: #{discriminator_forward.7} parent=5 // pred_region
        // Predicated region
        $region57: #{discriminator_forward.7} parent=55 // pred_check
          %p359 = pneg %p42
        $region58: #{discriminator_forward.7} parent=55 // pred_check_branch
          %361 = sbr.rel (%p359) target = $region60
        $region59: #{discriminator_forward.7} parent=55 // pred_region
          %p362 = scmp.lt.s32.totalorder %s22, 1
          %s363 = scalar_select %p362, %s22, 1
          %s364 = smul.addr %s363, 6
          %s365 = smul.addr %s364, 4
          %s366 = scalar_lea.vmem %s0, %s365
        $region60: #{discriminator_forward.7} parent=55 // pred_fallthru
          _
      $region56: #{discriminator_forward.7} parent=5 // pred_fallthru
        _
      %p367 = scmp.le.s32.totalorder 1, %s22
      %p368 = scmp.lt.s32.totalorder %s22, 3
      %p369 = pnand %p367, %p368
      %p370 = pneg %p369
      // Predicated region
      $region61: #{discriminator_forward.7} parent=5 // pred_check
        _
      $region62: #{discriminator_forward.7} parent=5 // pred_check_branch
        %372 = sbr.rel (%p369) target = $region64
      $region63: #{discriminator_forward.7} parent=5 // pred_region
        %s373 = ssub.s32 %s22, 1
        %p374 = scmp.lt.s32.totalorder %s27, 1
        %s375 = scalar_select %p374, %s27, 1
        %s376 = smul.addr %s375, 6
        %s377 = smul.addr %s376, 4
        %s378 = scalar_lea.vmem %s0, %s377
        %p379 = pneg %p48
        %p380 = pneg %p45
        %p381 = pneg %p69
        %p382 = pneg %p66
        %p383 = pneg %p90
        %p384 = pneg %p87
        %p385 = pneg %p111
        %p386 = pneg %p108
        %p387 = pneg %p132
        %p388 = pneg %p129
        %p389 = pneg %p153
        %p390 = pneg %p150
        %p391 = pneg %p174
        %p392 = pneg %p171
        %p393 = pneg %p195
        %p394 = pneg %p192
        %p395 = pneg %p216
        %p396 = pneg %p213
        %p397 = pneg %p237
        %p398 = pneg %p234
        %p399 = pneg %p258
        %p400 = pneg %p255
        %p401 = pneg %p284
        %p402 = pneg %p281
        %p403 = scmp.lt.s32.totalorder %s27, 1
        %s404 = scalar_select %p403, %s27, 1
        %s405 = smul.addr %s404, 8
        %s406 = scalar_lea.vmem %s11, %s405
        %p407 = pneg %p310
        %p408 = pneg %p307
        %s409 = sand.u32 %s297, 1
        %s410 = scalar_lea.sflag [#allocation3], %s409
        %s411 = sand.u32 %s297, 1
        %s412 = scalar_lea.vmem [#allocation2], %s411
        %p413 = scmp.lt.s32.totalorder %s27, 1
        %s414 = scalar_select %p413, %s27, 1
        %s415 = smul.addr %s414, 6
        %s416 = smul.addr %s415, 4
        %s417 = scalar_lea.vmem %s0, %s416
        %p418 = scmp.lt.s32.totalorder %s27, 1
        %s419 = scalar_select %p418, %s27, 1
        %s420 = smul.addr %s419, 8
        %s421 = scalar_lea.vmem %s11, %s420
        %v423 = vld [vmem:[%s2] sm:$0x7]
        %v424 = vld [vmem:[%s6] sm:$0x77]
        %v425 = vld [vmem:[%s417] sm:$0xff]
        %v426 = vld [vmem:[%s417 + $0x8] sm:$0xff]
        %v427 = vld [vmem:[%s417 + $0x10] sm:$0xff]
        %v428 = vld [vmem:[%s1] sm:$0xf]
        %v429 = vld [vmem:[%s1 + $0x4] sm:$0xf]
        %v430 = vld [vmem:[%s1 + $0x8] sm:$0xf]
        %v431 = vld [vmem:[%s1 + $0xc] sm:$0xf]
        %v432 = vld [vmem:[%s1 + $0x10] sm:$0xf]
        %v433 = vld [vmem:[%s1 + $0x14] sm:$0xf]
        %v434 = vld [vmem:[%s1 + $0x18] sm:$0xf]
        %v435 = vld [vmem:[%s1 + $0x1c] sm:$0xf]
        %v436 = vld [vmem:[%s1 + $0x20] sm:$0xf]
        %v437 = vld [vmem:[%s1 + $0x24] sm:$0xf]
        %v438 = vld [vmem:[%s1 + $0x28] sm:$0xf]
        %v439 = vld [vmem:[%s1 + $0x2c] sm:$0xf]
        %v440 = vld [vmem:[%s1 + $0x30] sm:$0xf]
        %v441 = vld [vmem:[%s1 + $0x34] sm:$0xf]
        %v442 = vld [vmem:[%s1 + $0x38] sm:$0xf]
        %v443 = vld [vmem:[%s1 + $0x3c] sm:$0xf]
        %v444 = vld [vmem:[%s1 + $0x40] sm:$0x3]
        %v445 = vld [vmem:[%s3] sm:$0xff]
        %v446 = vld [vmem:[%s3 + $0x8] sm:$0xff]
        %v447 = vld [vmem:[%s3 + $0x10] sm:$0xff]
        %v448 = vld [vmem:[%s3 + $0x18] sm:$0xff]
        %v449 = vld [vmem:[%s3 + $0x20] sm:$0xff]
        %v450 = vld [vmem:[%s3 + $0x28] sm:$0xff]
        %v451 = vld [vmem:[%s3 + $0x30] sm:$0xff]
        %v452 = vld [vmem:[%s3 + $0x38] sm:$0xff]
        %v453 = vld [vmem:[%s4] sm:$0xff]
        %v454 = vld [vmem:[%s4 + $0x8] sm:$0xff]
        %v455 = vld [vmem:[%s4 + $0x10] sm:$0xff]
        %v456 = vld [vmem:[%s4 + $0x18] sm:$0xff]
        %v457 = vlaneseq
        %v458 = vshrl.u32 %v457, 7
        %v459 = vsub.s32 0, %v458
        %v460 = vrot.slane %v423, %v459
        %v464 = vunpack.c.l.b16 %v425
        %v465 = vunpack.c.h.b16 %v425
        %v466 = vunpack.c.l.b16 %v426
        %v467 = vunpack.c.h.b16 %v426
        %v468 = vunpack.c.l.b16 %v427
        %v469 = vunpack.c.h.b16 %v427
        %v470 = vpack.c.b16 %v466, %v464
        %v471 = vpack.c.b16 %v467, %v465
        %v472 = vpack.c.b16 %v468, %v468
        %v473 = vpack.c.b16 %v469, %v469
        %v493 = vunpack.c.l.b16 %v428
        %v494 = vunpack.c.l.b16 %v429
        %v495 = vunpack.c.l.b16 %v430
        %v496 = vunpack.c.l.b16 %v431
        %v497 = vunpack.c.l.b16 %v432
        %v498 = vunpack.c.l.b16 %v433
        %v499 = vunpack.c.l.b16 %v434
        %v500 = vunpack.c.l.b16 %v435
        %v501 = vunpack.c.l.b16 %v436
        %v502 = vunpack.c.l.b16 %v437
        %v503 = vunpack.c.l.b16 %v438
        %v504 = vunpack.c.l.b16 %v439
        %v505 = vunpack.c.l.b16 %v440
        %v506 = vunpack.c.l.b16 %v441
        %v507 = vunpack.c.l.b16 %v442
        %v508 = vunpack.c.l.b16 %v443
        %v509 = vunpack.c.l.b16 %v444
        %v510 = vpack.c.b16 %v494, %v493
        %v511 = vpack.c.b16 %v496, %v495
        %v512 = vpack.c.b16 %v498, %v497
        %v513 = vpack.c.b16 %v500, %v499
        %v514 = vpack.c.b16 %v502, %v501
        %v515 = vpack.c.b16 %v504, %v503
        %v516 = vpack.c.b16 %v506, %v505
        %v517 = vpack.c.b16 %v508, %v507
        %v518 = vpack.c.b16 %v509, %v509
        %vm527 = vcmask 31744
        %v529 = vsel %vm527, %v471, 0
        %v532 = vsel %vm527, %v473, 0
        %vm534 = vcmask 1041408
        %v536 = vsel %vm534, %v518, 0
        %538 = vmatprep.subr.bf16.mxu0 0
        %539 = vmatpush1.bf16.msra.mxu0 %v510
        %540 = vmatprep.subr.bf16.mxu0 0
        %541 = vmatpush1.bf16.msra.mxu0 %v511
        %542 = vmatprep.subr.bf16.mxu0 0
        %543 = vmatpush1.bf16.msra.mxu0 %v512
        %544 = vmatprep.subr.bf16.mxu0 0
        %545 = vmatpush1.bf16.msra.mxu0 %v513
        %546 = vmatprep.subr.bf16.mxu0 0
        %547 = vmatpush1.bf16.msra.mxu0 %v514
        %548 = vmatprep.subr.bf16.mxu0 0
        %549 = vmatpush1.bf16.msra.mxu0 %v515
        %550 = vmatprep.subr.bf16.mxu0 0
        %551 = vmatpush1.bf16.msra.mxu0 %v516
        %552 = vmatprep.subr.bf16.mxu0 0
        %553 = vmatpush1.bf16.msra.mxu0 %v517
        %554 = vmatprep.subr.bf16.mxu0 0
        %555 = vmatpush1.bf16.msra.mxu0 %v536
        %556 = vmatprep.subr.bf16.mxu0 0
        %557 = vmatpush1.bf16.msra.mxu0 0
        %558 = vmatprep.subr.bf16.mxu0 0
        %559 = vmatpush1.bf16.msra.mxu0 0
        %560 = vmatprep.subr.bf16.mxu0 0
        %561 = vmatpush1.bf16.msra.mxu0 0
        %562 = vmatprep.subr.bf16.mxu0 0
        %563 = vmatpush1.bf16.msra.mxu0 0
        %564 = vmatprep.subr.bf16.mxu0 0
        %565 = vmatpush1.bf16.msra.mxu0 0
        %566 = vmatprep.subr.bf16.mxu0 0
        %567 = vmatpush1.bf16.msra.mxu0 0
        %568 = vmatprep.subr.bf16.mxu0 0
        %569 = vmatpush1.bf16.msra.mxu0 0
        %570 = vmatprep.mubr.bf16.mxu0 %v529
        %571 = vmatmul.mubr.bf16.gmra.mrb[0].mxu0 %v470
        %v572 = vpop.f32.mrb[0].mxu0
        %v573 = vadd.f32 %v460, %v572
        %v574 = vpop.f32.mrb[0].mxu0
        %v575 = vpop.f32.mrb[0].mxu0
        %v576 = vadd.f32 %v460, %v575
        %v577 = vpop.f32.mrb[0].mxu0
        %578 = vmatprep.mubr.bf16.mxu0 %v532
        %579 = vmatmul.mubr.bf16.gmra.mrb[0].mxu0 %v472
        %v580 = vpop.f32.mrb[0].mxu0
        %v581 = vadd.f32 %v460, %v580
        %v582 = vpop.f32.mrb[0].mxu0
        %v583 = vpop.f32.mrb[0].mxu0
        %v584 = vpop.f32.mrb[0].mxu0
        %585 = vdwg.mxu0
        %vm586 = vcmask 523264
        %v587 = vsel %vm586, %v573, 0.0
        %v588 = vsel %vm586, %v576, 0.0
        %v589 = vadd.f32 %v587, %v588
        %v590 = vsel %vm586, %v581, 0.0
        %v591 = vadd.f32 %v589, %v590
        %v592 = vrot.slane %v591, 4
        %v593 = vadd.f32 %v591, %v592
        %v594 = vrot.slane %v593, 2
        %v595 = vadd.f32 %v593, %v594
        %v596 = vrot.slane %v595, 1
        %v597 = vadd.f32 %v595, %v596
        %v598 = vmul.f32 %v573, %v573
        %v599 = vmul.f32 %v576, %v576
        %v600 = vmul.f32 %v581, %v581
        %v601 = vsel %vm586, %v598, 0.0
        %v602 = vsel %vm586, %v599, 0.0
        %v603 = vadd.f32 %v601, %v602
        %v604 = vsel %vm586, %v600, 0.0
        %v605 = vadd.f32 %v603, %v604
        %v606 = vrot.slane %v605, 4
        %v607 = vadd.f32 %v605, %v606
        %v608 = vrot.slane %v607, 2
        %v609 = vadd.f32 %v607, %v608
        %v610 = vrot.slane %v609, 1
        %v611 = vadd.f32 %v609, %v610
        %vm612 = vcmask 1040384
        %v613 = vsel %vm612, %v597, %v611
        %v615 = vsel %vm586, %v613, 0
        %617 = vmatprep.subr.mxu0 0.0
        %618 = vmatpush1.msra.mxu0 %v445
        %619 = vmatprep.subr.mxu0 0.0
        %620 = vmatpush1.msra.mxu0 %v446
        %621 = vmatprep.subr.mxu0 0.0
        %622 = vmatpush1.msra.mxu0 %v447
        %623 = vmatprep.subr.mxu0 0.0
        %624 = vmatpush1.msra.mxu0 %v448
        %625 = vmatprep.subr.mxu0 0.0
        %626 = vmatpush1.msra.mxu0 %v449
        %627 = vmatprep.subr.mxu0 0.0
        %628 = vmatpush1.msra.mxu0 %v450
        %629 = vmatprep.subr.mxu0 0.0
        %630 = vmatpush1.msra.mxu0 %v451
        %631 = vmatprep.subr.mxu0 0.0
        %632 = vmatpush1.msra.mxu0 %v452
        %633 = vmatprep.subr.mxu0 0.0
        %634 = vmatpush1.msra.mxu0 0.0
        %635 = vmatprep.subr.mxu0 0.0
        %636 = vmatpush1.msra.mxu0 0.0
        %637 = vmatprep.subr.mxu0 0.0
        %638 = vmatpush1.msra.mxu0 0.0
        %639 = vmatprep.subr.mxu0 0.0
        %640 = vmatpush1.msra.mxu0 0.0
        %641 = vmatprep.subr.mxu0 0.0
        %642 = vmatpush1.msra.mxu0 0.0
        %643 = vmatprep.subr.mxu0 0.0
        %644 = vmatpush1.msra.mxu0 0.0
        %645 = vmatprep.subr.mxu0 0.0
        %646 = vmatpush1.msra.mxu0 0.0
        %647 = vmatprep.subr.mxu0 0.0
        %648 = vmatpush1.msra.mxu0 0.0
        %649 = vmatprep.subr.mxu0 0.0
        %650 = vmatpush1.msra.mxu0 0.0
        %651 = vmatprep.subr.mxu0 0.0
        %652 = vmatpush1.msra.mxu0 0.0
        %653 = vmatprep.subr.mxu0 0.0
        %654 = vmatpush1.msra.mxu0 0.0
        %655 = vmatprep.subr.mxu0 0.0
        %656 = vmatpush1.msra.mxu0 0.0
        %657 = vmatprep.subr.mxu0 0.0
        %658 = vmatpush1.msra.mxu0 0.0
        %659 = vmatprep.subr.mxu0 0.0
        %660 = vmatpush1.msra.mxu0 0.0
        %661 = vmatprep.subr.mxu0 0.0
        %662 = vmatpush1.msra.mxu0 0.0
        %663 = vmatprep.subr.mxu0 0.0
        %664 = vmatpush1.msra.mxu0 0.0
        %665 = vmatprep.subr.mxu0 0.0
        %666 = vmatpush1.msra.mxu0 0.0
        %667 = vmatprep.subr.mxu0 0.0
        %668 = vmatpush1.msra.mxu0 0.0
        %669 = vmatprep.subr.mxu0 0.0
        %670 = vmatpush1.msra.mxu0 0.0
        %671 = vmatprep.subr.mxu0 0.0
        %672 = vmatpush1.msra.mxu0 0.0
        %673 = vmatprep.subr.mxu0 0.0
        %674 = vmatpush1.msra.mxu0 0.0
        %675 = vmatprep.subr.mxu0 0.0
        %676 = vmatpush1.msra.mxu0 0.0
        %677 = vmatprep.subr.mxu0 0.0
        %678 = vmatpush1.msra.mxu0 0.0
        %679 = vmatprep.subr.mxu0 0.0
        %680 = vmatpush1.msra.mxu0 0.0
        %681 = vmatprep.mubr.f32.mxu0 0.0
        %682 = vmatmul.mubr.f32.gmra.mrb[0].mxu0 %v615
        %v683 = vpop.f32.mrb[0].mxu0
        %v684 = vadd.f32 0.0, %v683
        %v685 = vpop.f32.mrb[0].mxu0
        %686 = vdwg.mxu0
        %v687 = vrcp.pop 48.0
        %v688 = vmul.f32 %v684, %v687
        %v689 = vmul.f32 %v688, %v688
        %v691 = vrot.slane %v689, 7
        %v693 = vsub.f32 %v688, %v691
        %v694 = vmax.f32 %v693, 0.0
        %v695 = vadd.f32 %v694, 1e-05
        %v696 = vrsqrt.pop %v695
        %v697 = vsel %vm612, %v688, %v696
        %vm698 = vcmask 261120
        %v700 = vsel %vm698, %v697, 0
        %702 = vmatprep.subr.mxu0 0.0
        %703 = vmatpush1.msra.mxu0 %v453
        %704 = vmatprep.subr.mxu0 0.0
        %705 = vmatpush1.msra.mxu0 %v454
        %706 = vmatprep.subr.mxu0 0.0
        %707 = vmatpush1.msra.mxu0 %v455
        %708 = vmatprep.subr.mxu0 0.0
        %709 = vmatpush1.msra.mxu0 %v456
        %710 = vmatprep.subr.mxu0 0.0
        %711 = vmatpush1.msra.mxu0 0.0
        %712 = vmatprep.subr.mxu0 0.0
        %713 = vmatpush1.msra.mxu0 0.0
        %714 = vmatprep.subr.mxu0 0.0
        %715 = vmatpush1.msra.mxu0 0.0
        %716 = vmatprep.subr.mxu0 0.0
        %717 = vmatpush1.msra.mxu0 0.0
        %718 = vmatprep.subr.mxu0 0.0
        %719 = vmatpush1.msra.mxu0 0.0
        %720 = vmatprep.subr.mxu0 0.0
        %721 = vmatpush1.msra.mxu0 0.0
        %722 = vmatprep.subr.mxu0 0.0
        %723 = vmatpush1.msra.mxu0 0.0
        %724 = vmatprep.subr.mxu0 0.0
        %725 = vmatpush1.msra.mxu0 0.0
        %726 = vmatprep.subr.mxu0 0.0
        %727 = vmatpush1.msra.mxu0 0.0
        %728 = vmatprep.subr.mxu0 0.0
        %729 = vmatpush1.msra.mxu0 0.0
        %730 = vmatprep.subr.mxu0 0.0
        %731 = vmatpush1.msra.mxu0 0.0
        %732 = vmatprep.subr.mxu0 0.0
        %733 = vmatpush1.msra.mxu0 0.0
        %734 = vmatprep.subr.mxu0 0.0
        %735 = vmatpush1.msra.mxu0 0.0
        %736 = vmatprep.subr.mxu0 0.0
        %737 = vmatpush1.msra.mxu0 0.0
        %738 = vmatprep.subr.mxu0 0.0
        %739 = vmatpush1.msra.mxu0 0.0
        %740 = vmatprep.subr.mxu0 0.0
        %741 = vmatpush1.msra.mxu0 0.0
        %742 = vmatprep.subr.mxu0 0.0
        %743 = vmatpush1.msra.mxu0 0.0
        %744 = vmatprep.subr.mxu0 0.0
        %745 = vmatpush1.msra.mxu0 0.0
        %746 = vmatprep.subr.mxu0 0.0
        %747 = vmatpush1.msra.mxu0 0.0
        %748 = vmatprep.subr.mxu0 0.0
        %749 = vmatpush1.msra.mxu0 0.0
        %750 = vmatprep.subr.mxu0 0.0
        %751 = vmatpush1.msra.mxu0 0.0
        %752 = vmatprep.subr.mxu0 0.0
        %753 = vmatpush1.msra.mxu0 0.0
        %754 = vmatprep.subr.mxu0 0.0
        %755 = vmatpush1.msra.mxu0 0.0
        %756 = vmatprep.subr.mxu0 0.0
        %757 = vmatpush1.msra.mxu0 0.0
        %758 = vmatprep.subr.mxu0 0.0
        %759 = vmatpush1.msra.mxu0 0.0
        %760 = vmatprep.subr.mxu0 0.0
        %761 = vmatpush1.msra.mxu0 0.0
        %762 = vmatprep.subr.mxu0 0.0
        %763 = vmatpush1.msra.mxu0 0.0
        %764 = vmatprep.subr.mxu0 0.0
        %765 = vmatpush1.msra.mxu0 0.0
        %766 = vmatprep.mubr.f32.mxu0 0.0
        %767 = vmatmul.mubr.f32.gmra.mrb[0].mxu0 %v700
        %v768 = vpop.f32.mrb[0].mxu0
        %v769 = vadd.f32 0.0, %v768
        %v770 = vpop.f32.mrb[0].mxu0
        %771 = vdwg.mxu0
        %v772 = vmul.f32 %v769, %v423
        %v774 = vrot.slane %v772, 1
        %v776 = vmul.f32 %v769, %v774
        %v778 = vrot.slane %v776, 6
        %v780 = vsub.f32 %v423, %v778
        %v781 = vlaneseq
        %v782 = vshrl.u32 %v781, 7
        %v783 = vsub.s32 1, %v782
        %v784 = vrot.slane %v772, %v783
        %v785 = vmul.f32 %v573, %v784
        %v786 = vmul.f32 %v576, %v784
        %v787 = vmul.f32 %v581, %v784
        %v788 = vlaneseq
        %v789 = vshrl.u32 %v788, 7
        %v790 = vsub.s32 2, %v789
        %v791 = vrot.slane %v780, %v790
        %v792 = vadd.f32 %v785, %v791
        %v793 = vadd.f32 %v786, %v791
        %v794 = vadd.f32 %v787, %v791
        %vm795 = vcmp.ge.f32.partialorder %v792, 0.0
        %vm796 = vcmp.ge.f32.partialorder %v793, 0.0
        %vm797 = vcmp.ge.f32.partialorder %v794, 0.0
        %v798 = vmul.f32 %v792, 0.2
        %v799 = vmul.f32 %v793, 0.2
        %v800 = vmul.f32 %v794, 0.2
        %v801 = vsel %vm795, %v792, %v798
        %v802 = vsel %vm796, %v793, %v799
        %v803 = vsel %vm797, %v794, %v800
        %v806 = vrot.slane %v801, 6
        %v807 = vrot.slane %v802, 6
        %v808 = vsel %vm534, %v806, %v807
        %v810 = vmax.f32 %v801, %v808
        %vm812 = vcmask 1043456
        %v813 = vrot.slane %v802, 4
        %v814 = vrot.slane %v803, 4
        %v815 = vsel %vm812, %v813, %v814
        %v817 = vmax.f32 %v810, %v815
        %v818 = vrot.slane %v803, 2
        %v820 = vmax.f32 %v817, %v818
        %vm821 = vcmask 521216
        %822 = vst.msk [vmem:[%s421] sm:$0x3f] %vm821, %v820
        %v823 = vsel %vm586, %v801, -inf
        %v824 = vsel %vm586, %v802, -inf
        %v825 = vsel %vm586, %v803, -inf
        %v826 = vmax.f32 %v823, %v824
        %v827 = vmax.f32 %v826, %v825
        %v828 = vrot.slane %v827, 4
        %v829 = vmax.f32 %v827, %v828
        %v830 = vrot.slane %v829, 2
        %v831 = vmax.f32 %v829, %v830
        %v832 = vrot.slane %v831, 1
        %v833 = vmax.f32 %v831, %v832
        %v834 = vpack.c.bf16 %v833, %v833
        %v835 = vld [vmem:[%s5] sm:$0xff]
        %v836 = vld [vmem:[%s5 + $0x8] sm:$0xff]
        %v837 = vld [vmem:[%s5 + $0x10] sm:$0xff]
        %v838 = vld [vmem:[%s5 + $0x18] sm:$0xff]
        %v839 = vld [vmem:[%s5 + $0x20] sm:$0xff]
        %v840 = vld [vmem:[%s5 + $0x28] sm:$0xff]
        %v841 = vld [vmem:[%s5 + $0x30] sm:$0xff]
        %v842 = vld [vmem:[%s5 + $0x38] sm:$0xff]
        %v851 = vunpack.c.l.b16 %v835
        %v852 = vunpack.c.h.b16 %v835
        %v853 = vunpack.c.l.b16 %v836
        %v854 = vunpack.c.h.b16 %v836
        %v855 = vunpack.c.l.b16 %v837
        %v856 = vunpack.c.h.b16 %v837
        %v857 = vunpack.c.l.b16 %v838
        %v858 = vunpack.c.h.b16 %v838
        %v859 = vunpack.c.l.b16 %v839
        %v860 = vunpack.c.h.b16 %v839
        %v861 = vunpack.c.l.b16 %v840
        %v862 = vunpack.c.h.b16 %v840
        %v863 = vunpack.c.l.b16 %v841
        %v864 = vunpack.c.h.b16 %v841
        %v865 = vunpack.c.l.b16 %v842
        %v866 = vunpack.c.h.b16 %v842
        %v867 = vpack.c.b16 %v853, %v851
        %v868 = vpack.c.b16 %v854, %v852
        %v869 = vpack.c.b16 %v857, %v855
        %v870 = vpack.c.b16 %v858, %v856
        %v871 = vpack.c.b16 %v861, %v859
        %v872 = vpack.c.b16 %v862, %v860
        %v873 = vpack.c.b16 %v865, %v863
        %v874 = vpack.c.b16 %v866, %v864
        %v884 = vlaneseq
        %v885 = vshrl.u32 %v884, 7
        %v886 = vsub.s32 0, %v885
        %v887 = vrot.slane %v424, %v886
        %v888 = vlaneseq
        %v889 = vshrl.u32 %v888, 7
        %v890 = vsub.s32 4, %v889
        %v891 = vrot.slane %v424, %v890
        %v895 = vsel %vm586, %v834, 0
        %897 = vmatprep.subr.bf16.mxu0 %v868
        %898 = vmatpush1.bf16.msra.mxu0 %v867
        %899 = vmatprep.subr.bf16.mxu0 %v870
        %900 = vmatpush1.bf16.msra.mxu0 %v869
        %901 = vmatprep.subr.bf16.mxu0 %v872
        %902 = vmatpush1.bf16.msra.mxu0 %v871
        %903 = vmatprep.subr.bf16.mxu0 %v874
        %904 = vmatpush1.bf16.msra.mxu0 %v873
        %905 = vmatprep.subr.bf16.mxu0 0
        %906 = vmatpush1.bf16.msra.mxu0 0
        %907 = vmatprep.subr.bf16.mxu0 0
        %908 = vmatpush1.bf16.msra.mxu0 0
        %909 = vmatprep.subr.bf16.mxu0 0
        %910 = vmatpush1.bf16.msra.mxu0 0
        %911 = vmatprep.subr.bf16.mxu0 0
        %912 = vmatpush1.bf16.msra.mxu0 0
        %913 = vmatprep.subr.bf16.mxu0 0
        %914 = vmatpush1.bf16.msra.mxu0 0
        %915 = vmatprep.subr.bf16.mxu0 0
        %916 = vmatpush1.bf16.msra.mxu0 0
        %917 = vmatprep.subr.bf16.mxu0 0
        %918 = vmatpush1.bf16.msra.mxu0 0
        %919 = vmatprep.subr.bf16.mxu0 0
        %920 = vmatpush1.bf16.msra.mxu0 0
        %921 = vmatprep.subr.bf16.mxu0 0
        %922 = vmatpush1.bf16.msra.mxu0 0
        %923 = vmatprep.subr.bf16.mxu0 0
        %924 = vmatpush1.bf16.msra.mxu0 0
        %925 = vmatprep.subr.bf16.mxu0 0
        %926 = vmatpush1.bf16.msra.mxu0 0
        %927 = vmatprep.subr.bf16.mxu0 0
        %928 = vmatpush1.bf16.msra.mxu0 0
        %929 = vmatprep.mubr.bf16.mxu0 0
        %930 = vmatmul.mubr.bf16.gmra.mrb[0].mxu0 %v895
        %v931 = vpop.f32.mrb[0].mxu0
        %v932 = vadd.f32 %v887, %v931
        %v933 = vpop.f32.mrb[0].mxu0
        %v934 = vadd.f32 %v891, %v933
        %v935 = vpop.f32.mrb[0].mxu0
        %v936 = vpop.f32.mrb[0].mxu0
        %937 = vdwg.mxu0
        %v938 = vld [vmem:[%s7] sm:$0xff]
        %v939 = vld [vmem:[%s7 + $0x8] sm:$0xff]
        %v940 = vld [vmem:[%s7 + $0x10] sm:$0xff]
        %v941 = vld [vmem:[%s7 + $0x18] sm:$0xff]
        %v942 = vld [vmem:[%s7 + $0x20] sm:$0xff]
        %v943 = vld [vmem:[%s7 + $0x28] sm:$0xff]
        %v944 = vld [vmem:[%s7 + $0x30] sm:$0xff]
        %v945 = vld [vmem:[%s7 + $0x38] sm:$0xff]
        %v946 = vld [vmem:[%s7 + $0x40] sm:$0xff]
        %v947 = vld [vmem:[%s7 + $0x48] sm:$0xff]
        %v948 = vld [vmem:[%s7 + $0x50] sm:$0xff]
        %v949 = vld [vmem:[%s7 + $0x58] sm:$0xff]
        %v950 = vld [vmem:[%s7 + $0x60] sm:$0xff]
        %v951 = vld [vmem:[%s7 + $0x68] sm:$0xff]
        %v952 = vld [vmem:[%s7 + $0x70] sm:$0xff]
        %v953 = vld [vmem:[%s7 + $0x78] sm:$0xff]
        %v954 = vld [vmem:[%s7 + $0x80] sm:$0xff]
        %v955 = vld [vmem:[%s7 + $0x88] sm:$0xff]
        %v956 = vld [vmem:[%s7 + $0x90] sm:$0xff]
        %v957 = vld [vmem:[%s7 + $0x98] sm:$0xff]
        %v958 = vld [vmem:[%s7 + $0xa0] sm:$0xff]
        %v959 = vld [vmem:[%s7 + $0xa8] sm:$0xff]
        %v960 = vld [vmem:[%s7 + $0xb0] sm:$0xff]
        %v961 = vld [vmem:[%s7 + $0xb8] sm:$0xff]
        %v962 = vld [vmem:[%s7 + $0xc0] sm:$0xff]
        %v963 = vld [vmem:[%s7 + $0xc8] sm:$0xff]
        %v964 = vld [vmem:[%s7 + $0xd0] sm:$0xff]
        %v965 = vld [vmem:[%s7 + $0xd8] sm:$0xff]
        %v966 = vld [vmem:[%s7 + $0xe0] sm:$0xff]
        %v967 = vld [vmem:[%s7 + $0xe8] sm:$0xff]
        %v968 = vld [vmem:[%s7 + $0xf0] sm:$0xff]
        %v969 = vld [vmem:[%s7 + $0xf8] sm:$0xff]
        %v970 = vld [vmem:[%s8] sm:$0xff]
        %v971 = vld [vmem:[%s8 + $0x8] sm:$0xff]
        %v972 = vld [vmem:[%s8 + $0x10] sm:$0xff]
        %v973 = vld [vmem:[%s8 + $0x18] sm:$0xff]
        %v974 = vld [vmem:[%s8 + $0x20] sm:$0xff]
        %v975 = vld [vmem:[%s8 + $0x28] sm:$0xff]
        %v976 = vld [vmem:[%s8 + $0x30] sm:$0xff]
        %v977 = vld [vmem:[%s8 + $0x38] sm:$0xff]
        %v978 = vadd.f32 %v932, 0.0
        %v979 = vadd.f32 %v934, 0.0
        %v980 = vmul.f32 %v932, %v932
        %v981 = vmul.f32 %v934, %v934
        %v982 = vadd.f32 %v980, 0.0
        %v983 = vadd.f32 %v981, 0.0
        %v986 = vrot.slane %v982, 7
        %v987 = vrot.slane %v983, 7
        %v990 = vsel %vm612, %v978, %v986
        %v991 = vsel %vm612, %v979, %v987
        %992 = vmatprep.subr.mxu0 0.0
        %993 = vmatpush1.msra.mxu0 %v938
        %994 = vmatprep.subr.mxu0 0.0
        %995 = vmatpush1.msra.mxu0 %v939
        %996 = vmatprep.subr.mxu0 0.0
        %997 = vmatpush1.msra.mxu0 %v940
        %998 = vmatprep.subr.mxu0 0.0
        %999 = vmatpush1.msra.mxu0 %v941
        %1000 = vmatprep.subr.mxu0 0.0
        %1001 = vmatpush1.msra.mxu0 %v942
        %1002 = vmatprep.subr.mxu0 0.0
        %1003 = vmatpush1.msra.mxu0 %v943
        %1004 = vmatprep.subr.mxu0 0.0
        %1005 = vmatpush1.msra.mxu0 %v944
        %1006 = vmatprep.subr.mxu0 0.0
        %1007 = vmatpush1.msra.mxu0 %v945
        %1008 = vmatprep.subr.mxu0 0.0
        %1009 = vmatpush1.msra.mxu0 %v946
        %1010 = vmatprep.subr.mxu0 0.0
        %1011 = vmatpush1.msra.mxu0 %v947
        %1012 = vmatprep.subr.mxu0 0.0
        %1013 = vmatpush1.msra.mxu0 %v948
        %1014 = vmatprep.subr.mxu0 0.0
        %1015 = vmatpush1.msra.mxu0 %v949
        %1016 = vmatprep.subr.mxu0 0.0
        %1017 = vmatpush1.msra.mxu0 %v950
        %1018 = vmatprep.subr.mxu0 0.0
        %1019 = vmatpush1.msra.mxu0 %v951
        %1020 = vmatprep.subr.mxu0 0.0
        %1021 = vmatpush1.msra.mxu0 %v952
        %1022 = vmatprep.subr.mxu0 0.0
        %1023 = vmatpush1.msra.mxu0 %v953
        %1024 = vmatprep.subr.mxu0 0.0
        %1025 = vmatpush1.msra.mxu0 %v954
        %1026 = vmatprep.subr.mxu0 0.0
        %1027 = vmatpush1.msra.mxu0 %v955
        %1028 = vmatprep.subr.mxu0 0.0
        %1029 = vmatpush1.msra.mxu0 %v956
        %1030 = vmatprep.subr.mxu0 0.0
        %1031 = vmatpush1.msra.mxu0 %v957
        %1032 = vmatprep.subr.mxu0 0.0
        %1033 = vmatpush1.msra.mxu0 %v958
        %1034 = vmatprep.subr.mxu0 0.0
        %1035 = vmatpush1.msra.mxu0 %v959
        %1036 = vmatprep.subr.mxu0 0.0
        %1037 = vmatpush1.msra.mxu0 %v960
        %1038 = vmatprep.subr.mxu0 0.0
        %1039 = vmatpush1.msra.mxu0 %v961
        %1040 = vmatprep.subr.mxu0 0.0
        %1041 = vmatpush1.msra.mxu0 %v962
        %1042 = vmatprep.subr.mxu0 0.0
        %1043 = vmatpush1.msra.mxu0 %v963
        %1044 = vmatprep.subr.mxu0 0.0
        %1045 = vmatpush1.msra.mxu0 %v964
        %1046 = vmatprep.subr.mxu0 0.0
        %1047 = vmatpush1.msra.mxu0 %v965
        %1048 = vmatprep.subr.mxu0 0.0
        %1049 = vmatpush1.msra.mxu0 %v966
        %1050 = vmatprep.subr.mxu0 0.0
        %1051 = vmatpush1.msra.mxu0 %v967
        %1052 = vmatprep.subr.mxu0 0.0
        %1053 = vmatpush1.msra.mxu0 %v968
        %1054 = vmatprep.subr.mxu0 0.0
        %1055 = vmatpush1.msra.mxu0 %v969
        %1056 = vmatprep.mubr.f32.mxu0 %v991
        %1057 = vmatmul.mubr.f32.gmra.mrb[0].mxu0 %v990
        %v1058 = vpop.f32.mrb[0].mxu0
        %v1059 = vadd.f32 0.0, %v1058
        %v1060 = vpop.f32.mrb[0].mxu0
        %1061 = vdwg.mxu0
        %v1062 = vrcp.pop 8.0
        %v1063 = vmul.f32 %v1059, %v1062
        %v1064 = vmul.f32 %v1063, %v1063
        %v1066 = vrot.slane %v1064, 7
        %v1068 = vsub.f32 %v1063, %v1066
        %v1069 = vmax.f32 %v1068, 0.0
        %v1070 = vadd.f32 %v1069, 1e-05
        %v1071 = vrsqrt.pop %v1070
        %v1072 = vsel %vm612, %v1063, %v1071
        %v1074 = vsel %vm698, %v1072, 0
        %1076 = vmatprep.subr.mxu0 %v971
        %1077 = vmatpush1.msra.mxu0 %v970
        %1078 = vmatprep.subr.mxu0 %v973
        %1079 = vmatpush1.msra.mxu0 %v972
        %1080 = vmatprep.subr.mxu0 %v975
        %1081 = vmatpush1.msra.mxu0 %v974
        %1082 = vmatprep.subr.mxu0 %v977
        %1083 = vmatpush1.msra.mxu0 %v976
        %1084 = vmatprep.subr.mxu0 0.0
        %1085 = vmatpush1.msra.mxu0 0.0
        %1086 = vmatprep.subr.mxu0 0.0
        %1087 = vmatpush1.msra.mxu0 0.0
        %1088 = vmatprep.subr.mxu0 0.0
        %1089 = vmatpush1.msra.mxu0 0.0
        %1090 = vmatprep.subr.mxu0 0.0
        %1091 = vmatpush1.msra.mxu0 0.0
        %1092 = vmatprep.subr.mxu0 0.0
        %1093 = vmatpush1.msra.mxu0 0.0
        %1094 = vmatprep.subr.mxu0 0.0
        %1095 = vmatpush1.msra.mxu0 0.0
        %1096 = vmatprep.subr.mxu0 0.0
        %1097 = vmatpush1.msra.mxu0 0.0
        %1098 = vmatprep.subr.mxu0 0.0
        %1099 = vmatpush1.msra.mxu0 0.0
        %1100 = vmatprep.subr.mxu0 0.0
        %1101 = vmatpush1.msra.mxu0 0.0
        %1102 = vmatprep.subr.mxu0 0.0
        %1103 = vmatpush1.msra.mxu0 0.0
        %1104 = vmatprep.subr.mxu0 0.0
        %1105 = vmatpush1.msra.mxu0 0.0
        %1106 = vmatprep.subr.mxu0 0.0
        %1107 = vmatpush1.msra.mxu0 0.0
        %1108 = vmatprep.subr.mxu0 0.0
        %1109 = vmatpush1.msra.mxu0 0.0
        %1110 = vmatprep.subr.mxu0 0.0
        %1111 = vmatpush1.msra.mxu0 0.0
        %1112 = vmatprep.subr.mxu0 0.0
        %1113 = vmatpush1.msra.mxu0 0.0
        %1114 = vmatprep.subr.mxu0 0.0
        %1115 = vmatpush1.msra.mxu0 0.0
        %1116 = vmatprep.subr.mxu0 0.0
        %1117 = vmatpush1.msra.mxu0 0.0
        %1118 = vmatprep.subr.mxu0 0.0
        %1119 = vmatpush1.msra.mxu0 0.0
        %1120 = vmatprep.subr.mxu0 0.0
        %1121 = vmatpush1.msra.mxu0 0.0
        %1122 = vmatprep.subr.mxu0 0.0
        %1123 = vmatpush1.msra.mxu0 0.0
        %1124 = vmatprep.subr.mxu0 0.0
        %1125 = vmatpush1.msra.mxu0 0.0
        %1126 = vmatprep.subr.mxu0 0.0
        %1127 = vmatpush1.msra.mxu0 0.0
        %1128 = vmatprep.subr.mxu0 0.0
        %1129 = vmatpush1.msra.mxu0 0.0
        %1130 = vmatprep.subr.mxu0 0.0
        %1131 = vmatpush1.msra.mxu0 0.0
        %1132 = vmatprep.subr.mxu0 0.0
        %1133 = vmatpush1.msra.mxu0 0.0
        %1134 = vmatprep.subr.mxu0 0.0
        %1135 = vmatpush1.msra.mxu0 0.0
        %1136 = vmatprep.subr.mxu0 0.0
        %1137 = vmatpush1.msra.mxu0 0.0
        %1138 = vmatprep.subr.mxu0 0.0
        %1139 = vmatpush1.msra.mxu0 0.0
        %1140 = vmatprep.mubr.f32.mxu0 0.0
        %1141 = vmatmul.mubr.f32.gmra.mrb[0].mxu0 %v1074
        %v1142 = vpop.f32.mrb[0].mxu0
        %v1143 = vadd.f32 0.0, %v1142
        %v1144 = vpop.f32.mrb[0].mxu0
        %v1145 = vadd.f32 0.0, %v1144
        %1146 = vdwg.mxu0
        %v1147 = vlaneseq
        %v1148 = vshrl.u32 %v1147, 7
        %v1149 = vsub.s32 1, %v1148
        %v1150 = vrot.slane %v424, %v1149
        %v1151 = vlaneseq
        %v1152 = vshrl.u32 %v1151, 7
        %v1153 = vsub.s32 5, %v1152
        %v1154 = vrot.slane %v424, %v1153
        %v1157 = vmul.f32 %v1143, %v1150
        %v1158 = vmul.f32 %v1145, %v1154
        %v1161 = vrot.slane %v1157, 1
        %v1162 = vrot.slane %v1158, 1
        %v1165 = vmul.f32 %v1143, %v1161
        %v1166 = vmul.f32 %v1145, %v1162
        %v1169 = vcombine.low %v1165, %v1166
        %v1170 = vrot.slane %v1169, 6
        %v1172 = vsub.f32 %v424, %v1170
        %v1173 = vmul.f32 %v932, %v1161
        %v1174 = vmul.f32 %v934, %v1162
        %v1176 = vlaneseq
        %v1177 = vshrl.u32 %v1176, 7
        %v1178 = vsub.s32 2, %v1177
        %v1179 = vrot.slane %v1172, %v1178
        %v1180 = vlaneseq
        %v1181 = vshrl.u32 %v1180, 7
        %v1182 = vsub.s32 6, %v1181
        %v1183 = vrot.slane %v1172, %v1182
        %v1186 = vadd.f32 %v1173, %v1179
        %v1187 = vadd.f32 %v1174, %v1183
        %vm1188 = vcmp.ge.f32.partialorder %v1186, 0.0
        %vm1189 = vcmp.ge.f32.partialorder %v1187, 0.0
        %v1190 = vmul.f32 %v1186, 0.2
        %v1191 = vmul.f32 %v1187, 0.2
        %v1192 = vsel %vm1188, %v1186, %v1190
        %v1193 = vsel %vm1189, %v1187, %v1191
        %v1194 = vpack.c.bf16 %v1192, %v1192
        %v1195 = vpack.c.bf16 %v1193, %v1193
        %v1196 = vld [vmem:[%s9] sm:$0xf]
        %v1197 = vld [vmem:[%s9 + $0x4] sm:$0xf]
        %v1198 = vld [vmem:[%s9 + $0x8] sm:$0xf]
        %v1199 = vld [vmem:[%s9 + $0xc] sm:$0xf]
        %v1200 = vld [vmem:[%s9 + $0x10] sm:$0xf]
        %v1201 = vld [vmem:[%s9 + $0x14] sm:$0xf]
        %v1202 = vld [vmem:[%s9 + $0x18] sm:$0xf]
        %v1203 = vld [vmem:[%s9 + $0x1c] sm:$0xf]
        %v1204 = vld [vmem:[%s9 + $0x20] sm:$0xf]
        %v1205 = vld [vmem:[%s9 + $0x24] sm:$0xf]
        %v1206 = vld [vmem:[%s9 + $0x28] sm:$0xf]
        %v1207 = vld [vmem:[%s9 + $0x2c] sm:$0xf]
        %v1208 = vld [vmem:[%s9 + $0x30] sm:$0xf]
        %v1209 = vld [vmem:[%s9 + $0x34] sm:$0xf]
        %v1210 = vld [vmem:[%s9 + $0x38] sm:$0xf]
        %v1211 = vld [vmem:[%s9 + $0x3c] sm:$0xf]
        %v1212 = vld [vmem:[%s9 + $0x40] sm:$0xf]
        %v1213 = vld [vmem:[%s9 + $0x44] sm:$0xf]
        %v1214 = vld [vmem:[%s9 + $0x48] sm:$0xf]
        %v1215 = vld [vmem:[%s9 + $0x4c] sm:$0xf]
        %v1216 = vld [vmem:[%s9 + $0x50] sm:$0xf]
        %v1217 = vld [vmem:[%s9 + $0x54] sm:$0xf]
        %v1218 = vld [vmem:[%s9 + $0x58] sm:$0xf]
        %v1219 = vld [vmem:[%s9 + $0x5c] sm:$0xf]
        %v1220 = vld [vmem:[%s9 + $0x60] sm:$0xf]
        %v1221 = vld [vmem:[%s9 + $0x64] sm:$0xf]
        %v1222 = vld [vmem:[%s9 + $0x68] sm:$0xf]
        %v1223 = vld [vmem:[%s9 + $0x6c] sm:$0xf]
        %v1224 = vld [vmem:[%s9 + $0x70] sm:$0xf]
        %v1225 = vld [vmem:[%s9 + $0x74] sm:$0xf]
        %v1226 = vld [vmem:[%s9 + $0x78] sm:$0xf]
        %v1227 = vld [vmem:[%s9 + $0x7c] sm:$0xf]
        %v1228 = vld [vmem:[%s10] sm:$0x1]
        %v1261 = vunpack.c.l.b16 %v1196
        %v1262 = vunpack.c.l.b16 %v1197
        %v1263 = vunpack.c.l.b16 %v1198
        %v1264 = vunpack.c.l.b16 %v1199
        %v1265 = vunpack.c.l.b16 %v1200
        %v1266 = vunpack.c.l.b16 %v1201
        %v1267 = vunpack.c.l.b16 %v1202
        %v1268 = vunpack.c.l.b16 %v1203
        %v1269 = vunpack.c.l.b16 %v1204
        %v1270 = vunpack.c.l.b16 %v1205
        %v1271 = vunpack.c.l.b16 %v1206
        %v1272 = vunpack.c.l.b16 %v1207
        %v1273 = vunpack.c.l.b16 %v1208
        %v1274 = vunpack.c.l.b16 %v1209
        %v1275 = vunpack.c.l.b16 %v1210
        %v1276 = vunpack.c.l.b16 %v1211
        %v1277 = vunpack.c.l.b16 %v1212
        %v1278 = vunpack.c.l.b16 %v1213
        %v1279 = vunpack.c.l.b16 %v1214
        %v1280 = vunpack.c.l.b16 %v1215
        %v1281 = vunpack.c.l.b16 %v1216
        %v1282 = vunpack.c.l.b16 %v1217
        %v1283 = vunpack.c.l.b16 %v1218
        %v1284 = vunpack.c.l.b16 %v1219
        %v1285 = vunpack.c.l.b16 %v1220
        %v1286 = vunpack.c.l.b16 %v1221
        %v1287 = vunpack.c.l.b16 %v1222
        %v1288 = vunpack.c.l.b16 %v1223
        %v1289 = vunpack.c.l.b16 %v1224
        %v1290 = vunpack.c.l.b16 %v1225
        %v1291 = vunpack.c.l.b16 %v1226
        %v1292 = vunpack.c.l.b16 %v1227
        %v1293 = vpack.c.b16 %v1262, %v1261
        %v1294 = vpack.c.b16 %v1264, %v1263
        %v1295 = vpack.c.b16 %v1266, %v1265
        %v1296 = vpack.c.b16 %v1268, %v1267
        %v1297 = vpack.c.b16 %v1270, %v1269
        %v1298 = vpack.c.b16 %v1272, %v1271
        %v1299 = vpack.c.b16 %v1274, %v1273
        %v1300 = vpack.c.b16 %v1276, %v1275
        %v1301 = vpack.c.b16 %v1278, %v1277
        %v1302 = vpack.c.b16 %v1280, %v1279
        %v1303 = vpack.c.b16 %v1282, %v1281
        %v1304 = vpack.c.b16 %v1284, %v1283
        %v1305 = vpack.c.b16 %v1286, %v1285
        %v1306 = vpack.c.b16 %v1288, %v1287
        %v1307 = vpack.c.b16 %v1290, %v1289
        %v1308 = vpack.c.b16 %v1292, %v1291
        %1325 = vmatprep.subr.bf16.mxu0 0
        %1326 = vmatpush1.bf16.msra.mxu0 %v1293
        %1327 = vmatprep.subr.bf16.mxu0 0
        %1328 = vmatpush1.bf16.msra.mxu0 %v1294
        %1329 = vmatprep.subr.bf16.mxu0 0
        %1330 = vmatpush1.bf16.msra.mxu0 %v1295
        %1331 = vmatprep.subr.bf16.mxu0 0
        %1332 = vmatpush1.bf16.msra.mxu0 %v1296
        %1333 = vmatprep.subr.bf16.mxu0 0
        %1334 = vmatpush1.bf16.msra.mxu0 %v1297
        %1335 = vmatprep.subr.bf16.mxu0 0
        %1336 = vmatpush1.bf16.msra.mxu0 %v1298
        %1337 = vmatprep.subr.bf16.mxu0 0
        %1338 = vmatpush1.bf16.msra.mxu0 %v1299
        %1339 = vmatprep.subr.bf16.mxu0 0
        %1340 = vmatpush1.bf16.msra.mxu0 %v1300
        %1341 = vmatprep.subr.bf16.mxu0 0
        %1342 = vmatpush1.bf16.msra.mxu0 %v1301
        %1343 = vmatprep.subr.bf16.mxu0 0
        %1344 = vmatpush1.bf16.msra.mxu0 %v1302
        %1345 = vmatprep.subr.bf16.mxu0 0
        %1346 = vmatpush1.bf16.msra.mxu0 %v1303
        %1347 = vmatprep.subr.bf16.mxu0 0
        %1348 = vmatpush1.bf16.msra.mxu0 %v1304
        %1349 = vmatprep.subr.bf16.mxu0 0
        %1350 = vmatpush1.bf16.msra.mxu0 %v1305
        %1351 = vmatprep.subr.bf16.mxu0 0
        %1352 = vmatpush1.bf16.msra.mxu0 %v1306
        %1353 = vmatprep.subr.bf16.mxu0 0
        %1354 = vmatpush1.bf16.msra.mxu0 %v1307
        %1355 = vmatprep.subr.bf16.mxu0 0
        %1356 = vmatpush1.bf16.msra.mxu0 %v1308
        %1357 = vmatprep.mubr.bf16.mxu0 %v1195
        %1358 = vmatmul.mubr.bf16.gmra.mrb[0].mxu0 %v1194
        %v1359 = vpop.f32.mrb[0].mxu0
        %v1360 = vadd.f32 %v1228, %v1359
        %v1361 = vpop.f32.mrb[0].mxu0
        %v1362 = vpop.f32.mrb[0].mxu0
        %v1363 = vpop.f32.mrb[0].mxu0
        %1364 = vdwg.mxu0
        %vm1365 = vcmask 8192
        %1366 = vst.msk [vmem:[%s412] sm:$0x1] %vm1365, %v1360
        %p1367 = scmp.lt.s32.totalorder %s27, 1
        %s1368 = scalar_select %p1367, %s27, 1
        %s1369 = smul.addr %s1368, 8
        %s1370 = scalar_lea.vmem %s11, %s1369
        %s1371 = sand.u32 %s297, 1
        %s1372 = scalar_lea.sflag [#allocation3], %s1371
        %s1373 = sand.u32 %s297, 1
        %s1374 = scalar_lea.vmem [#allocation2], %s1373
        // Predicated region
        $region65: #{discriminator_forward.7} parent=63 // pred_check
          %p1375 = pneg %p281
        $region66: #{discriminator_forward.7} parent=63 // pred_check_branch
          %1377 = sbr.rel (%p1375) target = $region68
        $region67: #{discriminator_forward.7} parent=63 // pred_region
          _
        $region68: #{discriminator_forward.7} parent=63 // pred_fallthru
          _
        // Predicated region
        $region69: #{discriminator_forward.7} parent=63 // pred_check
          %p1378 = pneg %p307
        $region70: #{discriminator_forward.7} parent=63 // pred_check_branch
          %1380 = sbr.rel (%p1378) target = $region72
        $region71: #{discriminator_forward.7} parent=63 // pred_region
          %s1382 = ssub.s32 16, 16
          %1383 = vsyncadd %s1372, %s1382
          %s1384 = smul.addr %s27, 16
          %s1385 = scalar_lea.hbm %s12, %s1384
          %s1387 = sshll.u32 %s1374, 4
          %s1388 = int_to_ptr.vmem [resolvable:$true] %s1387
          %1390 = dma.vmem_to_hbm [thread:$0]  %s1388, 16, %s1385, %s1372
        $region72: #{discriminator_forward.7} parent=63 // pred_fallthru
          _
      $region64: #{discriminator_forward.7} parent=5 // pred_fallthru
        _
      %p1391 = scmp.le.s32.totalorder 2, %s22
      // Predicated region
      $region73: #{discriminator_forward.7} parent=5 // pred_check
        %p1392 = pneg %p1391
      $region74: #{discriminator_forward.7} parent=5 // pred_check_branch
        %1394 = sbr.rel (%p1392) target = $region76
      $region75: #{discriminator_forward.7} parent=5 // pred_region
        %s1395 = ssub.s32 %s22, 2
        // Predicated region
        $region77: #{discriminator_forward.7} parent=75 // pred_check
          %p1396 = pneg %p287
        $region78: #{discriminator_forward.7} parent=75 // pred_check_branch
          %1398 = sbr.rel (%p1396) target = $region80
        $region79: #{discriminator_forward.7} parent=75 // pred_region
          %p1399 = scmp.lt.s32.totalorder %s28, 1
          %s1400 = scalar_select %p1399, %s28, 1
          %s1401 = smul.addr %s1400, 8
          %s1402 = scalar_lea.vmem %s11, %s1401
        $region80: #{discriminator_forward.7} parent=75 // pred_fallthru
          _
        // Predicated region
        $region81: #{discriminator_forward.7} parent=75 // pred_check
          %p1403 = pneg %p313
        $region82: #{discriminator_forward.7} parent=75 // pred_check_branch
          %1405 = sbr.rel (%p1403) target = $region84
        $region83: #{discriminator_forward.7} parent=75 // pred_region
          %s1406 = sand.u32 %s298, 1
          %s1407 = scalar_lea.sflag [#allocation3], %s1406
          %s1408 = sand.u32 %s298, 1
          %s1409 = scalar_lea.vmem [#allocation2], %s1408
          %1410 = dma.done %s1407, 16
        $region84: #{discriminator_forward.7} parent=75 // pred_fallthru
          _
      $region76: #{discriminator_forward.7} parent=5 // pred_fallthru
        _
    $region6: #{discriminator_forward.7} parent=1 // loop_footer
      %s26 = sadd.s32 1, %s22
    $region7: #{discriminator_forward.7} parent=1 // loop_footer_branch
      %21 = sbr.rel target = $region3
    $region8: #{discriminator_forward.7} parent=1 // loop_exit
      _
    %1411 = vsyncpa [#allocation3], 1
    %s1412 = scalar_lea.sflag [#allocation3], 1
    %1413 = vsyncpa %s1412, 1

</llo_original>
